<compile_context>
chip_gen: v7x
topology: tpu7x:2x2x1
jax: 0.10.0
libtpu: 0.0.40
codegen_flags: <defaults>
</compile_context>

<pallas_src>
import math
from functools import partial

import jax
import jax.numpy as jnp
from jax import lax
from jax.experimental import pallas as pl
from jax.experimental.pallas import tpu as pltpu

BN_EPS = 1e-5
LANES = 128


def _round_up(x, m):
    return (x + m - 1) // m * m


def _rows_per_chunk(H, W, Cp, max_acc_bytes=4 * 1024 * 1024):
    """Output rows per per-tap-matmul chunk; bounds the f32 accumulator temp."""
    th = max(1, min(H, max_acc_bytes // (W * Cp * 4)))
    while H % th:
        th -= 1
    return th


# ---------------------------------------------------------------------------
# Kernels
# ---------------------------------------------------------------------------
def _zero_halo(xpad_sc, H, W, Cp):
    """Zero only the 1-pixel spatial halo of the (H+2, W+2, Cp) bf16 scratch."""
    Hp, Wp = H + 2, W + 2
    xpad_sc[0:1, :, :] = jnp.zeros((1, Wp, Cp), jnp.bfloat16)
    xpad_sc[Hp - 1:Hp, :, :] = jnp.zeros((1, Wp, Cp), jnp.bfloat16)
    xpad_sc[:, 0:1, :] = jnp.zeros((Hp, 1, Cp), jnp.bfloat16)
    xpad_sc[:, Wp - 1:Wp, :] = jnp.zeros((Hp, 1, Cp), jnp.bfloat16)


def _conv3x3_from_xpad(xpad_sc, w_ref, out_ref, stats_ref, H, W, Cp, TH):
    """3x3 'same' conv as 9 accumulating per-tap MXU matmuls + channel stats.

    xpad_sc:   (H+2, W+2, Cp) bf16 scratch (halo zeroed, interior filled).
    w_ref:     (9, Cp, Cp) bf16 weights, tap-major (dy*3+dx, cin, cout).
    out_ref:   (1, H*W, Cp) bf16 output (raw conv result).
    stats_ref: (1, 2, Cp) f32 per-channel [sum, sum-of-squares] of the f32 conv.
    """
    w_taps = [w_ref[k] for k in range(9)]                 # (Cp, Cp) bf16 each
    s = jnp.zeros((1, Cp), jnp.float32)
    ss = jnp.zeros((1, Cp), jnp.float32)

    num_chunks = H // TH                                  # static, kept small
    for c in range(num_chunks):
        r0 = c * TH
        acc = jnp.zeros((TH * W, Cp), jnp.float32)
        for k in range(9):                                # taps (dy, dx)
            dy, dx = k // 3, k % 3
            lhs = (xpad_sc[r0 + dy:r0 + dy + TH, dx:dx + W, :]
                   .reshape(TH * W, Cp))
            acc = acc + jnp.dot(lhs, w_taps[k],
                                preferred_element_type=jnp.float32)
        out_ref[0, r0 * W:(r0 + TH) * W, :] = acc.astype(jnp.bfloat16)
        s = s + jnp.sum(acc, axis=0, keepdims=True)
        ss = ss + jnp.sum(acc * acc, axis=0, keepdims=True)

    stats_ref[0, 0:1, :] = s
    stats_ref[0, 1:2, :] = ss


def _conv1_kernel(x_ref, w_ref, h_ref, stats_ref, xpad_sc, *, H, W, Cp, TH):
    _zero_halo(xpad_sc, H, W, Cp)
    # Single f32 -> bf16 cast, straight into the padded-activation interior.
    xpad_sc[1:H + 1, 1:W + 1, :] = (
        x_ref[0].reshape(H, W, Cp).astype(jnp.bfloat16))
    _conv3x3_from_xpad(xpad_sc, w_ref, h_ref, stats_ref, H, W, Cp, TH)


def _bn_prelu_conv2_kernel(h1_ref, scale_ref, bias_ref, w_ref, alpha_ref,
                           h2_ref, stats_ref, xpad_sc, *, H, W, Cp, TH):
    _zero_halo(xpad_sc, H, W, Cp)
    # BN1 folded to per-channel scale/bias, then PReLU, written directly into
    # the xpad interior as bf16 (no separate full-image copy pass).
    a = h1_ref[0].astype(jnp.float32) * scale_ref[...] + bias_ref[...]
    alpha = alpha_ref[0]                                  # PReLU slope (SMEM)
    a = jnp.where(a > 0, a, alpha * a)
    xpad_sc[1:H + 1, 1:W + 1, :] = a.reshape(H, W, Cp).astype(jnp.bfloat16)
    _conv3x3_from_xpad(xpad_sc, w_ref, h2_ref, stats_ref, H, W, Cp, TH)


def _bn_residual_kernel(h2_ref, x_ref, scale_ref, bias_ref, out_ref):
    out_ref[0] = (h2_ref[0].astype(jnp.float32) * scale_ref[...]
                  + bias_ref[...] + x_ref[0])


# ---------------------------------------------------------------------------
# Wrapper
# ---------------------------------------------------------------------------
def _bn_fold(stats, gamma_p, beta_p, count):
    """Fold summed batch statistics into per-channel (scale, bias), f32.

    NOTE: var = E[x^2] - E[x]^2 in f32; fine for SRGAN-scale activations.
    TODO(synk): switch to per-image mean-centered partial sums if activation
                means ever grow large enough for catastrophic cancellation.
    """
    mean = stats[0] / count
    var = jnp.maximum(stats[1] / count - mean * mean, 0.0)
    scale = gamma_p * lax.rsqrt(var + BN_EPS)
    bias = beta_p - mean * scale
    return scale.reshape(1, -1), bias.reshape(1, -1)


def _vmem_cap_bytes():
    try:
        return int(pltpu.get_tpu_info().vmem_capacity_bytes)
    except Exception:
        return 64 * 1024 * 1024        # conservative: v7x per-core VMEM


def _compiler_params(vmem_need_bytes):
    cap = _vmem_cap_bytes()
    limit = int(min(int(0.75 * cap),
                    max(32 * 1024 * 1024, 2 * vmem_need_bytes)))
    return pltpu.CompilerParams(dimension_semantics=("parallel",),
                                vmem_limit_bytes=limit)


@jax.jit
def resblock_forward(x_nchw, params):
    """x_nchw: (N, C, H, W) float32 -> (N, C, H, W) float32."""
    w1, w2, g1, b1, g2, b2, alpha = params
    N, C, H, W = x_nchw.shape
    Cp = _round_up(C, LANES)
    HW = H * W
    M = N * HW
    TH = _rows_per_chunk(H, W, Cp)

    # ---- layout plumbing: NCHW -> (N, H*W, Cp), zero-padded channels --------
    x = jnp.transpose(x_nchw, (0, 2, 3, 1)).reshape(N, HW, C)
    x = jnp.pad(x, ((0, 0), (0, 0), (0, Cp - C)))

    def pack_weight(w):  # (3,3,Cin,Cout) HWIO -> (9, Cp, Cp) bf16, tap-major
        wp = jnp.pad(w, ((0, 0), (0, 0), (0, Cp - C), (0, Cp - C)))
        return wp.reshape(9, Cp, Cp).astype(jnp.bfloat16)

    w1m, w2m = pack_weight(w1), pack_weight(w2)
    pad_c = lambda v: jnp.pad(v, (0, Cp - C))
    g1p, b1p, g2p, b2p = pad_c(g1), pad_c(b1), pad_c(g2), pad_c(b2)

    act_spec = pl.BlockSpec((1, HW, Cp), lambda n: (n, 0, 0))
    w_spec = pl.BlockSpec((9, Cp, Cp), lambda n: (0, 0, 0))
    vec_spec = pl.BlockSpec((1, Cp), lambda n: (0, 0))
    stats_spec = pl.BlockSpec((1, 2, Cp), lambda n: (n, 0, 0))
    smem_spec = pl.BlockSpec(memory_space=pltpu.MemorySpace.SMEM)

    xpad_scratch = [pltpu.VMEM((H + 2, W + 2, Cp), jnp.bfloat16)]

    act_f32 = HW * Cp * 4
    act_bf16 = HW * Cp * 2
    conv_need = (2 * act_f32                      # f32 act block, 2x buffered
                 + 2 * act_bf16                   # bf16 act block, 2x buffered
                 + 2 * 9 * Cp * Cp * 2            # bf16 tap weights, 2x buffered
                 + (H + 2) * (W + 2) * Cp * 2     # bf16 padded-activation scratch
                 + 2 * TH * W * Cp * 4            # f32 acc + per-tap lhs temps
                 + act_f32                        # pass-B BN/PReLU f32 temp
                 + 16 * Cp * 4)                   # stats / scale / bias
    elem_need = 2 * (2 * act_f32 + act_bf16) + 16 * Cp * 4

    # ---- pass A: conv1 + per-image channel stats -----------------------------
    h1, stats1 = pl.pallas_call(
        partial(_conv1_kernel, H=H, W=W, Cp=Cp, TH=TH),
        grid=(N,),
        in_specs=[act_spec, w_spec],
        out_specs=(act_spec, stats_spec),
        out_shape=(jax.ShapeDtypeStruct((N, HW, Cp), jnp.bfloat16),
                   jax.ShapeDtypeStruct((N, 2, Cp), jnp.float32)),
        scratch_shapes=xpad_scratch,
        compiler_params=_compiler_params(conv_need),
    )(x, w1m)

    scale1, bias1 = _bn_fold(jnp.sum(stats1, axis=0), g1p, b1p, M)

    # ---- pass B: BN1 + PReLU + conv2 + per-image channel stats ---------------
    h2, stats2 = pl.pallas_call(
        partial(_bn_prelu_conv2_kernel, H=H, W=W, Cp=Cp, TH=TH),
        grid=(N,),
        in_specs=[act_spec, vec_spec, vec_spec, w_spec, smem_spec],
        out_specs=(act_spec, stats_spec),
        out_shape=(jax.ShapeDtypeStruct((N, HW, Cp), jnp.bfloat16),
                   jax.ShapeDtypeStruct((N, 2, Cp), jnp.float32)),
        scratch_shapes=xpad_scratch,
        compiler_params=_compiler_params(conv_need),
    )(h1, scale1, bias1, w2m, alpha)

    scale2, bias2 = _bn_fold(jnp.sum(stats2, axis=0), g2p, b2p, M)

    # ---- pass C: BN2 + residual add (output reuses the dead x buffer) --------
    out = pl.pallas_call(
        _bn_residual_kernel,
        grid=(N,),
        in_specs=[act_spec, act_spec, vec_spec, vec_spec],
        out_specs=act_spec,
        out_shape=jax.ShapeDtypeStruct((N, HW, Cp), jnp.float32),
        input_output_aliases={1: 0},
        compiler_params=_compiler_params(elem_need),
    )(h2, x, scale2, bias2)

    # ---- layout plumbing back to NCHW -----------------------------------------
    out = out[:, :, :C].reshape(N, H, W, C)
    return jnp.transpose(out, (0, 3, 1, 2))


# ---------------------------------------------------------------------------
# Pure-JAX reference (f32) matching the PyTorch forward (training-mode BN)
# ---------------------------------------------------------------------------
def resblock_reference(x_nchw, params):
    w1, w2, g1, b1, g2, b2, alpha = params
    x = jnp.transpose(x_nchw, (0, 2, 3, 1))

    def conv(h, w):
        return lax.conv_general_dilated(
            h, w, window_strides=(1, 1), padding="SAME",
            dimension_numbers=("NHWC", "HWIO", "NHWC"))

    def bn(h, g, b):
        mean = jnp.mean(h, axis=(0, 1, 2), keepdims=True)
        var = jnp.mean((h - mean) ** 2, axis=(0, 1, 2), keepdims=True)
        return (h - mean) * lax.rsqrt(var + BN_EPS) * g + b

    h = conv(x, w1)
    h = bn(h, g1, b1)
    h = jnp.where(h > 0, h, alpha[0] * h)
    h = conv(h, w2)
    h = bn(h, g2, b2)
    y = h + x
    return jnp.transpose(y, (0, 3, 1, 2))


def init_params(key, channels):
    """Parameter init mirroring nn.Conv2d / BatchNorm2d / PReLU defaults."""
    k1, k2 = jax.random.split(key)
    bound = 1.0 / math.sqrt(channels * 3 * 3)
    # conv weights directly in (kh, kw, Cin, Cout)
    w1 = jax.random.uniform(k1, (3, 3, channels, channels),
                            minval=-bound, maxval=bound, dtype=jnp.float32)
    w2 = jax.random.uniform(k2, (3, 3, channels, channels),
                            minval=-bound, maxval=bound, dtype=jnp.float32)
    g1 = jnp.ones((channels,), jnp.float32)
    b1 = jnp.zeros((channels,), jnp.float32)
    g2 = jnp.ones((channels,), jnp.float32)
    b2 = jnp.zeros((channels,), jnp.float32)
    alpha = jnp.array([0.25], jnp.float32)               # PReLU default
    return (w1, w2, g1, b1, g2, b2, alpha)


if __name__ == "__main__":
    key = jax.random.PRNGKey(0)
    kp, kx = jax.random.split(key)

    N, C, H, W = 2, 4, 16, 16
    params = init_params(kp, C)
    x = jax.random.normal(kx, (N, C, H, W), dtype=jnp.float32)

    out = jax.block_until_ready(resblock_forward(x, params))
    ref = resblock_reference(x, params)

    assert out.shape == (N, C, H, W)
    max_err = float(jnp.max(jnp.abs(out - ref)))
    # bf16 matmul operands + bf16 inter-pass activations, each normalized by
    # batch-norm -> expect a few e-2 worst-case abs error vs the f32 reference.
    assert jnp.allclose(out, ref, atol=3e-2, rtol=3e-2), \
        f"max abs err = {max_err}"

    print("KERNEL_OK")
</pallas_src>

<mosaic_0001>
module attributes {stable_mosaic.version = 11 : i64} {
  func.func @_conv1_kernel(%arg0: i32, %arg1: memref<1x256x128xf32, #tpu.memory_space<vmem>>, %arg2: memref<9x128x128xbf16, #tpu.memory_space<vmem>>, %arg3: memref<1x256x128xbf16, #tpu.memory_space<vmem>>, %arg4: memref<1x2x128xf32, #tpu.memory_space<vmem>>, %arg5: memref<18x18x128xbf16, #tpu.memory_space<vmem>>) attributes {dimension_semantics = [#tpu.dimension_semantics<parallel>], iteration_bounds = array<i64: 2>, scalar_prefetch = 0 : i64, scratch_operands = 1 : i64, tpu.core_type = #tpu.core_type<tc>, window_params = [{transform_indices = @transform_0, window_bounds = array<i64: 1, 256, 128>}, {pipeline_mode = #tpu.pipeline_mode<synchronous>, transform_indices = @transform_1, window_bounds = array<i64: 9, 128, 128>}, {transform_indices = @transform_2, window_bounds = array<i64: 1, 256, 128>}, {transform_indices = @transform_3, window_bounds = array<i64: 1, 2, 128>}]} {
    %cst = arith.constant 0.000000e+00 : bf16
    %0 = vector.broadcast %cst : bf16 to vector<1x18x128xbf16>
    %c0 = arith.constant 0 : index
    %c0_0 = arith.constant 0 : index
    %c0_1 = arith.constant 0 : index
    %1 = vector.load %arg5[%c0, %c0_0, %c0_1] : memref<18x18x128xbf16, #tpu.memory_space<vmem>>, vector<1x18x128xbf16>
    tpu.vector_store %arg5[%c0, %c0_0, %c0_1], %0 {strides = array<i32>} : memref<18x18x128xbf16, #tpu.memory_space<vmem>>, vector<1x18x128xbf16>,
    %cst_2 = arith.constant 0.000000e+00 : bf16
    %2 = vector.broadcast %cst_2 : bf16 to vector<1x18x128xbf16>
    %c17 = arith.constant 17 : index
    %c0_3 = arith.constant 0 : index
    %c0_4 = arith.constant 0 : index
    %3 = vector.load %arg5[%c17, %c0_3, %c0_4] : memref<18x18x128xbf16, #tpu.memory_space<vmem>>, vector<1x18x128xbf16>
    tpu.vector_store %arg5[%c17, %c0_3, %c0_4], %2 {strides = array<i32>} : memref<18x18x128xbf16, #tpu.memory_space<vmem>>, vector<1x18x128xbf16>,
    %cst_5 = arith.constant 0.000000e+00 : bf16
    %4 = vector.broadcast %cst_5 : bf16 to vector<18x1x128xbf16>
    %c0_6 = arith.constant 0 : index
    %c0_7 = arith.constant 0 : index
    %c0_8 = arith.constant 0 : index
    %5 = vector.load %arg5[%c0_6, %c0_7, %c0_8] : memref<18x18x128xbf16, #tpu.memory_space<vmem>>, vector<18x1x128xbf16>
    tpu.vector_store %arg5[%c0_6, %c0_7, %c0_8], %4 {strides = array<i32>} : memref<18x18x128xbf16, #tpu.memory_space<vmem>>, vector<18x1x128xbf16>,
    %cst_9 = arith.constant 0.000000e+00 : bf16
    %6 = vector.broadcast %cst_9 : bf16 to vector<18x1x128xbf16>
    %c0_10 = arith.constant 0 : index
    %c17_11 = arith.constant 17 : index
    %c0_12 = arith.constant 0 : index
    %7 = vector.load %arg5[%c0_10, %c17_11, %c0_12] : memref<18x18x128xbf16, #tpu.memory_space<vmem>>, vector<18x1x128xbf16>
    tpu.vector_store %arg5[%c0_10, %c17_11, %c0_12], %6 {strides = array<i32>} : memref<18x18x128xbf16, #tpu.memory_space<vmem>>, vector<18x1x128xbf16>,
    %c0_13 = arith.constant 0 : index
    %c0_14 = arith.constant 0 : index
    %c0_15 = arith.constant 0 : index
    %8 = vector.load %arg1[%c0_13, %c0_14, %c0_15] : memref<1x256x128xf32, #tpu.memory_space<vmem>>, vector<1x256x128xf32>
    %9 = vector.shape_cast %8 : vector<1x256x128xf32> to vector<256x128xf32>
    %10 = vector.shape_cast %9 : vector<256x128xf32> to vector<16x16x128xf32>
    %11 = arith.truncf %10 : vector<16x16x128xf32> to vector<16x16x128xbf16>
    %c1 = arith.constant 1 : index
    %c1_16 = arith.constant 1 : index
    %c0_17 = arith.constant 0 : index
    %12 = vector.load %arg5[%c1, %c1_16, %c0_17] : memref<18x18x128xbf16, #tpu.memory_space<vmem>>, vector<16x16x128xbf16>
    tpu.vector_store %arg5[%c1, %c1_16, %c0_17], %11 {strides = array<i32>} : memref<18x18x128xbf16, #tpu.memory_space<vmem>>, vector<16x16x128xbf16>,
    %c0_18 = arith.constant 0 : index
    %c0_19 = arith.constant 0 : index
    %c0_20 = arith.constant 0 : index
    %13 = vector.load %arg2[%c0_18, %c0_19, %c0_20] : memref<9x128x128xbf16, #tpu.memory_space<vmem>>, vector<1x128x128xbf16>
    %14 = vector.shape_cast %13 : vector<1x128x128xbf16> to vector<128x128xbf16>
    %c1_21 = arith.constant 1 : index
    %c0_22 = arith.constant 0 : index
    %c0_23 = arith.constant 0 : index
    %15 = vector.load %arg2[%c1_21, %c0_22, %c0_23] : memref<9x128x128xbf16, #tpu.memory_space<vmem>>, vector<1x128x128xbf16>
    %16 = vector.shape_cast %15 : vector<1x128x128xbf16> to vector<128x128xbf16>
    %c2 = arith.constant 2 : index
    %c0_24 = arith.constant 0 : index
    %c0_25 = arith.constant 0 : index
    %17 = vector.load %arg2[%c2, %c0_24, %c0_25] : memref<9x128x128xbf16, #tpu.memory_space<vmem>>, vector<1x128x128xbf16>
    %18 = vector.shape_cast %17 : vector<1x128x128xbf16> to vector<128x128xbf16>
    %c3 = arith.constant 3 : index
    %c0_26 = arith.constant 0 : index
    %c0_27 = arith.constant 0 : index
    %19 = vector.load %arg2[%c3, %c0_26, %c0_27] : memref<9x128x128xbf16, #tpu.memory_space<vmem>>, vector<1x128x128xbf16>
    %20 = vector.shape_cast %19 : vector<1x128x128xbf16> to vector<128x128xbf16>
    %c4 = arith.constant 4 : index
    %c0_28 = arith.constant 0 : index
    %c0_29 = arith.constant 0 : index
    %21 = vector.load %arg2[%c4, %c0_28, %c0_29] : memref<9x128x128xbf16, #tpu.memory_space<vmem>>, vector<1x128x128xbf16>
    %22 = vector.shape_cast %21 : vector<1x128x128xbf16> to vector<128x128xbf16>
    %c5 = arith.constant 5 : index
    %c0_30 = arith.constant 0 : index
    %c0_31 = arith.constant 0 : index
    %23 = vector.load %arg2[%c5, %c0_30, %c0_31] : memref<9x128x128xbf16, #tpu.memory_space<vmem>>, vector<1x128x128xbf16>
    %24 = vector.shape_cast %23 : vector<1x128x128xbf16> to vector<128x128xbf16>
    %c6 = arith.constant 6 : index
    %c0_32 = arith.constant 0 : index
    %c0_33 = arith.constant 0 : index
    %25 = vector.load %arg2[%c6, %c0_32, %c0_33] : memref<9x128x128xbf16, #tpu.memory_space<vmem>>, vector<1x128x128xbf16>
    %26 = vector.shape_cast %25 : vector<1x128x128xbf16> to vector<128x128xbf16>
    %c7 = arith.constant 7 : index
    %c0_34 = arith.constant 0 : index
    %c0_35 = arith.constant 0 : index
    %27 = vector.load %arg2[%c7, %c0_34, %c0_35] : memref<9x128x128xbf16, #tpu.memory_space<vmem>>, vector<1x128x128xbf16>
    %28 = vector.shape_cast %27 : vector<1x128x128xbf16> to vector<128x128xbf16>
    %c8 = arith.constant 8 : index
    %c0_36 = arith.constant 0 : index
    %c0_37 = arith.constant 0 : index
    %29 = vector.load %arg2[%c8, %c0_36, %c0_37] : memref<9x128x128xbf16, #tpu.memory_space<vmem>>, vector<1x128x128xbf16>
    %30 = vector.shape_cast %29 : vector<1x128x128xbf16> to vector<128x128xbf16>
    %cst_38 = arith.constant 0.000000e+00 : f32
    %31 = vector.broadcast %cst_38 : f32 to vector<1x128xf32>
    %cst_39 = arith.constant 0.000000e+00 : f32
    %32 = vector.broadcast %cst_39 : f32 to vector<1x128xf32>
    %cst_40 = arith.constant 0.000000e+00 : f32
    %33 = vector.broadcast %cst_40 : f32 to vector<256x128xf32>
    %c0_41 = arith.constant 0 : index
    %c0_42 = arith.constant 0 : index
    %c0_43 = arith.constant 0 : index
    %34 = vector.load %arg5[%c0_41, %c0_42, %c0_43] : memref<18x18x128xbf16, #tpu.memory_space<vmem>>, vector<16x16x128xbf16>
    %35 = vector.shape_cast %34 : vector<16x16x128xbf16> to vector<256x128xbf16>
    %cst_44 = arith.constant dense<0.000000e+00> : vector<256x128xf32>
    %36 = tpu.matmul %35, %14, %cst_44 {dimension_numbers = #tpu.dot_dimension_numbers<[1], [0], [0], [1], [0, 0, 1, 1], [], []>} : vector<256x128xbf16>, vector<128x128xbf16>, vector<256x128xf32> -> vector<256x128xf32>
    %37 = arith.addf %33, %36 : vector<256x128xf32>
    %c0_45 = arith.constant 0 : index
    %c1_46 = arith.constant 1 : index
    %c0_47 = arith.constant 0 : index
    %38 = vector.load %arg5[%c0_45, %c1_46, %c0_47] : memref<18x18x128xbf16, #tpu.memory_space<vmem>>, vector<16x16x128xbf16>
    %39 = vector.shape_cast %38 : vector<16x16x128xbf16> to vector<256x128xbf16>
    %cst_48 = arith.constant dense<0.000000e+00> : vector<256x128xf32>
    %40 = tpu.matmul %39, %16, %cst_48 {dimension_numbers = #tpu.dot_dimension_numbers<[1], [0], [0], [1], [0, 0, 1, 1], [], []>} : vector<256x128xbf16>, vector<128x128xbf16>, vector<256x128xf32> -> vector<256x128xf32>
    %41 = arith.addf %37, %40 : vector<256x128xf32>
    %c0_49 = arith.constant 0 : index
    %c2_50 = arith.constant 2 : index
    %c0_51 = arith.constant 0 : index
    %42 = vector.load %arg5[%c0_49, %c2_50, %c0_51] : memref<18x18x128xbf16, #tpu.memory_space<vmem>>, vector<16x16x128xbf16>
    %43 = vector.shape_cast %42 : vector<16x16x128xbf16> to vector<256x128xbf16>
    %cst_52 = arith.constant dense<0.000000e+00> : vector<256x128xf32>
    %44 = tpu.matmul %43, %18, %cst_52 {dimension_numbers = #tpu.dot_dimension_numbers<[1], [0], [0], [1], [0, 0, 1, 1], [], []>} : vector<256x128xbf16>, vector<128x128xbf16>, vector<256x128xf32> -> vector<256x128xf32>
    %45 = arith.addf %41, %44 : vector<256x128xf32>
    %c1_53 = arith.constant 1 : index
    %c0_54 = arith.constant 0 : index
    %c0_55 = arith.constant 0 : index
    %46 = vector.load %arg5[%c1_53, %c0_54, %c0_55] : memref<18x18x128xbf16, #tpu.memory_space<vmem>>, vector<16x16x128xbf16>
    %47 = vector.shape_cast %46 : vector<16x16x128xbf16> to vector<256x128xbf16>
    %cst_56 = arith.constant dense<0.000000e+00> : vector<256x128xf32>
    %48 = tpu.matmul %47, %20, %cst_56 {dimension_numbers = #tpu.dot_dimension_numbers<[1], [0], [0], [1], [0, 0, 1, 1], [], []>} : vector<256x128xbf16>, vector<128x128xbf16>, vector<256x128xf32> -> vector<256x128xf32>
    %49 = arith.addf %45, %48 : vector<256x128xf32>
    %c1_57 = arith.constant 1 : index
    %c1_58 = arith.constant 1 : index
    %c0_59 = arith.constant 0 : index
    %50 = vector.load %arg5[%c1_57, %c1_58, %c0_59] : memref<18x18x128xbf16, #tpu.memory_space<vmem>>, vector<16x16x128xbf16>
    %51 = vector.shape_cast %50 : vector<16x16x128xbf16> to vector<256x128xbf16>
    %cst_60 = arith.constant dense<0.000000e+00> : vector<256x128xf32>
    %52 = tpu.matmul %51, %22, %cst_60 {dimension_numbers = #tpu.dot_dimension_numbers<[1], [0], [0], [1], [0, 0, 1, 1], [], []>} : vector<256x128xbf16>, vector<128x128xbf16>, vector<256x128xf32> -> vector<256x128xf32>
    %53 = arith.addf %49, %52 : vector<256x128xf32>
    %c1_61 = arith.constant 1 : index
    %c2_62 = arith.constant 2 : index
    %c0_63 = arith.constant 0 : index
    %54 = vector.load %arg5[%c1_61, %c2_62, %c0_63] : memref<18x18x128xbf16, #tpu.memory_space<vmem>>, vector<16x16x128xbf16>
    %55 = vector.shape_cast %54 : vector<16x16x128xbf16> to vector<256x128xbf16>
    %cst_64 = arith.constant dense<0.000000e+00> : vector<256x128xf32>
    %56 = tpu.matmul %55, %24, %cst_64 {dimension_numbers = #tpu.dot_dimension_numbers<[1], [0], [0], [1], [0, 0, 1, 1], [], []>} : vector<256x128xbf16>, vector<128x128xbf16>, vector<256x128xf32> -> vector<256x128xf32>
    %57 = arith.addf %53, %56 : vector<256x128xf32>
    %c2_65 = arith.constant 2 : index
    %c0_66 = arith.constant 0 : index
    %c0_67 = arith.constant 0 : index
    %58 = vector.load %arg5[%c2_65, %c0_66, %c0_67] : memref<18x18x128xbf16, #tpu.memory_space<vmem>>, vector<16x16x128xbf16>
    %59 = vector.shape_cast %58 : vector<16x16x128xbf16> to vector<256x128xbf16>
    %cst_68 = arith.constant dense<0.000000e+00> : vector<256x128xf32>
    %60 = tpu.matmul %59, %26, %cst_68 {dimension_numbers = #tpu.dot_dimension_numbers<[1], [0], [0], [1], [0, 0, 1, 1], [], []>} : vector<256x128xbf16>, vector<128x128xbf16>, vector<256x128xf32> -> vector<256x128xf32>
    %61 = arith.addf %57, %60 : vector<256x128xf32>
    %c2_69 = arith.constant 2 : index
    %c1_70 = arith.constant 1 : index
    %c0_71 = arith.constant 0 : index
    %62 = vector.load %arg5[%c2_69, %c1_70, %c0_71] : memref<18x18x128xbf16, #tpu.memory_space<vmem>>, vector<16x16x128xbf16>
    %63 = vector.shape_cast %62 : vector<16x16x128xbf16> to vector<256x128xbf16>
    %cst_72 = arith.constant dense<0.000000e+00> : vector<256x128xf32>
    %64 = tpu.matmul %63, %28, %cst_72 {dimension_numbers = #tpu.dot_dimension_numbers<[1], [0], [0], [1], [0, 0, 1, 1], [], []>} : vector<256x128xbf16>, vector<128x128xbf16>, vector<256x128xf32> -> vector<256x128xf32>
    %65 = arith.addf %61, %64 : vector<256x128xf32>
    %c2_73 = arith.constant 2 : index
    %c2_74 = arith.constant 2 : index
    %c0_75 = arith.constant 0 : index
    %66 = vector.load %arg5[%c2_73, %c2_74, %c0_75] : memref<18x18x128xbf16, #tpu.memory_space<vmem>>, vector<16x16x128xbf16>
    %67 = vector.shape_cast %66 : vector<16x16x128xbf16> to vector<256x128xbf16>
    %cst_76 = arith.constant dense<0.000000e+00> : vector<256x128xf32>
    %68 = tpu.matmul %67, %30, %cst_76 {dimension_numbers = #tpu.dot_dimension_numbers<[1], [0], [0], [1], [0, 0, 1, 1], [], []>} : vector<256x128xbf16>, vector<128x128xbf16>, vector<256x128xf32> -> vector<256x128xf32>
    %69 = arith.addf %65, %68 : vector<256x128xf32>
    %70 = arith.truncf %69 : vector<256x128xf32> to vector<256x128xbf16>
    %c0_77 = arith.constant 0 : index
    %c0_78 = arith.constant 0 : index
    %c0_79 = arith.constant 0 : index
    %71 = vector.load %arg3[%c0_77, %c0_78, %c0_79] : memref<1x256x128xbf16, #tpu.memory_space<vmem>>, vector<1x256x128xbf16>
    %72 = vector.shape_cast %71 : vector<1x256x128xbf16> to vector<256x128xbf16>
    %73 = vector.shape_cast %70 : vector<256x128xbf16> to vector<1x256x128xbf16>
    tpu.vector_store %arg3[%c0_77, %c0_78, %c0_79], %73 {strides = array<i32>} : memref<1x256x128xbf16, #tpu.memory_space<vmem>>, vector<1x256x128xbf16>,
    %cst_80 = arith.constant dense<0.000000e+00> : vector<128xf32>
    %74 = vector.multi_reduction <add>, %69, %cst_80 [0] : vector<256x128xf32> to vector<128xf32>
    %75 = vector.shape_cast %74 : vector<128xf32> to vector<1x128xf32>
    %76 = arith.addf %31, %75 : vector<1x128xf32>
    %77 = arith.mulf %69, %69 : vector<256x128xf32>
    %cst_81 = arith.constant dense<0.000000e+00> : vector<128xf32>
    %78 = vector.multi_reduction <add>, %77, %cst_81 [0] : vector<256x128xf32> to vector<128xf32>
    %79 = vector.shape_cast %78 : vector<128xf32> to vector<1x128xf32>
    %80 = arith.addf %32, %79 : vector<1x128xf32>
    %c0_82 = arith.constant 0 : index
    %c0_83 = arith.constant 0 : index
    %c0_84 = arith.constant 0 : index
    %81 = vector.load %arg4[%c0_82, %c0_83, %c0_84] : memref<1x2x128xf32, #tpu.memory_space<vmem>>, vector<1x1x128xf32>
    %82 = vector.shape_cast %81 : vector<1x1x128xf32> to vector<1x128xf32>
    %83 = vector.shape_cast %76 : vector<1x128xf32> to vector<1x1x128xf32>
    tpu.vector_store %arg4[%c0_82, %c0_83, %c0_84], %83 {strides = array<i32>} : memref<1x2x128xf32, #tpu.memory_space<vmem>>, vector<1x1x128xf32>,
    %c0_85 = arith.constant 0 : index
    %c1_86 = arith.constant 1 : index
    %c0_87 = arith.constant 0 : index
    %84 = vector.load %arg4[%c0_85, %c1_86, %c0_87] : memref<1x2x128xf32, #tpu.memory_space<vmem>>, vector<1x1x128xf32>
    %85 = vector.shape_cast %84 : vector<1x1x128xf32> to vector<1x128xf32>
    %86 = vector.shape_cast %80 : vector<1x128xf32> to vector<1x1x128xf32>
    tpu.vector_store %arg4[%c0_85, %c1_86, %c0_87], %86 {strides = array<i32>} : memref<1x2x128xf32, #tpu.memory_space<vmem>>, vector<1x1x128xf32>,
    return
  }
  func.func @transform_0(%arg0: i32) -> (i32, i32, i32) {
    %c0_i32 = arith.constant 0 : i32
    %c0_i32_0 = arith.constant 0 : i32
    %c0_i32_1 = arith.constant 0 : i32
    return %arg0, %c0_i32, %c0_i32_0 : i32, i32, i32
  }
  func.func @transform_1(%arg0: i32) -> (i32, i32, i32) {
    %c0_i32 = arith.constant 0 : i32
    %c0_i32_0 = arith.constant 0 : i32
    %c0_i32_1 = arith.constant 0 : i32
    %c0_i32_2 = arith.constant 0 : i32
    return %c0_i32, %c0_i32_0, %c0_i32_1 : i32, i32, i32
  }
  func.func @transform_2(%arg0: i32) -> (i32, i32, i32) {
    %c0_i32 = arith.constant 0 : i32
    %c0_i32_0 = arith.constant 0 : i32
    %c0_i32_1 = arith.constant 0 : i32
    return %arg0, %c0_i32, %c0_i32_0 : i32, i32, i32
  }
  func.func @transform_3(%arg0: i32) -> (i32, i32, i32) {
    %c0_i32 = arith.constant 0 : i32
    %c0_i32_0 = arith.constant 0 : i32
    %c0_i32_1 = arith.constant 0 : i32
    return %arg0, %c0_i32, %c0_i32_0 : i32, i32, i32
  }
}

module attributes {stable_mosaic.version = 11 : i64} {
  func.func @_bn_residual_kernel(%arg0: i32, %arg1: memref<1x256x128xbf16, #tpu.memory_space<vmem>>, %arg2: memref<1x256x128xf32, #tpu.memory_space<vmem>>, %arg3: memref<1x128xf32, #tpu.memory_space<vmem>>, %arg4: memref<1x128xf32, #tpu.memory_space<vmem>>, %arg5: memref<1x256x128xf32, #tpu.memory_space<vmem>>) attributes {dimension_semantics = [#tpu.dimension_semantics<parallel>], iteration_bounds = array<i64: 2>, scalar_prefetch = 0 : i64, scratch_operands = 0 : i64, tpu.core_type = #tpu.core_type<tc>, window_params = [{transform_indices = @transform_0, window_bounds = array<i64: 1, 256, 128>}, {transform_indices = @transform_1, window_bounds = array<i64: 1, 256, 128>}, {pipeline_mode = #tpu.pipeline_mode<synchronous>, transform_indices = @transform_2, window_bounds = array<i64: 1, 128>}, {pipeline_mode = #tpu.pipeline_mode<synchronous>, transform_indices = @transform_3, window_bounds = array<i64: 1, 128>}, {transform_indices = @transform_4, window_bounds = array<i64: 1, 256, 128>}]} {
    %c0 = arith.constant 0 : index
    %c0_0 = arith.constant 0 : index
    %c0_1 = arith.constant 0 : index
    %0 = vector.load %arg1[%c0, %c0_0, %c0_1] : memref<1x256x128xbf16, #tpu.memory_space<vmem>>, vector<1x256x128xbf16>
    %1 = vector.shape_cast %0 : vector<1x256x128xbf16> to vector<256x128xbf16>
    %2 = arith.extf %1 : vector<256x128xbf16> to vector<256x128xf32>
    %c0_2 = arith.constant 0 : index
    %c0_3 = arith.constant 0 : index
    %3 = vector.load %arg3[%c0_2, %c0_3] : memref<1x128xf32, #tpu.memory_space<vmem>>, vector<1x128xf32>
    %4 = vector.broadcast %3 : vector<1x128xf32> to vector<256x128xf32>
    %5 = arith.mulf %2, %4 : vector<256x128xf32>
    %c0_4 = arith.constant 0 : index
    %c0_5 = arith.constant 0 : index
    %6 = vector.load %arg4[%c0_4, %c0_5] : memref<1x128xf32, #tpu.memory_space<vmem>>, vector<1x128xf32>
    %7 = vector.broadcast %6 : vector<1x128xf32> to vector<256x128xf32>
    %8 = arith.addf %5, %7 : vector<256x128xf32>
    %c0_6 = arith.constant 0 : index
    %c0_7 = arith.constant 0 : index
    %c0_8 = arith.constant 0 : index
    %9 = vector.load %arg2[%c0_6, %c0_7, %c0_8] : memref<1x256x128xf32, #tpu.memory_space<vmem>>, vector<1x256x128xf32>
    %10 = vector.shape_cast %9 : vector<1x256x128xf32> to vector<256x128xf32>
    %11 = arith.addf %8, %10 : vector<256x128xf32>
    %c0_9 = arith.constant 0 : index
    %c0_10 = arith.constant 0 : index
    %c0_11 = arith.constant 0 : index
    %12 = vector.load %arg5[%c0_9, %c0_10, %c0_11] : memref<1x256x128xf32, #tpu.memory_space<vmem>>, vector<1x256x128xf32>
    %13 = vector.shape_cast %12 : vector<1x256x128xf32> to vector<256x128xf32>
    %14 = vector.shape_cast %11 : vector<256x128xf32> to vector<1x256x128xf32>
    tpu.vector_store %arg5[%c0_9, %c0_10, %c0_11], %14 {strides = array<i32>} : memref<1x256x128xf32, #tpu.memory_space<vmem>>, vector<1x256x128xf32>,
    return
  }
  func.func @transform_0(%arg0: i32) -> (i32, i32, i32) {
    %c0_i32 = arith.constant 0 : i32
    %c0_i32_0 = arith.constant 0 : i32
    %c0_i32_1 = arith.constant 0 : i32
    return %arg0, %c0_i32, %c0_i32_0 : i32, i32, i32
  }
  func.func @transform_1(%arg0: i32) -> (i32, i32, i32) {
    %c0_i32 = arith.constant 0 : i32
    %c0_i32_0 = arith.constant 0 : i32
    %c0_i32_1 = arith.constant 0 : i32
    return %arg0, %c0_i32, %c0_i32_0 : i32, i32, i32
  }
  func.func @transform_2(%arg0: i32) -> (i32, i32) {
    %c0_i32 = arith.constant 0 : i32
    %c0_i32_0 = arith.constant 0 : i32
    %c0_i32_1 = arith.constant 0 : i32
    return %c0_i32, %c0_i32_0 : i32, i32
  }
  func.func @transform_3(%arg0: i32) -> (i32, i32) {
    %c0_i32 = arith.constant 0 : i32
    %c0_i32_0 = arith.constant 0 : i32
    %c0_i32_1 = arith.constant 0 : i32
    return %c0_i32, %c0_i32_0 : i32, i32
  }
  func.func @transform_4(%arg0: i32) -> (i32, i32, i32) {
    %c0_i32 = arith.constant 0 : i32
    %c0_i32_0 = arith.constant 0 : i32
    %c0_i32_1 = arith.constant 0 : i32
    return %arg0, %c0_i32, %c0_i32_0 : i32, i32, i32
  }
}

module attributes {stable_mosaic.version = 11 : i64} {
  func.func @_bn_prelu_conv2_kernel(%arg0: i32, %arg1: memref<1x256x128xbf16, #tpu.memory_space<vmem>>, %arg2: memref<1x128xf32, #tpu.memory_space<vmem>>, %arg3: memref<1x128xf32, #tpu.memory_space<vmem>>, %arg4: memref<9x128x128xbf16, #tpu.memory_space<vmem>>, %arg5: memref<1xf32, #tpu.memory_space<smem>>, %arg6: memref<1x256x128xbf16, #tpu.memory_space<vmem>>, %arg7: memref<1x2x128xf32, #tpu.memory_space<vmem>>, %arg8: memref<18x18x128xbf16, #tpu.memory_space<vmem>>) attributes {dimension_semantics = [#tpu.dimension_semantics<parallel>], iteration_bounds = array<i64: 2>, scalar_prefetch = 0 : i64, scratch_operands = 1 : i64, tpu.core_type = #tpu.core_type<tc>, window_params = [{transform_indices = @transform_0, window_bounds = array<i64: 1, 256, 128>}, {pipeline_mode = #tpu.pipeline_mode<synchronous>, transform_indices = @transform_1, window_bounds = array<i64: 1, 128>}, {pipeline_mode = #tpu.pipeline_mode<synchronous>, transform_indices = @transform_2, window_bounds = array<i64: 1, 128>}, {pipeline_mode = #tpu.pipeline_mode<synchronous>, transform_indices = @transform_3, window_bounds = array<i64: 9, 128, 128>}, {transform_indices = @transform_4, window_bounds = array<i64: 1>}, {transform_indices = @transform_5, window_bounds = array<i64: 1, 256, 128>}, {transform_indices = @transform_6, window_bounds = array<i64: 1, 2, 128>}]} {
    %cst = arith.constant 0.000000e+00 : bf16
    %0 = vector.broadcast %cst : bf16 to vector<1x18x128xbf16>
    %c0 = arith.constant 0 : index
    %c0_0 = arith.constant 0 : index
    %c0_1 = arith.constant 0 : index
    %1 = vector.load %arg8[%c0, %c0_0, %c0_1] : memref<18x18x128xbf16, #tpu.memory_space<vmem>>, vector<1x18x128xbf16>
    tpu.vector_store %arg8[%c0, %c0_0, %c0_1], %0 {strides = array<i32>} : memref<18x18x128xbf16, #tpu.memory_space<vmem>>, vector<1x18x128xbf16>,
    %cst_2 = arith.constant 0.000000e+00 : bf16
    %2 = vector.broadcast %cst_2 : bf16 to vector<1x18x128xbf16>
    %c17 = arith.constant 17 : index
    %c0_3 = arith.constant 0 : index
    %c0_4 = arith.constant 0 : index
    %3 = vector.load %arg8[%c17, %c0_3, %c0_4] : memref<18x18x128xbf16, #tpu.memory_space<vmem>>, vector<1x18x128xbf16>
    tpu.vector_store %arg8[%c17, %c0_3, %c0_4], %2 {strides = array<i32>} : memref<18x18x128xbf16, #tpu.memory_space<vmem>>, vector<1x18x128xbf16>,
    %cst_5 = arith.constant 0.000000e+00 : bf16
    %4 = vector.broadcast %cst_5 : bf16 to vector<18x1x128xbf16>
    %c0_6 = arith.constant 0 : index
    %c0_7 = arith.constant 0 : index
    %c0_8 = arith.constant 0 : index
    %5 = vector.load %arg8[%c0_6, %c0_7, %c0_8] : memref<18x18x128xbf16, #tpu.memory_space<vmem>>, vector<18x1x128xbf16>
    tpu.vector_store %arg8[%c0_6, %c0_7, %c0_8], %4 {strides = array<i32>} : memref<18x18x128xbf16, #tpu.memory_space<vmem>>, vector<18x1x128xbf16>,
    %cst_9 = arith.constant 0.000000e+00 : bf16
    %6 = vector.broadcast %cst_9 : bf16 to vector<18x1x128xbf16>
    %c0_10 = arith.constant 0 : index
    %c17_11 = arith.constant 17 : index
    %c0_12 = arith.constant 0 : index
    %7 = vector.load %arg8[%c0_10, %c17_11, %c0_12] : memref<18x18x128xbf16, #tpu.memory_space<vmem>>, vector<18x1x128xbf16>
    tpu.vector_store %arg8[%c0_10, %c17_11, %c0_12], %6 {strides = array<i32>} : memref<18x18x128xbf16, #tpu.memory_space<vmem>>, vector<18x1x128xbf16>,
    %c0_13 = arith.constant 0 : index
    %c0_14 = arith.constant 0 : index
    %c0_15 = arith.constant 0 : index
    %8 = vector.load %arg1[%c0_13, %c0_14, %c0_15] : memref<1x256x128xbf16, #tpu.memory_space<vmem>>, vector<1x256x128xbf16>
    %9 = vector.shape_cast %8 : vector<1x256x128xbf16> to vector<256x128xbf16>
    %10 = arith.extf %9 : vector<256x128xbf16> to vector<256x128xf32>
    %c0_16 = arith.constant 0 : index
    %c0_17 = arith.constant 0 : index
    %11 = vector.load %arg2[%c0_16, %c0_17] : memref<1x128xf32, #tpu.memory_space<vmem>>, vector<1x128xf32>
    %12 = vector.broadcast %11 : vector<1x128xf32> to vector<256x128xf32>
    %13 = arith.mulf %10, %12 : vector<256x128xf32>
    %c0_18 = arith.constant 0 : index
    %c0_19 = arith.constant 0 : index
    %14 = vector.load %arg3[%c0_18, %c0_19] : memref<1x128xf32, #tpu.memory_space<vmem>>, vector<1x128xf32>
    %15 = vector.broadcast %14 : vector<1x128xf32> to vector<256x128xf32>
    %16 = arith.addf %13, %15 : vector<256x128xf32>
    %c0_20 = arith.constant 0 : index
    %17 = memref.load %arg5[%c0_20] : memref<1xf32, #tpu.memory_space<smem>>
    %cst_21 = arith.constant 0.000000e+00 : f32
    %18 = vector.broadcast %cst_21 : f32 to vector<256x128xf32>
    %19 = arith.cmpf ogt, %16, %18 : vector<256x128xf32>
    %20 = vector.broadcast %17 : f32 to vector<256x128xf32>
    %21 = arith.mulf %20, %16 : vector<256x128xf32>
    %22 = arith.select %19, %16, %21 : vector<256x128xi1>, vector<256x128xf32>
    %23 = vector.shape_cast %22 : vector<256x128xf32> to vector<16x16x128xf32>
    %24 = arith.truncf %23 : vector<16x16x128xf32> to vector<16x16x128xbf16>
    %c1 = arith.constant 1 : index
    %c1_22 = arith.constant 1 : index
    %c0_23 = arith.constant 0 : index
    %25 = vector.load %arg8[%c1, %c1_22, %c0_23] : memref<18x18x128xbf16, #tpu.memory_space<vmem>>, vector<16x16x128xbf16>
    tpu.vector_store %arg8[%c1, %c1_22, %c0_23], %24 {strides = array<i32>} : memref<18x18x128xbf16, #tpu.memory_space<vmem>>, vector<16x16x128xbf16>,
    %c0_24 = arith.constant 0 : index
    %c0_25 = arith.constant 0 : index
    %c0_26 = arith.constant 0 : index
    %26 = vector.load %arg4[%c0_24, %c0_25, %c0_26] : memref<9x128x128xbf16, #tpu.memory_space<vmem>>, vector<1x128x128xbf16>
    %27 = vector.shape_cast %26 : vector<1x128x128xbf16> to vector<128x128xbf16>
    %c1_27 = arith.constant 1 : index
    %c0_28 = arith.constant 0 : index
    %c0_29 = arith.constant 0 : index
    %28 = vector.load %arg4[%c1_27, %c0_28, %c0_29] : memref<9x128x128xbf16, #tpu.memory_space<vmem>>, vector<1x128x128xbf16>
    %29 = vector.shape_cast %28 : vector<1x128x128xbf16> to vector<128x128xbf16>
    %c2 = arith.constant 2 : index
    %c0_30 = arith.constant 0 : index
    %c0_31 = arith.constant 0 : index
    %30 = vector.load %arg4[%c2, %c0_30, %c0_31] : memref<9x128x128xbf16, #tpu.memory_space<vmem>>, vector<1x128x128xbf16>
    %31 = vector.shape_cast %30 : vector<1x128x128xbf16> to vector<128x128xbf16>
    %c3 = arith.constant 3 : index
    %c0_32 = arith.constant 0 : index
    %c0_33 = arith.constant 0 : index
    %32 = vector.load %arg4[%c3, %c0_32, %c0_33] : memref<9x128x128xbf16, #tpu.memory_space<vmem>>, vector<1x128x128xbf16>
    %33 = vector.shape_cast %32 : vector<1x128x128xbf16> to vector<128x128xbf16>
    %c4 = arith.constant 4 : index
    %c0_34 = arith.constant 0 : index
    %c0_35 = arith.constant 0 : index
    %34 = vector.load %arg4[%c4, %c0_34, %c0_35] : memref<9x128x128xbf16, #tpu.memory_space<vmem>>, vector<1x128x128xbf16>
    %35 = vector.shape_cast %34 : vector<1x128x128xbf16> to vector<128x128xbf16>
    %c5 = arith.constant 5 : index
    %c0_36 = arith.constant 0 : index
    %c0_37 = arith.constant 0 : index
    %36 = vector.load %arg4[%c5, %c0_36, %c0_37] : memref<9x128x128xbf16, #tpu.memory_space<vmem>>, vector<1x128x128xbf16>
    %37 = vector.shape_cast %36 : vector<1x128x128xbf16> to vector<128x128xbf16>
    %c6 = arith.constant 6 : index
    %c0_38 = arith.constant 0 : index
    %c0_39 = arith.constant 0 : index
    %38 = vector.load %arg4[%c6, %c0_38, %c0_39] : memref<9x128x128xbf16, #tpu.memory_space<vmem>>, vector<1x128x128xbf16>
    %39 = vector.shape_cast %38 : vector<1x128x128xbf16> to vector<128x128xbf16>
    %c7 = arith.constant 7 : index
    %c0_40 = arith.constant 0 : index
    %c0_41 = arith.constant 0 : index
    %40 = vector.load %arg4[%c7, %c0_40, %c0_41] : memref<9x128x128xbf16, #tpu.memory_space<vmem>>, vector<1x128x128xbf16>
    %41 = vector.shape_cast %40 : vector<1x128x128xbf16> to vector<128x128xbf16>
    %c8 = arith.constant 8 : index
    %c0_42 = arith.constant 0 : index
    %c0_43 = arith.constant 0 : index
    %42 = vector.load %arg4[%c8, %c0_42, %c0_43] : memref<9x128x128xbf16, #tpu.memory_space<vmem>>, vector<1x128x128xbf16>
    %43 = vector.shape_cast %42 : vector<1x128x128xbf16> to vector<128x128xbf16>
    %cst_44 = arith.constant 0.000000e+00 : f32
    %44 = vector.broadcast %cst_44 : f32 to vector<1x128xf32>
    %cst_45 = arith.constant 0.000000e+00 : f32
    %45 = vector.broadcast %cst_45 : f32 to vector<1x128xf32>
    %cst_46 = arith.constant 0.000000e+00 : f32
    %46 = vector.broadcast %cst_46 : f32 to vector<256x128xf32>
    %c0_47 = arith.constant 0 : index
    %c0_48 = arith.constant 0 : index
    %c0_49 = arith.constant 0 : index
    %47 = vector.load %arg8[%c0_47, %c0_48, %c0_49] : memref<18x18x128xbf16, #tpu.memory_space<vmem>>, vector<16x16x128xbf16>
    %48 = vector.shape_cast %47 : vector<16x16x128xbf16> to vector<256x128xbf16>
    %cst_50 = arith.constant dense<0.000000e+00> : vector<256x128xf32>
    %49 = tpu.matmul %48, %27, %cst_50 {dimension_numbers = #tpu.dot_dimension_numbers<[1], [0], [0], [1], [0, 0, 1, 1], [], []>} : vector<256x128xbf16>, vector<128x128xbf16>, vector<256x128xf32> -> vector<256x128xf32>
    %50 = arith.addf %46, %49 : vector<256x128xf32>
    %c0_51 = arith.constant 0 : index
    %c1_52 = arith.constant 1 : index
    %c0_53 = arith.constant 0 : index
    %51 = vector.load %arg8[%c0_51, %c1_52, %c0_53] : memref<18x18x128xbf16, #tpu.memory_space<vmem>>, vector<16x16x128xbf16>
    %52 = vector.shape_cast %51 : vector<16x16x128xbf16> to vector<256x128xbf16>
    %cst_54 = arith.constant dense<0.000000e+00> : vector<256x128xf32>
    %53 = tpu.matmul %52, %29, %cst_54 {dimension_numbers = #tpu.dot_dimension_numbers<[1], [0], [0], [1], [0, 0, 1, 1], [], []>} : vector<256x128xbf16>, vector<128x128xbf16>, vector<256x128xf32> -> vector<256x128xf32>
    %54 = arith.addf %50, %53 : vector<256x128xf32>
    %c0_55 = arith.constant 0 : index
    %c2_56 = arith.constant 2 : index
    %c0_57 = arith.constant 0 : index
    %55 = vector.load %arg8[%c0_55, %c2_56, %c0_57] : memref<18x18x128xbf16, #tpu.memory_space<vmem>>, vector<16x16x128xbf16>
    %56 = vector.shape_cast %55 : vector<16x16x128xbf16> to vector<256x128xbf16>
    %cst_58 = arith.constant dense<0.000000e+00> : vector<256x128xf32>
    %57 = tpu.matmul %56, %31, %cst_58 {dimension_numbers = #tpu.dot_dimension_numbers<[1], [0], [0], [1], [0, 0, 1, 1], [], []>} : vector<256x128xbf16>, vector<128x128xbf16>, vector<256x128xf32> -> vector<256x128xf32>
    %58 = arith.addf %54, %57 : vector<256x128xf32>
    %c1_59 = arith.constant 1 : index
    %c0_60 = arith.constant 0 : index
    %c0_61 = arith.constant 0 : index
    %59 = vector.load %arg8[%c1_59, %c0_60, %c0_61] : memref<18x18x128xbf16, #tpu.memory_space<vmem>>, vector<16x16x128xbf16>
    %60 = vector.shape_cast %59 : vector<16x16x128xbf16> to vector<256x128xbf16>
    %cst_62 = arith.constant dense<0.000000e+00> : vector<256x128xf32>
    %61 = tpu.matmul %60, %33, %cst_62 {dimension_numbers = #tpu.dot_dimension_numbers<[1], [0], [0], [1], [0, 0, 1, 1], [], []>} : vector<256x128xbf16>, vector<128x128xbf16>, vector<256x128xf32> -> vector<256x128xf32>
    %62 = arith.addf %58, %61 : vector<256x128xf32>
    %c1_63 = arith.constant 1 : index
    %c1_64 = arith.constant 1 : index
    %c0_65 = arith.constant 0 : index
    %63 = vector.load %arg8[%c1_63, %c1_64, %c0_65] : memref<18x18x128xbf16, #tpu.memory_space<vmem>>, vector<16x16x128xbf16>
    %64 = vector.shape_cast %63 : vector<16x16x128xbf16> to vector<256x128xbf16>
    %cst_66 = arith.constant dense<0.000000e+00> : vector<256x128xf32>
    %65 = tpu.matmul %64, %35, %cst_66 {dimension_numbers = #tpu.dot_dimension_numbers<[1], [0], [0], [1], [0, 0, 1, 1], [], []>} : vector<256x128xbf16>, vector<128x128xbf16>, vector<256x128xf32> -> vector<256x128xf32>
    %66 = arith.addf %62, %65 : vector<256x128xf32>
    %c1_67 = arith.constant 1 : index
    %c2_68 = arith.constant 2 : index
    %c0_69 = arith.constant 0 : index
    %67 = vector.load %arg8[%c1_67, %c2_68, %c0_69] : memref<18x18x128xbf16, #tpu.memory_space<vmem>>, vector<16x16x128xbf16>
    %68 = vector.shape_cast %67 : vector<16x16x128xbf16> to vector<256x128xbf16>
    %cst_70 = arith.constant dense<0.000000e+00> : vector<256x128xf32>
    %69 = tpu.matmul %68, %37, %cst_70 {dimension_numbers = #tpu.dot_dimension_numbers<[1], [0], [0], [1], [0, 0, 1, 1], [], []>} : vector<256x128xbf16>, vector<128x128xbf16>, vector<256x128xf32> -> vector<256x128xf32>
    %70 = arith.addf %66, %69 : vector<256x128xf32>
    %c2_71 = arith.constant 2 : index
    %c0_72 = arith.constant 0 : index
    %c0_73 = arith.constant 0 : index
    %71 = vector.load %arg8[%c2_71, %c0_72, %c0_73] : memref<18x18x128xbf16, #tpu.memory_space<vmem>>, vector<16x16x128xbf16>
    %72 = vector.shape_cast %71 : vector<16x16x128xbf16> to vector<256x128xbf16>
    %cst_74 = arith.constant dense<0.000000e+00> : vector<256x128xf32>
    %73 = tpu.matmul %72, %39, %cst_74 {dimension_numbers = #tpu.dot_dimension_numbers<[1], [0], [0], [1], [0, 0, 1, 1], [], []>} : vector<256x128xbf16>, vector<128x128xbf16>, vector<256x128xf32> -> vector<256x128xf32>
    %74 = arith.addf %70, %73 : vector<256x128xf32>
    %c2_75 = arith.constant 2 : index
    %c1_76 = arith.constant 1 : index
    %c0_77 = arith.constant 0 : index
    %75 = vector.load %arg8[%c2_75, %c1_76, %c0_77] : memref<18x18x128xbf16, #tpu.memory_space<vmem>>, vector<16x16x128xbf16>
    %76 = vector.shape_cast %75 : vector<16x16x128xbf16> to vector<256x128xbf16>
    %cst_78 = arith.constant dense<0.000000e+00> : vector<256x128xf32>
    %77 = tpu.matmul %76, %41, %cst_78 {dimension_numbers = #tpu.dot_dimension_numbers<[1], [0], [0], [1], [0, 0, 1, 1], [], []>} : vector<256x128xbf16>, vector<128x128xbf16>, vector<256x128xf32> -> vector<256x128xf32>
    %78 = arith.addf %74, %77 : vector<256x128xf32>
    %c2_79 = arith.constant 2 : index
    %c2_80 = arith.constant 2 : index
    %c0_81 = arith.constant 0 : index
    %79 = vector.load %arg8[%c2_79, %c2_80, %c0_81] : memref<18x18x128xbf16, #tpu.memory_space<vmem>>, vector<16x16x128xbf16>
    %80 = vector.shape_cast %79 : vector<16x16x128xbf16> to vector<256x128xbf16>
    %cst_82 = arith.constant dense<0.000000e+00> : vector<256x128xf32>
    %81 = tpu.matmul %80, %43, %cst_82 {dimension_numbers = #tpu.dot_dimension_numbers<[1], [0], [0], [1], [0, 0, 1, 1], [], []>} : vector<256x128xbf16>, vector<128x128xbf16>, vector<256x128xf32> -> vector<256x128xf32>
    %82 = arith.addf %78, %81 : vector<256x128xf32>
    %83 = arith.truncf %82 : vector<256x128xf32> to vector<256x128xbf16>
    %c0_83 = arith.constant 0 : index
    %c0_84 = arith.constant 0 : index
    %c0_85 = arith.constant 0 : index
    %84 = vector.load %arg6[%c0_83, %c0_84, %c0_85] : memref<1x256x128xbf16, #tpu.memory_space<vmem>>, vector<1x256x128xbf16>
    %85 = vector.shape_cast %84 : vector<1x256x128xbf16> to vector<256x128xbf16>
    %86 = vector.shape_cast %83 : vector<256x128xbf16> to vector<1x256x128xbf16>
    tpu.vector_store %arg6[%c0_83, %c0_84, %c0_85], %86 {strides = array<i32>} : memref<1x256x128xbf16, #tpu.memory_space<vmem>>, vector<1x256x128xbf16>,
    %cst_86 = arith.constant dense<0.000000e+00> : vector<128xf32>
    %87 = vector.multi_reduction <add>, %82, %cst_86 [0] : vector<256x128xf32> to vector<128xf32>
    %88 = vector.shape_cast %87 : vector<128xf32> to vector<1x128xf32>
    %89 = arith.addf %44, %88 : vector<1x128xf32>
    %90 = arith.mulf %82, %82 : vector<256x128xf32>
    %cst_87 = arith.constant dense<0.000000e+00> : vector<128xf32>
    %91 = vector.multi_reduction <add>, %90, %cst_87 [0] : vector<256x128xf32> to vector<128xf32>
    %92 = vector.shape_cast %91 : vector<128xf32> to vector<1x128xf32>
    %93 = arith.addf %45, %92 : vector<1x128xf32>
    %c0_88 = arith.constant 0 : index
    %c0_89 = arith.constant 0 : index
    %c0_90 = arith.constant 0 : index
    %94 = vector.load %arg7[%c0_88, %c0_89, %c0_90] : memref<1x2x128xf32, #tpu.memory_space<vmem>>, vector<1x1x128xf32>
    %95 = vector.shape_cast %94 : vector<1x1x128xf32> to vector<1x128xf32>
    %96 = vector.shape_cast %89 : vector<1x128xf32> to vector<1x1x128xf32>
    tpu.vector_store %arg7[%c0_88, %c0_89, %c0_90], %96 {strides = array<i32>} : memref<1x2x128xf32, #tpu.memory_space<vmem>>, vector<1x1x128xf32>,
    %c0_91 = arith.constant 0 : index
    %c1_92 = arith.constant 1 : index
    %c0_93 = arith.constant 0 : index
    %97 = vector.load %arg7[%c0_91, %c1_92, %c0_93] : memref<1x2x128xf32, #tpu.memory_space<vmem>>, vector<1x1x128xf32>
    %98 = vector.shape_cast %97 : vector<1x1x128xf32> to vector<1x128xf32>
    %99 = vector.shape_cast %93 : vector<1x128xf32> to vector<1x1x128xf32>
    tpu.vector_store %arg7[%c0_91, %c1_92, %c0_93], %99 {strides = array<i32>} : memref<1x2x128xf32, #tpu.memory_space<vmem>>, vector<1x1x128xf32>,
    return
  }
  func.func @transform_0(%arg0: i32) -> (i32, i32, i32) {
    %c0_i32 = arith.constant 0 : i32
    %c0_i32_0 = arith.constant 0 : i32
    %c0_i32_1 = arith.constant 0 : i32
    return %arg0, %c0_i32, %c0_i32_0 : i32, i32, i32
  }
  func.func @transform_1(%arg0: i32) -> (i32, i32) {
    %c0_i32 = arith.constant 0 : i32
    %c0_i32_0 = arith.constant 0 : i32
    %c0_i32_1 = arith.constant 0 : i32
    return %c0_i32, %c0_i32_0 : i32, i32
  }
  func.func @transform_2(%arg0: i32) -> (i32, i32) {
    %c0_i32 = arith.constant 0 : i32
    %c0_i32_0 = arith.constant 0 : i32
    %c0_i32_1 = arith.constant 0 : i32
    return %c0_i32, %c0_i32_0 : i32, i32
  }
  func.func @transform_3(%arg0: i32) -> (i32, i32, i32) {
    %c0_i32 = arith.constant 0 : i32
    %c0_i32_0 = arith.constant 0 : i32
    %c0_i32_1 = arith.constant 0 : i32
    %c0_i32_2 = arith.constant 0 : i32
    return %c0_i32, %c0_i32_0, %c0_i32_1 : i32, i32, i32
  }
  func.func @transform_4(%arg0: i32) -> i32 {
    %c0_i32 = arith.constant 0 : i32
    %c0_i32_0 = arith.constant 0 : i32
    return %c0_i32 : i32
  }
  func.func @transform_5(%arg0: i32) -> (i32, i32, i32) {
    %c0_i32 = arith.constant 0 : i32
    %c0_i32_0 = arith.constant 0 : i32
    %c0_i32_1 = arith.constant 0 : i32
    return %arg0, %c0_i32, %c0_i32_0 : i32, i32, i32
  }
  func.func @transform_6(%arg0: i32) -> (i32, i32, i32) {
    %c0_i32 = arith.constant 0 : i32
    %c0_i32_0 = arith.constant 0 : i32
    %c0_i32_1 = arith.constant 0 : i32
    return %arg0, %c0_i32, %c0_i32_0 : i32, i32, i32
  }
}

</mosaic_0001>

<llo_original>
// kernel: resblock_forward.5
$region0: #{resblock_forward.5}
  #allocation0 [shape = 'u32[]', space=smem, size = 0x4, offset = 0x4, fixed_abs, tag = 'smem constant byte address 0x4 - core index']
  #allocation1 [shape = 'u32[144,128]{1,0:T(1,128)}', space=vmem, size = 0x12000, scoped, tag = 'internal scratch']
  %s0 = inlined_call_operand.vmem [shape: bf16[2,256,128], index: 0, kind: input, shape index: {}]
  %s1 = inlined_call_operand.vmem [shape: f32[2,256,128], index: 1, kind: input, shape index: {}, may-alias: {1,4}]
  %s2 = inlined_call_operand.vmem [shape: f32[1,128], index: 2, kind: input, shape index: {}]
  %s3 = inlined_call_operand.vmem [shape: f32[1,128], index: 3, kind: input, shape index: {}]
  %s4 = inlined_call_operand.vmem [shape: f32[2,256,128], index: 4, kind: output, shape index: {}, may-alias: {1,4}]
  %s5 = sld [smem:[#allocation0]]
  $region49: #{resblock_forward.5} parent=0
    _
  %s7 = ssub.s32 1, %s5
  %s8 = scalar_select 0, %s7, %s5
  loop: start=0, step=1, limit=4
  $region2: #{resblock_forward.5} parent=0 // loop_pre_header
    _
  $region3: #{resblock_forward.5} parent=0 // loop_header
    %s10 = sphi 0, %s14
    %p11 = scmp.ge.s32.totalorder %s10, 4
    %s20 = sphi 0, %s22
    %s23 = sphi 0, %s20
    %s24 = sphi 0, %s23
    %s40 = sphi 0, %s24
    %s46 = sphi 0, %s48
    %s49 = sphi 0, %s46
    %s50 = sphi 0, %s49
    %s66 = sphi 0, %s50
    %s70 = sphi 0, %s70
    %s72 = sphi 0, %s70
    %s73 = sphi 0, %s72
    %s87 = sphi 0, %s73
    %s91 = sphi 0, %s91
    %s93 = sphi 0, %s91
    %s94 = sphi 0, %s93
    %s108 = sphi 0, %s94
    %s114 = sphi 0, %s116
    %s117 = sphi 0, %s114
    %s118 = sphi 0, %s117
    %s134 = sphi 0, %s118
  $region4: #{resblock_forward.5} parent=0 // loop_header_branch
    %13 = sbr.rel (%p11) target = $region8
  $region5: #{resblock_forward.5} parent=0 // loop_body
    %s15 = ssub.s32 %s10, 1
    %s16 = ssub.s32 %s10, 2
    %s17 = sadd.s32 %s10, 1
    %s18 = ssub.s32 %s10, %s17
    %p19 = scmp.eq.s32.totalorder %s18, 0
    %s21 = sadd.s32 %s20, 1
    %s22 = scalar_select %p19, %s20, %s21
    %p25 = pneg %p19
    %p26 = scmp.eq.s32.totalorder %s10, 1
    %p27 = por %p25, %p26
    %p28 = scmp.ne.s32.totalorder %s20, %s23
    %p29 = scmp.eq.s32.totalorder %s10, 0
    %p30 = por %p28, %p29
    %p31 = scmp.ne.s32.totalorder %s20, %s23
    %p32 = scmp.eq.s32.totalorder %s15, 1
    %p33 = por %p31, %p32
    %p34 = scmp.ne.s32.totalorder %s23, %s24
    %p35 = scmp.eq.s32.totalorder %s15, 0
    %p36 = por %p34, %p35
    %p37 = scmp.ne.s32.totalorder %s23, %s24
    %p38 = scmp.eq.s32.totalorder %s16, 1
    %p39 = por %p37, %p38
    %p41 = scmp.ne.s32.totalorder %s24, %s40
    %p42 = scmp.eq.s32.totalorder %s16, 0
    %p43 = por %p41, %p42
    %s44 = ssub.s32 %s10, %s17
    %p45 = scmp.eq.s32.totalorder %s44, 0
    %s47 = sadd.s32 %s46, 1
    %s48 = scalar_select %p45, %s46, %s47
    %p51 = pneg %p45
    %p52 = scmp.eq.s32.totalorder %s10, 1
    %p53 = por %p51, %p52
    %p54 = scmp.ne.s32.totalorder %s46, %s49
    %p55 = scmp.eq.s32.totalorder %s10, 0
    %p56 = por %p54, %p55
    %p57 = scmp.ne.s32.totalorder %s46, %s49
    %p58 = scmp.eq.s32.totalorder %s15, 1
    %p59 = por %p57, %p58
    %p60 = scmp.ne.s32.totalorder %s49, %s50
    %p61 = scmp.eq.s32.totalorder %s15, 0
    %p62 = por %p60, %p61
    %p63 = scmp.ne.s32.totalorder %s49, %s50
    %p64 = scmp.eq.s32.totalorder %s16, 1
    %p65 = por %p63, %p64
    %p67 = scmp.ne.s32.totalorder %s50, %s66
    %p68 = scmp.eq.s32.totalorder %s16, 0
    %p69 = por %p67, %p68
    %s71 = sadd.s32 %s70, 1
    %p74 = scmp.eq.s32.totalorder %s10, 1
    %p75 = scmp.ne.s32.totalorder %s70, %s72
    %p76 = scmp.eq.s32.totalorder %s10, 0
    %p77 = por %p75, %p76
    %p78 = scmp.ne.s32.totalorder %s70, %s72
    %p79 = scmp.eq.s32.totalorder %s15, 1
    %p80 = por %p78, %p79
    %p81 = scmp.ne.s32.totalorder %s72, %s73
    %p82 = scmp.eq.s32.totalorder %s15, 0
    %p83 = por %p81, %p82
    %p84 = scmp.ne.s32.totalorder %s72, %s73
    %p85 = scmp.eq.s32.totalorder %s16, 1
    %p86 = por %p84, %p85
    %p88 = scmp.ne.s32.totalorder %s73, %s87
    %p89 = scmp.eq.s32.totalorder %s16, 0
    %p90 = por %p88, %p89
    %s92 = sadd.s32 %s91, 1
    %p95 = scmp.eq.s32.totalorder %s10, 1
    %p96 = scmp.ne.s32.totalorder %s91, %s93
    %p97 = scmp.eq.s32.totalorder %s10, 0
    %p98 = por %p96, %p97
    %p99 = scmp.ne.s32.totalorder %s91, %s93
    %p100 = scmp.eq.s32.totalorder %s15, 1
    %p101 = por %p99, %p100
    %p102 = scmp.ne.s32.totalorder %s93, %s94
    %p103 = scmp.eq.s32.totalorder %s15, 0
    %p104 = por %p102, %p103
    %p105 = scmp.ne.s32.totalorder %s93, %s94
    %p106 = scmp.eq.s32.totalorder %s16, 1
    %p107 = por %p105, %p106
    %p109 = scmp.ne.s32.totalorder %s94, %s108
    %p110 = scmp.eq.s32.totalorder %s16, 0
    %p111 = por %p109, %p110
    %s112 = ssub.s32 %s10, %s17
    %p113 = scmp.eq.s32.totalorder %s112, 0
    %s115 = sadd.s32 %s114, 1
    %s116 = scalar_select %p113, %s114, %s115
    %p119 = pneg %p113
    %p120 = scmp.eq.s32.totalorder %s10, 1
    %p121 = por %p119, %p120
    %p122 = scmp.ne.s32.totalorder %s114, %s117
    %p123 = scmp.eq.s32.totalorder %s10, 0
    %p124 = por %p122, %p123
    %p125 = scmp.ne.s32.totalorder %s114, %s117
    %p126 = scmp.eq.s32.totalorder %s15, 1
    %p127 = por %p125, %p126
    %p128 = scmp.ne.s32.totalorder %s117, %s118
    %p129 = scmp.eq.s32.totalorder %s15, 0
    %p130 = por %p128, %p129
    %p131 = scmp.ne.s32.totalorder %s117, %s118
    %p132 = scmp.eq.s32.totalorder %s16, 1
    %p133 = por %p131, %p132
    %p135 = scmp.ne.s32.totalorder %s118, %s134
    %p136 = scmp.eq.s32.totalorder %s16, 0
    %p137 = por %p135, %p136
    %p138 = scmp.le.s32.totalorder 1, %s10
    %p139 = scmp.lt.s32.totalorder %s10, 3
    %p140 = pnand %p138, %p139
    %p141 = pneg %p140
    // Predicated region
    $region9: #{resblock_forward.5} parent=5 // pred_check
      _
    $region10: #{resblock_forward.5} parent=5 // pred_check_branch
      %143 = sbr.rel (%p140) target = $region12
    $region11: #{resblock_forward.5} parent=5 // pred_region
      %s144 = ssub.s32 %s10, 1
      // Predicated region
      $region13: #{resblock_forward.5} parent=11 // pred_check
        %p145 = pneg %p83
      $region14: #{resblock_forward.5} parent=11 // pred_check_branch
        %147 = sbr.rel (%p145) target = $region16
      $region15: #{resblock_forward.5} parent=11 // pred_region
        _
      $region16: #{resblock_forward.5} parent=11 // pred_fallthru
        _
      // Predicated region
      $region17: #{resblock_forward.5} parent=11 // pred_check
        %p148 = pneg %p104
      $region18: #{resblock_forward.5} parent=11 // pred_check_branch
        %150 = sbr.rel (%p148) target = $region20
      $region19: #{resblock_forward.5} parent=11 // pred_region
        _
      $region20: #{resblock_forward.5} parent=11 // pred_fallthru
        _
    $region12: #{resblock_forward.5} parent=5 // pred_fallthru
      _
    %p151 = scmp.lt.s32.totalorder %s10, 2
    // Predicated region
    $region21: #{resblock_forward.5} parent=5 // pred_check
      %p152 = pneg %p151
    $region22: #{resblock_forward.5} parent=5 // pred_check_branch
      %154 = sbr.rel (%p152) target = $region24
    $region23: #{resblock_forward.5} parent=5 // pred_region
      // Predicated region
      $region25: #{resblock_forward.5} parent=23 // pred_check
        %p155 = pneg %p30
      $region26: #{resblock_forward.5} parent=23 // pred_check_branch
        %157 = sbr.rel (%p155) target = $region28
      $region27: #{resblock_forward.5} parent=23 // pred_region
        %p158 = scmp.lt.s32.totalorder %s10, 1
        %s159 = scalar_select %p158, %s10, 1
        %s160 = smul.addr %s159, 32
        %s161 = smul.addr %s160, 4
        %s162 = scalar_lea.vmem %s0, %s161
      $region28: #{resblock_forward.5} parent=23 // pred_fallthru
        _
      // Predicated region
      $region29: #{resblock_forward.5} parent=23 // pred_check
        %p163 = pneg %p56
      $region30: #{resblock_forward.5} parent=23 // pred_check_branch
        %165 = sbr.rel (%p163) target = $region32
      $region31: #{resblock_forward.5} parent=23 // pred_region
        %p166 = scmp.lt.s32.totalorder %s10, 1
        %s167 = scalar_select %p166, %s10, 1
        %s168 = smul.addr %s167, 32
        %s169 = smul.addr %s168, 8
        %s170 = scalar_lea.vmem %s1, %s169
      $region32: #{resblock_forward.5} parent=23 // pred_fallthru
        _
    $region24: #{resblock_forward.5} parent=5 // pred_fallthru
      _
    %p171 = scmp.le.s32.totalorder 1, %s10
    %p172 = scmp.lt.s32.totalorder %s10, 3
    %p173 = pnand %p171, %p172
    %p174 = pneg %p173
    // Predicated region
    $region33: #{resblock_forward.5} parent=5 // pred_check
      _
    $region34: #{resblock_forward.5} parent=5 // pred_check_branch
      %176 = sbr.rel (%p173) target = $region36
    $region35: #{resblock_forward.5} parent=5 // pred_region
      %s177 = ssub.s32 %s10, 1
      %p178 = scmp.lt.s32.totalorder %s15, 1
      %s179 = scalar_select %p178, %s15, 1
      %s180 = smul.addr %s179, 32
      %s181 = smul.addr %s180, 4
      %s182 = scalar_lea.vmem %s0, %s181
      %p183 = pneg %p36
      %p184 = pneg %p33
      %p185 = scmp.lt.s32.totalorder %s15, 1
      %s186 = scalar_select %p185, %s15, 1
      %s187 = smul.addr %s186, 32
      %s188 = smul.addr %s187, 8
      %s189 = scalar_lea.vmem %s1, %s188
      %p190 = pneg %p62
      %p191 = pneg %p59
      %p192 = pneg %p83
      %p193 = pneg %p80
      %p194 = pneg %p104
      %p195 = pneg %p101
      %p196 = pneg %p130
      %p197 = pneg %p127
      %p198 = scmp.lt.s32.totalorder %s15, 1
      %s199 = scalar_select %p198, %s15, 1
      %s200 = smul.addr %s199, 32
      %s201 = smul.addr %s200, 8
      %s202 = scalar_lea.vmem %s4, %s201
      %p203 = scmp.lt.s32.totalorder %s15, 1
      %s204 = scalar_select %p203, %s15, 1
      %s205 = smul.addr %s204, 32
      %s206 = smul.addr %s205, 4
      %s207 = scalar_lea.vmem %s0, %s206
      %p208 = scmp.lt.s32.totalorder %s15, 1
      %s209 = scalar_select %p208, %s15, 1
      %s210 = smul.addr %s209, 32
      %s211 = smul.addr %s210, 8
      %s212 = scalar_lea.vmem %s1, %s211
      %p213 = scmp.lt.s32.totalorder %s15, 1
      %s214 = scalar_select %p213, %s15, 1
      %s215 = smul.addr %s214, 32
      %s216 = smul.addr %s215, 8
      %s217 = scalar_lea.vmem %s4, %s216
      %v218 = vld [vmem:[%s207] sm:$0xf]
      %v219 = vld [vmem:[%s207 + $0x4] sm:$0xf]
      %v220 = vld [vmem:[%s207 + $0x8] sm:$0xf]
      %v221 = vld [vmem:[%s207 + $0xc] sm:$0xf]
      %v222 = vld [vmem:[%s207 + $0x10] sm:$0xf]
      %v223 = vld [vmem:[%s207 + $0x14] sm:$0xf]
      %v224 = vld [vmem:[%s207 + $0x18] sm:$0xf]
      %v225 = vld [vmem:[%s207 + $0x1c] sm:$0xf]
      %v226 = vld [vmem:[%s207 + $0x20] sm:$0xf]
      %v227 = vld [vmem:[%s207 + $0x24] sm:$0xf]
      %v228 = vld [vmem:[%s207 + $0x28] sm:$0xf]
      %v229 = vld [vmem:[%s207 + $0x2c] sm:$0xf]
      %v230 = vld [vmem:[%s207 + $0x30] sm:$0xf]
      %v231 = vld [vmem:[%s207 + $0x34] sm:$0xf]
      %v232 = vld [vmem:[%s207 + $0x38] sm:$0xf]
      %v233 = vld [vmem:[%s207 + $0x3c] sm:$0xf]
      %v234 = vld [vmem:[%s207 + $0x40] sm:$0xf]
      %v235 = vld [vmem:[%s207 + $0x44] sm:$0xf]
      %v236 = vld [vmem:[%s207 + $0x48] sm:$0xf]
      %v237 = vld [vmem:[%s207 + $0x4c] sm:$0xf]
      %v238 = vld [vmem:[%s207 + $0x50] sm:$0xf]
      %v239 = vld [vmem:[%s207 + $0x54] sm:$0xf]
      %v240 = vld [vmem:[%s207 + $0x58] sm:$0xf]
      %v241 = vld [vmem:[%s207 + $0x5c] sm:$0xf]
      %v242 = vld [vmem:[%s207 + $0x60] sm:$0xf]
      %v243 = vld [vmem:[%s207 + $0x64] sm:$0xf]
      %v244 = vld [vmem:[%s207 + $0x68] sm:$0xf]
      %v245 = vld [vmem:[%s207 + $0x6c] sm:$0xf]
      %v246 = vld [vmem:[%s207 + $0x70] sm:$0xf]
      %v247 = vld [vmem:[%s207 + $0x74] sm:$0xf]
      %v248 = vld [vmem:[%s207 + $0x78] sm:$0xf]
      %v249 = vld [vmem:[%s207 + $0x7c] sm:$0xf]
      %v250 = vunpack.c.l.bf16 %v218
      %v251 = vunpack.c.l.bf16 %v219
      %v252 = vunpack.c.l.bf16 %v220
      %v253 = vunpack.c.l.bf16 %v221
      %v254 = vunpack.c.l.bf16 %v222
      %v255 = vunpack.c.l.bf16 %v223
      %v256 = vunpack.c.l.bf16 %v224
      %v257 = vunpack.c.l.bf16 %v225
      %v258 = vunpack.c.l.bf16 %v226
      %v259 = vunpack.c.l.bf16 %v227
      %v260 = vunpack.c.l.bf16 %v228
      %v261 = vunpack.c.l.bf16 %v229
      %v262 = vunpack.c.l.bf16 %v230
      %v263 = vunpack.c.l.bf16 %v231
      %v264 = vunpack.c.l.bf16 %v232
      %v265 = vunpack.c.l.bf16 %v233
      %v266 = vunpack.c.l.bf16 %v234
      %v267 = vunpack.c.l.bf16 %v235
      %v268 = vunpack.c.l.bf16 %v236
      %v269 = vunpack.c.l.bf16 %v237
      %v270 = vunpack.c.l.bf16 %v238
      %v271 = vunpack.c.l.bf16 %v239
      %v272 = vunpack.c.l.bf16 %v240
      %v273 = vunpack.c.l.bf16 %v241
      %v274 = vunpack.c.l.bf16 %v242
      %v275 = vunpack.c.l.bf16 %v243
      %v276 = vunpack.c.l.bf16 %v244
      %v277 = vunpack.c.l.bf16 %v245
      %v278 = vunpack.c.l.bf16 %v246
      %v279 = vunpack.c.l.bf16 %v247
      %v280 = vunpack.c.l.bf16 %v248
      %v281 = vunpack.c.l.bf16 %v249
      %v282 = vld [vmem:[%s2] sm:$0x1]
      %v284 = vlaneseq
      %v285 = vshrl.u32 %v284, 7
      %v286 = vsub.s32 0, %v285
      %v287 = vrot.slane %v282, %v286
      %v289 = vmul.f32 %v250, %v287
      %v290 = vmul.f32 %v251, %v287
      %v291 = vmul.f32 %v252, %v287
      %v292 = vmul.f32 %v253, %v287
      %v293 = vmul.f32 %v254, %v287
      %v294 = vmul.f32 %v255, %v287
      %v295 = vmul.f32 %v256, %v287
      %v296 = vmul.f32 %v257, %v287
      %v297 = vmul.f32 %v258, %v287
      %v298 = vmul.f32 %v259, %v287
      %v299 = vmul.f32 %v260, %v287
      %v300 = vmul.f32 %v261, %v287
      %v301 = vmul.f32 %v262, %v287
      %v302 = vmul.f32 %v263, %v287
      %v303 = vmul.f32 %v264, %v287
      %v304 = vmul.f32 %v265, %v287
      %v305 = vmul.f32 %v266, %v287
      %v306 = vmul.f32 %v267, %v287
      %v307 = vmul.f32 %v268, %v287
      %v308 = vmul.f32 %v269, %v287
      %v309 = vmul.f32 %v270, %v287
      %v310 = vmul.f32 %v271, %v287
      %v311 = vmul.f32 %v272, %v287
      %v312 = vmul.f32 %v273, %v287
      %v313 = vmul.f32 %v274, %v287
      %v314 = vmul.f32 %v275, %v287
      %v315 = vmul.f32 %v276, %v287
      %v316 = vmul.f32 %v277, %v287
      %v317 = vmul.f32 %v278, %v287
      %v318 = vmul.f32 %v279, %v287
      %v319 = vmul.f32 %v280, %v287
      %v320 = vmul.f32 %v281, %v287
      %v321 = vld [vmem:[%s3] sm:$0x1]
      %v323 = vlaneseq
      %v324 = vshrl.u32 %v323, 7
      %v325 = vsub.s32 0, %v324
      %v326 = vrot.slane %v321, %v325
      %v328 = vadd.f32 %v289, %v326
      %v329 = vadd.f32 %v290, %v326
      %v330 = vadd.f32 %v291, %v326
      %v331 = vadd.f32 %v292, %v326
      %v332 = vadd.f32 %v293, %v326
      %v333 = vadd.f32 %v294, %v326
      %v334 = vadd.f32 %v295, %v326
      %v335 = vadd.f32 %v296, %v326
      %v336 = vadd.f32 %v297, %v326
      %v337 = vadd.f32 %v298, %v326
      %v338 = vadd.f32 %v299, %v326
      %v339 = vadd.f32 %v300, %v326
      %v340 = vadd.f32 %v301, %v326
      %v341 = vadd.f32 %v302, %v326
      %v342 = vadd.f32 %v303, %v326
      %v343 = vadd.f32 %v304, %v326
      %v344 = vadd.f32 %v305, %v326
      %v345 = vadd.f32 %v306, %v326
      %v346 = vadd.f32 %v307, %v326
      %v347 = vadd.f32 %v308, %v326
      %v348 = vadd.f32 %v309, %v326
      %v349 = vadd.f32 %v310, %v326
      %v350 = vadd.f32 %v311, %v326
      %v351 = vadd.f32 %v312, %v326
      %v352 = vadd.f32 %v313, %v326
      %v353 = vadd.f32 %v314, %v326
      %v354 = vadd.f32 %v315, %v326
      %v355 = vadd.f32 %v316, %v326
      %v356 = vadd.f32 %v317, %v326
      %v357 = vadd.f32 %v318, %v326
      %v358 = vadd.f32 %v319, %v326
      %v359 = vadd.f32 %v320, %v326
      %v360 = vld [vmem:[%s212] sm:$0xff]
      %v361 = vld [vmem:[%s212 + $0x8] sm:$0xff]
      %v362 = vld [vmem:[%s212 + $0x10] sm:$0xff]
      %v363 = vld [vmem:[%s212 + $0x18] sm:$0xff]
      %v364 = vld [vmem:[%s212 + $0x20] sm:$0xff]
      %v365 = vld [vmem:[%s212 + $0x28] sm:$0xff]
      %v366 = vld [vmem:[%s212 + $0x30] sm:$0xff]
      %v367 = vld [vmem:[%s212 + $0x38] sm:$0xff]
      %v368 = vld [vmem:[%s212 + $0x40] sm:$0xff]
      %v369 = vld [vmem:[%s212 + $0x48] sm:$0xff]
      %v370 = vld [vmem:[%s212 + $0x50] sm:$0xff]
      %v371 = vld [vmem:[%s212 + $0x58] sm:$0xff]
      %v372 = vld [vmem:[%s212 + $0x60] sm:$0xff]
      %v373 = vld [vmem:[%s212 + $0x68] sm:$0xff]
      %v374 = vld [vmem:[%s212 + $0x70] sm:$0xff]
      %v375 = vld [vmem:[%s212 + $0x78] sm:$0xff]
      %v376 = vld [vmem:[%s212 + $0x80] sm:$0xff]
      %v377 = vld [vmem:[%s212 + $0x88] sm:$0xff]
      %v378 = vld [vmem:[%s212 + $0x90] sm:$0xff]
      %v379 = vld [vmem:[%s212 + $0x98] sm:$0xff]
      %v380 = vld [vmem:[%s212 + $0xa0] sm:$0xff]
      %v381 = vld [vmem:[%s212 + $0xa8] sm:$0xff]
      %v382 = vld [vmem:[%s212 + $0xb0] sm:$0xff]
      %v383 = vld [vmem:[%s212 + $0xb8] sm:$0xff]
      %v384 = vld [vmem:[%s212 + $0xc0] sm:$0xff]
      %v385 = vld [vmem:[%s212 + $0xc8] sm:$0xff]
      %v386 = vld [vmem:[%s212 + $0xd0] sm:$0xff]
      %v387 = vld [vmem:[%s212 + $0xd8] sm:$0xff]
      %v388 = vld [vmem:[%s212 + $0xe0] sm:$0xff]
      %v389 = vld [vmem:[%s212 + $0xe8] sm:$0xff]
      %v390 = vld [vmem:[%s212 + $0xf0] sm:$0xff]
      %v391 = vld [vmem:[%s212 + $0xf8] sm:$0xff]
      %v392 = vadd.f32 %v328, %v360
      %v393 = vadd.f32 %v329, %v361
      %v394 = vadd.f32 %v330, %v362
      %v395 = vadd.f32 %v331, %v363
      %v396 = vadd.f32 %v332, %v364
      %v397 = vadd.f32 %v333, %v365
      %v398 = vadd.f32 %v334, %v366
      %v399 = vadd.f32 %v335, %v367
      %v400 = vadd.f32 %v336, %v368
      %v401 = vadd.f32 %v337, %v369
      %v402 = vadd.f32 %v338, %v370
      %v403 = vadd.f32 %v339, %v371
      %v404 = vadd.f32 %v340, %v372
      %v405 = vadd.f32 %v341, %v373
      %v406 = vadd.f32 %v342, %v374
      %v407 = vadd.f32 %v343, %v375
      %v408 = vadd.f32 %v344, %v376
      %v409 = vadd.f32 %v345, %v377
      %v410 = vadd.f32 %v346, %v378
      %v411 = vadd.f32 %v347, %v379
      %v412 = vadd.f32 %v348, %v380
      %v413 = vadd.f32 %v349, %v381
      %v414 = vadd.f32 %v350, %v382
      %v415 = vadd.f32 %v351, %v383
      %v416 = vadd.f32 %v352, %v384
      %v417 = vadd.f32 %v353, %v385
      %v418 = vadd.f32 %v354, %v386
      %v419 = vadd.f32 %v355, %v387
      %v420 = vadd.f32 %v356, %v388
      %v421 = vadd.f32 %v357, %v389
      %v422 = vadd.f32 %v358, %v390
      %v423 = vadd.f32 %v359, %v391
      %424 = vst [vmem:[%s217] sm:$0xff] %v392
      %425 = vst [vmem:[%s217 + $0x8] sm:$0xff] %v393
      %426 = vst [vmem:[%s217 + $0x10] sm:$0xff] %v394
      %427 = vst [vmem:[%s217 + $0x18] sm:$0xff] %v395
      %428 = vst [vmem:[%s217 + $0x20] sm:$0xff] %v396
      %429 = vst [vmem:[%s217 + $0x28] sm:$0xff] %v397
      %430 = vst [vmem:[%s217 + $0x30] sm:$0xff] %v398
      %431 = vst [vmem:[%s217 + $0x38] sm:$0xff] %v399
      %432 = vst [vmem:[%s217 + $0x40] sm:$0xff] %v400
      %433 = vst [vmem:[%s217 + $0x48] sm:$0xff] %v401
      %434 = vst [vmem:[%s217 + $0x50] sm:$0xff] %v402
      %435 = vst [vmem:[%s217 + $0x58] sm:$0xff] %v403
      %436 = vst [vmem:[%s217 + $0x60] sm:$0xff] %v404
      %437 = vst [vmem:[%s217 + $0x68] sm:$0xff] %v405
      %438 = vst [vmem:[%s217 + $0x70] sm:$0xff] %v406
      %439 = vst [vmem:[%s217 + $0x78] sm:$0xff] %v407
      %440 = vst [vmem:[%s217 + $0x80] sm:$0xff] %v408
      %441 = vst [vmem:[%s217 + $0x88] sm:$0xff] %v409
      %442 = vst [vmem:[%s217 + $0x90] sm:$0xff] %v410
      %443 = vst [vmem:[%s217 + $0x98] sm:$0xff] %v411
      %444 = vst [vmem:[%s217 + $0xa0] sm:$0xff] %v412
      %445 = vst [vmem:[%s217 + $0xa8] sm:$0xff] %v413
      %446 = vst [vmem:[%s217 + $0xb0] sm:$0xff] %v414
      %447 = vst [vmem:[%s217 + $0xb8] sm:$0xff] %v415
      %448 = vst [vmem:[%s217 + $0xc0] sm:$0xff] %v416
      %449 = vst [vmem:[%s217 + $0xc8] sm:$0xff] %v417
      %450 = vst [vmem:[%s217 + $0xd0] sm:$0xff] %v418
      %451 = vst [vmem:[%s217 + $0xd8] sm:$0xff] %v419
      %452 = vst [vmem:[%s217 + $0xe0] sm:$0xff] %v420
      %453 = vst [vmem:[%s217 + $0xe8] sm:$0xff] %v421
      %454 = vst [vmem:[%s217 + $0xf0] sm:$0xff] %v422
      %455 = vst [vmem:[%s217 + $0xf8] sm:$0xff] %v423
      %p456 = scmp.lt.s32.totalorder %s15, 1
      %s457 = scalar_select %p456, %s15, 1
      %s458 = smul.addr %s457, 32
      %s459 = smul.addr %s458, 8
      %s460 = scalar_lea.vmem %s4, %s459
      // Predicated region
      $region37: #{resblock_forward.5} parent=35 // pred_check
        %p461 = pneg %p127
      $region38: #{resblock_forward.5} parent=35 // pred_check_branch
        %463 = sbr.rel (%p461) target = $region40
      $region39: #{resblock_forward.5} parent=35 // pred_region
        _
      $region40: #{resblock_forward.5} parent=35 // pred_fallthru
        _
    $region36: #{resblock_forward.5} parent=5 // pred_fallthru
      _
    %p464 = scmp.le.s32.totalorder 2, %s10
    // Predicated region
    $region41: #{resblock_forward.5} parent=5 // pred_check
      %p465 = pneg %p464
    $region42: #{resblock_forward.5} parent=5 // pred_check_branch
      %467 = sbr.rel (%p465) target = $region44
    $region43: #{resblock_forward.5} parent=5 // pred_region
      %s468 = ssub.s32 %s10, 2
      // Predicated region
      $region45: #{resblock_forward.5} parent=43 // pred_check
        %p469 = pneg %p133
      $region46: #{resblock_forward.5} parent=43 // pred_check_branch
        %471 = sbr.rel (%p469) target = $region48
      $region47: #{resblock_forward.5} parent=43 // pred_region
        %p472 = scmp.lt.s32.totalorder %s16, 1
        %s473 = scalar_select %p472, %s16, 1
        %s474 = smul.addr %s473, 32
        %s475 = smul.addr %s474, 8
        %s476 = scalar_lea.vmem %s4, %s475
      $region48: #{resblock_forward.5} parent=43 // pred_fallthru
        _
    $region44: #{resblock_forward.5} parent=5 // pred_fallthru
      _
  $region6: #{resblock_forward.5} parent=0 // loop_footer
    %s14 = sadd.s32 1, %s10
  $region7: #{resblock_forward.5} parent=0 // loop_footer_branch
    %9 = sbr.rel target = $region3
  $region8: #{resblock_forward.5} parent=0 // loop_exit
    _

// kernel: resblock_forward.4
$region0: #{resblock_forward.4}
  #allocation0 [shape = 'u32[]', space=smem, size = 0x4, offset = 0x4, fixed_abs, tag = 'smem constant byte address 0x4 - core index']
  #allocation1 [shape = 'u32[144,128]{1,0:T(1,128)}', space=vmem, size = 0x12000, scoped, tag = 'internal scratch']
  #allocation2 [shape = 'bf16[18,18,128]{2,1,0:T(8,128)(2,1)}', space=vmem, size = 0x1b000, scoped, tag = 'scratch operand']
  #allocation3 [shape = 'f32[1]{0:T(128)S(6)}', space=smem, size = 0x200, scoped, tag = 'scoped memory for resblock_forward.4']
  %s0 = inlined_call_operand.vmem [shape: bf16[2,256,128], index: 0, kind: input, shape index: {}]
  %s1 = inlined_call_operand.vmem [shape: f32[1,128], index: 1, kind: input, shape index: {}]
  %s2 = inlined_call_operand.vmem [shape: f32[1,128], index: 2, kind: input, shape index: {}]
  %s3 = inlined_call_operand.vmem [shape: bf16[9,128,128], index: 3, kind: input, shape index: {}]
  %s4 = inlined_call_operand.<no memory space> [shape: f32[1], index: 4, kind: input, shape index: {}]
  %s5 = inlined_call_operand.vmem [shape: bf16[2,256,128], index: 5, kind: output, shape index: {0}]
  %s6 = inlined_call_operand.vmem [shape: f32[2,2,128], index: 6, kind: output, shape index: {1}]
  %7 = xla_tuple %s5, %s6
  %s8 = sld [smem:[#allocation0]]
  $region61: #{resblock_forward.4} parent=0
    _
  %s10 = ssub.s32 1, %s8
  %s11 = scalar_select 0, %s10, %s8
  %12 = sst [smem:[#allocation3]] %s4
  loop: start=0, step=1, limit=4
  $region2: #{resblock_forward.4} parent=0 // loop_pre_header
    _
  $region3: #{resblock_forward.4} parent=0 // loop_header
    %s14 = sphi 0, %s18
    %p15 = scmp.ge.s32.totalorder %s14, 4
    %s24 = sphi 0, %s26
    %s27 = sphi 0, %s24
    %s28 = sphi 0, %s27
    %s44 = sphi 0, %s28
    %s48 = sphi 0, %s48
    %s50 = sphi 0, %s48
    %s51 = sphi 0, %s50
    %s65 = sphi 0, %s51
    %s69 = sphi 0, %s69
    %s71 = sphi 0, %s69
    %s72 = sphi 0, %s71
    %s86 = sphi 0, %s72
    %s90 = sphi 0, %s90
    %s92 = sphi 0, %s90
    %s93 = sphi 0, %s92
    %s107 = sphi 0, %s93
    %s111 = sphi 0, %s111
    %s113 = sphi 0, %s111
    %s114 = sphi 0, %s113
    %s128 = sphi 0, %s114
    %s134 = sphi 0, %s136
    %s137 = sphi 0, %s134
    %s138 = sphi 0, %s137
    %s154 = sphi 0, %s138
    %s160 = sphi 0, %s162
    %s163 = sphi 0, %s160
    %s164 = sphi 0, %s163
    %s180 = sphi 0, %s164
  $region4: #{resblock_forward.4} parent=0 // loop_header_branch
    %17 = sbr.rel (%p15) target = $region8
  $region5: #{resblock_forward.4} parent=0 // loop_body
    %s19 = ssub.s32 %s14, 1
    %s20 = ssub.s32 %s14, 2
    %s21 = sadd.s32 %s14, 1
    %s22 = ssub.s32 %s14, %s21
    %p23 = scmp.eq.s32.totalorder %s22, 0
    %s25 = sadd.s32 %s24, 1
    %s26 = scalar_select %p23, %s24, %s25
    %p29 = pneg %p23
    %p30 = scmp.eq.s32.totalorder %s14, 1
    %p31 = por %p29, %p30
    %p32 = scmp.ne.s32.totalorder %s24, %s27
    %p33 = scmp.eq.s32.totalorder %s14, 0
    %p34 = por %p32, %p33
    %p35 = scmp.ne.s32.totalorder %s24, %s27
    %p36 = scmp.eq.s32.totalorder %s19, 1
    %p37 = por %p35, %p36
    %p38 = scmp.ne.s32.totalorder %s27, %s28
    %p39 = scmp.eq.s32.totalorder %s19, 0
    %p40 = por %p38, %p39
    %p41 = scmp.ne.s32.totalorder %s27, %s28
    %p42 = scmp.eq.s32.totalorder %s20, 1
    %p43 = por %p41, %p42
    %p45 = scmp.ne.s32.totalorder %s28, %s44
    %p46 = scmp.eq.s32.totalorder %s20, 0
    %p47 = por %p45, %p46
    %s49 = sadd.s32 %s48, 1
    %p52 = scmp.eq.s32.totalorder %s14, 1
    %p53 = scmp.ne.s32.totalorder %s48, %s50
    %p54 = scmp.eq.s32.totalorder %s14, 0
    %p55 = por %p53, %p54
    %p56 = scmp.ne.s32.totalorder %s48, %s50
    %p57 = scmp.eq.s32.totalorder %s19, 1
    %p58 = por %p56, %p57
    %p59 = scmp.ne.s32.totalorder %s50, %s51
    %p60 = scmp.eq.s32.totalorder %s19, 0
    %p61 = por %p59, %p60
    %p62 = scmp.ne.s32.totalorder %s50, %s51
    %p63 = scmp.eq.s32.totalorder %s20, 1
    %p64 = por %p62, %p63
    %p66 = scmp.ne.s32.totalorder %s51, %s65
    %p67 = scmp.eq.s32.totalorder %s20, 0
    %p68 = por %p66, %p67
    %s70 = sadd.s32 %s69, 1
    %p73 = scmp.eq.s32.totalorder %s14, 1
    %p74 = scmp.ne.s32.totalorder %s69, %s71
    %p75 = scmp.eq.s32.totalorder %s14, 0
    %p76 = por %p74, %p75
    %p77 = scmp.ne.s32.totalorder %s69, %s71
    %p78 = scmp.eq.s32.totalorder %s19, 1
    %p79 = por %p77, %p78
    %p80 = scmp.ne.s32.totalorder %s71, %s72
    %p81 = scmp.eq.s32.totalorder %s19, 0
    %p82 = por %p80, %p81
    %p83 = scmp.ne.s32.totalorder %s71, %s72
    %p84 = scmp.eq.s32.totalorder %s20, 1
    %p85 = por %p83, %p84
    %p87 = scmp.ne.s32.totalorder %s72, %s86
    %p88 = scmp.eq.s32.totalorder %s20, 0
    %p89 = por %p87, %p88
    %s91 = sadd.s32 %s90, 1
    %p94 = scmp.eq.s32.totalorder %s14, 1
    %p95 = scmp.ne.s32.totalorder %s90, %s92
    %p96 = scmp.eq.s32.totalorder %s14, 0
    %p97 = por %p95, %p96
    %p98 = scmp.ne.s32.totalorder %s90, %s92
    %p99 = scmp.eq.s32.totalorder %s19, 1
    %p100 = por %p98, %p99
    %p101 = scmp.ne.s32.totalorder %s92, %s93
    %p102 = scmp.eq.s32.totalorder %s19, 0
    %p103 = por %p101, %p102
    %p104 = scmp.ne.s32.totalorder %s92, %s93
    %p105 = scmp.eq.s32.totalorder %s20, 1
    %p106 = por %p104, %p105
    %p108 = scmp.ne.s32.totalorder %s93, %s107
    %p109 = scmp.eq.s32.totalorder %s20, 0
    %p110 = por %p108, %p109
    %s112 = sadd.s32 %s111, 1
    %p115 = scmp.eq.s32.totalorder %s14, 1
    %p116 = scmp.ne.s32.totalorder %s111, %s113
    %p117 = scmp.eq.s32.totalorder %s14, 0
    %p118 = por %p116, %p117
    %p119 = scmp.ne.s32.totalorder %s111, %s113
    %p120 = scmp.eq.s32.totalorder %s19, 1
    %p121 = por %p119, %p120
    %p122 = scmp.ne.s32.totalorder %s113, %s114
    %p123 = scmp.eq.s32.totalorder %s19, 0
    %p124 = por %p122, %p123
    %p125 = scmp.ne.s32.totalorder %s113, %s114
    %p126 = scmp.eq.s32.totalorder %s20, 1
    %p127 = por %p125, %p126
    %p129 = scmp.ne.s32.totalorder %s114, %s128
    %p130 = scmp.eq.s32.totalorder %s20, 0
    %p131 = por %p129, %p130
    %s132 = ssub.s32 %s14, %s21
    %p133 = scmp.eq.s32.totalorder %s132, 0
    %s135 = sadd.s32 %s134, 1
    %s136 = scalar_select %p133, %s134, %s135
    %p139 = pneg %p133
    %p140 = scmp.eq.s32.totalorder %s14, 1
    %p141 = por %p139, %p140
    %p142 = scmp.ne.s32.totalorder %s134, %s137
    %p143 = scmp.eq.s32.totalorder %s14, 0
    %p144 = por %p142, %p143
    %p145 = scmp.ne.s32.totalorder %s134, %s137
    %p146 = scmp.eq.s32.totalorder %s19, 1
    %p147 = por %p145, %p146
    %p148 = scmp.ne.s32.totalorder %s137, %s138
    %p149 = scmp.eq.s32.totalorder %s19, 0
    %p150 = por %p148, %p149
    %p151 = scmp.ne.s32.totalorder %s137, %s138
    %p152 = scmp.eq.s32.totalorder %s20, 1
    %p153 = por %p151, %p152
    %p155 = scmp.ne.s32.totalorder %s138, %s154
    %p156 = scmp.eq.s32.totalorder %s20, 0
    %p157 = por %p155, %p156
    %s158 = ssub.s32 %s14, %s21
    %p159 = scmp.eq.s32.totalorder %s158, 0
    %s161 = sadd.s32 %s160, 1
    %s162 = scalar_select %p159, %s160, %s161
    %p165 = pneg %p159
    %p166 = scmp.eq.s32.totalorder %s14, 1
    %p167 = por %p165, %p166
    %p168 = scmp.ne.s32.totalorder %s160, %s163
    %p169 = scmp.eq.s32.totalorder %s14, 0
    %p170 = por %p168, %p169
    %p171 = scmp.ne.s32.totalorder %s160, %s163
    %p172 = scmp.eq.s32.totalorder %s19, 1
    %p173 = por %p171, %p172
    %p174 = scmp.ne.s32.totalorder %s163, %s164
    %p175 = scmp.eq.s32.totalorder %s19, 0
    %p176 = por %p174, %p175
    %p177 = scmp.ne.s32.totalorder %s163, %s164
    %p178 = scmp.eq.s32.totalorder %s20, 1
    %p179 = por %p177, %p178
    %p181 = scmp.ne.s32.totalorder %s164, %s180
    %p182 = scmp.eq.s32.totalorder %s20, 0
    %p183 = por %p181, %p182
    %p184 = scmp.le.s32.totalorder 1, %s14
    %p185 = scmp.lt.s32.totalorder %s14, 3
    %p186 = pnand %p184, %p185
    %p187 = pneg %p186
    // Predicated region
    $region9: #{resblock_forward.4} parent=5 // pred_check
      _
    $region10: #{resblock_forward.4} parent=5 // pred_check_branch
      %189 = sbr.rel (%p186) target = $region12
    $region11: #{resblock_forward.4} parent=5 // pred_region
      %s190 = ssub.s32 %s14, 1
      // Predicated region
      $region13: #{resblock_forward.4} parent=11 // pred_check
        %p191 = pneg %p61
      $region14: #{resblock_forward.4} parent=11 // pred_check_branch
        %193 = sbr.rel (%p191) target = $region16
      $region15: #{resblock_forward.4} parent=11 // pred_region
        _
      $region16: #{resblock_forward.4} parent=11 // pred_fallthru
        _
      // Predicated region
      $region17: #{resblock_forward.4} parent=11 // pred_check
        %p194 = pneg %p82
      $region18: #{resblock_forward.4} parent=11 // pred_check_branch
        %196 = sbr.rel (%p194) target = $region20
      $region19: #{resblock_forward.4} parent=11 // pred_region
        _
      $region20: #{resblock_forward.4} parent=11 // pred_fallthru
        _
      // Predicated region
      $region21: #{resblock_forward.4} parent=11 // pred_check
        %p197 = pneg %p103
      $region22: #{resblock_forward.4} parent=11 // pred_check_branch
        %199 = sbr.rel (%p197) target = $region24
      $region23: #{resblock_forward.4} parent=11 // pred_region
        _
      $region24: #{resblock_forward.4} parent=11 // pred_fallthru
        _
      // Predicated region
      $region25: #{resblock_forward.4} parent=11 // pred_check
        %p200 = pneg %p124
      $region26: #{resblock_forward.4} parent=11 // pred_check_branch
        %202 = sbr.rel (%p200) target = $region28
      $region27: #{resblock_forward.4} parent=11 // pred_region
        _
      $region28: #{resblock_forward.4} parent=11 // pred_fallthru
        _
    $region12: #{resblock_forward.4} parent=5 // pred_fallthru
      _
    %p203 = scmp.lt.s32.totalorder %s14, 2
    // Predicated region
    $region29: #{resblock_forward.4} parent=5 // pred_check
      %p204 = pneg %p203
    $region30: #{resblock_forward.4} parent=5 // pred_check_branch
      %206 = sbr.rel (%p204) target = $region32
    $region31: #{resblock_forward.4} parent=5 // pred_region
      // Predicated region
      $region33: #{resblock_forward.4} parent=31 // pred_check
        %p207 = pneg %p34
      $region34: #{resblock_forward.4} parent=31 // pred_check_branch
        %209 = sbr.rel (%p207) target = $region36
      $region35: #{resblock_forward.4} parent=31 // pred_region
        %p210 = scmp.lt.s32.totalorder %s14, 1
        %s211 = scalar_select %p210, %s14, 1
        %s212 = smul.addr %s211, 32
        %s213 = smul.addr %s212, 4
        %s214 = scalar_lea.vmem %s0, %s213
      $region36: #{resblock_forward.4} parent=31 // pred_fallthru
        _
    $region32: #{resblock_forward.4} parent=5 // pred_fallthru
      _
    %p215 = scmp.le.s32.totalorder 1, %s14
    %p216 = scmp.lt.s32.totalorder %s14, 3
    %p217 = pnand %p215, %p216
    %p218 = pneg %p217
    // Predicated region
    $region37: #{resblock_forward.4} parent=5 // pred_check
      _
    $region38: #{resblock_forward.4} parent=5 // pred_check_branch
      %220 = sbr.rel (%p217) target = $region40
    $region39: #{resblock_forward.4} parent=5 // pred_region
      %s221 = ssub.s32 %s14, 1
      %p222 = scmp.lt.s32.totalorder %s19, 1
      %s223 = scalar_select %p222, %s19, 1
      %s224 = smul.addr %s223, 32
      %s225 = smul.addr %s224, 4
      %s226 = scalar_lea.vmem %s0, %s225
      %p227 = pneg %p40
      %p228 = pneg %p37
      %p229 = pneg %p61
      %p230 = pneg %p58
      %p231 = pneg %p82
      %p232 = pneg %p79
      %p233 = pneg %p103
      %p234 = pneg %p100
      %p235 = pneg %p124
      %p236 = pneg %p121
      %p237 = pneg %p150
      %p238 = pneg %p147
      %p239 = scmp.lt.s32.totalorder %s19, 1
      %s240 = scalar_select %p239, %s19, 1
      %s241 = smul.addr %s240, 32
      %s242 = smul.addr %s241, 4
      %s243 = scalar_lea.vmem %s5, %s242
      %p244 = pneg %p176
      %p245 = pneg %p173
      %p246 = scmp.lt.s32.totalorder %s19, 1
      %s247 = scalar_select %p246, %s19, 1
      %s248 = smul.addr %s247, 2
      %s249 = scalar_lea.vmem %s6, %s248
      %p250 = scmp.lt.s32.totalorder %s19, 1
      %s251 = scalar_select %p250, %s19, 1
      %s252 = smul.addr %s251, 32
      %s253 = smul.addr %s252, 4
      %s254 = scalar_lea.vmem %s0, %s253
      %p255 = scmp.lt.s32.totalorder %s19, 1
      %s256 = scalar_select %p255, %s19, 1
      %s257 = smul.addr %s256, 32
      %s258 = smul.addr %s257, 4
      %s259 = scalar_lea.vmem %s5, %s258
      %p260 = scmp.lt.s32.totalorder %s19, 1
      %s261 = scalar_select %p260, %s19, 1
      %s262 = smul.addr %s261, 2
      %s263 = scalar_lea.vmem %s6, %s262
      %265 = vst [vmem:[#allocation2] sm:$0xf] 0
      %266 = vst [vmem:[#allocation2 + $0x4] sm:$0xf] 0
      %267 = vst [vmem:[#allocation2 + $0x8] sm:$0x1] 0
      %s268 = scalar_lea.vmem [#allocation2], 204
      %269 = vst [vmem:[%s268] sm:$0xf] 0
      %270 = vst [vmem:[%s268 + $0x4] sm:$0xf] 0
      %271 = vst [vmem:[%s268 + $0x8] sm:$0x1] 0
      %vm272 = vcmask 1040384
      %vm273 = vsmask.f32 256
      %vm274 = vmand %vm272, %vm273
      %v275 = vld [vmem:[#allocation2] sm:$0x1]
      %v276 = vsel %vm274, 0, %v275
      %277 = vst [vmem:[#allocation2] sm:$0x1] %v276
      %v278 = vld [vmem:[#allocation2 + $0xc] sm:$0x1]
      %v279 = vsel %vm274, 0, %v278
      %280 = vst [vmem:[#allocation2 + $0xc] sm:$0x1] %v279
      %v281 = vld [vmem:[#allocation2 + $0x18] sm:$0x1]
      %v282 = vsel %vm274, 0, %v281
      %283 = vst [vmem:[#allocation2 + $0x18] sm:$0x1] %v282
      %v284 = vld [vmem:[#allocation2 + $0x24] sm:$0x1]
      %v285 = vsel %vm274, 0, %v284
      %286 = vst [vmem:[#allocation2 + $0x24] sm:$0x1] %v285
      %v287 = vld [vmem:[#allocation2 + $0x30] sm:$0x1]
      %v288 = vsel %vm274, 0, %v287
      %289 = vst [vmem:[#allocation2 + $0x30] sm:$0x1] %v288
      %v290 = vld [vmem:[#allocation2 + $0x3c] sm:$0x1]
      %v291 = vsel %vm274, 0, %v290
      %292 = vst [vmem:[#allocation2 + $0x3c] sm:$0x1] %v291
      %v293 = vld [vmem:[#allocation2 + $0x48] sm:$0x1]
      %v294 = vsel %vm274, 0, %v293
      %295 = vst [vmem:[#allocation2 + $0x48] sm:$0x1] %v294
      %v296 = vld [vmem:[#allocation2 + $0x54] sm:$0x1]
      %v297 = vsel %vm274, 0, %v296
      %298 = vst [vmem:[#allocation2 + $0x54] sm:$0x1] %v297
      %v299 = vld [vmem:[#allocation2 + $0x60] sm:$0x1]
      %v300 = vsel %vm274, 0, %v299
      %301 = vst [vmem:[#allocation2 + $0x60] sm:$0x1] %v300
      %v302 = vld [vmem:[#allocation2 + $0x6c] sm:$0x1]
      %v303 = vsel %vm274, 0, %v302
      %304 = vst [vmem:[#allocation2 + $0x6c] sm:$0x1] %v303
      %v305 = vld [vmem:[#allocation2 + $0x78] sm:$0x1]
      %v306 = vsel %vm274, 0, %v305
      %307 = vst [vmem:[#allocation2 + $0x78] sm:$0x1] %v306
      %v308 = vld [vmem:[#allocation2 + $0x84] sm:$0x1]
      %v309 = vsel %vm274, 0, %v308
      %310 = vst [vmem:[#allocation2 + $0x84] sm:$0x1] %v309
      %v311 = vld [vmem:[#allocation2 + $0x90] sm:$0x1]
      %v312 = vsel %vm274, 0, %v311
      %313 = vst [vmem:[#allocation2 + $0x90] sm:$0x1] %v312
      %v314 = vld [vmem:[#allocation2 + $0x9c] sm:$0x1]
      %v315 = vsel %vm274, 0, %v314
      %316 = vst [vmem:[#allocation2 + $0x9c] sm:$0x1] %v315
      %v317 = vld [vmem:[#allocation2 + $0xa8] sm:$0x1]
      %v318 = vsel %vm274, 0, %v317
      %319 = vst [vmem:[#allocation2 + $0xa8] sm:$0x1] %v318
      %v320 = vld [vmem:[#allocation2 + $0xb4] sm:$0x1]
      %v321 = vsel %vm274, 0, %v320
      %322 = vst [vmem:[#allocation2 + $0xb4] sm:$0x1] %v321
      %v323 = vld [vmem:[#allocation2 + $0xc0] sm:$0x1]
      %v324 = vsel %vm274, 0, %v323
      %325 = vst [vmem:[#allocation2 + $0xc0] sm:$0x1] %v324
      %v326 = vld [vmem:[#allocation2 + $0xcc] sm:$0x1]
      %v327 = vsel %vm274, 0, %v326
      %328 = vst [vmem:[#allocation2 + $0xcc] sm:$0x1] %v327
      %vm329 = vsmask.f32 7938
      %vm330 = vmand %vm272, %vm329
      %v331 = vld [vmem:[#allocation2 + $0x8] sm:$0x1]
      %v332 = vsel %vm330, 0, %v331
      %333 = vst [vmem:[#allocation2 + $0x8] sm:$0x1] %v332
      %v334 = vld [vmem:[#allocation2 + $0x14] sm:$0x1]
      %v335 = vsel %vm330, 0, %v334
      %336 = vst [vmem:[#allocation2 + $0x14] sm:$0x1] %v335
      %v337 = vld [vmem:[#allocation2 + $0x20] sm:$0x1]
      %v338 = vsel %vm330, 0, %v337
      %339 = vst [vmem:[#allocation2 + $0x20] sm:$0x1] %v338
      %v340 = vld [vmem:[#allocation2 + $0x2c] sm:$0x1]
      %v341 = vsel %vm330, 0, %v340
      %342 = vst [vmem:[#allocation2 + $0x2c] sm:$0x1] %v341
      %v343 = vld [vmem:[#allocation2 + $0x38] sm:$0x1]
      %v344 = vsel %vm330, 0, %v343
      %345 = vst [vmem:[#allocation2 + $0x38] sm:$0x1] %v344
      %v346 = vld [vmem:[#allocation2 + $0x44] sm:$0x1]
      %v347 = vsel %vm330, 0, %v346
      %348 = vst [vmem:[#allocation2 + $0x44] sm:$0x1] %v347
      %v349 = vld [vmem:[#allocation2 + $0x50] sm:$0x1]
      %v350 = vsel %vm330, 0, %v349
      %351 = vst [vmem:[#allocation2 + $0x50] sm:$0x1] %v350
      %v352 = vld [vmem:[#allocation2 + $0x5c] sm:$0x1]
      %v353 = vsel %vm330, 0, %v352
      %354 = vst [vmem:[#allocation2 + $0x5c] sm:$0x1] %v353
      %v355 = vld [vmem:[#allocation2 + $0x68] sm:$0x1]
      %v356 = vsel %vm330, 0, %v355
      %357 = vst [vmem:[#allocation2 + $0x68] sm:$0x1] %v356
      %v358 = vld [vmem:[#allocation2 + $0x74] sm:$0x1]
      %v359 = vsel %vm330, 0, %v358
      %360 = vst [vmem:[#allocation2 + $0x74] sm:$0x1] %v359
      %v361 = vld [vmem:[#allocation2 + $0x80] sm:$0x1]
      %v362 = vsel %vm330, 0, %v361
      %363 = vst [vmem:[#allocation2 + $0x80] sm:$0x1] %v362
      %v364 = vld [vmem:[#allocation2 + $0x8c] sm:$0x1]
      %v365 = vsel %vm330, 0, %v364
      %366 = vst [vmem:[#allocation2 + $0x8c] sm:$0x1] %v365
      %v367 = vld [vmem:[#allocation2 + $0x98] sm:$0x1]
      %v368 = vsel %vm330, 0, %v367
      %369 = vst [vmem:[#allocation2 + $0x98] sm:$0x1] %v368
      %v370 = vld [vmem:[#allocation2 + $0xa4] sm:$0x1]
      %v371 = vsel %vm330, 0, %v370
      %372 = vst [vmem:[#allocation2 + $0xa4] sm:$0x1] %v371
      %v373 = vld [vmem:[#allocation2 + $0xb0] sm:$0x1]
      %v374 = vsel %vm330, 0, %v373
      %375 = vst [vmem:[#allocation2 + $0xb0] sm:$0x1] %v374
      %v376 = vld [vmem:[#allocation2 + $0xbc] sm:$0x1]
      %v377 = vsel %vm330, 0, %v376
      %378 = vst [vmem:[#allocation2 + $0xbc] sm:$0x1] %v377
      %v379 = vld [vmem:[#allocation2 + $0xc8] sm:$0x1]
      %v380 = vsel %vm330, 0, %v379
      %381 = vst [vmem:[#allocation2 + $0xc8] sm:$0x1] %v380
      %v382 = vld [vmem:[#allocation2 + $0xd4] sm:$0x1]
      %v383 = vsel %vm330, 0, %v382
      %384 = vst [vmem:[#allocation2 + $0xd4] sm:$0x1] %v383
      %v385 = vld [vmem:[%s254] sm:$0xf]
      %v386 = vld [vmem:[%s254 + $0x4] sm:$0xf]
      %v387 = vld [vmem:[%s254 + $0x8] sm:$0xf]
      %v388 = vld [vmem:[%s254 + $0xc] sm:$0xf]
      %v389 = vld [vmem:[%s254 + $0x10] sm:$0xf]
      %v390 = vld [vmem:[%s254 + $0x14] sm:$0xf]
      %v391 = vld [vmem:[%s254 + $0x18] sm:$0xf]
      %v392 = vld [vmem:[%s254 + $0x1c] sm:$0xf]
      %v393 = vld [vmem:[%s254 + $0x20] sm:$0xf]
      %v394 = vld [vmem:[%s254 + $0x24] sm:$0xf]
      %v395 = vld [vmem:[%s254 + $0x28] sm:$0xf]
      %v396 = vld [vmem:[%s254 + $0x2c] sm:$0xf]
      %v397 = vld [vmem:[%s254 + $0x30] sm:$0xf]
      %v398 = vld [vmem:[%s254 + $0x34] sm:$0xf]
      %v399 = vld [vmem:[%s254 + $0x38] sm:$0xf]
      %v400 = vld [vmem:[%s254 + $0x3c] sm:$0xf]
      %v401 = vld [vmem:[%s254 + $0x40] sm:$0xf]
      %v402 = vld [vmem:[%s254 + $0x44] sm:$0xf]
      %v403 = vld [vmem:[%s254 + $0x48] sm:$0xf]
      %v404 = vld [vmem:[%s254 + $0x4c] sm:$0xf]
      %v405 = vld [vmem:[%s254 + $0x50] sm:$0xf]
      %v406 = vld [vmem:[%s254 + $0x54] sm:$0xf]
      %v407 = vld [vmem:[%s254 + $0x58] sm:$0xf]
      %v408 = vld [vmem:[%s254 + $0x5c] sm:$0xf]
      %v409 = vld [vmem:[%s254 + $0x60] sm:$0xf]
      %v410 = vld [vmem:[%s254 + $0x64] sm:$0xf]
      %v411 = vld [vmem:[%s254 + $0x68] sm:$0xf]
      %v412 = vld [vmem:[%s254 + $0x6c] sm:$0xf]
      %v413 = vld [vmem:[%s254 + $0x70] sm:$0xf]
      %v414 = vld [vmem:[%s254 + $0x74] sm:$0xf]
      %v415 = vld [vmem:[%s254 + $0x78] sm:$0xf]
      %v416 = vld [vmem:[%s254 + $0x7c] sm:$0xf]
      %v417 = vunpack.c.l.bf16 %v385
      %v418 = vunpack.c.l.bf16 %v386
      %v419 = vunpack.c.l.bf16 %v387
      %v420 = vunpack.c.l.bf16 %v388
      %v421 = vunpack.c.l.bf16 %v389
      %v422 = vunpack.c.l.bf16 %v390
      %v423 = vunpack.c.l.bf16 %v391
      %v424 = vunpack.c.l.bf16 %v392
      %v425 = vunpack.c.l.bf16 %v393
      %v426 = vunpack.c.l.bf16 %v394
      %v427 = vunpack.c.l.bf16 %v395
      %v428 = vunpack.c.l.bf16 %v396
      %v429 = vunpack.c.l.bf16 %v397
      %v430 = vunpack.c.l.bf16 %v398
      %v431 = vunpack.c.l.bf16 %v399
      %v432 = vunpack.c.l.bf16 %v400
      %v433 = vunpack.c.l.bf16 %v401
      %v434 = vunpack.c.l.bf16 %v402
      %v435 = vunpack.c.l.bf16 %v403
      %v436 = vunpack.c.l.bf16 %v404
      %v437 = vunpack.c.l.bf16 %v405
      %v438 = vunpack.c.l.bf16 %v406
      %v439 = vunpack.c.l.bf16 %v407
      %v440 = vunpack.c.l.bf16 %v408
      %v441 = vunpack.c.l.bf16 %v409
      %v442 = vunpack.c.l.bf16 %v410
      %v443 = vunpack.c.l.bf16 %v411
      %v444 = vunpack.c.l.bf16 %v412
      %v445 = vunpack.c.l.bf16 %v413
      %v446 = vunpack.c.l.bf16 %v414
      %v447 = vunpack.c.l.bf16 %v415
      %v448 = vunpack.c.l.bf16 %v416
      %v449 = vld [vmem:[%s1] sm:$0x1]
      %v451 = vlaneseq
      %v452 = vshrl.u32 %v451, 7
      %v453 = vsub.s32 0, %v452
      %v454 = vrot.slane %v449, %v453
      %v456 = vmul.f32 %v417, %v454
      %v457 = vmul.f32 %v418, %v454
      %v458 = vmul.f32 %v419, %v454
      %v459 = vmul.f32 %v420, %v454
      %v460 = vmul.f32 %v421, %v454
      %v461 = vmul.f32 %v422, %v454
      %v462 = vmul.f32 %v423, %v454
      %v463 = vmul.f32 %v424, %v454
      %v464 = vmul.f32 %v425, %v454
      %v465 = vmul.f32 %v426, %v454
      %v466 = vmul.f32 %v427, %v454
      %v467 = vmul.f32 %v428, %v454
      %v468 = vmul.f32 %v429, %v454
      %v469 = vmul.f32 %v430, %v454
      %v470 = vmul.f32 %v431, %v454
      %v471 = vmul.f32 %v432, %v454
      %v472 = vmul.f32 %v433, %v454
      %v473 = vmul.f32 %v434, %v454
      %v474 = vmul.f32 %v435, %v454
      %v475 = vmul.f32 %v436, %v454
      %v476 = vmul.f32 %v437, %v454
      %v477 = vmul.f32 %v438, %v454
      %v478 = vmul.f32 %v439, %v454
      %v479 = vmul.f32 %v440, %v454
      %v480 = vmul.f32 %v441, %v454
      %v481 = vmul.f32 %v442, %v454
      %v482 = vmul.f32 %v443, %v454
      %v483 = vmul.f32 %v444, %v454
      %v484 = vmul.f32 %v445, %v454
      %v485 = vmul.f32 %v446, %v454
      %v486 = vmul.f32 %v447, %v454
      %v487 = vmul.f32 %v448, %v454
      %v488 = vld [vmem:[%s2] sm:$0x1]
      %v490 = vlaneseq
      %v491 = vshrl.u32 %v490, 7
      %v492 = vsub.s32 0, %v491
      %v493 = vrot.slane %v488, %v492
      %v495 = vadd.f32 %v456, %v493
      %v496 = vadd.f32 %v457, %v493
      %v497 = vadd.f32 %v458, %v493
      %v498 = vadd.f32 %v459, %v493
      %v499 = vadd.f32 %v460, %v493
      %v500 = vadd.f32 %v461, %v493
      %v501 = vadd.f32 %v462, %v493
      %v502 = vadd.f32 %v463, %v493
      %v503 = vadd.f32 %v464, %v493
      %v504 = vadd.f32 %v465, %v493
      %v505 = vadd.f32 %v466, %v493
      %v506 = vadd.f32 %v467, %v493
      %v507 = vadd.f32 %v468, %v493
      %v508 = vadd.f32 %v469, %v493
      %v509 = vadd.f32 %v470, %v493
      %v510 = vadd.f32 %v471, %v493
      %v511 = vadd.f32 %v472, %v493
      %v512 = vadd.f32 %v473, %v493
      %v513 = vadd.f32 %v474, %v493
      %v514 = vadd.f32 %v475, %v493
      %v515 = vadd.f32 %v476, %v493
      %v516 = vadd.f32 %v477, %v493
      %v517 = vadd.f32 %v478, %v493
      %v518 = vadd.f32 %v479, %v493
      %v519 = vadd.f32 %v480, %v493
      %v520 = vadd.f32 %v481, %v493
      %v521 = vadd.f32 %v482, %v493
      %v522 = vadd.f32 %v483, %v493
      %v523 = vadd.f32 %v484, %v493
      %v524 = vadd.f32 %v485, %v493
      %v525 = vadd.f32 %v486, %v493
      %v526 = vadd.f32 %v487, %v493
      %s527 = sld [smem:[#allocation3]]
      %vm528 = vcmp.gt.f32.partialorder %v495, 0.0
      %vm529 = vcmp.gt.f32.partialorder %v496, 0.0
      %vm530 = vcmp.gt.f32.partialorder %v497, 0.0
      %vm531 = vcmp.gt.f32.partialorder %v498, 0.0
      %vm532 = vcmp.gt.f32.partialorder %v499, 0.0
      %vm533 = vcmp.gt.f32.partialorder %v500, 0.0
      %vm534 = vcmp.gt.f32.partialorder %v501, 0.0
      %vm535 = vcmp.gt.f32.partialorder %v502, 0.0
      %vm536 = vcmp.gt.f32.partialorder %v503, 0.0
      %vm537 = vcmp.gt.f32.partialorder %v504, 0.0
      %vm538 = vcmp.gt.f32.partialorder %v505, 0.0
      %vm539 = vcmp.gt.f32.partialorder %v506, 0.0
      %vm540 = vcmp.gt.f32.partialorder %v507, 0.0
      %vm541 = vcmp.gt.f32.partialorder %v508, 0.0
      %vm542 = vcmp.gt.f32.partialorder %v509, 0.0
      %vm543 = vcmp.gt.f32.partialorder %v510, 0.0
      %vm544 = vcmp.gt.f32.partialorder %v511, 0.0
      %vm545 = vcmp.gt.f32.partialorder %v512, 0.0
      %vm546 = vcmp.gt.f32.partialorder %v513, 0.0
      %vm547 = vcmp.gt.f32.partialorder %v514, 0.0
      %vm548 = vcmp.gt.f32.partialorder %v515, 0.0
      %vm549 = vcmp.gt.f32.partialorder %v516, 0.0
      %vm550 = vcmp.gt.f32.partialorder %v517, 0.0
      %vm551 = vcmp.gt.f32.partialorder %v518, 0.0
      %vm552 = vcmp.gt.f32.partialorder %v519, 0.0
      %vm553 = vcmp.gt.f32.partialorder %v520, 0.0
      %vm554 = vcmp.gt.f32.partialorder %v521, 0.0
      %vm555 = vcmp.gt.f32.partialorder %v522, 0.0
      %vm556 = vcmp.gt.f32.partialorder %v523, 0.0
      %vm557 = vcmp.gt.f32.partialorder %v524, 0.0
      %vm558 = vcmp.gt.f32.partialorder %v525, 0.0
      %vm559 = vcmp.gt.f32.partialorder %v526, 0.0
      %v560 = vstv %s527
      %v561 = vmul.f32 %v560, %v495
      %v562 = vmul.f32 %v560, %v496
      %v563 = vmul.f32 %v560, %v497
      %v564 = vmul.f32 %v560, %v498
      %v565 = vmul.f32 %v560, %v499
      %v566 = vmul.f32 %v560, %v500
      %v567 = vmul.f32 %v560, %v501
      %v568 = vmul.f32 %v560, %v502
      %v569 = vmul.f32 %v560, %v503
      %v570 = vmul.f32 %v560, %v504
      %v571 = vmul.f32 %v560, %v505
      %v572 = vmul.f32 %v560, %v506
      %v573 = vmul.f32 %v560, %v507
      %v574 = vmul.f32 %v560, %v508
      %v575 = vmul.f32 %v560, %v509
      %v576 = vmul.f32 %v560, %v510
      %v577 = vmul.f32 %v560, %v511
      %v578 = vmul.f32 %v560, %v512
      %v579 = vmul.f32 %v560, %v513
      %v580 = vmul.f32 %v560, %v514
      %v581 = vmul.f32 %v560, %v515
      %v582 = vmul.f32 %v560, %v516
      %v583 = vmul.f32 %v560, %v517
      %v584 = vmul.f32 %v560, %v518
      %v585 = vmul.f32 %v560, %v519
      %v586 = vmul.f32 %v560, %v520
      %v587 = vmul.f32 %v560, %v521
      %v588 = vmul.f32 %v560, %v522
      %v589 = vmul.f32 %v560, %v523
      %v590 = vmul.f32 %v560, %v524
      %v591 = vmul.f32 %v560, %v525
      %v592 = vmul.f32 %v560, %v526
      %v593 = vsel %vm528, %v495, %v561
      %v594 = vsel %vm529, %v496, %v562
      %v595 = vsel %vm530, %v497, %v563
      %v596 = vsel %vm531, %v498, %v564
      %v597 = vsel %vm532, %v499, %v565
      %v598 = vsel %vm533, %v500, %v566
      %v599 = vsel %vm534, %v501, %v567
      %v600 = vsel %vm535, %v502, %v568
      %v601 = vsel %vm536, %v503, %v569
      %v602 = vsel %vm537, %v504, %v570
      %v603 = vsel %vm538, %v505, %v571
      %v604 = vsel %vm539, %v506, %v572
      %v605 = vsel %vm540, %v507, %v573
      %v606 = vsel %vm541, %v508, %v574
      %v607 = vsel %vm542, %v509, %v575
      %v608 = vsel %vm543, %v510, %v576
      %v609 = vsel %vm544, %v511, %v577
      %v610 = vsel %vm545, %v512, %v578
      %v611 = vsel %vm546, %v513, %v579
      %v612 = vsel %vm547, %v514, %v580
      %v613 = vsel %vm548, %v515, %v581
      %v614 = vsel %vm549, %v516, %v582
      %v615 = vsel %vm550, %v517, %v583
      %v616 = vsel %vm551, %v518, %v584
      %v617 = vsel %vm552, %v519, %v585
      %v618 = vsel %vm553, %v520, %v586
      %v619 = vsel %vm554, %v521, %v587
      %v620 = vsel %vm555, %v522, %v588
      %v621 = vsel %vm556, %v523, %v589
      %v622 = vsel %vm557, %v524, %v590
      %v623 = vsel %vm558, %v525, %v591
      %v624 = vsel %vm559, %v526, %v592
      %v625 = vpack.c.bf16 %v594, %v593
      %v626 = vpack.c.bf16 %v596, %v595
      %v627 = vpack.c.bf16 %v598, %v597
      %v628 = vpack.c.bf16 %v600, %v599
      %v629 = vpack.c.bf16 %v602, %v601
      %v630 = vpack.c.bf16 %v604, %v603
      %v631 = vpack.c.bf16 %v606, %v605
      %v632 = vpack.c.bf16 %v608, %v607
      %v633 = vpack.c.bf16 %v610, %v609
      %v634 = vpack.c.bf16 %v612, %v611
      %v635 = vpack.c.bf16 %v614, %v613
      %v636 = vpack.c.bf16 %v616, %v615
      %v637 = vpack.c.bf16 %v618, %v617
      %v638 = vpack.c.bf16 %v620, %v619
      %v639 = vpack.c.bf16 %v622, %v621
      %v640 = vpack.c.bf16 %v624, %v623
      %v657 = vunpack.c.l.b16 %v625
      %v658 = vunpack.c.h.b16 %v625
      %v659 = vunpack.c.l.b16 %v626
      %v660 = vunpack.c.h.b16 %v626
      %v661 = vunpack.c.l.b16 %v627
      %v662 = vunpack.c.h.b16 %v627
      %v663 = vunpack.c.l.b16 %v628
      %v664 = vunpack.c.h.b16 %v628
      %v665 = vunpack.c.l.b16 %v629
      %v666 = vunpack.c.h.b16 %v629
      %v667 = vunpack.c.l.b16 %v630
      %v668 = vunpack.c.h.b16 %v630
      %v669 = vunpack.c.l.b16 %v631
      %v670 = vunpack.c.h.b16 %v631
      %v671 = vunpack.c.l.b16 %v632
      %v672 = vunpack.c.h.b16 %v632
      %v673 = vunpack.c.l.b16 %v633
      %v674 = vunpack.c.h.b16 %v633
      %v675 = vunpack.c.l.b16 %v634
      %v676 = vunpack.c.h.b16 %v634
      %v677 = vunpack.c.l.b16 %v635
      %v678 = vunpack.c.h.b16 %v635
      %v679 = vunpack.c.l.b16 %v636
      %v680 = vunpack.c.h.b16 %v636
      %v681 = vunpack.c.l.b16 %v637
      %v682 = vunpack.c.h.b16 %v637
      %v683 = vunpack.c.l.b16 %v638
      %v684 = vunpack.c.h.b16 %v638
      %v685 = vunpack.c.l.b16 %v639
      %v686 = vunpack.c.h.b16 %v639
      %v687 = vunpack.c.l.b16 %v640
      %v688 = vunpack.c.h.b16 %v640
      %v689 = vpack.c.b16 %v657, %v657
      %v690 = vpack.c.b16 %v658, %v658
      %v691 = vpack.c.b16 %v659, %v659
      %v692 = vpack.c.b16 %v660, %v660
      %v693 = vpack.c.b16 %v661, %v661
      %v694 = vpack.c.b16 %v662, %v662
      %v695 = vpack.c.b16 %v663, %v663
      %v696 = vpack.c.b16 %v664, %v664
      %v697 = vpack.c.b16 %v665, %v665
      %v698 = vpack.c.b16 %v666, %v666
      %v699 = vpack.c.b16 %v667, %v667
      %v700 = vpack.c.b16 %v668, %v668
      %v701 = vpack.c.b16 %v669, %v669
      %v702 = vpack.c.b16 %v670, %v670
      %v703 = vpack.c.b16 %v671, %v671
      %v704 = vpack.c.b16 %v672, %v672
      %v705 = vpack.c.b16 %v673, %v673
      %v706 = vpack.c.b16 %v674, %v674
      %v707 = vpack.c.b16 %v675, %v675
      %v708 = vpack.c.b16 %v676, %v676
      %v709 = vpack.c.b16 %v677, %v677
      %v710 = vpack.c.b16 %v678, %v678
      %v711 = vpack.c.b16 %v679, %v679
      %v712 = vpack.c.b16 %v680, %v680
      %v713 = vpack.c.b16 %v681, %v681
      %v714 = vpack.c.b16 %v682, %v682
      %v715 = vpack.c.b16 %v683, %v683
      %v716 = vpack.c.b16 %v684, %v684
      %v717 = vpack.c.b16 %v685, %v685
      %v718 = vpack.c.b16 %v686, %v686
      %v719 = vpack.c.b16 %v687, %v687
      %v720 = vpack.c.b16 %v688, %v688
      %vm721 = vsmask.f32 4368
      %vm722 = vmor %vm273, %vm721
      %v724 = vshrl.u32 %v689, 16
      %v726 = vrot.slane %v724, 7
      %v727 = vshll.u32 %v689, 16
      %v729 = vor.u32 %v726, %v727
      %v730 = vrot.slane %v726, 4
      %v732 = vshrl.u32 %v690, 16
      %v734 = vrot.slane %v732, 7
      %v735 = vshll.u32 %v690, 16
      %v737 = vor.u32 %v734, %v735
      %v738 = vsel %vm722, %v730, %v737
      %v739 = vrot.slane %v734, 4
      %v741 = vshrl.u32 %v691, 16
      %v743 = vrot.slane %v741, 7
      %v744 = vshll.u32 %v691, 16
      %v746 = vor.u32 %v743, %v744
      %v747 = vrot.slane %v743, 4
      %v749 = vshrl.u32 %v692, 16
      %v751 = vrot.slane %v749, 7
      %v752 = vshll.u32 %v692, 16
      %v754 = vor.u32 %v751, %v752
      %v755 = vsel %vm722, %v747, %v754
      %v756 = vrot.slane %v751, 4
      %v758 = vshrl.u32 %v693, 16
      %v760 = vrot.slane %v758, 7
      %v761 = vshll.u32 %v693, 16
      %v763 = vor.u32 %v760, %v761
      %v764 = vrot.slane %v760, 4
      %v766 = vshrl.u32 %v694, 16
      %v768 = vrot.slane %v766, 7
      %v769 = vshll.u32 %v694, 16
      %v771 = vor.u32 %v768, %v769
      %v772 = vsel %vm722, %v764, %v771
      %v773 = vrot.slane %v768, 4
      %v775 = vshrl.u32 %v695, 16
      %v777 = vrot.slane %v775, 7
      %v778 = vshll.u32 %v695, 16
      %v780 = vor.u32 %v777, %v778
      %v781 = vrot.slane %v777, 4
      %v783 = vshrl.u32 %v696, 16
      %v785 = vrot.slane %v783, 7
      %v786 = vshll.u32 %v696, 16
      %v788 = vor.u32 %v785, %v786
      %v789 = vsel %vm722, %v781, %v788
      %v790 = vrot.slane %v785, 4
      %v792 = vshrl.u32 %v697, 16
      %v794 = vrot.slane %v792, 7
      %v795 = vshll.u32 %v697, 16
      %v797 = vor.u32 %v794, %v795
      %v798 = vrot.slane %v794, 4
      %v800 = vshrl.u32 %v698, 16
      %v802 = vrot.slane %v800, 7
      %v803 = vshll.u32 %v698, 16
      %v805 = vor.u32 %v802, %v803
      %v806 = vsel %vm722, %v798, %v805
      %v807 = vrot.slane %v802, 4
      %v809 = vshrl.u32 %v699, 16
      %v811 = vrot.slane %v809, 7
      %v812 = vshll.u32 %v699, 16
      %v814 = vor.u32 %v811, %v812
      %v815 = vrot.slane %v811, 4
      %v817 = vshrl.u32 %v700, 16
      %v819 = vrot.slane %v817, 7
      %v820 = vshll.u32 %v700, 16
      %v822 = vor.u32 %v819, %v820
      %v823 = vsel %vm722, %v815, %v822
      %v824 = vrot.slane %v819, 4
      %v826 = vshrl.u32 %v701, 16
      %v828 = vrot.slane %v826, 7
      %v829 = vshll.u32 %v701, 16
      %v831 = vor.u32 %v828, %v829
      %v832 = vrot.slane %v828, 4
      %v834 = vshrl.u32 %v702, 16
      %v836 = vrot.slane %v834, 7
      %v837 = vshll.u32 %v702, 16
      %v839 = vor.u32 %v836, %v837
      %v840 = vsel %vm722, %v832, %v839
      %v841 = vrot.slane %v836, 4
      %v843 = vshrl.u32 %v703, 16
      %v845 = vrot.slane %v843, 7
      %v846 = vshll.u32 %v703, 16
      %v848 = vor.u32 %v845, %v846
      %v849 = vrot.slane %v845, 4
      %v851 = vshrl.u32 %v704, 16
      %v853 = vrot.slane %v851, 7
      %v854 = vshll.u32 %v704, 16
      %v856 = vor.u32 %v853, %v854
      %v857 = vsel %vm722, %v849, %v856
      %v858 = vrot.slane %v853, 4
      %v860 = vshrl.u32 %v705, 16
      %v862 = vrot.slane %v860, 7
      %v863 = vshll.u32 %v705, 16
      %v865 = vor.u32 %v862, %v863
      %v866 = vrot.slane %v862, 4
      %v868 = vshrl.u32 %v706, 16
      %v870 = vrot.slane %v868, 7
      %v871 = vshll.u32 %v706, 16
      %v873 = vor.u32 %v870, %v871
      %v874 = vsel %vm722, %v866, %v873
      %v875 = vrot.slane %v870, 4
      %v877 = vshrl.u32 %v707, 16
      %v879 = vrot.slane %v877, 7
      %v880 = vshll.u32 %v707, 16
      %v882 = vor.u32 %v879, %v880
      %v883 = vrot.slane %v879, 4
      %v885 = vshrl.u32 %v708, 16
      %v887 = vrot.slane %v885, 7
      %v888 = vshll.u32 %v708, 16
      %v890 = vor.u32 %v887, %v888
      %v891 = vsel %vm722, %v883, %v890
      %v892 = vrot.slane %v887, 4
      %v894 = vshrl.u32 %v709, 16
      %v896 = vrot.slane %v894, 7
      %v897 = vshll.u32 %v709, 16
      %v899 = vor.u32 %v896, %v897
      %v900 = vrot.slane %v896, 4
      %v902 = vshrl.u32 %v710, 16
      %v904 = vrot.slane %v902, 7
      %v905 = vshll.u32 %v710, 16
      %v907 = vor.u32 %v904, %v905
      %v908 = vsel %vm722, %v900, %v907
      %v909 = vrot.slane %v904, 4
      %v911 = vshrl.u32 %v711, 16
      %v913 = vrot.slane %v911, 7
      %v914 = vshll.u32 %v711, 16
      %v916 = vor.u32 %v913, %v914
      %v917 = vrot.slane %v913, 4
      %v919 = vshrl.u32 %v712, 16
      %v921 = vrot.slane %v919, 7
      %v922 = vshll.u32 %v712, 16
      %v924 = vor.u32 %v921, %v922
      %v925 = vsel %vm722, %v917, %v924
      %v926 = vrot.slane %v921, 4
      %v928 = vshrl.u32 %v713, 16
      %v930 = vrot.slane %v928, 7
      %v931 = vshll.u32 %v713, 16
      %v933 = vor.u32 %v930, %v931
      %v934 = vrot.slane %v930, 4
      %v936 = vshrl.u32 %v714, 16
      %v938 = vrot.slane %v936, 7
      %v939 = vshll.u32 %v714, 16
      %v941 = vor.u32 %v938, %v939
      %v942 = vsel %vm722, %v934, %v941
      %v943 = vrot.slane %v938, 4
      %v945 = vshrl.u32 %v715, 16
      %v947 = vrot.slane %v945, 7
      %v948 = vshll.u32 %v715, 16
      %v950 = vor.u32 %v947, %v948
      %v951 = vrot.slane %v947, 4
      %v953 = vshrl.u32 %v716, 16
      %v955 = vrot.slane %v953, 7
      %v956 = vshll.u32 %v716, 16
      %v958 = vor.u32 %v955, %v956
      %v959 = vsel %vm722, %v951, %v958
      %v960 = vrot.slane %v955, 4
      %v962 = vshrl.u32 %v717, 16
      %v964 = vrot.slane %v962, 7
      %v965 = vshll.u32 %v717, 16
      %v967 = vor.u32 %v964, %v965
      %v968 = vrot.slane %v964, 4
      %v970 = vshrl.u32 %v718, 16
      %v972 = vrot.slane %v970, 7
      %v973 = vshll.u32 %v718, 16
      %v975 = vor.u32 %v972, %v973
      %v976 = vsel %vm722, %v968, %v975
      %v977 = vrot.slane %v972, 4
      %v979 = vshrl.u32 %v719, 16
      %v981 = vrot.slane %v979, 7
      %v982 = vshll.u32 %v719, 16
      %v984 = vor.u32 %v981, %v982
      %v985 = vrot.slane %v981, 4
      %v987 = vshrl.u32 %v720, 16
      %v989 = vrot.slane %v987, 7
      %v990 = vshll.u32 %v720, 16
      %v992 = vor.u32 %v989, %v990
      %v993 = vsel %vm722, %v985, %v992
      %v994 = vrot.slane %v989, 4
      %s1043 = scalar_lea.vmem [#allocation2], 12
      %vm1044 = vcmask 1043456
      %vm1045 = vmand %vm1044, %vm329
      %v1046 = vld [vmem:[%s1043] sm:$0xf]
      %v1047 = vsel %vm1045, %v729, %v1046
      %1048 = vst [vmem:[%s1043] sm:$0xf] %v1047
      %1049 = vst [vmem:[%s1043 + $0x4] sm:$0xf] %v738
      %v1050 = vld [vmem:[%s1043 + $0x8] sm:$0x1]
      %v1051 = vsel %vm274, %v739, %v1050
      %1052 = vst [vmem:[%s1043 + $0x8] sm:$0x1] %v1051
      %v1053 = vld [vmem:[%s1043 + $0xc] sm:$0xf]
      %v1054 = vsel %vm1045, %v746, %v1053
      %1055 = vst [vmem:[%s1043 + $0xc] sm:$0xf] %v1054
      %1056 = vst [vmem:[%s1043 + $0x10] sm:$0xf] %v755
      %v1057 = vld [vmem:[%s1043 + $0x14] sm:$0x1]
      %v1058 = vsel %vm274, %v756, %v1057
      %1059 = vst [vmem:[%s1043 + $0x14] sm:$0x1] %v1058
      %v1060 = vld [vmem:[%s1043 + $0x18] sm:$0xf]
      %v1061 = vsel %vm1045, %v763, %v1060
      %1062 = vst [vmem:[%s1043 + $0x18] sm:$0xf] %v1061
      %1063 = vst [vmem:[%s1043 + $0x1c] sm:$0xf] %v772
      %v1064 = vld [vmem:[%s1043 + $0x20] sm:$0x1]
      %v1065 = vsel %vm274, %v773, %v1064
      %1066 = vst [vmem:[%s1043 + $0x20] sm:$0x1] %v1065
      %v1067 = vld [vmem:[%s1043 + $0x24] sm:$0xf]
      %v1068 = vsel %vm1045, %v780, %v1067
      %1069 = vst [vmem:[%s1043 + $0x24] sm:$0xf] %v1068
      %1070 = vst [vmem:[%s1043 + $0x28] sm:$0xf] %v789
      %v1071 = vld [vmem:[%s1043 + $0x2c] sm:$0x1]
      %v1072 = vsel %vm274, %v790, %v1071
      %1073 = vst [vmem:[%s1043 + $0x2c] sm:$0x1] %v1072
      %v1074 = vld [vmem:[%s1043 + $0x30] sm:$0xf]
      %v1075 = vsel %vm1045, %v797, %v1074
      %1076 = vst [vmem:[%s1043 + $0x30] sm:$0xf] %v1075
      %1077 = vst [vmem:[%s1043 + $0x34] sm:$0xf] %v806
      %v1078 = vld [vmem:[%s1043 + $0x38] sm:$0x1]
      %v1079 = vsel %vm274, %v807, %v1078
      %1080 = vst [vmem:[%s1043 + $0x38] sm:$0x1] %v1079
      %v1081 = vld [vmem:[%s1043 + $0x3c] sm:$0xf]
      %v1082 = vsel %vm1045, %v814, %v1081
      %1083 = vst [vmem:[%s1043 + $0x3c] sm:$0xf] %v1082
      %1084 = vst [vmem:[%s1043 + $0x40] sm:$0xf] %v823
      %v1085 = vld [vmem:[%s1043 + $0x44] sm:$0x1]
      %v1086 = vsel %vm274, %v824, %v1085
      %1087 = vst [vmem:[%s1043 + $0x44] sm:$0x1] %v1086
      %v1088 = vld [vmem:[%s1043 + $0x48] sm:$0xf]
      %v1089 = vsel %vm1045, %v831, %v1088
      %1090 = vst [vmem:[%s1043 + $0x48] sm:$0xf] %v1089
      %1091 = vst [vmem:[%s1043 + $0x4c] sm:$0xf] %v840
      %v1092 = vld [vmem:[%s1043 + $0x50] sm:$0x1]
      %v1093 = vsel %vm274, %v841, %v1092
      %1094 = vst [vmem:[%s1043 + $0x50] sm:$0x1] %v1093
      %v1095 = vld [vmem:[%s1043 + $0x54] sm:$0xf]
      %v1096 = vsel %vm1045, %v848, %v1095
      %1097 = vst [vmem:[%s1043 + $0x54] sm:$0xf] %v1096
      %1098 = vst [vmem:[%s1043 + $0x58] sm:$0xf] %v857
      %v1099 = vld [vmem:[%s1043 + $0x5c] sm:$0x1]
      %v1100 = vsel %vm274, %v858, %v1099
      %1101 = vst [vmem:[%s1043 + $0x5c] sm:$0x1] %v1100
      %v1102 = vld [vmem:[%s1043 + $0x60] sm:$0xf]
      %v1103 = vsel %vm1045, %v865, %v1102
      %1104 = vst [vmem:[%s1043 + $0x60] sm:$0xf] %v1103
      %1105 = vst [vmem:[%s1043 + $0x64] sm:$0xf] %v874
      %v1106 = vld [vmem:[%s1043 + $0x68] sm:$0x1]
      %v1107 = vsel %vm274, %v875, %v1106
      %1108 = vst [vmem:[%s1043 + $0x68] sm:$0x1] %v1107
      %v1109 = vld [vmem:[%s1043 + $0x6c] sm:$0xf]
      %v1110 = vsel %vm1045, %v882, %v1109
      %1111 = vst [vmem:[%s1043 + $0x6c] sm:$0xf] %v1110
      %1112 = vst [vmem:[%s1043 + $0x70] sm:$0xf] %v891
      %v1113 = vld [vmem:[%s1043 + $0x74] sm:$0x1]
      %v1114 = vsel %vm274, %v892, %v1113
      %1115 = vst [vmem:[%s1043 + $0x74] sm:$0x1] %v1114
      %v1116 = vld [vmem:[%s1043 + $0x78] sm:$0xf]
      %v1117 = vsel %vm1045, %v899, %v1116
      %1118 = vst [vmem:[%s1043 + $0x78] sm:$0xf] %v1117
      %1119 = vst [vmem:[%s1043 + $0x7c] sm:$0xf] %v908
      %v1120 = vld [vmem:[%s1043 + $0x80] sm:$0x1]
      %v1121 = vsel %vm274, %v909, %v1120
      %1122 = vst [vmem:[%s1043 + $0x80] sm:$0x1] %v1121
      %v1123 = vld [vmem:[%s1043 + $0x84] sm:$0xf]
      %v1124 = vsel %vm1045, %v916, %v1123
      %1125 = vst [vmem:[%s1043 + $0x84] sm:$0xf] %v1124
      %1126 = vst [vmem:[%s1043 + $0x88] sm:$0xf] %v925
      %v1127 = vld [vmem:[%s1043 + $0x8c] sm:$0x1]
      %v1128 = vsel %vm274, %v926, %v1127
      %1129 = vst [vmem:[%s1043 + $0x8c] sm:$0x1] %v1128
      %v1130 = vld [vmem:[%s1043 + $0x90] sm:$0xf]
      %v1131 = vsel %vm1045, %v933, %v1130
      %1132 = vst [vmem:[%s1043 + $0x90] sm:$0xf] %v1131
      %1133 = vst [vmem:[%s1043 + $0x94] sm:$0xf] %v942
      %v1134 = vld [vmem:[%s1043 + $0x98] sm:$0x1]
      %v1135 = vsel %vm274, %v943, %v1134
      %1136 = vst [vmem:[%s1043 + $0x98] sm:$0x1] %v1135
      %v1137 = vld [vmem:[%s1043 + $0x9c] sm:$0xf]
      %v1138 = vsel %vm1045, %v950, %v1137
      %1139 = vst [vmem:[%s1043 + $0x9c] sm:$0xf] %v1138
      %1140 = vst [vmem:[%s1043 + $0xa0] sm:$0xf] %v959
      %v1141 = vld [vmem:[%s1043 + $0xa4] sm:$0x1]
      %v1142 = vsel %vm274, %v960, %v1141
      %1143 = vst [vmem:[%s1043 + $0xa4] sm:$0x1] %v1142
      %v1144 = vld [vmem:[%s1043 + $0xa8] sm:$0xf]
      %v1145 = vsel %vm1045, %v967, %v1144
      %1146 = vst [vmem:[%s1043 + $0xa8] sm:$0xf] %v1145
      %1147 = vst [vmem:[%s1043 + $0xac] sm:$0xf] %v976
      %v1148 = vld [vmem:[%s1043 + $0xb0] sm:$0x1]
      %v1149 = vsel %vm274, %v977, %v1148
      %1150 = vst [vmem:[%s1043 + $0xb0] sm:$0x1] %v1149
      %v1151 = vld [vmem:[%s1043 + $0xb4] sm:$0xf]
      %v1152 = vsel %vm1045, %v984, %v1151
      %1153 = vst [vmem:[%s1043 + $0xb4] sm:$0xf] %v1152
      %1154 = vst [vmem:[%s1043 + $0xb8] sm:$0xf] %v993
      %v1155 = vld [vmem:[%s1043 + $0xbc] sm:$0x1]
      %v1156 = vsel %vm274, %v994, %v1155
      %1157 = vst [vmem:[%s1043 + $0xbc] sm:$0x1] %v1156
      %v1158 = vld [vmem:[%s3] sm:$0xf]
      %v1159 = vld [vmem:[%s3 + $0x4] sm:$0xf]
      %v1160 = vld [vmem:[%s3 + $0x8] sm:$0xf]
      %v1161 = vld [vmem:[%s3 + $0xc] sm:$0xf]
      %v1162 = vld [vmem:[%s3 + $0x10] sm:$0xf]
      %v1163 = vld [vmem:[%s3 + $0x14] sm:$0xf]
      %v1164 = vld [vmem:[%s3 + $0x18] sm:$0xf]
      %v1165 = vld [vmem:[%s3 + $0x1c] sm:$0xf]
      %v1166 = vld [vmem:[%s3 + $0x20] sm:$0xf]
      %v1167 = vld [vmem:[%s3 + $0x24] sm:$0xf]
      %v1168 = vld [vmem:[%s3 + $0x28] sm:$0xf]
      %v1169 = vld [vmem:[%s3 + $0x2c] sm:$0xf]
      %v1170 = vld [vmem:[%s3 + $0x30] sm:$0xf]
      %v1171 = vld [vmem:[%s3 + $0x34] sm:$0xf]
      %v1172 = vld [vmem:[%s3 + $0x38] sm:$0xf]
      %v1173 = vld [vmem:[%s3 + $0x3c] sm:$0xf]
      %s1174 = scalar_lea.vmem %s3, 64
      %v1175 = vld [vmem:[%s1174] sm:$0xf]
      %v1176 = vld [vmem:[%s1174 + $0x4] sm:$0xf]
      %v1177 = vld [vmem:[%s1174 + $0x8] sm:$0xf]
      %v1178 = vld [vmem:[%s1174 + $0xc] sm:$0xf]
      %v1179 = vld [vmem:[%s1174 + $0x10] sm:$0xf]
      %v1180 = vld [vmem:[%s1174 + $0x14] sm:$0xf]
      %v1181 = vld [vmem:[%s1174 + $0x18] sm:$0xf]
      %v1182 = vld [vmem:[%s1174 + $0x1c] sm:$0xf]
      %v1183 = vld [vmem:[%s1174 + $0x20] sm:$0xf]
      %v1184 = vld [vmem:[%s1174 + $0x24] sm:$0xf]
      %v1185 = vld [vmem:[%s1174 + $0x28] sm:$0xf]
      %v1186 = vld [vmem:[%s1174 + $0x2c] sm:$0xf]
      %v1187 = vld [vmem:[%s1174 + $0x30] sm:$0xf]
      %v1188 = vld [vmem:[%s1174 + $0x34] sm:$0xf]
      %v1189 = vld [vmem:[%s1174 + $0x38] sm:$0xf]
      %v1190 = vld [vmem:[%s1174 + $0x3c] sm:$0xf]
      %s1191 = scalar_lea.vmem %s3, 128
      %v1192 = vld [vmem:[%s1191] sm:$0xf]
      %v1193 = vld [vmem:[%s1191 + $0x4] sm:$0xf]
      %v1194 = vld [vmem:[%s1191 + $0x8] sm:$0xf]
      %v1195 = vld [vmem:[%s1191 + $0xc] sm:$0xf]
      %v1196 = vld [vmem:[%s1191 + $0x10] sm:$0xf]
      %v1197 = vld [vmem:[%s1191 + $0x14] sm:$0xf]
      %v1198 = vld [vmem:[%s1191 + $0x18] sm:$0xf]
      %v1199 = vld [vmem:[%s1191 + $0x1c] sm:$0xf]
      %v1200 = vld [vmem:[%s1191 + $0x20] sm:$0xf]
      %v1201 = vld [vmem:[%s1191 + $0x24] sm:$0xf]
      %v1202 = vld [vmem:[%s1191 + $0x28] sm:$0xf]
      %v1203 = vld [vmem:[%s1191 + $0x2c] sm:$0xf]
      %v1204 = vld [vmem:[%s1191 + $0x30] sm:$0xf]
      %v1205 = vld [vmem:[%s1191 + $0x34] sm:$0xf]
      %v1206 = vld [vmem:[%s1191 + $0x38] sm:$0xf]
      %v1207 = vld [vmem:[%s1191 + $0x3c] sm:$0xf]
      %s1208 = scalar_lea.vmem %s3, 192
      %v1209 = vld [vmem:[%s1208] sm:$0xf]
      %v1210 = vld [vmem:[%s1208 + $0x4] sm:$0xf]
      %v1211 = vld [vmem:[%s1208 + $0x8] sm:$0xf]
      %v1212 = vld [vmem:[%s1208 + $0xc] sm:$0xf]
      %v1213 = vld [vmem:[%s1208 + $0x10] sm:$0xf]
      %v1214 = vld [vmem:[%s1208 + $0x14] sm:$0xf]
      %v1215 = vld [vmem:[%s1208 + $0x18] sm:$0xf]
      %v1216 = vld [vmem:[%s1208 + $0x1c] sm:$0xf]
      %v1217 = vld [vmem:[%s1208 + $0x20] sm:$0xf]
      %v1218 = vld [vmem:[%s1208 + $0x24] sm:$0xf]
      %v1219 = vld [vmem:[%s1208 + $0x28] sm:$0xf]
      %v1220 = vld [vmem:[%s1208 + $0x2c] sm:$0xf]
      %v1221 = vld [vmem:[%s1208 + $0x30] sm:$0xf]
      %v1222 = vld [vmem:[%s1208 + $0x34] sm:$0xf]
      %v1223 = vld [vmem:[%s1208 + $0x38] sm:$0xf]
      %v1224 = vld [vmem:[%s1208 + $0x3c] sm:$0xf]
      %s1225 = scalar_lea.vmem %s3, 256
      %v1226 = vld [vmem:[%s1225] sm:$0xf]
      %v1227 = vld [vmem:[%s1225 + $0x4] sm:$0xf]
      %v1228 = vld [vmem:[%s1225 + $0x8] sm:$0xf]
      %v1229 = vld [vmem:[%s1225 + $0xc] sm:$0xf]
      %v1230 = vld [vmem:[%s1225 + $0x10] sm:$0xf]
      %v1231 = vld [vmem:[%s1225 + $0x14] sm:$0xf]
      %v1232 = vld [vmem:[%s1225 + $0x18] sm:$0xf]
      %v1233 = vld [vmem:[%s1225 + $0x1c] sm:$0xf]
      %v1234 = vld [vmem:[%s1225 + $0x20] sm:$0xf]
      %v1235 = vld [vmem:[%s1225 + $0x24] sm:$0xf]
      %v1236 = vld [vmem:[%s1225 + $0x28] sm:$0xf]
      %v1237 = vld [vmem:[%s1225 + $0x2c] sm:$0xf]
      %v1238 = vld [vmem:[%s1225 + $0x30] sm:$0xf]
      %v1239 = vld [vmem:[%s1225 + $0x34] sm:$0xf]
      %v1240 = vld [vmem:[%s1225 + $0x38] sm:$0xf]
      %v1241 = vld [vmem:[%s1225 + $0x3c] sm:$0xf]
      %s1242 = scalar_lea.vmem %s3, 320
      %v1243 = vld [vmem:[%s1242] sm:$0xf]
      %v1244 = vld [vmem:[%s1242 + $0x4] sm:$0xf]
      %v1245 = vld [vmem:[%s1242 + $0x8] sm:$0xf]
      %v1246 = vld [vmem:[%s1242 + $0xc] sm:$0xf]
      %v1247 = vld [vmem:[%s1242 + $0x10] sm:$0xf]
      %v1248 = vld [vmem:[%s1242 + $0x14] sm:$0xf]
      %v1249 = vld [vmem:[%s1242 + $0x18] sm:$0xf]
      %v1250 = vld [vmem:[%s1242 + $0x1c] sm:$0xf]
      %v1251 = vld [vmem:[%s1242 + $0x20] sm:$0xf]
      %v1252 = vld [vmem:[%s1242 + $0x24] sm:$0xf]
      %v1253 = vld [vmem:[%s1242 + $0x28] sm:$0xf]
      %v1254 = vld [vmem:[%s1242 + $0x2c] sm:$0xf]
      %v1255 = vld [vmem:[%s1242 + $0x30] sm:$0xf]
      %v1256 = vld [vmem:[%s1242 + $0x34] sm:$0xf]
      %v1257 = vld [vmem:[%s1242 + $0x38] sm:$0xf]
      %v1258 = vld [vmem:[%s1242 + $0x3c] sm:$0xf]
      %s1259 = scalar_lea.vmem %s3, 384
      %v1260 = vld [vmem:[%s1259] sm:$0xf]
      %v1261 = vld [vmem:[%s1259 + $0x4] sm:$0xf]
      %v1262 = vld [vmem:[%s1259 + $0x8] sm:$0xf]
      %v1263 = vld [vmem:[%s1259 + $0xc] sm:$0xf]
      %v1264 = vld [vmem:[%s1259 + $0x10] sm:$0xf]
      %v1265 = vld [vmem:[%s1259 + $0x14] sm:$0xf]
      %v1266 = vld [vmem:[%s1259 + $0x18] sm:$0xf]
      %v1267 = vld [vmem:[%s1259 + $0x1c] sm:$0xf]
      %v1268 = vld [vmem:[%s1259 + $0x20] sm:$0xf]
      %v1269 = vld [vmem:[%s1259 + $0x24] sm:$0xf]
      %v1270 = vld [vmem:[%s1259 + $0x28] sm:$0xf]
      %v1271 = vld [vmem:[%s1259 + $0x2c] sm:$0xf]
      %v1272 = vld [vmem:[%s1259 + $0x30] sm:$0xf]
      %v1273 = vld [vmem:[%s1259 + $0x34] sm:$0xf]
      %v1274 = vld [vmem:[%s1259 + $0x38] sm:$0xf]
      %v1275 = vld [vmem:[%s1259 + $0x3c] sm:$0xf]
      %s1276 = scalar_lea.vmem %s3, 448
      %v1277 = vld [vmem:[%s1276] sm:$0xf]
      %v1278 = vld [vmem:[%s1276 + $0x4] sm:$0xf]
      %v1279 = vld [vmem:[%s1276 + $0x8] sm:$0xf]
      %v1280 = vld [vmem:[%s1276 + $0xc] sm:$0xf]
      %v1281 = vld [vmem:[%s1276 + $0x10] sm:$0xf]
      %v1282 = vld [vmem:[%s1276 + $0x14] sm:$0xf]
      %v1283 = vld [vmem:[%s1276 + $0x18] sm:$0xf]
      %v1284 = vld [vmem:[%s1276 + $0x1c] sm:$0xf]
      %v1285 = vld [vmem:[%s1276 + $0x20] sm:$0xf]
      %v1286 = vld [vmem:[%s1276 + $0x24] sm:$0xf]
      %v1287 = vld [vmem:[%s1276 + $0x28] sm:$0xf]
      %v1288 = vld [vmem:[%s1276 + $0x2c] sm:$0xf]
      %v1289 = vld [vmem:[%s1276 + $0x30] sm:$0xf]
      %v1290 = vld [vmem:[%s1276 + $0x34] sm:$0xf]
      %v1291 = vld [vmem:[%s1276 + $0x38] sm:$0xf]
      %v1292 = vld [vmem:[%s1276 + $0x3c] sm:$0xf]
      %s1293 = scalar_lea.vmem %s3, 512
      %v1294 = vld [vmem:[%s1293] sm:$0xf]
      %v1295 = vld [vmem:[%s1293 + $0x4] sm:$0xf]
      %v1296 = vld [vmem:[%s1293 + $0x8] sm:$0xf]
      %v1297 = vld [vmem:[%s1293 + $0xc] sm:$0xf]
      %v1298 = vld [vmem:[%s1293 + $0x10] sm:$0xf]
      %v1299 = vld [vmem:[%s1293 + $0x14] sm:$0xf]
      %v1300 = vld [vmem:[%s1293 + $0x18] sm:$0xf]
      %v1301 = vld [vmem:[%s1293 + $0x1c] sm:$0xf]
      %v1302 = vld [vmem:[%s1293 + $0x20] sm:$0xf]
      %v1303 = vld [vmem:[%s1293 + $0x24] sm:$0xf]
      %v1304 = vld [vmem:[%s1293 + $0x28] sm:$0xf]
      %v1305 = vld [vmem:[%s1293 + $0x2c] sm:$0xf]
      %v1306 = vld [vmem:[%s1293 + $0x30] sm:$0xf]
      %v1307 = vld [vmem:[%s1293 + $0x34] sm:$0xf]
      %v1308 = vld [vmem:[%s1293 + $0x38] sm:$0xf]
      %v1309 = vld [vmem:[%s1293 + $0x3c] sm:$0xf]
      %v1310 = vld [vmem:[#allocation2] sm:$0xf]
      %v1311 = vld [vmem:[#allocation2 + $0x4] sm:$0xf]
      %v1312 = vld [vmem:[#allocation2 + $0xc] sm:$0xf]
      %v1313 = vld [vmem:[#allocation2 + $0x10] sm:$0xf]
      %v1314 = vld [vmem:[#allocation2 + $0x18] sm:$0xf]
      %v1315 = vld [vmem:[#allocation2 + $0x1c] sm:$0xf]
      %v1316 = vld [vmem:[#allocation2 + $0x24] sm:$0xf]
      %v1317 = vld [vmem:[#allocation2 + $0x28] sm:$0xf]
      %v1318 = vld [vmem:[#allocation2 + $0x30] sm:$0xf]
      %v1319 = vld [vmem:[#allocation2 + $0x34] sm:$0xf]
      %v1320 = vld [vmem:[#allocation2 + $0x3c] sm:$0xf]
      %v1321 = vld [vmem:[#allocation2 + $0x40] sm:$0xf]
      %v1322 = vld [vmem:[#allocation2 + $0x48] sm:$0xf]
      %v1323 = vld [vmem:[#allocation2 + $0x4c] sm:$0xf]
      %v1324 = vld [vmem:[#allocation2 + $0x54] sm:$0xf]
      %v1325 = vld [vmem:[#allocation2 + $0x58] sm:$0xf]
      %v1326 = vld [vmem:[#allocation2 + $0x60] sm:$0xf]
      %v1327 = vld [vmem:[#allocation2 + $0x64] sm:$0xf]
      %v1328 = vld [vmem:[#allocation2 + $0x6c] sm:$0xf]
      %v1329 = vld [vmem:[#allocation2 + $0x70] sm:$0xf]
      %v1330 = vld [vmem:[#allocation2 + $0x78] sm:$0xf]
      %v1331 = vld [vmem:[#allocation2 + $0x7c] sm:$0xf]
      %v1332 = vld [vmem:[#allocation2 + $0x84] sm:$0xf]
      %v1333 = vld [vmem:[#allocation2 + $0x88] sm:$0xf]
      %v1334 = vld [vmem:[#allocation2 + $0x90] sm:$0xf]
      %v1335 = vld [vmem:[#allocation2 + $0x94] sm:$0xf]
      %v1336 = vld [vmem:[#allocation2 + $0x9c] sm:$0xf]
      %v1337 = vld [vmem:[#allocation2 + $0xa0] sm:$0xf]
      %v1338 = vld [vmem:[#allocation2 + $0xa8] sm:$0xf]
      %v1339 = vld [vmem:[#allocation2 + $0xac] sm:$0xf]
      %v1340 = vld [vmem:[#allocation2 + $0xb4] sm:$0xf]
      %v1341 = vld [vmem:[#allocation2 + $0xb8] sm:$0xf]
      %v1342 = vld [vmem:[#allocation2 + $0x8] sm:$0x1]
      %v1343 = vld [vmem:[#allocation2 + $0x14] sm:$0x1]
      %v1344 = vld [vmem:[#allocation2 + $0x20] sm:$0x1]
      %v1345 = vld [vmem:[#allocation2 + $0x2c] sm:$0x1]
      %v1346 = vld [vmem:[#allocation2 + $0x38] sm:$0x1]
      %v1347 = vld [vmem:[#allocation2 + $0x44] sm:$0x1]
      %v1348 = vld [vmem:[#allocation2 + $0x50] sm:$0x1]
      %v1349 = vld [vmem:[#allocation2 + $0x5c] sm:$0x1]
      %v1350 = vld [vmem:[#allocation2 + $0x68] sm:$0x1]
      %v1351 = vld [vmem:[#allocation2 + $0x74] sm:$0x1]
      %v1352 = vld [vmem:[#allocation2 + $0x80] sm:$0x1]
      %v1353 = vld [vmem:[#allocation2 + $0x8c] sm:$0x1]
      %v1354 = vld [vmem:[#allocation2 + $0x98] sm:$0x1]
      %v1355 = vld [vmem:[#allocation2 + $0xa4] sm:$0x1]
      %v1356 = vld [vmem:[#allocation2 + $0xb0] sm:$0x1]
      %v1357 = vld [vmem:[#allocation2 + $0xbc] sm:$0x1]
      %vm1358 = vsmask.f32 3328
      %vm1359 = vsmask.f32 7440
      %vm1360 = vmor %vm1358, %vm1359
      %v1362 = vshrl.u32 %v1310, 16
      %v1364 = vrot.slane %v1362, 4
      %v1365 = vshll.u32 %v1310, 16
      %v1367 = vrot.slane %v1365, 5
      %v1368 = vor.u32 %v1364, %v1367
      %v1369 = vrot.slane %v1368, 4
      %v1371 = vshll.u32 %v1311, 16
      %v1373 = vrot.slane %v1371, 5
      %v1374 = vsel %vm1360, %v1369, %v1373
      %v1375 = vshrl.u32 %v1311, 16
      %v1377 = vrot.slane %v1375, 4
      %v1378 = vor.u32 %v1377, %v1373
      %v1379 = vrot.slane %v1378, 4
      %v1381 = vshll.u32 %v1342, 16
      %v1383 = vrot.slane %v1381, 5
      %v1384 = vsel %vm1360, %v1379, %v1383
      %v1386 = vshrl.u32 %v1312, 16
      %v1388 = vrot.slane %v1386, 4
      %v1389 = vshll.u32 %v1312, 16
      %v1391 = vrot.slane %v1389, 5
      %v1392 = vor.u32 %v1388, %v1391
      %v1393 = vrot.slane %v1392, 4
      %v1395 = vshll.u32 %v1313, 16
      %v1397 = vrot.slane %v1395, 5
      %v1398 = vsel %vm1360, %v1393, %v1397
      %v1399 = vshrl.u32 %v1313, 16
      %v1401 = vrot.slane %v1399, 4
      %v1402 = vor.u32 %v1401, %v1397
      %v1403 = vrot.slane %v1402, 4
      %v1405 = vshll.u32 %v1343, 16
      %v1407 = vrot.slane %v1405, 5
      %v1408 = vsel %vm1360, %v1403, %v1407
      %v1410 = vshrl.u32 %v1314, 16
      %v1412 = vrot.slane %v1410, 4
      %v1413 = vshll.u32 %v1314, 16
      %v1415 = vrot.slane %v1413, 5
      %v1416 = vor.u32 %v1412, %v1415
      %v1417 = vrot.slane %v1416, 4
      %v1419 = vshll.u32 %v1315, 16
      %v1421 = vrot.slane %v1419, 5
      %v1422 = vsel %vm1360, %v1417, %v1421
      %v1423 = vshrl.u32 %v1315, 16
      %v1425 = vrot.slane %v1423, 4
      %v1426 = vor.u32 %v1425, %v1421
      %v1427 = vrot.slane %v1426, 4
      %v1429 = vshll.u32 %v1344, 16
      %v1431 = vrot.slane %v1429, 5
      %v1432 = vsel %vm1360, %v1427, %v1431
      %v1434 = vshrl.u32 %v1316, 16
      %v1436 = vrot.slane %v1434, 4
      %v1437 = vshll.u32 %v1316, 16
      %v1439 = vrot.slane %v1437, 5
      %v1440 = vor.u32 %v1436, %v1439
      %v1441 = vrot.slane %v1440, 4
      %v1443 = vshll.u32 %v1317, 16
      %v1445 = vrot.slane %v1443, 5
      %v1446 = vsel %vm1360, %v1441, %v1445
      %v1447 = vshrl.u32 %v1317, 16
      %v1449 = vrot.slane %v1447, 4
      %v1450 = vor.u32 %v1449, %v1445
      %v1451 = vrot.slane %v1450, 4
      %v1453 = vshll.u32 %v1345, 16
      %v1455 = vrot.slane %v1453, 5
      %v1456 = vsel %vm1360, %v1451, %v1455
      %v1458 = vshrl.u32 %v1318, 16
      %v1460 = vrot.slane %v1458, 4
      %v1461 = vshll.u32 %v1318, 16
      %v1463 = vrot.slane %v1461, 5
      %v1464 = vor.u32 %v1460, %v1463
      %v1465 = vrot.slane %v1464, 4
      %v1467 = vshll.u32 %v1319, 16
      %v1469 = vrot.slane %v1467, 5
      %v1470 = vsel %vm1360, %v1465, %v1469
      %v1471 = vshrl.u32 %v1319, 16
      %v1473 = vrot.slane %v1471, 4
      %v1474 = vor.u32 %v1473, %v1469
      %v1475 = vrot.slane %v1474, 4
      %v1477 = vshll.u32 %v1346, 16
      %v1479 = vrot.slane %v1477, 5
      %v1480 = vsel %vm1360, %v1475, %v1479
      %v1482 = vshrl.u32 %v1320, 16
      %v1484 = vrot.slane %v1482, 4
      %v1485 = vshll.u32 %v1320, 16
      %v1487 = vrot.slane %v1485, 5
      %v1488 = vor.u32 %v1484, %v1487
      %v1489 = vrot.slane %v1488, 4
      %v1491 = vshll.u32 %v1321, 16
      %v1493 = vrot.slane %v1491, 5
      %v1494 = vsel %vm1360, %v1489, %v1493
      %v1495 = vshrl.u32 %v1321, 16
      %v1497 = vrot.slane %v1495, 4
      %v1498 = vor.u32 %v1497, %v1493
      %v1499 = vrot.slane %v1498, 4
      %v1501 = vshll.u32 %v1347, 16
      %v1503 = vrot.slane %v1501, 5
      %v1504 = vsel %vm1360, %v1499, %v1503
      %v1506 = vshrl.u32 %v1322, 16
      %v1508 = vrot.slane %v1506, 4
      %v1509 = vshll.u32 %v1322, 16
      %v1511 = vrot.slane %v1509, 5
      %v1512 = vor.u32 %v1508, %v1511
      %v1513 = vrot.slane %v1512, 4
      %v1515 = vshll.u32 %v1323, 16
      %v1517 = vrot.slane %v1515, 5
      %v1518 = vsel %vm1360, %v1513, %v1517
      %v1519 = vshrl.u32 %v1323, 16
      %v1521 = vrot.slane %v1519, 4
      %v1522 = vor.u32 %v1521, %v1517
      %v1523 = vrot.slane %v1522, 4
      %v1525 = vshll.u32 %v1348, 16
      %v1527 = vrot.slane %v1525, 5
      %v1528 = vsel %vm1360, %v1523, %v1527
      %v1530 = vshrl.u32 %v1324, 16
      %v1532 = vrot.slane %v1530, 4
      %v1533 = vshll.u32 %v1324, 16
      %v1535 = vrot.slane %v1533, 5
      %v1536 = vor.u32 %v1532, %v1535
      %v1537 = vrot.slane %v1536, 4
      %v1539 = vshll.u32 %v1325, 16
      %v1541 = vrot.slane %v1539, 5
      %v1542 = vsel %vm1360, %v1537, %v1541
      %v1543 = vshrl.u32 %v1325, 16
      %v1545 = vrot.slane %v1543, 4
      %v1546 = vor.u32 %v1545, %v1541
      %v1547 = vrot.slane %v1546, 4
      %v1549 = vshll.u32 %v1349, 16
      %v1551 = vrot.slane %v1549, 5
      %v1552 = vsel %vm1360, %v1547, %v1551
      %v1554 = vshrl.u32 %v1326, 16
      %v1556 = vrot.slane %v1554, 4
      %v1557 = vshll.u32 %v1326, 16
      %v1559 = vrot.slane %v1557, 5
      %v1560 = vor.u32 %v1556, %v1559
      %v1561 = vrot.slane %v1560, 4
      %v1563 = vshll.u32 %v1327, 16
      %v1565 = vrot.slane %v1563, 5
      %v1566 = vsel %vm1360, %v1561, %v1565
      %v1567 = vshrl.u32 %v1327, 16
      %v1569 = vrot.slane %v1567, 4
      %v1570 = vor.u32 %v1569, %v1565
      %v1571 = vrot.slane %v1570, 4
      %v1573 = vshll.u32 %v1350, 16
      %v1575 = vrot.slane %v1573, 5
      %v1576 = vsel %vm1360, %v1571, %v1575
      %v1578 = vshrl.u32 %v1328, 16
      %v1580 = vrot.slane %v1578, 4
      %v1581 = vshll.u32 %v1328, 16
      %v1583 = vrot.slane %v1581, 5
      %v1584 = vor.u32 %v1580, %v1583
      %v1585 = vrot.slane %v1584, 4
      %v1587 = vshll.u32 %v1329, 16
      %v1589 = vrot.slane %v1587, 5
      %v1590 = vsel %vm1360, %v1585, %v1589
      %v1591 = vshrl.u32 %v1329, 16
      %v1593 = vrot.slane %v1591, 4
      %v1594 = vor.u32 %v1593, %v1589
      %v1595 = vrot.slane %v1594, 4
      %v1597 = vshll.u32 %v1351, 16
      %v1599 = vrot.slane %v1597, 5
      %v1600 = vsel %vm1360, %v1595, %v1599
      %v1602 = vshrl.u32 %v1330, 16
      %v1604 = vrot.slane %v1602, 4
      %v1605 = vshll.u32 %v1330, 16
      %v1607 = vrot.slane %v1605, 5
      %v1608 = vor.u32 %v1604, %v1607
      %v1609 = vrot.slane %v1608, 4
      %v1611 = vshll.u32 %v1331, 16
      %v1613 = vrot.slane %v1611, 5
      %v1614 = vsel %vm1360, %v1609, %v1613
      %v1615 = vshrl.u32 %v1331, 16
      %v1617 = vrot.slane %v1615, 4
      %v1618 = vor.u32 %v1617, %v1613
      %v1619 = vrot.slane %v1618, 4
      %v1621 = vshll.u32 %v1352, 16
      %v1623 = vrot.slane %v1621, 5
      %v1624 = vsel %vm1360, %v1619, %v1623
      %v1626 = vshrl.u32 %v1332, 16
      %v1628 = vrot.slane %v1626, 4
      %v1629 = vshll.u32 %v1332, 16
      %v1631 = vrot.slane %v1629, 5
      %v1632 = vor.u32 %v1628, %v1631
      %v1633 = vrot.slane %v1632, 4
      %v1635 = vshll.u32 %v1333, 16
      %v1637 = vrot.slane %v1635, 5
      %v1638 = vsel %vm1360, %v1633, %v1637
      %v1639 = vshrl.u32 %v1333, 16
      %v1641 = vrot.slane %v1639, 4
      %v1642 = vor.u32 %v1641, %v1637
      %v1643 = vrot.slane %v1642, 4
      %v1645 = vshll.u32 %v1353, 16
      %v1647 = vrot.slane %v1645, 5
      %v1648 = vsel %vm1360, %v1643, %v1647
      %v1650 = vshrl.u32 %v1334, 16
      %v1652 = vrot.slane %v1650, 4
      %v1653 = vshll.u32 %v1334, 16
      %v1655 = vrot.slane %v1653, 5
      %v1656 = vor.u32 %v1652, %v1655
      %v1657 = vrot.slane %v1656, 4
      %v1659 = vshll.u32 %v1335, 16
      %v1661 = vrot.slane %v1659, 5
      %v1662 = vsel %vm1360, %v1657, %v1661
      %v1663 = vshrl.u32 %v1335, 16
      %v1665 = vrot.slane %v1663, 4
      %v1666 = vor.u32 %v1665, %v1661
      %v1667 = vrot.slane %v1666, 4
      %v1669 = vshll.u32 %v1354, 16
      %v1671 = vrot.slane %v1669, 5
      %v1672 = vsel %vm1360, %v1667, %v1671
      %v1674 = vshrl.u32 %v1336, 16
      %v1676 = vrot.slane %v1674, 4
      %v1677 = vshll.u32 %v1336, 16
      %v1679 = vrot.slane %v1677, 5
      %v1680 = vor.u32 %v1676, %v1679
      %v1681 = vrot.slane %v1680, 4
      %v1683 = vshll.u32 %v1337, 16
      %v1685 = vrot.slane %v1683, 5
      %v1686 = vsel %vm1360, %v1681, %v1685
      %v1687 = vshrl.u32 %v1337, 16
      %v1689 = vrot.slane %v1687, 4
      %v1690 = vor.u32 %v1689, %v1685
      %v1691 = vrot.slane %v1690, 4
      %v1693 = vshll.u32 %v1355, 16
      %v1695 = vrot.slane %v1693, 5
      %v1696 = vsel %vm1360, %v1691, %v1695
      %v1698 = vshrl.u32 %v1338, 16
      %v1700 = vrot.slane %v1698, 4
      %v1701 = vshll.u32 %v1338, 16
      %v1703 = vrot.slane %v1701, 5
      %v1704 = vor.u32 %v1700, %v1703
      %v1705 = vrot.slane %v1704, 4
      %v1707 = vshll.u32 %v1339, 16
      %v1709 = vrot.slane %v1707, 5
      %v1710 = vsel %vm1360, %v1705, %v1709
      %v1711 = vshrl.u32 %v1339, 16
      %v1713 = vrot.slane %v1711, 4
      %v1714 = vor.u32 %v1713, %v1709
      %v1715 = vrot.slane %v1714, 4
      %v1717 = vshll.u32 %v1356, 16
      %v1719 = vrot.slane %v1717, 5
      %v1720 = vsel %vm1360, %v1715, %v1719
      %v1722 = vshrl.u32 %v1340, 16
      %v1724 = vrot.slane %v1722, 4
      %v1725 = vshll.u32 %v1340, 16
      %v1727 = vrot.slane %v1725, 5
      %v1728 = vor.u32 %v1724, %v1727
      %v1729 = vrot.slane %v1728, 4
      %v1731 = vshll.u32 %v1341, 16
      %v1733 = vrot.slane %v1731, 5
      %v1734 = vsel %vm1360, %v1729, %v1733
      %v1735 = vshrl.u32 %v1341, 16
      %v1737 = vrot.slane %v1735, 4
      %v1738 = vor.u32 %v1737, %v1733
      %v1739 = vrot.slane %v1738, 4
      %v1741 = vshll.u32 %v1357, 16
      %v1743 = vrot.slane %v1741, 5
      %v1744 = vsel %vm1360, %v1739, %v1743
      %v1745 = vunpack.c.l.b16 %v1374
      %v1746 = vunpack.c.l.b16 %v1384
      %v1747 = vunpack.c.l.b16 %v1398
      %v1748 = vunpack.c.l.b16 %v1408
      %v1749 = vunpack.c.l.b16 %v1422
      %v1750 = vunpack.c.l.b16 %v1432
      %v1751 = vunpack.c.l.b16 %v1446
      %v1752 = vunpack.c.l.b16 %v1456
      %v1753 = vunpack.c.l.b16 %v1470
      %v1754 = vunpack.c.l.b16 %v1480
      %v1755 = vunpack.c.l.b16 %v1494
      %v1756 = vunpack.c.l.b16 %v1504
      %v1757 = vunpack.c.l.b16 %v1518
      %v1758 = vunpack.c.l.b16 %v1528
      %v1759 = vunpack.c.l.b16 %v1542
      %v1760 = vunpack.c.l.b16 %v1552
      %v1761 = vunpack.c.l.b16 %v1566
      %v1762 = vunpack.c.l.b16 %v1576
      %v1763 = vunpack.c.l.b16 %v1590
      %v1764 = vunpack.c.l.b16 %v1600
      %v1765 = vunpack.c.l.b16 %v1614
      %v1766 = vunpack.c.l.b16 %v1624
      %v1767 = vunpack.c.l.b16 %v1638
      %v1768 = vunpack.c.l.b16 %v1648
      %v1769 = vunpack.c.l.b16 %v1662
      %v1770 = vunpack.c.l.b16 %v1672
      %v1771 = vunpack.c.l.b16 %v1686
      %v1772 = vunpack.c.l.b16 %v1696
      %v1773 = vunpack.c.l.b16 %v1710
      %v1774 = vunpack.c.l.b16 %v1720
      %v1775 = vunpack.c.l.b16 %v1734
      %v1776 = vunpack.c.l.b16 %v1744
      %v1777 = vpack.c.b16 %v1746, %v1745
      %v1778 = vpack.c.b16 %v1748, %v1747
      %v1779 = vpack.c.b16 %v1750, %v1749
      %v1780 = vpack.c.b16 %v1752, %v1751
      %v1781 = vpack.c.b16 %v1754, %v1753
      %v1782 = vpack.c.b16 %v1756, %v1755
      %v1783 = vpack.c.b16 %v1758, %v1757
      %v1784 = vpack.c.b16 %v1760, %v1759
      %v1785 = vpack.c.b16 %v1762, %v1761
      %v1786 = vpack.c.b16 %v1764, %v1763
      %v1787 = vpack.c.b16 %v1766, %v1765
      %v1788 = vpack.c.b16 %v1768, %v1767
      %v1789 = vpack.c.b16 %v1770, %v1769
      %v1790 = vpack.c.b16 %v1772, %v1771
      %v1791 = vpack.c.b16 %v1774, %v1773
      %v1792 = vpack.c.b16 %v1776, %v1775
      %v1825 = vunpack.c.l.b16 %v1175
      %v1826 = vunpack.c.l.b16 %v1176
      %v1827 = vunpack.c.l.b16 %v1177
      %v1828 = vunpack.c.l.b16 %v1178
      %v1829 = vunpack.c.l.b16 %v1179
      %v1830 = vunpack.c.l.b16 %v1180
      %v1831 = vunpack.c.l.b16 %v1181
      %v1832 = vunpack.c.l.b16 %v1182
      %v1833 = vunpack.c.l.b16 %v1183
      %v1834 = vunpack.c.l.b16 %v1184
      %v1835 = vunpack.c.l.b16 %v1185
      %v1836 = vunpack.c.l.b16 %v1186
      %v1837 = vunpack.c.l.b16 %v1187
      %v1838 = vunpack.c.l.b16 %v1188
      %v1839 = vunpack.c.l.b16 %v1189
      %v1840 = vunpack.c.l.b16 %v1190
      %v1841 = vpack.c.b16 %v1826, %v1825
      %v1842 = vpack.c.b16 %v1828, %v1827
      %v1843 = vpack.c.b16 %v1830, %v1829
      %v1844 = vpack.c.b16 %v1832, %v1831
      %v1845 = vpack.c.b16 %v1834, %v1833
      %v1846 = vpack.c.b16 %v1836, %v1835
      %v1847 = vpack.c.b16 %v1838, %v1837
      %v1848 = vpack.c.b16 %v1840, %v1839
      %1857 = vmatprep.subr.bf16.mxu0 0
      %1858 = vmatpush1.bf16.msra.mxu0 %v1841
      %1859 = vmatprep.subr.bf16.mxu0 0
      %1860 = vmatpush1.bf16.msra.mxu0 %v1842
      %1861 = vmatprep.subr.bf16.mxu0 0
      %1862 = vmatpush1.bf16.msra.mxu0 %v1843
      %1863 = vmatprep.subr.bf16.mxu0 0
      %1864 = vmatpush1.bf16.msra.mxu0 %v1844
      %1865 = vmatprep.subr.bf16.mxu0 0
      %1866 = vmatpush1.bf16.msra.mxu0 %v1845
      %1867 = vmatprep.subr.bf16.mxu0 0
      %1868 = vmatpush1.bf16.msra.mxu0 %v1846
      %1869 = vmatprep.subr.bf16.mxu0 0
      %1870 = vmatpush1.bf16.msra.mxu0 %v1847
      %1871 = vmatprep.subr.bf16.mxu0 0
      %1872 = vmatpush1.bf16.msra.mxu0 %v1848
      %1873 = vmatprep.subr.bf16.mxu0 0
      %1874 = vmatpush1.bf16.msra.mxu0 0
      %1875 = vmatprep.subr.bf16.mxu0 0
      %1876 = vmatpush1.bf16.msra.mxu0 0
      %1877 = vmatprep.subr.bf16.mxu0 0
      %1878 = vmatpush1.bf16.msra.mxu0 0
      %1879 = vmatprep.subr.bf16.mxu0 0
      %1880 = vmatpush1.bf16.msra.mxu0 0
      %1881 = vmatprep.subr.bf16.mxu0 0
      %1882 = vmatpush1.bf16.msra.mxu0 0
      %1883 = vmatprep.subr.bf16.mxu0 0
      %1884 = vmatpush1.bf16.msra.mxu0 0
      %1885 = vmatprep.subr.bf16.mxu0 0
      %1886 = vmatpush1.bf16.msra.mxu0 0
      %1887 = vmatprep.subr.bf16.mxu0 0
      %1888 = vmatpush1.bf16.msra.mxu0 0
      %1889 = vmatprep.mubr.bf16.mxu0 0
      %1890 = vmatmul.mubr.bf16.gmra.mrb[0].mxu0 %v1777
      %v1891 = vpop.f32.mrb[0].mxu0
      %v1892 = vadd.f32 0.0, %v1891
      %v1893 = vpop.f32.mrb[0].mxu0
      %v1894 = vpop.f32.mrb[0].mxu0
      %v1895 = vadd.f32 0.0, %v1894
      %v1896 = vpop.f32.mrb[0].mxu0
      %1897 = vmatprep.mubr.bf16.mxu0 0
      %1898 = vmatmul.mubr.bf16.gmra.mrb[0].mxu0 %v1778
      %v1899 = vpop.f32.mrb[0].mxu0
      %v1900 = vadd.f32 0.0, %v1899
      %v1901 = vpop.f32.mrb[0].mxu0
      %v1902 = vpop.f32.mrb[0].mxu0
      %v1903 = vadd.f32 0.0, %v1902
      %v1904 = vpop.f32.mrb[0].mxu0
      %1905 = vmatprep.mubr.bf16.mxu0 0
      %1906 = vmatmul.mubr.bf16.gmra.mrb[0].mxu0 %v1779
      %v1907 = vpop.f32.mrb[0].mxu0
      %v1908 = vadd.f32 0.0, %v1907
      %v1909 = vpop.f32.mrb[0].mxu0
      %v1910 = vpop.f32.mrb[0].mxu0
      %v1911 = vadd.f32 0.0, %v1910
      %v1912 = vpop.f32.mrb[0].mxu0
      %1913 = vmatprep.mubr.bf16.mxu0 0
      %1914 = vmatmul.mubr.bf16.gmra.mrb[0].mxu0 %v1780
      %v1915 = vpop.f32.mrb[0].mxu0
      %v1916 = vadd.f32 0.0, %v1915
      %v1917 = vpop.f32.mrb[0].mxu0
      %v1918 = vpop.f32.mrb[0].mxu0
      %v1919 = vadd.f32 0.0, %v1918
      %v1920 = vpop.f32.mrb[0].mxu0
      %1921 = vmatprep.mubr.bf16.mxu0 0
      %1922 = vmatmul.mubr.bf16.gmra.mrb[0].mxu0 %v1781
      %v1923 = vpop.f32.mrb[0].mxu0
      %v1924 = vadd.f32 0.0, %v1923
      %v1925 = vpop.f32.mrb[0].mxu0
      %v1926 = vpop.f32.mrb[0].mxu0
      %v1927 = vadd.f32 0.0, %v1926
      %v1928 = vpop.f32.mrb[0].mxu0
      %1929 = vmatprep.mubr.bf16.mxu0 0
      %1930 = vmatmul.mubr.bf16.gmra.mrb[0].mxu0 %v1782
      %v1931 = vpop.f32.mrb[0].mxu0
      %v1932 = vadd.f32 0.0, %v1931
      %v1933 = vpop.f32.mrb[0].mxu0
      %v1934 = vpop.f32.mrb[0].mxu0
      %v1935 = vadd.f32 0.0, %v1934
      %v1936 = vpop.f32.mrb[0].mxu0
      %1937 = vmatprep.mubr.bf16.mxu0 0
      %1938 = vmatmul.mubr.bf16.gmra.mrb[0].mxu0 %v1783
      %v1939 = vpop.f32.mrb[0].mxu0
      %v1940 = vadd.f32 0.0, %v1939
      %v1941 = vpop.f32.mrb[0].mxu0
      %v1942 = vpop.f32.mrb[0].mxu0
      %v1943 = vadd.f32 0.0, %v1942
      %v1944 = vpop.f32.mrb[0].mxu0
      %1945 = vmatprep.mubr.bf16.mxu0 0
      %1946 = vmatmul.mubr.bf16.gmra.mrb[0].mxu0 %v1784
      %v1947 = vpop.f32.mrb[0].mxu0
      %v1948 = vadd.f32 0.0, %v1947
      %v1949 = vpop.f32.mrb[0].mxu0
      %v1950 = vpop.f32.mrb[0].mxu0
      %v1951 = vadd.f32 0.0, %v1950
      %v1952 = vpop.f32.mrb[0].mxu0
      %1953 = vmatprep.mubr.bf16.mxu0 0
      %1954 = vmatmul.mubr.bf16.gmra.mrb[0].mxu0 %v1785
      %v1955 = vpop.f32.mrb[0].mxu0
      %v1956 = vadd.f32 0.0, %v1955
      %v1957 = vpop.f32.mrb[0].mxu0
      %v1958 = vpop.f32.mrb[0].mxu0
      %v1959 = vadd.f32 0.0, %v1958
      %v1960 = vpop.f32.mrb[0].mxu0
      %1961 = vmatprep.mubr.bf16.mxu0 0
      %1962 = vmatmul.mubr.bf16.gmra.mrb[0].mxu0 %v1786
      %v1963 = vpop.f32.mrb[0].mxu0
      %v1964 = vadd.f32 0.0, %v1963
      %v1965 = vpop.f32.mrb[0].mxu0
      %v1966 = vpop.f32.mrb[0].mxu0
      %v1967 = vadd.f32 0.0, %v1966
      %v1968 = vpop.f32.mrb[0].mxu0
      %1969 = vmatprep.mubr.bf16.mxu0 0
      %1970 = vmatmul.mubr.bf16.gmra.mrb[0].mxu0 %v1787
      %v1971 = vpop.f32.mrb[0].mxu0
      %v1972 = vadd.f32 0.0, %v1971
      %v1973 = vpop.f32.mrb[0].mxu0
      %v1974 = vpop.f32.mrb[0].mxu0
      %v1975 = vadd.f32 0.0, %v1974
      %v1976 = vpop.f32.mrb[0].mxu0
      %1977 = vmatprep.mubr.bf16.mxu0 0
      %1978 = vmatmul.mubr.bf16.gmra.mrb[0].mxu0 %v1788
      %v1979 = vpop.f32.mrb[0].mxu0
      %v1980 = vadd.f32 0.0, %v1979
      %v1981 = vpop.f32.mrb[0].mxu0
      %v1982 = vpop.f32.mrb[0].mxu0
      %v1983 = vadd.f32 0.0, %v1982
      %v1984 = vpop.f32.mrb[0].mxu0
      %1985 = vmatprep.mubr.bf16.mxu0 0
      %1986 = vmatmul.mubr.bf16.gmra.mrb[0].mxu0 %v1789
      %v1987 = vpop.f32.mrb[0].mxu0
      %v1988 = vadd.f32 0.0, %v1987
      %v1989 = vpop.f32.mrb[0].mxu0
      %v1990 = vpop.f32.mrb[0].mxu0
      %v1991 = vadd.f32 0.0, %v1990
      %v1992 = vpop.f32.mrb[0].mxu0
      %1993 = vmatprep.mubr.bf16.mxu0 0
      %1994 = vmatmul.mubr.bf16.gmra.mrb[0].mxu0 %v1790
      %v1995 = vpop.f32.mrb[0].mxu0
      %v1996 = vadd.f32 0.0, %v1995
      %v1997 = vpop.f32.mrb[0].mxu0
      %v1998 = vpop.f32.mrb[0].mxu0
      %v1999 = vadd.f32 0.0, %v1998
      %v2000 = vpop.f32.mrb[0].mxu0
      %2001 = vmatprep.mubr.bf16.mxu0 0
      %2002 = vmatmul.mubr.bf16.gmra.mrb[0].mxu0 %v1791
      %v2003 = vpop.f32.mrb[0].mxu0
      %v2004 = vadd.f32 0.0, %v2003
      %v2005 = vpop.f32.mrb[0].mxu0
      %v2006 = vpop.f32.mrb[0].mxu0
      %v2007 = vadd.f32 0.0, %v2006
      %v2008 = vpop.f32.mrb[0].mxu0
      %2009 = vmatprep.mubr.bf16.mxu0 0
      %2010 = vmatmul.mubr.bf16.gmra.mrb[0].mxu0 %v1792
      %v2011 = vpop.f32.mrb[0].mxu0
      %v2012 = vadd.f32 0.0, %v2011
      %v2013 = vpop.f32.mrb[0].mxu0
      %v2014 = vpop.f32.mrb[0].mxu0
      %v2015 = vadd.f32 0.0, %v2014
      %v2016 = vpop.f32.mrb[0].mxu0
      %2017 = vdwg.mxu0
      %v2050 = vunpack.c.l.b16 %v1310
      %v2051 = vunpack.c.l.b16 %v1311
      %v2052 = vunpack.c.l.b16 %v1312
      %v2053 = vunpack.c.l.b16 %v1313
      %v2054 = vunpack.c.l.b16 %v1314
      %v2055 = vunpack.c.l.b16 %v1315
      %v2056 = vunpack.c.l.b16 %v1316
      %v2057 = vunpack.c.l.b16 %v1317
      %v2058 = vunpack.c.l.b16 %v1318
      %v2059 = vunpack.c.l.b16 %v1319
      %v2060 = vunpack.c.l.b16 %v1320
      %v2061 = vunpack.c.l.b16 %v1321
      %v2062 = vunpack.c.l.b16 %v1322
      %v2063 = vunpack.c.l.b16 %v1323
      %v2064 = vunpack.c.l.b16 %v1324
      %v2065 = vunpack.c.l.b16 %v1325
      %v2066 = vunpack.c.l.b16 %v1326
      %v2067 = vunpack.c.l.b16 %v1327
      %v2068 = vunpack.c.l.b16 %v1328
      %v2069 = vunpack.c.l.b16 %v1329
      %v2070 = vunpack.c.l.b16 %v1330
      %v2071 = vunpack.c.l.b16 %v1331
      %v2072 = vunpack.c.l.b16 %v1332
      %v2073 = vunpack.c.l.b16 %v1333
      %v2074 = vunpack.c.l.b16 %v1334
      %v2075 = vunpack.c.l.b16 %v1335
      %v2076 = vunpack.c.l.b16 %v1336
      %v2077 = vunpack.c.l.b16 %v1337
      %v2078 = vunpack.c.l.b16 %v1338
      %v2079 = vunpack.c.l.b16 %v1339
      %v2080 = vunpack.c.l.b16 %v1340
      %v2081 = vunpack.c.l.b16 %v1341
      %v2082 = vpack.c.b16 %v2051, %v2050
      %v2083 = vpack.c.b16 %v2053, %v2052
      %v2084 = vpack.c.b16 %v2055, %v2054
      %v2085 = vpack.c.b16 %v2057, %v2056
      %v2086 = vpack.c.b16 %v2059, %v2058
      %v2087 = vpack.c.b16 %v2061, %v2060
      %v2088 = vpack.c.b16 %v2063, %v2062
      %v2089 = vpack.c.b16 %v2065, %v2064
      %v2090 = vpack.c.b16 %v2067, %v2066
      %v2091 = vpack.c.b16 %v2069, %v2068
      %v2092 = vpack.c.b16 %v2071, %v2070
      %v2093 = vpack.c.b16 %v2073, %v2072
      %v2094 = vpack.c.b16 %v2075, %v2074
      %v2095 = vpack.c.b16 %v2077, %v2076
      %v2096 = vpack.c.b16 %v2079, %v2078
      %v2097 = vpack.c.b16 %v2081, %v2080
      %v2130 = vunpack.c.l.b16 %v1158
      %v2131 = vunpack.c.l.b16 %v1159
      %v2132 = vunpack.c.l.b16 %v1160
      %v2133 = vunpack.c.l.b16 %v1161
      %v2134 = vunpack.c.l.b16 %v1162
      %v2135 = vunpack.c.l.b16 %v1163
      %v2136 = vunpack.c.l.b16 %v1164
      %v2137 = vunpack.c.l.b16 %v1165
      %v2138 = vunpack.c.l.b16 %v1166
      %v2139 = vunpack.c.l.b16 %v1167
      %v2140 = vunpack.c.l.b16 %v1168
      %v2141 = vunpack.c.l.b16 %v1169
      %v2142 = vunpack.c.l.b16 %v1170
      %v2143 = vunpack.c.l.b16 %v1171
      %v2144 = vunpack.c.l.b16 %v1172
      %v2145 = vunpack.c.l.b16 %v1173
      %v2146 = vpack.c.b16 %v2131, %v2130
      %v2147 = vpack.c.b16 %v2133, %v2132
      %v2148 = vpack.c.b16 %v2135, %v2134
      %v2149 = vpack.c.b16 %v2137, %v2136
      %v2150 = vpack.c.b16 %v2139, %v2138
      %v2151 = vpack.c.b16 %v2141, %v2140
      %v2152 = vpack.c.b16 %v2143, %v2142
      %v2153 = vpack.c.b16 %v2145, %v2144
      %2162 = vmatprep.subr.bf16.mxu0 0
      %2163 = vmatpush1.bf16.msra.mxu0 %v2146
      %2164 = vmatprep.subr.bf16.mxu0 0
      %2165 = vmatpush1.bf16.msra.mxu0 %v2147
      %2166 = vmatprep.subr.bf16.mxu0 0
      %2167 = vmatpush1.bf16.msra.mxu0 %v2148
      %2168 = vmatprep.subr.bf16.mxu0 0
      %2169 = vmatpush1.bf16.msra.mxu0 %v2149
      %2170 = vmatprep.subr.bf16.mxu0 0
      %2171 = vmatpush1.bf16.msra.mxu0 %v2150
      %2172 = vmatprep.subr.bf16.mxu0 0
      %2173 = vmatpush1.bf16.msra.mxu0 %v2151
      %2174 = vmatprep.subr.bf16.mxu0 0
      %2175 = vmatpush1.bf16.msra.mxu0 %v2152
      %2176 = vmatprep.subr.bf16.mxu0 0
      %2177 = vmatpush1.bf16.msra.mxu0 %v2153
      %2178 = vmatprep.subr.bf16.mxu0 0
      %2179 = vmatpush1.bf16.msra.mxu0 0
      %2180 = vmatprep.subr.bf16.mxu0 0
      %2181 = vmatpush1.bf16.msra.mxu0 0
      %2182 = vmatprep.subr.bf16.mxu0 0
      %2183 = vmatpush1.bf16.msra.mxu0 0
      %2184 = vmatprep.subr.bf16.mxu0 0
      %2185 = vmatpush1.bf16.msra.mxu0 0
      %2186 = vmatprep.subr.bf16.mxu0 0
      %2187 = vmatpush1.bf16.msra.mxu0 0
      %2188 = vmatprep.subr.bf16.mxu0 0
      %2189 = vmatpush1.bf16.msra.mxu0 0
      %2190 = vmatprep.subr.bf16.mxu0 0
      %2191 = vmatpush1.bf16.msra.mxu0 0
      %2192 = vmatprep.subr.bf16.mxu0 0
      %2193 = vmatpush1.bf16.msra.mxu0 0
      %2194 = vmatprep.mubr.bf16.mxu0 0
      %2195 = vmatmul.mubr.bf16.gmra.mrb[0].mxu0 %v2082
      %v2196 = vpop.f32.mrb[0].mxu0
      %v2197 = vadd.f32 %v1892, %v2196
      %v2198 = vpop.f32.mrb[0].mxu0
      %v2199 = vpop.f32.mrb[0].mxu0
      %v2200 = vadd.f32 %v1895, %v2199
      %v2201 = vpop.f32.mrb[0].mxu0
      %2202 = vmatprep.mubr.bf16.mxu0 0
      %2203 = vmatmul.mubr.bf16.gmra.mrb[0].mxu0 %v2083
      %v2204 = vpop.f32.mrb[0].mxu0
      %v2205 = vadd.f32 %v1900, %v2204
      %v2206 = vpop.f32.mrb[0].mxu0
      %v2207 = vpop.f32.mrb[0].mxu0
      %v2208 = vadd.f32 %v1903, %v2207
      %v2209 = vpop.f32.mrb[0].mxu0
      %2210 = vmatprep.mubr.bf16.mxu0 0
      %2211 = vmatmul.mubr.bf16.gmra.mrb[0].mxu0 %v2084
      %v2212 = vpop.f32.mrb[0].mxu0
      %v2213 = vadd.f32 %v1908, %v2212
      %v2214 = vpop.f32.mrb[0].mxu0
      %v2215 = vpop.f32.mrb[0].mxu0
      %v2216 = vadd.f32 %v1911, %v2215
      %v2217 = vpop.f32.mrb[0].mxu0
      %2218 = vmatprep.mubr.bf16.mxu0 0
      %2219 = vmatmul.mubr.bf16.gmra.mrb[0].mxu0 %v2085
      %v2220 = vpop.f32.mrb[0].mxu0
      %v2221 = vadd.f32 %v1916, %v2220
      %v2222 = vpop.f32.mrb[0].mxu0
      %v2223 = vpop.f32.mrb[0].mxu0
      %v2224 = vadd.f32 %v1919, %v2223
      %v2225 = vpop.f32.mrb[0].mxu0
      %2226 = vmatprep.mubr.bf16.mxu0 0
      %2227 = vmatmul.mubr.bf16.gmra.mrb[0].mxu0 %v2086
      %v2228 = vpop.f32.mrb[0].mxu0
      %v2229 = vadd.f32 %v1924, %v2228
      %v2230 = vpop.f32.mrb[0].mxu0
      %v2231 = vpop.f32.mrb[0].mxu0
      %v2232 = vadd.f32 %v1927, %v2231
      %v2233 = vpop.f32.mrb[0].mxu0
      %2234 = vmatprep.mubr.bf16.mxu0 0
      %2235 = vmatmul.mubr.bf16.gmra.mrb[0].mxu0 %v2087
      %v2236 = vpop.f32.mrb[0].mxu0
      %v2237 = vadd.f32 %v1932, %v2236
      %v2238 = vpop.f32.mrb[0].mxu0
      %v2239 = vpop.f32.mrb[0].mxu0
      %v2240 = vadd.f32 %v1935, %v2239
      %v2241 = vpop.f32.mrb[0].mxu0
      %2242 = vmatprep.mubr.bf16.mxu0 0
      %2243 = vmatmul.mubr.bf16.gmra.mrb[0].mxu0 %v2088
      %v2244 = vpop.f32.mrb[0].mxu0
      %v2245 = vadd.f32 %v1940, %v2244
      %v2246 = vpop.f32.mrb[0].mxu0
      %v2247 = vpop.f32.mrb[0].mxu0
      %v2248 = vadd.f32 %v1943, %v2247
      %v2249 = vpop.f32.mrb[0].mxu0
      %2250 = vmatprep.mubr.bf16.mxu0 0
      %2251 = vmatmul.mubr.bf16.gmra.mrb[0].mxu0 %v2089
      %v2252 = vpop.f32.mrb[0].mxu0
      %v2253 = vadd.f32 %v1948, %v2252
      %v2254 = vpop.f32.mrb[0].mxu0
      %v2255 = vpop.f32.mrb[0].mxu0
      %v2256 = vadd.f32 %v1951, %v2255
      %v2257 = vpop.f32.mrb[0].mxu0
      %2258 = vmatprep.mubr.bf16.mxu0 0
      %2259 = vmatmul.mubr.bf16.gmra.mrb[0].mxu0 %v2090
      %v2260 = vpop.f32.mrb[0].mxu0
      %v2261 = vadd.f32 %v1956, %v2260
      %v2262 = vpop.f32.mrb[0].mxu0
      %v2263 = vpop.f32.mrb[0].mxu0
      %v2264 = vadd.f32 %v1959, %v2263
      %v2265 = vpop.f32.mrb[0].mxu0
      %2266 = vmatprep.mubr.bf16.mxu0 0
      %2267 = vmatmul.mubr.bf16.gmra.mrb[0].mxu0 %v2091
      %v2268 = vpop.f32.mrb[0].mxu0
      %v2269 = vadd.f32 %v1964, %v2268
      %v2270 = vpop.f32.mrb[0].mxu0
      %v2271 = vpop.f32.mrb[0].mxu0
      %v2272 = vadd.f32 %v1967, %v2271
      %v2273 = vpop.f32.mrb[0].mxu0
      %2274 = vmatprep.mubr.bf16.mxu0 0
      %2275 = vmatmul.mubr.bf16.gmra.mrb[0].mxu0 %v2092
      %v2276 = vpop.f32.mrb[0].mxu0
      %v2277 = vadd.f32 %v1972, %v2276
      %v2278 = vpop.f32.mrb[0].mxu0
      %v2279 = vpop.f32.mrb[0].mxu0
      %v2280 = vadd.f32 %v1975, %v2279
      %v2281 = vpop.f32.mrb[0].mxu0
      %2282 = vmatprep.mubr.bf16.mxu0 0
      %2283 = vmatmul.mubr.bf16.gmra.mrb[0].mxu0 %v2093
      %v2284 = vpop.f32.mrb[0].mxu0
      %v2285 = vadd.f32 %v1980, %v2284
      %v2286 = vpop.f32.mrb[0].mxu0
      %v2287 = vpop.f32.mrb[0].mxu0
      %v2288 = vadd.f32 %v1983, %v2287
      %v2289 = vpop.f32.mrb[0].mxu0
      %2290 = vmatprep.mubr.bf16.mxu0 0
      %2291 = vmatmul.mubr.bf16.gmra.mrb[0].mxu0 %v2094
      %v2292 = vpop.f32.mrb[0].mxu0
      %v2293 = vadd.f32 %v1988, %v2292
      %v2294 = vpop.f32.mrb[0].mxu0
      %v2295 = vpop.f32.mrb[0].mxu0
      %v2296 = vadd.f32 %v1991, %v2295
      %v2297 = vpop.f32.mrb[0].mxu0
      %2298 = vmatprep.mubr.bf16.mxu0 0
      %2299 = vmatmul.mubr.bf16.gmra.mrb[0].mxu0 %v2095
      %v2300 = vpop.f32.mrb[0].mxu0
      %v2301 = vadd.f32 %v1996, %v2300
      %v2302 = vpop.f32.mrb[0].mxu0
      %v2303 = vpop.f32.mrb[0].mxu0
      %v2304 = vadd.f32 %v1999, %v2303
      %v2305 = vpop.f32.mrb[0].mxu0
      %2306 = vmatprep.mubr.bf16.mxu0 0
      %2307 = vmatmul.mubr.bf16.gmra.mrb[0].mxu0 %v2096
      %v2308 = vpop.f32.mrb[0].mxu0
      %v2309 = vadd.f32 %v2004, %v2308
      %v2310 = vpop.f32.mrb[0].mxu0
      %v2311 = vpop.f32.mrb[0].mxu0
      %v2312 = vadd.f32 %v2007, %v2311
      %v2313 = vpop.f32.mrb[0].mxu0
      %2314 = vmatprep.mubr.bf16.mxu0 0
      %2315 = vmatmul.mubr.bf16.gmra.mrb[0].mxu0 %v2097
      %v2316 = vpop.f32.mrb[0].mxu0
      %v2317 = vadd.f32 %v2012, %v2316
      %v2318 = vpop.f32.mrb[0].mxu0
      %v2319 = vpop.f32.mrb[0].mxu0
      %v2320 = vadd.f32 %v2015, %v2319
      %v2321 = vpop.f32.mrb[0].mxu0
      %2322 = vdwg.mxu0
      %v2323 = vld [vmem:[#allocation2] sm:$0xe]
      %v2324 = vld [vmem:[#allocation2 + $0xc] sm:$0xe]
      %v2325 = vld [vmem:[#allocation2 + $0x18] sm:$0xe]
      %v2326 = vld [vmem:[#allocation2 + $0x24] sm:$0xe]
      %v2327 = vld [vmem:[#allocation2 + $0x30] sm:$0xe]
      %v2328 = vld [vmem:[#allocation2 + $0x3c] sm:$0xe]
      %v2329 = vld [vmem:[#allocation2 + $0x48] sm:$0xe]
      %v2330 = vld [vmem:[#allocation2 + $0x54] sm:$0xe]
      %v2331 = vld [vmem:[#allocation2 + $0x60] sm:$0xe]
      %v2332 = vld [vmem:[#allocation2 + $0x6c] sm:$0xe]
      %v2333 = vld [vmem:[#allocation2 + $0x78] sm:$0xe]
      %v2334 = vld [vmem:[#allocation2 + $0x84] sm:$0xe]
      %v2335 = vld [vmem:[#allocation2 + $0x90] sm:$0xe]
      %v2336 = vld [vmem:[#allocation2 + $0x9c] sm:$0xe]
      %v2337 = vld [vmem:[#allocation2 + $0xa8] sm:$0xe]
      %v2338 = vld [vmem:[#allocation2 + $0xb4] sm:$0xe]
      %vm2371 = vcmask 1042432
      %vm2372 = vcmask 1046532
      %vm2373 = vmor %vm2371, %vm2372
      %v2374 = vrot.slane %v2323, 5
      %v2375 = vrot.slane %v2374, 4
      %v2376 = vrot.slane %v1311, 5
      %v2377 = vsel %vm2373, %v2375, %v2376
      %v2378 = vrot.slane %v2376, 4
      %v2379 = vrot.slane %v1342, 5
      %v2380 = vsel %vm2373, %v2378, %v2379
      %v2381 = vrot.slane %v2324, 5
      %v2382 = vrot.slane %v2381, 4
      %v2383 = vrot.slane %v1313, 5
      %v2384 = vsel %vm2373, %v2382, %v2383
      %v2385 = vrot.slane %v2383, 4
      %v2386 = vrot.slane %v1343, 5
      %v2387 = vsel %vm2373, %v2385, %v2386
      %v2388 = vrot.slane %v2325, 5
      %v2389 = vrot.slane %v2388, 4
      %v2390 = vrot.slane %v1315, 5
      %v2391 = vsel %vm2373, %v2389, %v2390
      %v2392 = vrot.slane %v2390, 4
      %v2393 = vrot.slane %v1344, 5
      %v2394 = vsel %vm2373, %v2392, %v2393
      %v2395 = vrot.slane %v2326, 5
      %v2396 = vrot.slane %v2395, 4
      %v2397 = vrot.slane %v1317, 5
      %v2398 = vsel %vm2373, %v2396, %v2397
      %v2399 = vrot.slane %v2397, 4
      %v2400 = vrot.slane %v1345, 5
      %v2401 = vsel %vm2373, %v2399, %v2400
      %v2402 = vrot.slane %v2327, 5
      %v2403 = vrot.slane %v2402, 4
      %v2404 = vrot.slane %v1319, 5
      %v2405 = vsel %vm2373, %v2403, %v2404
      %v2406 = vrot.slane %v2404, 4
      %v2407 = vrot.slane %v1346, 5
      %v2408 = vsel %vm2373, %v2406, %v2407
      %v2409 = vrot.slane %v2328, 5
      %v2410 = vrot.slane %v2409, 4
      %v2411 = vrot.slane %v1321, 5
      %v2412 = vsel %vm2373, %v2410, %v2411
      %v2413 = vrot.slane %v2411, 4
      %v2414 = vrot.slane %v1347, 5
      %v2415 = vsel %vm2373, %v2413, %v2414
      %v2416 = vrot.slane %v2329, 5
      %v2417 = vrot.slane %v2416, 4
      %v2418 = vrot.slane %v1323, 5
      %v2419 = vsel %vm2373, %v2417, %v2418
      %v2420 = vrot.slane %v2418, 4
      %v2421 = vrot.slane %v1348, 5
      %v2422 = vsel %vm2373, %v2420, %v2421
      %v2423 = vrot.slane %v2330, 5
      %v2424 = vrot.slane %v2423, 4
      %v2425 = vrot.slane %v1325, 5
      %v2426 = vsel %vm2373, %v2424, %v2425
      %v2427 = vrot.slane %v2425, 4
      %v2428 = vrot.slane %v1349, 5
      %v2429 = vsel %vm2373, %v2427, %v2428
      %v2430 = vrot.slane %v2331, 5
      %v2431 = vrot.slane %v2430, 4
      %v2432 = vrot.slane %v1327, 5
      %v2433 = vsel %vm2373, %v2431, %v2432
      %v2434 = vrot.slane %v2432, 4
      %v2435 = vrot.slane %v1350, 5
      %v2436 = vsel %vm2373, %v2434, %v2435
      %v2437 = vrot.slane %v2332, 5
      %v2438 = vrot.slane %v2437, 4
      %v2439 = vrot.slane %v1329, 5
      %v2440 = vsel %vm2373, %v2438, %v2439
      %v2441 = vrot.slane %v2439, 4
      %v2442 = vrot.slane %v1351, 5
      %v2443 = vsel %vm2373, %v2441, %v2442
      %v2444 = vrot.slane %v2333, 5
      %v2445 = vrot.slane %v2444, 4
      %v2446 = vrot.slane %v1331, 5
      %v2447 = vsel %vm2373, %v2445, %v2446
      %v2448 = vrot.slane %v2446, 4
      %v2449 = vrot.slane %v1352, 5
      %v2450 = vsel %vm2373, %v2448, %v2449
      %v2451 = vrot.slane %v2334, 5
      %v2452 = vrot.slane %v2451, 4
      %v2453 = vrot.slane %v1333, 5
      %v2454 = vsel %vm2373, %v2452, %v2453
      %v2455 = vrot.slane %v2453, 4
      %v2456 = vrot.slane %v1353, 5
      %v2457 = vsel %vm2373, %v2455, %v2456
      %v2458 = vrot.slane %v2335, 5
      %v2459 = vrot.slane %v2458, 4
      %v2460 = vrot.slane %v1335, 5
      %v2461 = vsel %vm2373, %v2459, %v2460
      %v2462 = vrot.slane %v2460, 4
      %v2463 = vrot.slane %v1354, 5
      %v2464 = vsel %vm2373, %v2462, %v2463
      %v2465 = vrot.slane %v2336, 5
      %v2466 = vrot.slane %v2465, 4
      %v2467 = vrot.slane %v1337, 5
      %v2468 = vsel %vm2373, %v2466, %v2467
      %v2469 = vrot.slane %v2467, 4
      %v2470 = vrot.slane %v1355, 5
      %v2471 = vsel %vm2373, %v2469, %v2470
      %v2472 = vrot.slane %v2337, 5
      %v2473 = vrot.slane %v2472, 4
      %v2474 = vrot.slane %v1339, 5
      %v2475 = vsel %vm2373, %v2473, %v2474
      %v2476 = vrot.slane %v2474, 4
      %v2477 = vrot.slane %v1356, 5
      %v2478 = vsel %vm2373, %v2476, %v2477
      %v2479 = vrot.slane %v2338, 5
      %v2480 = vrot.slane %v2479, 4
      %v2481 = vrot.slane %v1341, 5
      %v2482 = vsel %vm2373, %v2480, %v2481
      %v2483 = vrot.slane %v2481, 4
      %v2484 = vrot.slane %v1357, 5
      %v2485 = vsel %vm2373, %v2483, %v2484
      %v2486 = vunpack.c.l.b16 %v2377
      %v2487 = vunpack.c.l.b16 %v2380
      %v2488 = vunpack.c.l.b16 %v2384
      %v2489 = vunpack.c.l.b16 %v2387
      %v2490 = vunpack.c.l.b16 %v2391
      %v2491 = vunpack.c.l.b16 %v2394
      %v2492 = vunpack.c.l.b16 %v2398
      %v2493 = vunpack.c.l.b16 %v2401
      %v2494 = vunpack.c.l.b16 %v2405
      %v2495 = vunpack.c.l.b16 %v2408
      %v2496 = vunpack.c.l.b16 %v2412
      %v2497 = vunpack.c.l.b16 %v2415
      %v2498 = vunpack.c.l.b16 %v2419
      %v2499 = vunpack.c.l.b16 %v2422
      %v2500 = vunpack.c.l.b16 %v2426
      %v2501 = vunpack.c.l.b16 %v2429
      %v2502 = vunpack.c.l.b16 %v2433
      %v2503 = vunpack.c.l.b16 %v2436
      %v2504 = vunpack.c.l.b16 %v2440
      %v2505 = vunpack.c.l.b16 %v2443
      %v2506 = vunpack.c.l.b16 %v2447
      %v2507 = vunpack.c.l.b16 %v2450
      %v2508 = vunpack.c.l.b16 %v2454
      %v2509 = vunpack.c.l.b16 %v2457
      %v2510 = vunpack.c.l.b16 %v2461
      %v2511 = vunpack.c.l.b16 %v2464
      %v2512 = vunpack.c.l.b16 %v2468
      %v2513 = vunpack.c.l.b16 %v2471
      %v2514 = vunpack.c.l.b16 %v2475
      %v2515 = vunpack.c.l.b16 %v2478
      %v2516 = vunpack.c.l.b16 %v2482
      %v2517 = vunpack.c.l.b16 %v2485
      %v2518 = vpack.c.b16 %v2487, %v2486
      %v2519 = vpack.c.b16 %v2489, %v2488
      %v2520 = vpack.c.b16 %v2491, %v2490
      %v2521 = vpack.c.b16 %v2493, %v2492
      %v2522 = vpack.c.b16 %v2495, %v2494
      %v2523 = vpack.c.b16 %v2497, %v2496
      %v2524 = vpack.c.b16 %v2499, %v2498
      %v2525 = vpack.c.b16 %v2501, %v2500
      %v2526 = vpack.c.b16 %v2503, %v2502
      %v2527 = vpack.c.b16 %v2505, %v2504
      %v2528 = vpack.c.b16 %v2507, %v2506
      %v2529 = vpack.c.b16 %v2509, %v2508
      %v2530 = vpack.c.b16 %v2511, %v2510
      %v2531 = vpack.c.b16 %v2513, %v2512
      %v2532 = vpack.c.b16 %v2515, %v2514
      %v2533 = vpack.c.b16 %v2517, %v2516
      %v2566 = vunpack.c.l.b16 %v1192
      %v2567 = vunpack.c.l.b16 %v1193
      %v2568 = vunpack.c.l.b16 %v1194
      %v2569 = vunpack.c.l.b16 %v1195
      %v2570 = vunpack.c.l.b16 %v1196
      %v2571 = vunpack.c.l.b16 %v1197
      %v2572 = vunpack.c.l.b16 %v1198
      %v2573 = vunpack.c.l.b16 %v1199
      %v2574 = vunpack.c.l.b16 %v1200
      %v2575 = vunpack.c.l.b16 %v1201
      %v2576 = vunpack.c.l.b16 %v1202
      %v2577 = vunpack.c.l.b16 %v1203
      %v2578 = vunpack.c.l.b16 %v1204
      %v2579 = vunpack.c.l.b16 %v1205
      %v2580 = vunpack.c.l.b16 %v1206
      %v2581 = vunpack.c.l.b16 %v1207
      %v2582 = vpack.c.b16 %v2567, %v2566
      %v2583 = vpack.c.b16 %v2569, %v2568
      %v2584 = vpack.c.b16 %v2571, %v2570
      %v2585 = vpack.c.b16 %v2573, %v2572
      %v2586 = vpack.c.b16 %v2575, %v2574
      %v2587 = vpack.c.b16 %v2577, %v2576
      %v2588 = vpack.c.b16 %v2579, %v2578
      %v2589 = vpack.c.b16 %v2581, %v2580
      %2598 = vmatprep.subr.bf16.mxu0 0
      %2599 = vmatpush1.bf16.msra.mxu0 %v2582
      %2600 = vmatprep.subr.bf16.mxu0 0
      %2601 = vmatpush1.bf16.msra.mxu0 %v2583
      %2602 = vmatprep.subr.bf16.mxu0 0
      %2603 = vmatpush1.bf16.msra.mxu0 %v2584
      %2604 = vmatprep.subr.bf16.mxu0 0
      %2605 = vmatpush1.bf16.msra.mxu0 %v2585
      %2606 = vmatprep.subr.bf16.mxu0 0
      %2607 = vmatpush1.bf16.msra.mxu0 %v2586
      %2608 = vmatprep.subr.bf16.mxu0 0
      %2609 = vmatpush1.bf16.msra.mxu0 %v2587
      %2610 = vmatprep.subr.bf16.mxu0 0
      %2611 = vmatpush1.bf16.msra.mxu0 %v2588
      %2612 = vmatprep.subr.bf16.mxu0 0
      %2613 = vmatpush1.bf16.msra.mxu0 %v2589
      %2614 = vmatprep.subr.bf16.mxu0 0
      %2615 = vmatpush1.bf16.msra.mxu0 0
      %2616 = vmatprep.subr.bf16.mxu0 0
      %2617 = vmatpush1.bf16.msra.mxu0 0
      %2618 = vmatprep.subr.bf16.mxu0 0
      %2619 = vmatpush1.bf16.msra.mxu0 0
      %2620 = vmatprep.subr.bf16.mxu0 0
      %2621 = vmatpush1.bf16.msra.mxu0 0
      %2622 = vmatprep.subr.bf16.mxu0 0
      %2623 = vmatpush1.bf16.msra.mxu0 0
      %2624 = vmatprep.subr.bf16.mxu0 0
      %2625 = vmatpush1.bf16.msra.mxu0 0
      %2626 = vmatprep.subr.bf16.mxu0 0
      %2627 = vmatpush1.bf16.msra.mxu0 0
      %2628 = vmatprep.subr.bf16.mxu0 0
      %2629 = vmatpush1.bf16.msra.mxu0 0
      %2630 = vmatprep.mubr.bf16.mxu0 0
      %2631 = vmatmul.mubr.bf16.gmra.mrb[0].mxu0 %v2518
      %v2632 = vpop.f32.mrb[0].mxu0
      %v2633 = vadd.f32 0.0, %v2632
      %v2634 = vpop.f32.mrb[0].mxu0
      %v2635 = vpop.f32.mrb[0].mxu0
      %v2636 = vadd.f32 0.0, %v2635
      %v2637 = vpop.f32.mrb[0].mxu0
      %2638 = vmatprep.mubr.bf16.mxu0 0
      %2639 = vmatmul.mubr.bf16.gmra.mrb[0].mxu0 %v2519
      %v2640 = vpop.f32.mrb[0].mxu0
      %v2641 = vadd.f32 0.0, %v2640
      %v2642 = vpop.f32.mrb[0].mxu0
      %v2643 = vpop.f32.mrb[0].mxu0
      %v2644 = vadd.f32 0.0, %v2643
      %v2645 = vpop.f32.mrb[0].mxu0
      %2646 = vmatprep.mubr.bf16.mxu0 0
      %2647 = vmatmul.mubr.bf16.gmra.mrb[0].mxu0 %v2520
      %v2648 = vpop.f32.mrb[0].mxu0
      %v2649 = vadd.f32 0.0, %v2648
      %v2650 = vpop.f32.mrb[0].mxu0
      %v2651 = vpop.f32.mrb[0].mxu0
      %v2652 = vadd.f32 0.0, %v2651
      %v2653 = vpop.f32.mrb[0].mxu0
      %2654 = vmatprep.mubr.bf16.mxu0 0
      %2655 = vmatmul.mubr.bf16.gmra.mrb[0].mxu0 %v2521
      %v2656 = vpop.f32.mrb[0].mxu0
      %v2657 = vadd.f32 0.0, %v2656
      %v2658 = vpop.f32.mrb[0].mxu0
      %v2659 = vpop.f32.mrb[0].mxu0
      %v2660 = vadd.f32 0.0, %v2659
      %v2661 = vpop.f32.mrb[0].mxu0
      %2662 = vmatprep.mubr.bf16.mxu0 0
      %2663 = vmatmul.mubr.bf16.gmra.mrb[0].mxu0 %v2522
      %v2664 = vpop.f32.mrb[0].mxu0
      %v2665 = vadd.f32 0.0, %v2664
      %v2666 = vpop.f32.mrb[0].mxu0
      %v2667 = vpop.f32.mrb[0].mxu0
      %v2668 = vadd.f32 0.0, %v2667
      %v2669 = vpop.f32.mrb[0].mxu0
      %2670 = vmatprep.mubr.bf16.mxu0 0
      %2671 = vmatmul.mubr.bf16.gmra.mrb[0].mxu0 %v2523
      %v2672 = vpop.f32.mrb[0].mxu0
      %v2673 = vadd.f32 0.0, %v2672
      %v2674 = vpop.f32.mrb[0].mxu0
      %v2675 = vpop.f32.mrb[0].mxu0
      %v2676 = vadd.f32 0.0, %v2675
      %v2677 = vpop.f32.mrb[0].mxu0
      %2678 = vmatprep.mubr.bf16.mxu0 0
      %2679 = vmatmul.mubr.bf16.gmra.mrb[0].mxu0 %v2524
      %v2680 = vpop.f32.mrb[0].mxu0
      %v2681 = vadd.f32 0.0, %v2680
      %v2682 = vpop.f32.mrb[0].mxu0
      %v2683 = vpop.f32.mrb[0].mxu0
      %v2684 = vadd.f32 0.0, %v2683
      %v2685 = vpop.f32.mrb[0].mxu0
      %2686 = vmatprep.mubr.bf16.mxu0 0
      %2687 = vmatmul.mubr.bf16.gmra.mrb[0].mxu0 %v2525
      %v2688 = vpop.f32.mrb[0].mxu0
      %v2689 = vadd.f32 0.0, %v2688
      %v2690 = vpop.f32.mrb[0].mxu0
      %v2691 = vpop.f32.mrb[0].mxu0
      %v2692 = vadd.f32 0.0, %v2691
      %v2693 = vpop.f32.mrb[0].mxu0
      %2694 = vmatprep.mubr.bf16.mxu0 0
      %2695 = vmatmul.mubr.bf16.gmra.mrb[0].mxu0 %v2526
      %v2696 = vpop.f32.mrb[0].mxu0
      %v2697 = vadd.f32 0.0, %v2696
      %v2698 = vpop.f32.mrb[0].mxu0
      %v2699 = vpop.f32.mrb[0].mxu0
      %v2700 = vadd.f32 0.0, %v2699
      %v2701 = vpop.f32.mrb[0].mxu0
      %2702 = vmatprep.mubr.bf16.mxu0 0
      %2703 = vmatmul.mubr.bf16.gmra.mrb[0].mxu0 %v2527
      %v2704 = vpop.f32.mrb[0].mxu0
      %v2705 = vadd.f32 0.0, %v2704
      %v2706 = vpop.f32.mrb[0].mxu0
      %v2707 = vpop.f32.mrb[0].mxu0
      %v2708 = vadd.f32 0.0, %v2707
      %v2709 = vpop.f32.mrb[0].mxu0
      %2710 = vmatprep.mubr.bf16.mxu0 0
      %2711 = vmatmul.mubr.bf16.gmra.mrb[0].mxu0 %v2528
      %v2712 = vpop.f32.mrb[0].mxu0
      %v2713 = vadd.f32 0.0, %v2712
      %v2714 = vpop.f32.mrb[0].mxu0
      %v2715 = vpop.f32.mrb[0].mxu0
      %v2716 = vadd.f32 0.0, %v2715
      %v2717 = vpop.f32.mrb[0].mxu0
      %2718 = vmatprep.mubr.bf16.mxu0 0
      %2719 = vmatmul.mubr.bf16.gmra.mrb[0].mxu0 %v2529
      %v2720 = vpop.f32.mrb[0].mxu0
      %v2721 = vadd.f32 0.0, %v2720
      %v2722 = vpop.f32.mrb[0].mxu0
      %v2723 = vpop.f32.mrb[0].mxu0
      %v2724 = vadd.f32 0.0, %v2723
      %v2725 = vpop.f32.mrb[0].mxu0
      %2726 = vmatprep.mubr.bf16.mxu0 0
      %2727 = vmatmul.mubr.bf16.gmra.mrb[0].mxu0 %v2530
      %v2728 = vpop.f32.mrb[0].mxu0
      %v2729 = vadd.f32 0.0, %v2728
      %v2730 = vpop.f32.mrb[0].mxu0
      %v2731 = vpop.f32.mrb[0].mxu0
      %v2732 = vadd.f32 0.0, %v2731
      %v2733 = vpop.f32.mrb[0].mxu0
      %2734 = vmatprep.mubr.bf16.mxu0 0
      %2735 = vmatmul.mubr.bf16.gmra.mrb[0].mxu0 %v2531
      %v2736 = vpop.f32.mrb[0].mxu0
      %v2737 = vadd.f32 0.0, %v2736
      %v2738 = vpop.f32.mrb[0].mxu0
      %v2739 = vpop.f32.mrb[0].mxu0
      %v2740 = vadd.f32 0.0, %v2739
      %v2741 = vpop.f32.mrb[0].mxu0
      %2742 = vmatprep.mubr.bf16.mxu0 0
      %2743 = vmatmul.mubr.bf16.gmra.mrb[0].mxu0 %v2532
      %v2744 = vpop.f32.mrb[0].mxu0
      %v2745 = vadd.f32 0.0, %v2744
      %v2746 = vpop.f32.mrb[0].mxu0
      %v2747 = vpop.f32.mrb[0].mxu0
      %v2748 = vadd.f32 0.0, %v2747
      %v2749 = vpop.f32.mrb[0].mxu0
      %2750 = vmatprep.mubr.bf16.mxu0 0
      %2751 = vmatmul.mubr.bf16.gmra.mrb[0].mxu0 %v2533
      %v2752 = vpop.f32.mrb[0].mxu0
      %v2753 = vadd.f32 0.0, %v2752
      %v2754 = vpop.f32.mrb[0].mxu0
      %v2755 = vpop.f32.mrb[0].mxu0
      %v2756 = vadd.f32 0.0, %v2755
      %v2757 = vpop.f32.mrb[0].mxu0
      %2758 = vdwg.mxu0
      %v2759 = vadd.f32 %v2197, %v2633
      %v2760 = vadd.f32 %v2200, %v2636
      %v2761 = vadd.f32 %v2205, %v2641
      %v2762 = vadd.f32 %v2208, %v2644
      %v2763 = vadd.f32 %v2213, %v2649
      %v2764 = vadd.f32 %v2216, %v2652
      %v2765 = vadd.f32 %v2221, %v2657
      %v2766 = vadd.f32 %v2224, %v2660
      %v2767 = vadd.f32 %v2229, %v2665
      %v2768 = vadd.f32 %v2232, %v2668
      %v2769 = vadd.f32 %v2237, %v2673
      %v2770 = vadd.f32 %v2240, %v2676
      %v2771 = vadd.f32 %v2245, %v2681
      %v2772 = vadd.f32 %v2248, %v2684
      %v2773 = vadd.f32 %v2253, %v2689
      %v2774 = vadd.f32 %v2256, %v2692
      %v2775 = vadd.f32 %v2261, %v2697
      %v2776 = vadd.f32 %v2264, %v2700
      %v2777 = vadd.f32 %v2269, %v2705
      %v2778 = vadd.f32 %v2272, %v2708
      %v2779 = vadd.f32 %v2277, %v2713
      %v2780 = vadd.f32 %v2280, %v2716
      %v2781 = vadd.f32 %v2285, %v2721
      %v2782 = vadd.f32 %v2288, %v2724
      %v2783 = vadd.f32 %v2293, %v2729
      %v2784 = vadd.f32 %v2296, %v2732
      %v2785 = vadd.f32 %v2301, %v2737
      %v2786 = vadd.f32 %v2304, %v2740
      %v2787 = vadd.f32 %v2309, %v2745
      %v2788 = vadd.f32 %v2312, %v2748
      %v2789 = vadd.f32 %v2317, %v2753
      %v2790 = vadd.f32 %v2320, %v2756
      %v2791 = vld [vmem:[%s1043] sm:$0xf]
      %v2792 = vld [vmem:[%s1043 + $0x4] sm:$0xf]
      %v2793 = vld [vmem:[%s1043 + $0xc] sm:$0xf]
      %v2794 = vld [vmem:[%s1043 + $0x10] sm:$0xf]
      %v2795 = vld [vmem:[%s1043 + $0x18] sm:$0xf]
      %v2796 = vld [vmem:[%s1043 + $0x1c] sm:$0xf]
      %v2797 = vld [vmem:[%s1043 + $0x24] sm:$0xf]
      %v2798 = vld [vmem:[%s1043 + $0x28] sm:$0xf]
      %v2799 = vld [vmem:[%s1043 + $0x30] sm:$0xf]
      %v2800 = vld [vmem:[%s1043 + $0x34] sm:$0xf]
      %v2801 = vld [vmem:[%s1043 + $0x3c] sm:$0xf]
      %v2802 = vld [vmem:[%s1043 + $0x40] sm:$0xf]
      %v2803 = vld [vmem:[%s1043 + $0x48] sm:$0xf]
      %v2804 = vld [vmem:[%s1043 + $0x4c] sm:$0xf]
      %v2805 = vld [vmem:[%s1043 + $0x54] sm:$0xf]
      %v2806 = vld [vmem:[%s1043 + $0x58] sm:$0xf]
      %v2807 = vld [vmem:[%s1043 + $0x60] sm:$0xf]
      %v2808 = vld [vmem:[%s1043 + $0x64] sm:$0xf]
      %v2809 = vld [vmem:[%s1043 + $0x6c] sm:$0xf]
      %v2810 = vld [vmem:[%s1043 + $0x70] sm:$0xf]
      %v2811 = vld [vmem:[%s1043 + $0x78] sm:$0xf]
      %v2812 = vld [vmem:[%s1043 + $0x7c] sm:$0xf]
      %v2813 = vld [vmem:[%s1043 + $0x84] sm:$0xf]
      %v2814 = vld [vmem:[%s1043 + $0x88] sm:$0xf]
      %v2815 = vld [vmem:[%s1043 + $0x90] sm:$0xf]
      %v2816 = vld [vmem:[%s1043 + $0x94] sm:$0xf]
      %v2817 = vld [vmem:[%s1043 + $0x9c] sm:$0xf]
      %v2818 = vld [vmem:[%s1043 + $0xa0] sm:$0xf]
      %v2819 = vld [vmem:[%s1043 + $0xa8] sm:$0xf]
      %v2820 = vld [vmem:[%s1043 + $0xac] sm:$0xf]
      %v2821 = vld [vmem:[%s1043 + $0xb4] sm:$0xf]
      %v2822 = vld [vmem:[%s1043 + $0xb8] sm:$0xf]
      %v2855 = vunpack.c.l.b16 %v2791
      %v2856 = vunpack.c.l.b16 %v2792
      %v2857 = vunpack.c.l.b16 %v2793
      %v2858 = vunpack.c.l.b16 %v2794
      %v2859 = vunpack.c.l.b16 %v2795
      %v2860 = vunpack.c.l.b16 %v2796
      %v2861 = vunpack.c.l.b16 %v2797
      %v2862 = vunpack.c.l.b16 %v2798
      %v2863 = vunpack.c.l.b16 %v2799
      %v2864 = vunpack.c.l.b16 %v2800
      %v2865 = vunpack.c.l.b16 %v2801
      %v2866 = vunpack.c.l.b16 %v2802
      %v2867 = vunpack.c.l.b16 %v2803
      %v2868 = vunpack.c.l.b16 %v2804
      %v2869 = vunpack.c.l.b16 %v2805
      %v2870 = vunpack.c.l.b16 %v2806
      %v2871 = vunpack.c.l.b16 %v2807
      %v2872 = vunpack.c.l.b16 %v2808
      %v2873 = vunpack.c.l.b16 %v2809
      %v2874 = vunpack.c.l.b16 %v2810
      %v2875 = vunpack.c.l.b16 %v2811
      %v2876 = vunpack.c.l.b16 %v2812
      %v2877 = vunpack.c.l.b16 %v2813
      %v2878 = vunpack.c.l.b16 %v2814
      %v2879 = vunpack.c.l.b16 %v2815
      %v2880 = vunpack.c.l.b16 %v2816
      %v2881 = vunpack.c.l.b16 %v2817
      %v2882 = vunpack.c.l.b16 %v2818
      %v2883 = vunpack.c.l.b16 %v2819
      %v2884 = vunpack.c.l.b16 %v2820
      %v2885 = vunpack.c.l.b16 %v2821
      %v2886 = vunpack.c.l.b16 %v2822
      %v2887 = vpack.c.b16 %v2856, %v2855
      %v2888 = vpack.c.b16 %v2858, %v2857
      %v2889 = vpack.c.b16 %v2860, %v2859
      %v2890 = vpack.c.b16 %v2862, %v2861
      %v2891 = vpack.c.b16 %v2864, %v2863
      %v2892 = vpack.c.b16 %v2866, %v2865
      %v2893 = vpack.c.b16 %v2868, %v2867
      %v2894 = vpack.c.b16 %v2870, %v2869
      %v2895 = vpack.c.b16 %v2872, %v2871
      %v2896 = vpack.c.b16 %v2874, %v2873
      %v2897 = vpack.c.b16 %v2876, %v2875
      %v2898 = vpack.c.b16 %v2878, %v2877
      %v2899 = vpack.c.b16 %v2880, %v2879
      %v2900 = vpack.c.b16 %v2882, %v2881
      %v2901 = vpack.c.b16 %v2884, %v2883
      %v2902 = vpack.c.b16 %v2886, %v2885
      %v2935 = vunpack.c.l.b16 %v1209
      %v2936 = vunpack.c.l.b16 %v1210
      %v2937 = vunpack.c.l.b16 %v1211
      %v2938 = vunpack.c.l.b16 %v1212
      %v2939 = vunpack.c.l.b16 %v1213
      %v2940 = vunpack.c.l.b16 %v1214
      %v2941 = vunpack.c.l.b16 %v1215
      %v2942 = vunpack.c.l.b16 %v1216
      %v2943 = vunpack.c.l.b16 %v1217
      %v2944 = vunpack.c.l.b16 %v1218
      %v2945 = vunpack.c.l.b16 %v1219
      %v2946 = vunpack.c.l.b16 %v1220
      %v2947 = vunpack.c.l.b16 %v1221
      %v2948 = vunpack.c.l.b16 %v1222
      %v2949 = vunpack.c.l.b16 %v1223
      %v2950 = vunpack.c.l.b16 %v1224
      %v2951 = vpack.c.b16 %v2936, %v2935
      %v2952 = vpack.c.b16 %v2938, %v2937
      %v2953 = vpack.c.b16 %v2940, %v2939
      %v2954 = vpack.c.b16 %v2942, %v2941
      %v2955 = vpack.c.b16 %v2944, %v2943
      %v2956 = vpack.c.b16 %v2946, %v2945
      %v2957 = vpack.c.b16 %v2948, %v2947
      %v2958 = vpack.c.b16 %v2950, %v2949
      %2967 = vmatprep.subr.bf16.mxu0 0
      %2968 = vmatpush1.bf16.msra.mxu0 %v2951
      %2969 = vmatprep.subr.bf16.mxu0 0
      %2970 = vmatpush1.bf16.msra.mxu0 %v2952
      %2971 = vmatprep.subr.bf16.mxu0 0
      %2972 = vmatpush1.bf16.msra.mxu0 %v2953
      %2973 = vmatprep.subr.bf16.mxu0 0
      %2974 = vmatpush1.bf16.msra.mxu0 %v2954
      %2975 = vmatprep.subr.bf16.mxu0 0
      %2976 = vmatpush1.bf16.msra.mxu0 %v2955
      %2977 = vmatprep.subr.bf16.mxu0 0
      %2978 = vmatpush1.bf16.msra.mxu0 %v2956
      %2979 = vmatprep.subr.bf16.mxu0 0
      %2980 = vmatpush1.bf16.msra.mxu0 %v2957
      %2981 = vmatprep.subr.bf16.mxu0 0
      %2982 = vmatpush1.bf16.msra.mxu0 %v2958
      %2983 = vmatprep.subr.bf16.mxu0 0
      %2984 = vmatpush1.bf16.msra.mxu0 0
      %2985 = vmatprep.subr.bf16.mxu0 0
      %2986 = vmatpush1.bf16.msra.mxu0 0
      %2987 = vmatprep.subr.bf16.mxu0 0
      %2988 = vmatpush1.bf16.msra.mxu0 0
      %2989 = vmatprep.subr.bf16.mxu0 0
      %2990 = vmatpush1.bf16.msra.mxu0 0
      %2991 = vmatprep.subr.bf16.mxu0 0
      %2992 = vmatpush1.bf16.msra.mxu0 0
      %2993 = vmatprep.subr.bf16.mxu0 0
      %2994 = vmatpush1.bf16.msra.mxu0 0
      %2995 = vmatprep.subr.bf16.mxu0 0
      %2996 = vmatpush1.bf16.msra.mxu0 0
      %2997 = vmatprep.subr.bf16.mxu0 0
      %2998 = vmatpush1.bf16.msra.mxu0 0
      %2999 = vmatprep.mubr.bf16.mxu0 0
      %3000 = vmatmul.mubr.bf16.gmra.mrb[0].mxu0 %v2887
      %v3001 = vpop.f32.mrb[0].mxu0
      %v3002 = vadd.f32 0.0, %v3001
      %v3003 = vpop.f32.mrb[0].mxu0
      %v3004 = vpop.f32.mrb[0].mxu0
      %v3005 = vadd.f32 0.0, %v3004
      %v3006 = vpop.f32.mrb[0].mxu0
      %3007 = vmatprep.mubr.bf16.mxu0 0
      %3008 = vmatmul.mubr.bf16.gmra.mrb[0].mxu0 %v2888
      %v3009 = vpop.f32.mrb[0].mxu0
      %v3010 = vadd.f32 0.0, %v3009
      %v3011 = vpop.f32.mrb[0].mxu0
      %v3012 = vpop.f32.mrb[0].mxu0
      %v3013 = vadd.f32 0.0, %v3012
      %v3014 = vpop.f32.mrb[0].mxu0
      %3015 = vmatprep.mubr.bf16.mxu0 0
      %3016 = vmatmul.mubr.bf16.gmra.mrb[0].mxu0 %v2889
      %v3017 = vpop.f32.mrb[0].mxu0
      %v3018 = vadd.f32 0.0, %v3017
      %v3019 = vpop.f32.mrb[0].mxu0
      %v3020 = vpop.f32.mrb[0].mxu0
      %v3021 = vadd.f32 0.0, %v3020
      %v3022 = vpop.f32.mrb[0].mxu0
      %3023 = vmatprep.mubr.bf16.mxu0 0
      %3024 = vmatmul.mubr.bf16.gmra.mrb[0].mxu0 %v2890
      %v3025 = vpop.f32.mrb[0].mxu0
      %v3026 = vadd.f32 0.0, %v3025
      %v3027 = vpop.f32.mrb[0].mxu0
      %v3028 = vpop.f32.mrb[0].mxu0
      %v3029 = vadd.f32 0.0, %v3028
      %v3030 = vpop.f32.mrb[0].mxu0
      %3031 = vmatprep.mubr.bf16.mxu0 0
      %3032 = vmatmul.mubr.bf16.gmra.mrb[0].mxu0 %v2891
      %v3033 = vpop.f32.mrb[0].mxu0
      %v3034 = vadd.f32 0.0, %v3033
      %v3035 = vpop.f32.mrb[0].mxu0
      %v3036 = vpop.f32.mrb[0].mxu0
      %v3037 = vadd.f32 0.0, %v3036
      %v3038 = vpop.f32.mrb[0].mxu0
      %3039 = vmatprep.mubr.bf16.mxu0 0
      %3040 = vmatmul.mubr.bf16.gmra.mrb[0].mxu0 %v2892
      %v3041 = vpop.f32.mrb[0].mxu0
      %v3042 = vadd.f32 0.0, %v3041
      %v3043 = vpop.f32.mrb[0].mxu0
      %v3044 = vpop.f32.mrb[0].mxu0
      %v3045 = vadd.f32 0.0, %v3044
      %v3046 = vpop.f32.mrb[0].mxu0
      %3047 = vmatprep.mubr.bf16.mxu0 0
      %3048 = vmatmul.mubr.bf16.gmra.mrb[0].mxu0 %v2893
      %v3049 = vpop.f32.mrb[0].mxu0
      %v3050 = vadd.f32 0.0, %v3049
      %v3051 = vpop.f32.mrb[0].mxu0
      %v3052 = vpop.f32.mrb[0].mxu0
      %v3053 = vadd.f32 0.0, %v3052
      %v3054 = vpop.f32.mrb[0].mxu0
      %3055 = vmatprep.mubr.bf16.mxu0 0
      %3056 = vmatmul.mubr.bf16.gmra.mrb[0].mxu0 %v2894
      %v3057 = vpop.f32.mrb[0].mxu0
      %v3058 = vadd.f32 0.0, %v3057
      %v3059 = vpop.f32.mrb[0].mxu0
      %v3060 = vpop.f32.mrb[0].mxu0
      %v3061 = vadd.f32 0.0, %v3060
      %v3062 = vpop.f32.mrb[0].mxu0
      %3063 = vmatprep.mubr.bf16.mxu0 0
      %3064 = vmatmul.mubr.bf16.gmra.mrb[0].mxu0 %v2895
      %v3065 = vpop.f32.mrb[0].mxu0
      %v3066 = vadd.f32 0.0, %v3065
      %v3067 = vpop.f32.mrb[0].mxu0
      %v3068 = vpop.f32.mrb[0].mxu0
      %v3069 = vadd.f32 0.0, %v3068
      %v3070 = vpop.f32.mrb[0].mxu0
      %3071 = vmatprep.mubr.bf16.mxu0 0
      %3072 = vmatmul.mubr.bf16.gmra.mrb[0].mxu0 %v2896
      %v3073 = vpop.f32.mrb[0].mxu0
      %v3074 = vadd.f32 0.0, %v3073
      %v3075 = vpop.f32.mrb[0].mxu0
      %v3076 = vpop.f32.mrb[0].mxu0
      %v3077 = vadd.f32 0.0, %v3076
      %v3078 = vpop.f32.mrb[0].mxu0
      %3079 = vmatprep.mubr.bf16.mxu0 0
      %3080 = vmatmul.mubr.bf16.gmra.mrb[0].mxu0 %v2897
      %v3081 = vpop.f32.mrb[0].mxu0
      %v3082 = vadd.f32 0.0, %v3081
      %v3083 = vpop.f32.mrb[0].mxu0
      %v3084 = vpop.f32.mrb[0].mxu0
      %v3085 = vadd.f32 0.0, %v3084
      %v3086 = vpop.f32.mrb[0].mxu0
      %3087 = vmatprep.mubr.bf16.mxu0 0
      %3088 = vmatmul.mubr.bf16.gmra.mrb[0].mxu0 %v2898
      %v3089 = vpop.f32.mrb[0].mxu0
      %v3090 = vadd.f32 0.0, %v3089
      %v3091 = vpop.f32.mrb[0].mxu0
      %v3092 = vpop.f32.mrb[0].mxu0
      %v3093 = vadd.f32 0.0, %v3092
      %v3094 = vpop.f32.mrb[0].mxu0
      %3095 = vmatprep.mubr.bf16.mxu0 0
      %3096 = vmatmul.mubr.bf16.gmra.mrb[0].mxu0 %v2899
      %v3097 = vpop.f32.mrb[0].mxu0
      %v3098 = vadd.f32 0.0, %v3097
      %v3099 = vpop.f32.mrb[0].mxu0
      %v3100 = vpop.f32.mrb[0].mxu0
      %v3101 = vadd.f32 0.0, %v3100
      %v3102 = vpop.f32.mrb[0].mxu0
      %3103 = vmatprep.mubr.bf16.mxu0 0
      %3104 = vmatmul.mubr.bf16.gmra.mrb[0].mxu0 %v2900
      %v3105 = vpop.f32.mrb[0].mxu0
      %v3106 = vadd.f32 0.0, %v3105
      %v3107 = vpop.f32.mrb[0].mxu0
      %v3108 = vpop.f32.mrb[0].mxu0
      %v3109 = vadd.f32 0.0, %v3108
      %v3110 = vpop.f32.mrb[0].mxu0
      %3111 = vmatprep.mubr.bf16.mxu0 0
      %3112 = vmatmul.mubr.bf16.gmra.mrb[0].mxu0 %v2901
      %v3113 = vpop.f32.mrb[0].mxu0
      %v3114 = vadd.f32 0.0, %v3113
      %v3115 = vpop.f32.mrb[0].mxu0
      %v3116 = vpop.f32.mrb[0].mxu0
      %v3117 = vadd.f32 0.0, %v3116
      %v3118 = vpop.f32.mrb[0].mxu0
      %3119 = vmatprep.mubr.bf16.mxu0 0
      %3120 = vmatmul.mubr.bf16.gmra.mrb[0].mxu0 %v2902
      %v3121 = vpop.f32.mrb[0].mxu0
      %v3122 = vadd.f32 0.0, %v3121
      %v3123 = vpop.f32.mrb[0].mxu0
      %v3124 = vpop.f32.mrb[0].mxu0
      %v3125 = vadd.f32 0.0, %v3124
      %v3126 = vpop.f32.mrb[0].mxu0
      %3127 = vdwg.mxu0
      %v3128 = vadd.f32 %v2759, %v3002
      %v3129 = vadd.f32 %v2760, %v3005
      %v3130 = vadd.f32 %v2761, %v3010
      %v3131 = vadd.f32 %v2762, %v3013
      %v3132 = vadd.f32 %v2763, %v3018
      %v3133 = vadd.f32 %v2764, %v3021
      %v3134 = vadd.f32 %v2765, %v3026
      %v3135 = vadd.f32 %v2766, %v3029
      %v3136 = vadd.f32 %v2767, %v3034
      %v3137 = vadd.f32 %v2768, %v3037
      %v3138 = vadd.f32 %v2769, %v3042
      %v3139 = vadd.f32 %v2770, %v3045
      %v3140 = vadd.f32 %v2771, %v3050
      %v3141 = vadd.f32 %v2772, %v3053
      %v3142 = vadd.f32 %v2773, %v3058
      %v3143 = vadd.f32 %v2774, %v3061
      %v3144 = vadd.f32 %v2775, %v3066
      %v3145 = vadd.f32 %v2776, %v3069
      %v3146 = vadd.f32 %v2777, %v3074
      %v3147 = vadd.f32 %v2778, %v3077
      %v3148 = vadd.f32 %v2779, %v3082
      %v3149 = vadd.f32 %v2780, %v3085
      %v3150 = vadd.f32 %v2781, %v3090
      %v3151 = vadd.f32 %v2782, %v3093
      %v3152 = vadd.f32 %v2783, %v3098
      %v3153 = vadd.f32 %v2784, %v3101
      %v3154 = vadd.f32 %v2785, %v3106
      %v3155 = vadd.f32 %v2786, %v3109
      %v3156 = vadd.f32 %v2787, %v3114
      %v3157 = vadd.f32 %v2788, %v3117
      %v3158 = vadd.f32 %v2789, %v3122
      %v3159 = vadd.f32 %v2790, %v3125
      %v3160 = vld [vmem:[%s1043] sm:$0xf]
      %v3161 = vld [vmem:[%s1043 + $0x4] sm:$0xf]
      %v3162 = vld [vmem:[%s1043 + $0x8] sm:$0x1]
      %v3163 = vld [vmem:[%s1043 + $0xc] sm:$0xf]
      %v3164 = vld [vmem:[%s1043 + $0x10] sm:$0xf]
      %v3165 = vld [vmem:[%s1043 + $0x14] sm:$0x1]
      %v3166 = vld [vmem:[%s1043 + $0x18] sm:$0xf]
      %v3167 = vld [vmem:[%s1043 + $0x1c] sm:$0xf]
      %v3168 = vld [vmem:[%s1043 + $0x20] sm:$0x1]
      %v3169 = vld [vmem:[%s1043 + $0x24] sm:$0xf]
      %v3170 = vld [vmem:[%s1043 + $0x28] sm:$0xf]
      %v3171 = vld [vmem:[%s1043 + $0x2c] sm:$0x1]
      %v3172 = vld [vmem:[%s1043 + $0x30] sm:$0xf]
      %v3173 = vld [vmem:[%s1043 + $0x34] sm:$0xf]
      %v3174 = vld [vmem:[%s1043 + $0x38] sm:$0x1]
      %v3175 = vld [vmem:[%s1043 + $0x3c] sm:$0xf]
      %v3176 = vld [vmem:[%s1043 + $0x40] sm:$0xf]
      %v3177 = vld [vmem:[%s1043 + $0x44] sm:$0x1]
      %v3178 = vld [vmem:[%s1043 + $0x48] sm:$0xf]
      %v3179 = vld [vmem:[%s1043 + $0x4c] sm:$0xf]
      %v3180 = vld [vmem:[%s1043 + $0x50] sm:$0x1]
      %v3181 = vld [vmem:[%s1043 + $0x54] sm:$0xf]
      %v3182 = vld [vmem:[%s1043 + $0x58] sm:$0xf]
      %v3183 = vld [vmem:[%s1043 + $0x5c] sm:$0x1]
      %v3184 = vld [vmem:[%s1043 + $0x60] sm:$0xf]
      %v3185 = vld [vmem:[%s1043 + $0x64] sm:$0xf]
      %v3186 = vld [vmem:[%s1043 + $0x68] sm:$0x1]
      %v3187 = vld [vmem:[%s1043 + $0x6c] sm:$0xf]
      %v3188 = vld [vmem:[%s1043 + $0x70] sm:$0xf]
      %v3189 = vld [vmem:[%s1043 + $0x74] sm:$0x1]
      %v3190 = vld [vmem:[%s1043 + $0x78] sm:$0xf]
      %v3191 = vld [vmem:[%s1043 + $0x7c] sm:$0xf]
      %v3192 = vld [vmem:[%s1043 + $0x80] sm:$0x1]
      %v3193 = vld [vmem:[%s1043 + $0x84] sm:$0xf]
      %v3194 = vld [vmem:[%s1043 + $0x88] sm:$0xf]
      %v3195 = vld [vmem:[%s1043 + $0x8c] sm:$0x1]
      %v3196 = vld [vmem:[%s1043 + $0x90] sm:$0xf]
      %v3197 = vld [vmem:[%s1043 + $0x94] sm:$0xf]
      %v3198 = vld [vmem:[%s1043 + $0x98] sm:$0x1]
      %v3199 = vld [vmem:[%s1043 + $0x9c] sm:$0xf]
      %v3200 = vld [vmem:[%s1043 + $0xa0] sm:$0xf]
      %v3201 = vld [vmem:[%s1043 + $0xa4] sm:$0x1]
      %v3202 = vld [vmem:[%s1043 + $0xa8] sm:$0xf]
      %v3203 = vld [vmem:[%s1043 + $0xac] sm:$0xf]
      %v3204 = vld [vmem:[%s1043 + $0xb0] sm:$0x1]
      %v3205 = vld [vmem:[%s1043 + $0xb4] sm:$0xf]
      %v3206 = vld [vmem:[%s1043 + $0xb8] sm:$0xf]
      %v3207 = vld [vmem:[%s1043 + $0xbc] sm:$0x1]
      %v3209 = vshrl.u32 %v3160, 16
      %v3211 = vrot.slane %v3209, 4
      %v3212 = vshll.u32 %v3160, 16
      %v3214 = vrot.slane %v3212, 5
      %v3215 = vor.u32 %v3211, %v3214
      %v3216 = vrot.slane %v3215, 4
      %v3218 = vshll.u32 %v3161, 16
      %v3220 = vrot.slane %v3218, 5
      %v3221 = vsel %vm1360, %v3216, %v3220
      %v3222 = vshrl.u32 %v3161, 16
      %v3224 = vrot.slane %v3222, 4
      %v3225 = vor.u32 %v3224, %v3220
      %v3226 = vrot.slane %v3225, 4
      %v3228 = vshll.u32 %v3162, 16
      %v3230 = vrot.slane %v3228, 5
      %v3231 = vsel %vm1360, %v3226, %v3230
      %v3233 = vshrl.u32 %v3163, 16
      %v3235 = vrot.slane %v3233, 4
      %v3236 = vshll.u32 %v3163, 16
      %v3238 = vrot.slane %v3236, 5
      %v3239 = vor.u32 %v3235, %v3238
      %v3240 = vrot.slane %v3239, 4
      %v3242 = vshll.u32 %v3164, 16
      %v3244 = vrot.slane %v3242, 5
      %v3245 = vsel %vm1360, %v3240, %v3244
      %v3246 = vshrl.u32 %v3164, 16
      %v3248 = vrot.slane %v3246, 4
      %v3249 = vor.u32 %v3248, %v3244
      %v3250 = vrot.slane %v3249, 4
      %v3252 = vshll.u32 %v3165, 16
      %v3254 = vrot.slane %v3252, 5
      %v3255 = vsel %vm1360, %v3250, %v3254
      %v3257 = vshrl.u32 %v3166, 16
      %v3259 = vrot.slane %v3257, 4
      %v3260 = vshll.u32 %v3166, 16
      %v3262 = vrot.slane %v3260, 5
      %v3263 = vor.u32 %v3259, %v3262
      %v3264 = vrot.slane %v3263, 4
      %v3266 = vshll.u32 %v3167, 16
      %v3268 = vrot.slane %v3266, 5
      %v3269 = vsel %vm1360, %v3264, %v3268
      %v3270 = vshrl.u32 %v3167, 16
      %v3272 = vrot.slane %v3270, 4
      %v3273 = vor.u32 %v3272, %v3268
      %v3274 = vrot.slane %v3273, 4
      %v3276 = vshll.u32 %v3168, 16
      %v3278 = vrot.slane %v3276, 5
      %v3279 = vsel %vm1360, %v3274, %v3278
      %v3281 = vshrl.u32 %v3169, 16
      %v3283 = vrot.slane %v3281, 4
      %v3284 = vshll.u32 %v3169, 16
      %v3286 = vrot.slane %v3284, 5
      %v3287 = vor.u32 %v3283, %v3286
      %v3288 = vrot.slane %v3287, 4
      %v3290 = vshll.u32 %v3170, 16
      %v3292 = vrot.slane %v3290, 5
      %v3293 = vsel %vm1360, %v3288, %v3292
      %v3294 = vshrl.u32 %v3170, 16
      %v3296 = vrot.slane %v3294, 4
      %v3297 = vor.u32 %v3296, %v3292
      %v3298 = vrot.slane %v3297, 4
      %v3300 = vshll.u32 %v3171, 16
      %v3302 = vrot.slane %v3300, 5
      %v3303 = vsel %vm1360, %v3298, %v3302
      %v3305 = vshrl.u32 %v3172, 16
      %v3307 = vrot.slane %v3305, 4
      %v3308 = vshll.u32 %v3172, 16
      %v3310 = vrot.slane %v3308, 5
      %v3311 = vor.u32 %v3307, %v3310
      %v3312 = vrot.slane %v3311, 4
      %v3314 = vshll.u32 %v3173, 16
      %v3316 = vrot.slane %v3314, 5
      %v3317 = vsel %vm1360, %v3312, %v3316
      %v3318 = vshrl.u32 %v3173, 16
      %v3320 = vrot.slane %v3318, 4
      %v3321 = vor.u32 %v3320, %v3316
      %v3322 = vrot.slane %v3321, 4
      %v3324 = vshll.u32 %v3174, 16
      %v3326 = vrot.slane %v3324, 5
      %v3327 = vsel %vm1360, %v3322, %v3326
      %v3329 = vshrl.u32 %v3175, 16
      %v3331 = vrot.slane %v3329, 4
      %v3332 = vshll.u32 %v3175, 16
      %v3334 = vrot.slane %v3332, 5
      %v3335 = vor.u32 %v3331, %v3334
      %v3336 = vrot.slane %v3335, 4
      %v3338 = vshll.u32 %v3176, 16
      %v3340 = vrot.slane %v3338, 5
      %v3341 = vsel %vm1360, %v3336, %v3340
      %v3342 = vshrl.u32 %v3176, 16
      %v3344 = vrot.slane %v3342, 4
      %v3345 = vor.u32 %v3344, %v3340
      %v3346 = vrot.slane %v3345, 4
      %v3348 = vshll.u32 %v3177, 16
      %v3350 = vrot.slane %v3348, 5
      %v3351 = vsel %vm1360, %v3346, %v3350
      %v3353 = vshrl.u32 %v3178, 16
      %v3355 = vrot.slane %v3353, 4
      %v3356 = vshll.u32 %v3178, 16
      %v3358 = vrot.slane %v3356, 5
      %v3359 = vor.u32 %v3355, %v3358
      %v3360 = vrot.slane %v3359, 4
      %v3362 = vshll.u32 %v3179, 16
      %v3364 = vrot.slane %v3362, 5
      %v3365 = vsel %vm1360, %v3360, %v3364
      %v3366 = vshrl.u32 %v3179, 16
      %v3368 = vrot.slane %v3366, 4
      %v3369 = vor.u32 %v3368, %v3364
      %v3370 = vrot.slane %v3369, 4
      %v3372 = vshll.u32 %v3180, 16
      %v3374 = vrot.slane %v3372, 5
      %v3375 = vsel %vm1360, %v3370, %v3374
      %v3377 = vshrl.u32 %v3181, 16
      %v3379 = vrot.slane %v3377, 4
      %v3380 = vshll.u32 %v3181, 16
      %v3382 = vrot.slane %v3380, 5
      %v3383 = vor.u32 %v3379, %v3382
      %v3384 = vrot.slane %v3383, 4
      %v3386 = vshll.u32 %v3182, 16
      %v3388 = vrot.slane %v3386, 5
      %v3389 = vsel %vm1360, %v3384, %v3388
      %v3390 = vshrl.u32 %v3182, 16
      %v3392 = vrot.slane %v3390, 4
      %v3393 = vor.u32 %v3392, %v3388
      %v3394 = vrot.slane %v3393, 4
      %v3396 = vshll.u32 %v3183, 16
      %v3398 = vrot.slane %v3396, 5
      %v3399 = vsel %vm1360, %v3394, %v3398
      %v3401 = vshrl.u32 %v3184, 16
      %v3403 = vrot.slane %v3401, 4
      %v3404 = vshll.u32 %v3184, 16
      %v3406 = vrot.slane %v3404, 5
      %v3407 = vor.u32 %v3403, %v3406
      %v3408 = vrot.slane %v3407, 4
      %v3410 = vshll.u32 %v3185, 16
      %v3412 = vrot.slane %v3410, 5
      %v3413 = vsel %vm1360, %v3408, %v3412
      %v3414 = vshrl.u32 %v3185, 16
      %v3416 = vrot.slane %v3414, 4
      %v3417 = vor.u32 %v3416, %v3412
      %v3418 = vrot.slane %v3417, 4
      %v3420 = vshll.u32 %v3186, 16
      %v3422 = vrot.slane %v3420, 5
      %v3423 = vsel %vm1360, %v3418, %v3422
      %v3425 = vshrl.u32 %v3187, 16
      %v3427 = vrot.slane %v3425, 4
      %v3428 = vshll.u32 %v3187, 16
      %v3430 = vrot.slane %v3428, 5
      %v3431 = vor.u32 %v3427, %v3430
      %v3432 = vrot.slane %v3431, 4
      %v3434 = vshll.u32 %v3188, 16
      %v3436 = vrot.slane %v3434, 5
      %v3437 = vsel %vm1360, %v3432, %v3436
      %v3438 = vshrl.u32 %v3188, 16
      %v3440 = vrot.slane %v3438, 4
      %v3441 = vor.u32 %v3440, %v3436
      %v3442 = vrot.slane %v3441, 4
      %v3444 = vshll.u32 %v3189, 16
      %v3446 = vrot.slane %v3444, 5
      %v3447 = vsel %vm1360, %v3442, %v3446
      %v3449 = vshrl.u32 %v3190, 16
      %v3451 = vrot.slane %v3449, 4
      %v3452 = vshll.u32 %v3190, 16
      %v3454 = vrot.slane %v3452, 5
      %v3455 = vor.u32 %v3451, %v3454
      %v3456 = vrot.slane %v3455, 4
      %v3458 = vshll.u32 %v3191, 16
      %v3460 = vrot.slane %v3458, 5
      %v3461 = vsel %vm1360, %v3456, %v3460
      %v3462 = vshrl.u32 %v3191, 16
      %v3464 = vrot.slane %v3462, 4
      %v3465 = vor.u32 %v3464, %v3460
      %v3466 = vrot.slane %v3465, 4
      %v3468 = vshll.u32 %v3192, 16
      %v3470 = vrot.slane %v3468, 5
      %v3471 = vsel %vm1360, %v3466, %v3470
      %v3473 = vshrl.u32 %v3193, 16
      %v3475 = vrot.slane %v3473, 4
      %v3476 = vshll.u32 %v3193, 16
      %v3478 = vrot.slane %v3476, 5
      %v3479 = vor.u32 %v3475, %v3478
      %v3480 = vrot.slane %v3479, 4
      %v3482 = vshll.u32 %v3194, 16
      %v3484 = vrot.slane %v3482, 5
      %v3485 = vsel %vm1360, %v3480, %v3484
      %v3486 = vshrl.u32 %v3194, 16
      %v3488 = vrot.slane %v3486, 4
      %v3489 = vor.u32 %v3488, %v3484
      %v3490 = vrot.slane %v3489, 4
      %v3492 = vshll.u32 %v3195, 16
      %v3494 = vrot.slane %v3492, 5
      %v3495 = vsel %vm1360, %v3490, %v3494
      %v3497 = vshrl.u32 %v3196, 16
      %v3499 = vrot.slane %v3497, 4
      %v3500 = vshll.u32 %v3196, 16
      %v3502 = vrot.slane %v3500, 5
      %v3503 = vor.u32 %v3499, %v3502
      %v3504 = vrot.slane %v3503, 4
      %v3506 = vshll.u32 %v3197, 16
      %v3508 = vrot.slane %v3506, 5
      %v3509 = vsel %vm1360, %v3504, %v3508
      %v3510 = vshrl.u32 %v3197, 16
      %v3512 = vrot.slane %v3510, 4
      %v3513 = vor.u32 %v3512, %v3508
      %v3514 = vrot.slane %v3513, 4
      %v3516 = vshll.u32 %v3198, 16
      %v3518 = vrot.slane %v3516, 5
      %v3519 = vsel %vm1360, %v3514, %v3518
      %v3521 = vshrl.u32 %v3199, 16
      %v3523 = vrot.slane %v3521, 4
      %v3524 = vshll.u32 %v3199, 16
      %v3526 = vrot.slane %v3524, 5
      %v3527 = vor.u32 %v3523, %v3526
      %v3528 = vrot.slane %v3527, 4
      %v3530 = vshll.u32 %v3200, 16
      %v3532 = vrot.slane %v3530, 5
      %v3533 = vsel %vm1360, %v3528, %v3532
      %v3534 = vshrl.u32 %v3200, 16
      %v3536 = vrot.slane %v3534, 4
      %v3537 = vor.u32 %v3536, %v3532
      %v3538 = vrot.slane %v3537, 4
      %v3540 = vshll.u32 %v3201, 16
      %v3542 = vrot.slane %v3540, 5
      %v3543 = vsel %vm1360, %v3538, %v3542
      %v3545 = vshrl.u32 %v3202, 16
      %v3547 = vrot.slane %v3545, 4
      %v3548 = vshll.u32 %v3202, 16
      %v3550 = vrot.slane %v3548, 5
      %v3551 = vor.u32 %v3547, %v3550
      %v3552 = vrot.slane %v3551, 4
      %v3554 = vshll.u32 %v3203, 16
      %v3556 = vrot.slane %v3554, 5
      %v3557 = vsel %vm1360, %v3552, %v3556
      %v3558 = vshrl.u32 %v3203, 16
      %v3560 = vrot.slane %v3558, 4
      %v3561 = vor.u32 %v3560, %v3556
      %v3562 = vrot.slane %v3561, 4
      %v3564 = vshll.u32 %v3204, 16
      %v3566 = vrot.slane %v3564, 5
      %v3567 = vsel %vm1360, %v3562, %v3566
      %v3569 = vshrl.u32 %v3205, 16
      %v3571 = vrot.slane %v3569, 4
      %v3572 = vshll.u32 %v3205, 16
      %v3574 = vrot.slane %v3572, 5
      %v3575 = vor.u32 %v3571, %v3574
      %v3576 = vrot.slane %v3575, 4
      %v3578 = vshll.u32 %v3206, 16
      %v3580 = vrot.slane %v3578, 5
      %v3581 = vsel %vm1360, %v3576, %v3580
      %v3582 = vshrl.u32 %v3206, 16
      %v3584 = vrot.slane %v3582, 4
      %v3585 = vor.u32 %v3584, %v3580
      %v3586 = vrot.slane %v3585, 4
      %v3588 = vshll.u32 %v3207, 16
      %v3590 = vrot.slane %v3588, 5
      %v3591 = vsel %vm1360, %v3586, %v3590
      %v3592 = vunpack.c.l.b16 %v3221
      %v3593 = vunpack.c.l.b16 %v3231
      %v3594 = vunpack.c.l.b16 %v3245
      %v3595 = vunpack.c.l.b16 %v3255
      %v3596 = vunpack.c.l.b16 %v3269
      %v3597 = vunpack.c.l.b16 %v3279
      %v3598 = vunpack.c.l.b16 %v3293
      %v3599 = vunpack.c.l.b16 %v3303
      %v3600 = vunpack.c.l.b16 %v3317
      %v3601 = vunpack.c.l.b16 %v3327
      %v3602 = vunpack.c.l.b16 %v3341
      %v3603 = vunpack.c.l.b16 %v3351
      %v3604 = vunpack.c.l.b16 %v3365
      %v3605 = vunpack.c.l.b16 %v3375
      %v3606 = vunpack.c.l.b16 %v3389
      %v3607 = vunpack.c.l.b16 %v3399
      %v3608 = vunpack.c.l.b16 %v3413
      %v3609 = vunpack.c.l.b16 %v3423
      %v3610 = vunpack.c.l.b16 %v3437
      %v3611 = vunpack.c.l.b16 %v3447
      %v3612 = vunpack.c.l.b16 %v3461
      %v3613 = vunpack.c.l.b16 %v3471
      %v3614 = vunpack.c.l.b16 %v3485
      %v3615 = vunpack.c.l.b16 %v3495
      %v3616 = vunpack.c.l.b16 %v3509
      %v3617 = vunpack.c.l.b16 %v3519
      %v3618 = vunpack.c.l.b16 %v3533
      %v3619 = vunpack.c.l.b16 %v3543
      %v3620 = vunpack.c.l.b16 %v3557
      %v3621 = vunpack.c.l.b16 %v3567
      %v3622 = vunpack.c.l.b16 %v3581
      %v3623 = vunpack.c.l.b16 %v3591
      %v3624 = vpack.c.b16 %v3593, %v3592
      %v3625 = vpack.c.b16 %v3595, %v3594
      %v3626 = vpack.c.b16 %v3597, %v3596
      %v3627 = vpack.c.b16 %v3599, %v3598
      %v3628 = vpack.c.b16 %v3601, %v3600
      %v3629 = vpack.c.b16 %v3603, %v3602
      %v3630 = vpack.c.b16 %v3605, %v3604
      %v3631 = vpack.c.b16 %v3607, %v3606
      %v3632 = vpack.c.b16 %v3609, %v3608
      %v3633 = vpack.c.b16 %v3611, %v3610
      %v3634 = vpack.c.b16 %v3613, %v3612
      %v3635 = vpack.c.b16 %v3615, %v3614
      %v3636 = vpack.c.b16 %v3617, %v3616
      %v3637 = vpack.c.b16 %v3619, %v3618
      %v3638 = vpack.c.b16 %v3621, %v3620
      %v3639 = vpack.c.b16 %v3623, %v3622
      %v3672 = vunpack.c.l.b16 %v1226
      %v3673 = vunpack.c.l.b16 %v1227
      %v3674 = vunpack.c.l.b16 %v1228
      %v3675 = vunpack.c.l.b16 %v1229
      %v3676 = vunpack.c.l.b16 %v1230
      %v3677 = vunpack.c.l.b16 %v1231
      %v3678 = vunpack.c.l.b16 %v1232
      %v3679 = vunpack.c.l.b16 %v1233
      %v3680 = vunpack.c.l.b16 %v1234
      %v3681 = vunpack.c.l.b16 %v1235
      %v3682 = vunpack.c.l.b16 %v1236
      %v3683 = vunpack.c.l.b16 %v1237
      %v3684 = vunpack.c.l.b16 %v1238
      %v3685 = vunpack.c.l.b16 %v1239
      %v3686 = vunpack.c.l.b16 %v1240
      %v3687 = vunpack.c.l.b16 %v1241
      %v3688 = vpack.c.b16 %v3673, %v3672
      %v3689 = vpack.c.b16 %v3675, %v3674
      %v3690 = vpack.c.b16 %v3677, %v3676
      %v3691 = vpack.c.b16 %v3679, %v3678
      %v3692 = vpack.c.b16 %v3681, %v3680
      %v3693 = vpack.c.b16 %v3683, %v3682
      %v3694 = vpack.c.b16 %v3685, %v3684
      %v3695 = vpack.c.b16 %v3687, %v3686
      %3704 = vmatprep.subr.bf16.mxu0 0
      %3705 = vmatpush1.bf16.msra.mxu0 %v3688
      %3706 = vmatprep.subr.bf16.mxu0 0
      %3707 = vmatpush1.bf16.msra.mxu0 %v3689
      %3708 = vmatprep.subr.bf16.mxu0 0
      %3709 = vmatpush1.bf16.msra.mxu0 %v3690
      %3710 = vmatprep.subr.bf16.mxu0 0
      %3711 = vmatpush1.bf16.msra.mxu0 %v3691
      %3712 = vmatprep.subr.bf16.mxu0 0
      %3713 = vmatpush1.bf16.msra.mxu0 %v3692
      %3714 = vmatprep.subr.bf16.mxu0 0
      %3715 = vmatpush1.bf16.msra.mxu0 %v3693
      %3716 = vmatprep.subr.bf16.mxu0 0
      %3717 = vmatpush1.bf16.msra.mxu0 %v3694
      %3718 = vmatprep.subr.bf16.mxu0 0
      %3719 = vmatpush1.bf16.msra.mxu0 %v3695
      %3720 = vmatprep.subr.bf16.mxu0 0
      %3721 = vmatpush1.bf16.msra.mxu0 0
      %3722 = vmatprep.subr.bf16.mxu0 0
      %3723 = vmatpush1.bf16.msra.mxu0 0
      %3724 = vmatprep.subr.bf16.mxu0 0
      %3725 = vmatpush1.bf16.msra.mxu0 0
      %3726 = vmatprep.subr.bf16.mxu0 0
      %3727 = vmatpush1.bf16.msra.mxu0 0
      %3728 = vmatprep.subr.bf16.mxu0 0
      %3729 = vmatpush1.bf16.msra.mxu0 0
      %3730 = vmatprep.subr.bf16.mxu0 0
      %3731 = vmatpush1.bf16.msra.mxu0 0
      %3732 = vmatprep.subr.bf16.mxu0 0
      %3733 = vmatpush1.bf16.msra.mxu0 0
      %3734 = vmatprep.subr.bf16.mxu0 0
      %3735 = vmatpush1.bf16.msra.mxu0 0
      %3736 = vmatprep.mubr.bf16.mxu0 0
      %3737 = vmatmul.mubr.bf16.gmra.mrb[0].mxu0 %v3624
      %v3738 = vpop.f32.mrb[0].mxu0
      %v3739 = vadd.f32 0.0, %v3738
      %v3740 = vpop.f32.mrb[0].mxu0
      %v3741 = vpop.f32.mrb[0].mxu0
      %v3742 = vadd.f32 0.0, %v3741
      %v3743 = vpop.f32.mrb[0].mxu0
      %3744 = vmatprep.mubr.bf16.mxu0 0
      %3745 = vmatmul.mubr.bf16.gmra.mrb[0].mxu0 %v3625
      %v3746 = vpop.f32.mrb[0].mxu0
      %v3747 = vadd.f32 0.0, %v3746
      %v3748 = vpop.f32.mrb[0].mxu0
      %v3749 = vpop.f32.mrb[0].mxu0
      %v3750 = vadd.f32 0.0, %v3749
      %v3751 = vpop.f32.mrb[0].mxu0
      %3752 = vmatprep.mubr.bf16.mxu0 0
      %3753 = vmatmul.mubr.bf16.gmra.mrb[0].mxu0 %v3626
      %v3754 = vpop.f32.mrb[0].mxu0
      %v3755 = vadd.f32 0.0, %v3754
      %v3756 = vpop.f32.mrb[0].mxu0
      %v3757 = vpop.f32.mrb[0].mxu0
      %v3758 = vadd.f32 0.0, %v3757
      %v3759 = vpop.f32.mrb[0].mxu0
      %3760 = vmatprep.mubr.bf16.mxu0 0
      %3761 = vmatmul.mubr.bf16.gmra.mrb[0].mxu0 %v3627
      %v3762 = vpop.f32.mrb[0].mxu0
      %v3763 = vadd.f32 0.0, %v3762
      %v3764 = vpop.f32.mrb[0].mxu0
      %v3765 = vpop.f32.mrb[0].mxu0
      %v3766 = vadd.f32 0.0, %v3765
      %v3767 = vpop.f32.mrb[0].mxu0
      %3768 = vmatprep.mubr.bf16.mxu0 0
      %3769 = vmatmul.mubr.bf16.gmra.mrb[0].mxu0 %v3628
      %v3770 = vpop.f32.mrb[0].mxu0
      %v3771 = vadd.f32 0.0, %v3770
      %v3772 = vpop.f32.mrb[0].mxu0
      %v3773 = vpop.f32.mrb[0].mxu0
      %v3774 = vadd.f32 0.0, %v3773
      %v3775 = vpop.f32.mrb[0].mxu0
      %3776 = vmatprep.mubr.bf16.mxu0 0
      %3777 = vmatmul.mubr.bf16.gmra.mrb[0].mxu0 %v3629
      %v3778 = vpop.f32.mrb[0].mxu0
      %v3779 = vadd.f32 0.0, %v3778
      %v3780 = vpop.f32.mrb[0].mxu0
      %v3781 = vpop.f32.mrb[0].mxu0
      %v3782 = vadd.f32 0.0, %v3781
      %v3783 = vpop.f32.mrb[0].mxu0
      %3784 = vmatprep.mubr.bf16.mxu0 0
      %3785 = vmatmul.mubr.bf16.gmra.mrb[0].mxu0 %v3630
      %v3786 = vpop.f32.mrb[0].mxu0
      %v3787 = vadd.f32 0.0, %v3786
      %v3788 = vpop.f32.mrb[0].mxu0
      %v3789 = vpop.f32.mrb[0].mxu0
      %v3790 = vadd.f32 0.0, %v3789
      %v3791 = vpop.f32.mrb[0].mxu0
      %3792 = vmatprep.mubr.bf16.mxu0 0
      %3793 = vmatmul.mubr.bf16.gmra.mrb[0].mxu0 %v3631
      %v3794 = vpop.f32.mrb[0].mxu0
      %v3795 = vadd.f32 0.0, %v3794
      %v3796 = vpop.f32.mrb[0].mxu0
      %v3797 = vpop.f32.mrb[0].mxu0
      %v3798 = vadd.f32 0.0, %v3797
      %v3799 = vpop.f32.mrb[0].mxu0
      %3800 = vmatprep.mubr.bf16.mxu0 0
      %3801 = vmatmul.mubr.bf16.gmra.mrb[0].mxu0 %v3632
      %v3802 = vpop.f32.mrb[0].mxu0
      %v3803 = vadd.f32 0.0, %v3802
      %v3804 = vpop.f32.mrb[0].mxu0
      %v3805 = vpop.f32.mrb[0].mxu0
      %v3806 = vadd.f32 0.0, %v3805
      %v3807 = vpop.f32.mrb[0].mxu0
      %3808 = vmatprep.mubr.bf16.mxu0 0
      %3809 = vmatmul.mubr.bf16.gmra.mrb[0].mxu0 %v3633
      %v3810 = vpop.f32.mrb[0].mxu0
      %v3811 = vadd.f32 0.0, %v3810
      %v3812 = vpop.f32.mrb[0].mxu0
      %v3813 = vpop.f32.mrb[0].mxu0
      %v3814 = vadd.f32 0.0, %v3813
      %v3815 = vpop.f32.mrb[0].mxu0
      %3816 = vmatprep.mubr.bf16.mxu0 0
      %3817 = vmatmul.mubr.bf16.gmra.mrb[0].mxu0 %v3634
      %v3818 = vpop.f32.mrb[0].mxu0
      %v3819 = vadd.f32 0.0, %v3818
      %v3820 = vpop.f32.mrb[0].mxu0
      %v3821 = vpop.f32.mrb[0].mxu0
      %v3822 = vadd.f32 0.0, %v3821
      %v3823 = vpop.f32.mrb[0].mxu0
      %3824 = vmatprep.mubr.bf16.mxu0 0
      %3825 = vmatmul.mubr.bf16.gmra.mrb[0].mxu0 %v3635
      %v3826 = vpop.f32.mrb[0].mxu0
      %v3827 = vadd.f32 0.0, %v3826
      %v3828 = vpop.f32.mrb[0].mxu0
      %v3829 = vpop.f32.mrb[0].mxu0
      %v3830 = vadd.f32 0.0, %v3829
      %v3831 = vpop.f32.mrb[0].mxu0
      %3832 = vmatprep.mubr.bf16.mxu0 0
      %3833 = vmatmul.mubr.bf16.gmra.mrb[0].mxu0 %v3636
      %v3834 = vpop.f32.mrb[0].mxu0
      %v3835 = vadd.f32 0.0, %v3834
      %v3836 = vpop.f32.mrb[0].mxu0
      %v3837 = vpop.f32.mrb[0].mxu0
      %v3838 = vadd.f32 0.0, %v3837
      %v3839 = vpop.f32.mrb[0].mxu0
      %3840 = vmatprep.mubr.bf16.mxu0 0
      %3841 = vmatmul.mubr.bf16.gmra.mrb[0].mxu0 %v3637
      %v3842 = vpop.f32.mrb[0].mxu0
      %v3843 = vadd.f32 0.0, %v3842
      %v3844 = vpop.f32.mrb[0].mxu0
      %v3845 = vpop.f32.mrb[0].mxu0
      %v3846 = vadd.f32 0.0, %v3845
      %v3847 = vpop.f32.mrb[0].mxu0
      %3848 = vmatprep.mubr.bf16.mxu0 0
      %3849 = vmatmul.mubr.bf16.gmra.mrb[0].mxu0 %v3638
      %v3850 = vpop.f32.mrb[0].mxu0
      %v3851 = vadd.f32 0.0, %v3850
      %v3852 = vpop.f32.mrb[0].mxu0
      %v3853 = vpop.f32.mrb[0].mxu0
      %v3854 = vadd.f32 0.0, %v3853
      %v3855 = vpop.f32.mrb[0].mxu0
      %3856 = vmatprep.mubr.bf16.mxu0 0
      %3857 = vmatmul.mubr.bf16.gmra.mrb[0].mxu0 %v3639
      %v3858 = vpop.f32.mrb[0].mxu0
      %v3859 = vadd.f32 0.0, %v3858
      %v3860 = vpop.f32.mrb[0].mxu0
      %v3861 = vpop.f32.mrb[0].mxu0
      %v3862 = vadd.f32 0.0, %v3861
      %v3863 = vpop.f32.mrb[0].mxu0
      %3864 = vdwg.mxu0
      %v3865 = vadd.f32 %v3128, %v3739
      %v3866 = vadd.f32 %v3129, %v3742
      %v3867 = vadd.f32 %v3130, %v3747
      %v3868 = vadd.f32 %v3131, %v3750
      %v3869 = vadd.f32 %v3132, %v3755
      %v3870 = vadd.f32 %v3133, %v3758
      %v3871 = vadd.f32 %v3134, %v3763
      %v3872 = vadd.f32 %v3135, %v3766
      %v3873 = vadd.f32 %v3136, %v3771
      %v3874 = vadd.f32 %v3137, %v3774
      %v3875 = vadd.f32 %v3138, %v3779
      %v3876 = vadd.f32 %v3139, %v3782
      %v3877 = vadd.f32 %v3140, %v3787
      %v3878 = vadd.f32 %v3141, %v3790
      %v3879 = vadd.f32 %v3142, %v3795
      %v3880 = vadd.f32 %v3143, %v3798
      %v3881 = vadd.f32 %v3144, %v3803
      %v3882 = vadd.f32 %v3145, %v3806
      %v3883 = vadd.f32 %v3146, %v3811
      %v3884 = vadd.f32 %v3147, %v3814
      %v3885 = vadd.f32 %v3148, %v3819
      %v3886 = vadd.f32 %v3149, %v3822
      %v3887 = vadd.f32 %v3150, %v3827
      %v3888 = vadd.f32 %v3151, %v3830
      %v3889 = vadd.f32 %v3152, %v3835
      %v3890 = vadd.f32 %v3153, %v3838
      %v3891 = vadd.f32 %v3154, %v3843
      %v3892 = vadd.f32 %v3155, %v3846
      %v3893 = vadd.f32 %v3156, %v3851
      %v3894 = vadd.f32 %v3157, %v3854
      %v3895 = vadd.f32 %v3158, %v3859
      %v3896 = vadd.f32 %v3159, %v3862
      %v3897 = vld [vmem:[%s1043] sm:$0xe]
      %v3898 = vld [vmem:[%s1043 + $0xc] sm:$0xe]
      %v3899 = vld [vmem:[%s1043 + $0x18] sm:$0xe]
      %v3900 = vld [vmem:[%s1043 + $0x24] sm:$0xe]
      %v3901 = vld [vmem:[%s1043 + $0x30] sm:$0xe]
      %v3902 = vld [vmem:[%s1043 + $0x3c] sm:$0xe]
      %v3903 = vld [vmem:[%s1043 + $0x48] sm:$0xe]
      %v3904 = vld [vmem:[%s1043 + $0x54] sm:$0xe]
      %v3905 = vld [vmem:[%s1043 + $0x60] sm:$0xe]
      %v3906 = vld [vmem:[%s1043 + $0x6c] sm:$0xe]
      %v3907 = vld [vmem:[%s1043 + $0x78] sm:$0xe]
      %v3908 = vld [vmem:[%s1043 + $0x84] sm:$0xe]
      %v3909 = vld [vmem:[%s1043 + $0x90] sm:$0xe]
      %v3910 = vld [vmem:[%s1043 + $0x9c] sm:$0xe]
      %v3911 = vld [vmem:[%s1043 + $0xa8] sm:$0xe]
      %v3912 = vld [vmem:[%s1043 + $0xb4] sm:$0xe]
      %v3961 = vrot.slane %v3897, 5
      %v3962 = vrot.slane %v3961, 4
      %v3963 = vrot.slane %v3161, 5
      %v3964 = vsel %vm2373, %v3962, %v3963
      %v3965 = vrot.slane %v3963, 4
      %v3966 = vrot.slane %v3162, 5
      %v3967 = vsel %vm2373, %v3965, %v3966
      %v3968 = vrot.slane %v3898, 5
      %v3969 = vrot.slane %v3968, 4
      %v3970 = vrot.slane %v3164, 5
      %v3971 = vsel %vm2373, %v3969, %v3970
      %v3972 = vrot.slane %v3970, 4
      %v3973 = vrot.slane %v3165, 5
      %v3974 = vsel %vm2373, %v3972, %v3973
      %v3975 = vrot.slane %v3899, 5
      %v3976 = vrot.slane %v3975, 4
      %v3977 = vrot.slane %v3167, 5
      %v3978 = vsel %vm2373, %v3976, %v3977
      %v3979 = vrot.slane %v3977, 4
      %v3980 = vrot.slane %v3168, 5
      %v3981 = vsel %vm2373, %v3979, %v3980
      %v3982 = vrot.slane %v3900, 5
      %v3983 = vrot.slane %v3982, 4
      %v3984 = vrot.slane %v3170, 5
      %v3985 = vsel %vm2373, %v3983, %v3984
      %v3986 = vrot.slane %v3984, 4
      %v3987 = vrot.slane %v3171, 5
      %v3988 = vsel %vm2373, %v3986, %v3987
      %v3989 = vrot.slane %v3901, 5
      %v3990 = vrot.slane %v3989, 4
      %v3991 = vrot.slane %v3173, 5
      %v3992 = vsel %vm2373, %v3990, %v3991
      %v3993 = vrot.slane %v3991, 4
      %v3994 = vrot.slane %v3174, 5
      %v3995 = vsel %vm2373, %v3993, %v3994
      %v3996 = vrot.slane %v3902, 5
      %v3997 = vrot.slane %v3996, 4
      %v3998 = vrot.slane %v3176, 5
      %v3999 = vsel %vm2373, %v3997, %v3998
      %v4000 = vrot.slane %v3998, 4
      %v4001 = vrot.slane %v3177, 5
      %v4002 = vsel %vm2373, %v4000, %v4001
      %v4003 = vrot.slane %v3903, 5
      %v4004 = vrot.slane %v4003, 4
      %v4005 = vrot.slane %v3179, 5
      %v4006 = vsel %vm2373, %v4004, %v4005
      %v4007 = vrot.slane %v4005, 4
      %v4008 = vrot.slane %v3180, 5
      %v4009 = vsel %vm2373, %v4007, %v4008
      %v4010 = vrot.slane %v3904, 5
      %v4011 = vrot.slane %v4010, 4
      %v4012 = vrot.slane %v3182, 5
      %v4013 = vsel %vm2373, %v4011, %v4012
      %v4014 = vrot.slane %v4012, 4
      %v4015 = vrot.slane %v3183, 5
      %v4016 = vsel %vm2373, %v4014, %v4015
      %v4017 = vrot.slane %v3905, 5
      %v4018 = vrot.slane %v4017, 4
      %v4019 = vrot.slane %v3185, 5
      %v4020 = vsel %vm2373, %v4018, %v4019
      %v4021 = vrot.slane %v4019, 4
      %v4022 = vrot.slane %v3186, 5
      %v4023 = vsel %vm2373, %v4021, %v4022
      %v4024 = vrot.slane %v3906, 5
      %v4025 = vrot.slane %v4024, 4
      %v4026 = vrot.slane %v3188, 5
      %v4027 = vsel %vm2373, %v4025, %v4026
      %v4028 = vrot.slane %v4026, 4
      %v4029 = vrot.slane %v3189, 5
      %v4030 = vsel %vm2373, %v4028, %v4029
      %v4031 = vrot.slane %v3907, 5
      %v4032 = vrot.slane %v4031, 4
      %v4033 = vrot.slane %v3191, 5
      %v4034 = vsel %vm2373, %v4032, %v4033
      %v4035 = vrot.slane %v4033, 4
      %v4036 = vrot.slane %v3192, 5
      %v4037 = vsel %vm2373, %v4035, %v4036
      %v4038 = vrot.slane %v3908, 5
      %v4039 = vrot.slane %v4038, 4
      %v4040 = vrot.slane %v3194, 5
      %v4041 = vsel %vm2373, %v4039, %v4040
      %v4042 = vrot.slane %v4040, 4
      %v4043 = vrot.slane %v3195, 5
      %v4044 = vsel %vm2373, %v4042, %v4043
      %v4045 = vrot.slane %v3909, 5
      %v4046 = vrot.slane %v4045, 4
      %v4047 = vrot.slane %v3197, 5
      %v4048 = vsel %vm2373, %v4046, %v4047
      %v4049 = vrot.slane %v4047, 4
      %v4050 = vrot.slane %v3198, 5
      %v4051 = vsel %vm2373, %v4049, %v4050
      %v4052 = vrot.slane %v3910, 5
      %v4053 = vrot.slane %v4052, 4
      %v4054 = vrot.slane %v3200, 5
      %v4055 = vsel %vm2373, %v4053, %v4054
      %v4056 = vrot.slane %v4054, 4
      %v4057 = vrot.slane %v3201, 5
      %v4058 = vsel %vm2373, %v4056, %v4057
      %v4059 = vrot.slane %v3911, 5
      %v4060 = vrot.slane %v4059, 4
      %v4061 = vrot.slane %v3203, 5
      %v4062 = vsel %vm2373, %v4060, %v4061
      %v4063 = vrot.slane %v4061, 4
      %v4064 = vrot.slane %v3204, 5
      %v4065 = vsel %vm2373, %v4063, %v4064
      %v4066 = vrot.slane %v3912, 5
      %v4067 = vrot.slane %v4066, 4
      %v4068 = vrot.slane %v3206, 5
      %v4069 = vsel %vm2373, %v4067, %v4068
      %v4070 = vrot.slane %v4068, 4
      %v4071 = vrot.slane %v3207, 5
      %v4072 = vsel %vm2373, %v4070, %v4071
      %v4073 = vunpack.c.l.b16 %v3964
      %v4074 = vunpack.c.l.b16 %v3967
      %v4075 = vunpack.c.l.b16 %v3971
      %v4076 = vunpack.c.l.b16 %v3974
      %v4077 = vunpack.c.l.b16 %v3978
      %v4078 = vunpack.c.l.b16 %v3981
      %v4079 = vunpack.c.l.b16 %v3985
      %v4080 = vunpack.c.l.b16 %v3988
      %v4081 = vunpack.c.l.b16 %v3992
      %v4082 = vunpack.c.l.b16 %v3995
      %v4083 = vunpack.c.l.b16 %v3999
      %v4084 = vunpack.c.l.b16 %v4002
      %v4085 = vunpack.c.l.b16 %v4006
      %v4086 = vunpack.c.l.b16 %v4009
      %v4087 = vunpack.c.l.b16 %v4013
      %v4088 = vunpack.c.l.b16 %v4016
      %v4089 = vunpack.c.l.b16 %v4020
      %v4090 = vunpack.c.l.b16 %v4023
      %v4091 = vunpack.c.l.b16 %v4027
      %v4092 = vunpack.c.l.b16 %v4030
      %v4093 = vunpack.c.l.b16 %v4034
      %v4094 = vunpack.c.l.b16 %v4037
      %v4095 = vunpack.c.l.b16 %v4041
      %v4096 = vunpack.c.l.b16 %v4044
      %v4097 = vunpack.c.l.b16 %v4048
      %v4098 = vunpack.c.l.b16 %v4051
      %v4099 = vunpack.c.l.b16 %v4055
      %v4100 = vunpack.c.l.b16 %v4058
      %v4101 = vunpack.c.l.b16 %v4062
      %v4102 = vunpack.c.l.b16 %v4065
      %v4103 = vunpack.c.l.b16 %v4069
      %v4104 = vunpack.c.l.b16 %v4072
      %v4105 = vpack.c.b16 %v4074, %v4073
      %v4106 = vpack.c.b16 %v4076, %v4075
      %v4107 = vpack.c.b16 %v4078, %v4077
      %v4108 = vpack.c.b16 %v4080, %v4079
      %v4109 = vpack.c.b16 %v4082, %v4081
      %v4110 = vpack.c.b16 %v4084, %v4083
      %v4111 = vpack.c.b16 %v4086, %v4085
      %v4112 = vpack.c.b16 %v4088, %v4087
      %v4113 = vpack.c.b16 %v4090, %v4089
      %v4114 = vpack.c.b16 %v4092, %v4091
      %v4115 = vpack.c.b16 %v4094, %v4093
      %v4116 = vpack.c.b16 %v4096, %v4095
      %v4117 = vpack.c.b16 %v4098, %v4097
      %v4118 = vpack.c.b16 %v4100, %v4099
      %v4119 = vpack.c.b16 %v4102, %v4101
      %v4120 = vpack.c.b16 %v4104, %v4103
      %v4153 = vunpack.c.l.b16 %v1243
      %v4154 = vunpack.c.l.b16 %v1244
      %v4155 = vunpack.c.l.b16 %v1245
      %v4156 = vunpack.c.l.b16 %v1246
      %v4157 = vunpack.c.l.b16 %v1247
      %v4158 = vunpack.c.l.b16 %v1248
      %v4159 = vunpack.c.l.b16 %v1249
      %v4160 = vunpack.c.l.b16 %v1250
      %v4161 = vunpack.c.l.b16 %v1251
      %v4162 = vunpack.c.l.b16 %v1252
      %v4163 = vunpack.c.l.b16 %v1253
      %v4164 = vunpack.c.l.b16 %v1254
      %v4165 = vunpack.c.l.b16 %v1255
      %v4166 = vunpack.c.l.b16 %v1256
      %v4167 = vunpack.c.l.b16 %v1257
      %v4168 = vunpack.c.l.b16 %v1258
      %v4169 = vpack.c.b16 %v4154, %v4153
      %v4170 = vpack.c.b16 %v4156, %v4155
      %v4171 = vpack.c.b16 %v4158, %v4157
      %v4172 = vpack.c.b16 %v4160, %v4159
      %v4173 = vpack.c.b16 %v4162, %v4161
      %v4174 = vpack.c.b16 %v4164, %v4163
      %v4175 = vpack.c.b16 %v4166, %v4165
      %v4176 = vpack.c.b16 %v4168, %v4167
      %4185 = vmatprep.subr.bf16.mxu0 0
      %4186 = vmatpush1.bf16.msra.mxu0 %v4169
      %4187 = vmatprep.subr.bf16.mxu0 0
      %4188 = vmatpush1.bf16.msra.mxu0 %v4170
      %4189 = vmatprep.subr.bf16.mxu0 0
      %4190 = vmatpush1.bf16.msra.mxu0 %v4171
      %4191 = vmatprep.subr.bf16.mxu0 0
      %4192 = vmatpush1.bf16.msra.mxu0 %v4172
      %4193 = vmatprep.subr.bf16.mxu0 0
      %4194 = vmatpush1.bf16.msra.mxu0 %v4173
      %4195 = vmatprep.subr.bf16.mxu0 0
      %4196 = vmatpush1.bf16.msra.mxu0 %v4174
      %4197 = vmatprep.subr.bf16.mxu0 0
      %4198 = vmatpush1.bf16.msra.mxu0 %v4175
      %4199 = vmatprep.subr.bf16.mxu0 0
      %4200 = vmatpush1.bf16.msra.mxu0 %v4176
      %4201 = vmatprep.subr.bf16.mxu0 0
      %4202 = vmatpush1.bf16.msra.mxu0 0
      %4203 = vmatprep.subr.bf16.mxu0 0
      %4204 = vmatpush1.bf16.msra.mxu0 0
      %4205 = vmatprep.subr.bf16.mxu0 0
      %4206 = vmatpush1.bf16.msra.mxu0 0
      %4207 = vmatprep.subr.bf16.mxu0 0
      %4208 = vmatpush1.bf16.msra.mxu0 0
      %4209 = vmatprep.subr.bf16.mxu0 0
      %4210 = vmatpush1.bf16.msra.mxu0 0
      %4211 = vmatprep.subr.bf16.mxu0 0
      %4212 = vmatpush1.bf16.msra.mxu0 0
      %4213 = vmatprep.subr.bf16.mxu0 0
      %4214 = vmatpush1.bf16.msra.mxu0 0
      %4215 = vmatprep.subr.bf16.mxu0 0
      %4216 = vmatpush1.bf16.msra.mxu0 0
      %4217 = vmatprep.mubr.bf16.mxu0 0
      %4218 = vmatmul.mubr.bf16.gmra.mrb[0].mxu0 %v4105
      %v4219 = vpop.f32.mrb[0].mxu0
      %v4220 = vadd.f32 0.0, %v4219
      %v4221 = vpop.f32.mrb[0].mxu0
      %v4222 = vpop.f32.mrb[0].mxu0
      %v4223 = vadd.f32 0.0, %v4222
      %v4224 = vpop.f32.mrb[0].mxu0
      %4225 = vmatprep.mubr.bf16.mxu0 0
      %4226 = vmatmul.mubr.bf16.gmra.mrb[0].mxu0 %v4106
      %v4227 = vpop.f32.mrb[0].mxu0
      %v4228 = vadd.f32 0.0, %v4227
      %v4229 = vpop.f32.mrb[0].mxu0
      %v4230 = vpop.f32.mrb[0].mxu0
      %v4231 = vadd.f32 0.0, %v4230
      %v4232 = vpop.f32.mrb[0].mxu0
      %4233 = vmatprep.mubr.bf16.mxu0 0
      %4234 = vmatmul.mubr.bf16.gmra.mrb[0].mxu0 %v4107
      %v4235 = vpop.f32.mrb[0].mxu0
      %v4236 = vadd.f32 0.0, %v4235
      %v4237 = vpop.f32.mrb[0].mxu0
      %v4238 = vpop.f32.mrb[0].mxu0
      %v4239 = vadd.f32 0.0, %v4238
      %v4240 = vpop.f32.mrb[0].mxu0
      %4241 = vmatprep.mubr.bf16.mxu0 0
      %4242 = vmatmul.mubr.bf16.gmra.mrb[0].mxu0 %v4108
      %v4243 = vpop.f32.mrb[0].mxu0
      %v4244 = vadd.f32 0.0, %v4243
      %v4245 = vpop.f32.mrb[0].mxu0
      %v4246 = vpop.f32.mrb[0].mxu0
      %v4247 = vadd.f32 0.0, %v4246
      %v4248 = vpop.f32.mrb[0].mxu0
      %4249 = vmatprep.mubr.bf16.mxu0 0
      %4250 = vmatmul.mubr.bf16.gmra.mrb[0].mxu0 %v4109
      %v4251 = vpop.f32.mrb[0].mxu0
      %v4252 = vadd.f32 0.0, %v4251
      %v4253 = vpop.f32.mrb[0].mxu0
      %v4254 = vpop.f32.mrb[0].mxu0
      %v4255 = vadd.f32 0.0, %v4254
      %v4256 = vpop.f32.mrb[0].mxu0
      %4257 = vmatprep.mubr.bf16.mxu0 0
      %4258 = vmatmul.mubr.bf16.gmra.mrb[0].mxu0 %v4110
      %v4259 = vpop.f32.mrb[0].mxu0
      %v4260 = vadd.f32 0.0, %v4259
      %v4261 = vpop.f32.mrb[0].mxu0
      %v4262 = vpop.f32.mrb[0].mxu0
      %v4263 = vadd.f32 0.0, %v4262
      %v4264 = vpop.f32.mrb[0].mxu0
      %4265 = vmatprep.mubr.bf16.mxu0 0
      %4266 = vmatmul.mubr.bf16.gmra.mrb[0].mxu0 %v4111
      %v4267 = vpop.f32.mrb[0].mxu0
      %v4268 = vadd.f32 0.0, %v4267
      %v4269 = vpop.f32.mrb[0].mxu0
      %v4270 = vpop.f32.mrb[0].mxu0
      %v4271 = vadd.f32 0.0, %v4270
      %v4272 = vpop.f32.mrb[0].mxu0
      %4273 = vmatprep.mubr.bf16.mxu0 0
      %4274 = vmatmul.mubr.bf16.gmra.mrb[0].mxu0 %v4112
      %v4275 = vpop.f32.mrb[0].mxu0
      %v4276 = vadd.f32 0.0, %v4275
      %v4277 = vpop.f32.mrb[0].mxu0
      %v4278 = vpop.f32.mrb[0].mxu0
      %v4279 = vadd.f32 0.0, %v4278
      %v4280 = vpop.f32.mrb[0].mxu0
      %4281 = vmatprep.mubr.bf16.mxu0 0
      %4282 = vmatmul.mubr.bf16.gmra.mrb[0].mxu0 %v4113
      %v4283 = vpop.f32.mrb[0].mxu0
      %v4284 = vadd.f32 0.0, %v4283
      %v4285 = vpop.f32.mrb[0].mxu0
      %v4286 = vpop.f32.mrb[0].mxu0
      %v4287 = vadd.f32 0.0, %v4286
      %v4288 = vpop.f32.mrb[0].mxu0
      %4289 = vmatprep.mubr.bf16.mxu0 0
      %4290 = vmatmul.mubr.bf16.gmra.mrb[0].mxu0 %v4114
      %v4291 = vpop.f32.mrb[0].mxu0
      %v4292 = vadd.f32 0.0, %v4291
      %v4293 = vpop.f32.mrb[0].mxu0
      %v4294 = vpop.f32.mrb[0].mxu0
      %v4295 = vadd.f32 0.0, %v4294
      %v4296 = vpop.f32.mrb[0].mxu0
      %4297 = vmatprep.mubr.bf16.mxu0 0
      %4298 = vmatmul.mubr.bf16.gmra.mrb[0].mxu0 %v4115
      %v4299 = vpop.f32.mrb[0].mxu0
      %v4300 = vadd.f32 0.0, %v4299
      %v4301 = vpop.f32.mrb[0].mxu0
      %v4302 = vpop.f32.mrb[0].mxu0
      %v4303 = vadd.f32 0.0, %v4302
      %v4304 = vpop.f32.mrb[0].mxu0
      %4305 = vmatprep.mubr.bf16.mxu0 0
      %4306 = vmatmul.mubr.bf16.gmra.mrb[0].mxu0 %v4116
      %v4307 = vpop.f32.mrb[0].mxu0
      %v4308 = vadd.f32 0.0, %v4307
      %v4309 = vpop.f32.mrb[0].mxu0
      %v4310 = vpop.f32.mrb[0].mxu0
      %v4311 = vadd.f32 0.0, %v4310
      %v4312 = vpop.f32.mrb[0].mxu0
      %4313 = vmatprep.mubr.bf16.mxu0 0
      %4314 = vmatmul.mubr.bf16.gmra.mrb[0].mxu0 %v4117
      %v4315 = vpop.f32.mrb[0].mxu0
      %v4316 = vadd.f32 0.0, %v4315
      %v4317 = vpop.f32.mrb[0].mxu0
      %v4318 = vpop.f32.mrb[0].mxu0
      %v4319 = vadd.f32 0.0, %v4318
      %v4320 = vpop.f32.mrb[0].mxu0
      %4321 = vmatprep.mubr.bf16.mxu0 0
      %4322 = vmatmul.mubr.bf16.gmra.mrb[0].mxu0 %v4118
      %v4323 = vpop.f32.mrb[0].mxu0
      %v4324 = vadd.f32 0.0, %v4323
      %v4325 = vpop.f32.mrb[0].mxu0
      %v4326 = vpop.f32.mrb[0].mxu0
      %v4327 = vadd.f32 0.0, %v4326
      %v4328 = vpop.f32.mrb[0].mxu0
      %4329 = vmatprep.mubr.bf16.mxu0 0
      %4330 = vmatmul.mubr.bf16.gmra.mrb[0].mxu0 %v4119
      %v4331 = vpop.f32.mrb[0].mxu0
      %v4332 = vadd.f32 0.0, %v4331
      %v4333 = vpop.f32.mrb[0].mxu0
      %v4334 = vpop.f32.mrb[0].mxu0
      %v4335 = vadd.f32 0.0, %v4334
      %v4336 = vpop.f32.mrb[0].mxu0
      %4337 = vmatprep.mubr.bf16.mxu0 0
      %4338 = vmatmul.mubr.bf16.gmra.mrb[0].mxu0 %v4120
      %v4339 = vpop.f32.mrb[0].mxu0
      %v4340 = vadd.f32 0.0, %v4339
      %v4341 = vpop.f32.mrb[0].mxu0
      %v4342 = vpop.f32.mrb[0].mxu0
      %v4343 = vadd.f32 0.0, %v4342
      %v4344 = vpop.f32.mrb[0].mxu0
      %4345 = vdwg.mxu0
      %v4346 = vadd.f32 %v3865, %v4220
      %v4347 = vadd.f32 %v3866, %v4223
      %v4348 = vadd.f32 %v3867, %v4228
      %v4349 = vadd.f32 %v3868, %v4231
      %v4350 = vadd.f32 %v3869, %v4236
      %v4351 = vadd.f32 %v3870, %v4239
      %v4352 = vadd.f32 %v3871, %v4244
      %v4353 = vadd.f32 %v3872, %v4247
      %v4354 = vadd.f32 %v3873, %v4252
      %v4355 = vadd.f32 %v3874, %v4255
      %v4356 = vadd.f32 %v3875, %v4260
      %v4357 = vadd.f32 %v3876, %v4263
      %v4358 = vadd.f32 %v3877, %v4268
      %v4359 = vadd.f32 %v3878, %v4271
      %v4360 = vadd.f32 %v3879, %v4276
      %v4361 = vadd.f32 %v3880, %v4279
      %v4362 = vadd.f32 %v3881, %v4284
      %v4363 = vadd.f32 %v3882, %v4287
      %v4364 = vadd.f32 %v3883, %v4292
      %v4365 = vadd.f32 %v3884, %v4295
      %v4366 = vadd.f32 %v3885, %v4300
      %v4367 = vadd.f32 %v3886, %v4303
      %v4368 = vadd.f32 %v3887, %v4308
      %v4369 = vadd.f32 %v3888, %v4311
      %v4370 = vadd.f32 %v3889, %v4316
      %v4371 = vadd.f32 %v3890, %v4319
      %v4372 = vadd.f32 %v3891, %v4324
      %v4373 = vadd.f32 %v3892, %v4327
      %v4374 = vadd.f32 %v3893, %v4332
      %v4375 = vadd.f32 %v3894, %v4335
      %v4376 = vadd.f32 %v3895, %v4340
      %v4377 = vadd.f32 %v3896, %v4343
      %s4378 = scalar_lea.vmem [#allocation2], 24
      %v4379 = vld [vmem:[%s4378] sm:$0xf]
      %v4380 = vld [vmem:[%s4378 + $0x4] sm:$0xf]
      %v4381 = vld [vmem:[%s4378 + $0xc] sm:$0xf]
      %v4382 = vld [vmem:[%s4378 + $0x10] sm:$0xf]
      %v4383 = vld [vmem:[%s4378 + $0x18] sm:$0xf]
      %v4384 = vld [vmem:[%s4378 + $0x1c] sm:$0xf]
      %v4385 = vld [vmem:[%s4378 + $0x24] sm:$0xf]
      %v4386 = vld [vmem:[%s4378 + $0x28] sm:$0xf]
      %v4387 = vld [vmem:[%s4378 + $0x30] sm:$0xf]
      %v4388 = vld [vmem:[%s4378 + $0x34] sm:$0xf]
      %v4389 = vld [vmem:[%s4378 + $0x3c] sm:$0xf]
      %v4390 = vld [vmem:[%s4378 + $0x40] sm:$0xf]
      %v4391 = vld [vmem:[%s4378 + $0x48] sm:$0xf]
      %v4392 = vld [vmem:[%s4378 + $0x4c] sm:$0xf]
      %v4393 = vld [vmem:[%s4378 + $0x54] sm:$0xf]
      %v4394 = vld [vmem:[%s4378 + $0x58] sm:$0xf]
      %v4395 = vld [vmem:[%s4378 + $0x60] sm:$0xf]
      %v4396 = vld [vmem:[%s4378 + $0x64] sm:$0xf]
      %v4397 = vld [vmem:[%s4378 + $0x6c] sm:$0xf]
      %v4398 = vld [vmem:[%s4378 + $0x70] sm:$0xf]
      %v4399 = vld [vmem:[%s4378 + $0x78] sm:$0xf]
      %v4400 = vld [vmem:[%s4378 + $0x7c] sm:$0xf]
      %v4401 = vld [vmem:[%s4378 + $0x84] sm:$0xf]
      %v4402 = vld [vmem:[%s4378 + $0x88] sm:$0xf]
      %v4403 = vld [vmem:[%s4378 + $0x90] sm:$0xf]
      %v4404 = vld [vmem:[%s4378 + $0x94] sm:$0xf]
      %v4405 = vld [vmem:[%s4378 + $0x9c] sm:$0xf]
      %v4406 = vld [vmem:[%s4378 + $0xa0] sm:$0xf]
      %v4407 = vld [vmem:[%s4378 + $0xa8] sm:$0xf]
      %v4408 = vld [vmem:[%s4378 + $0xac] sm:$0xf]
      %v4409 = vld [vmem:[%s4378 + $0xb4] sm:$0xf]
      %v4410 = vld [vmem:[%s4378 + $0xb8] sm:$0xf]
      %v4443 = vunpack.c.l.b16 %v4379
      %v4444 = vunpack.c.l.b16 %v4380
      %v4445 = vunpack.c.l.b16 %v4381
      %v4446 = vunpack.c.l.b16 %v4382
      %v4447 = vunpack.c.l.b16 %v4383
      %v4448 = vunpack.c.l.b16 %v4384
      %v4449 = vunpack.c.l.b16 %v4385
      %v4450 = vunpack.c.l.b16 %v4386
      %v4451 = vunpack.c.l.b16 %v4387
      %v4452 = vunpack.c.l.b16 %v4388
      %v4453 = vunpack.c.l.b16 %v4389
      %v4454 = vunpack.c.l.b16 %v4390
      %v4455 = vunpack.c.l.b16 %v4391
      %v4456 = vunpack.c.l.b16 %v4392
      %v4457 = vunpack.c.l.b16 %v4393
      %v4458 = vunpack.c.l.b16 %v4394
      %v4459 = vunpack.c.l.b16 %v4395
      %v4460 = vunpack.c.l.b16 %v4396
      %v4461 = vunpack.c.l.b16 %v4397
      %v4462 = vunpack.c.l.b16 %v4398
      %v4463 = vunpack.c.l.b16 %v4399
      %v4464 = vunpack.c.l.b16 %v4400
      %v4465 = vunpack.c.l.b16 %v4401
      %v4466 = vunpack.c.l.b16 %v4402
      %v4467 = vunpack.c.l.b16 %v4403
      %v4468 = vunpack.c.l.b16 %v4404
      %v4469 = vunpack.c.l.b16 %v4405
      %v4470 = vunpack.c.l.b16 %v4406
      %v4471 = vunpack.c.l.b16 %v4407
      %v4472 = vunpack.c.l.b16 %v4408
      %v4473 = vunpack.c.l.b16 %v4409
      %v4474 = vunpack.c.l.b16 %v4410
      %v4475 = vpack.c.b16 %v4444, %v4443
      %v4476 = vpack.c.b16 %v4446, %v4445
      %v4477 = vpack.c.b16 %v4448, %v4447
      %v4478 = vpack.c.b16 %v4450, %v4449
      %v4479 = vpack.c.b16 %v4452, %v4451
      %v4480 = vpack.c.b16 %v4454, %v4453
      %v4481 = vpack.c.b16 %v4456, %v4455
      %v4482 = vpack.c.b16 %v4458, %v4457
      %v4483 = vpack.c.b16 %v4460, %v4459
      %v4484 = vpack.c.b16 %v4462, %v4461
      %v4485 = vpack.c.b16 %v4464, %v4463
      %v4486 = vpack.c.b16 %v4466, %v4465
      %v4487 = vpack.c.b16 %v4468, %v4467
      %v4488 = vpack.c.b16 %v4470, %v4469
      %v4489 = vpack.c.b16 %v4472, %v4471
      %v4490 = vpack.c.b16 %v4474, %v4473
      %v4523 = vunpack.c.l.b16 %v1260
      %v4524 = vunpack.c.l.b16 %v1261
      %v4525 = vunpack.c.l.b16 %v1262
      %v4526 = vunpack.c.l.b16 %v1263
      %v4527 = vunpack.c.l.b16 %v1264
      %v4528 = vunpack.c.l.b16 %v1265
      %v4529 = vunpack.c.l.b16 %v1266
      %v4530 = vunpack.c.l.b16 %v1267
      %v4531 = vunpack.c.l.b16 %v1268
      %v4532 = vunpack.c.l.b16 %v1269
      %v4533 = vunpack.c.l.b16 %v1270
      %v4534 = vunpack.c.l.b16 %v1271
      %v4535 = vunpack.c.l.b16 %v1272
      %v4536 = vunpack.c.l.b16 %v1273
      %v4537 = vunpack.c.l.b16 %v1274
      %v4538 = vunpack.c.l.b16 %v1275
      %v4539 = vpack.c.b16 %v4524, %v4523
      %v4540 = vpack.c.b16 %v4526, %v4525
      %v4541 = vpack.c.b16 %v4528, %v4527
      %v4542 = vpack.c.b16 %v4530, %v4529
      %v4543 = vpack.c.b16 %v4532, %v4531
      %v4544 = vpack.c.b16 %v4534, %v4533
      %v4545 = vpack.c.b16 %v4536, %v4535
      %v4546 = vpack.c.b16 %v4538, %v4537
      %4555 = vmatprep.subr.bf16.mxu0 0
      %4556 = vmatpush1.bf16.msra.mxu0 %v4539
      %4557 = vmatprep.subr.bf16.mxu0 0
      %4558 = vmatpush1.bf16.msra.mxu0 %v4540
      %4559 = vmatprep.subr.bf16.mxu0 0
      %4560 = vmatpush1.bf16.msra.mxu0 %v4541
      %4561 = vmatprep.subr.bf16.mxu0 0
      %4562 = vmatpush1.bf16.msra.mxu0 %v4542
      %4563 = vmatprep.subr.bf16.mxu0 0
      %4564 = vmatpush1.bf16.msra.mxu0 %v4543
      %4565 = vmatprep.subr.bf16.mxu0 0
      %4566 = vmatpush1.bf16.msra.mxu0 %v4544
      %4567 = vmatprep.subr.bf16.mxu0 0
      %4568 = vmatpush1.bf16.msra.mxu0 %v4545
      %4569 = vmatprep.subr.bf16.mxu0 0
      %4570 = vmatpush1.bf16.msra.mxu0 %v4546
      %4571 = vmatprep.subr.bf16.mxu0 0
      %4572 = vmatpush1.bf16.msra.mxu0 0
      %4573 = vmatprep.subr.bf16.mxu0 0
      %4574 = vmatpush1.bf16.msra.mxu0 0
      %4575 = vmatprep.subr.bf16.mxu0 0
      %4576 = vmatpush1.bf16.msra.mxu0 0
      %4577 = vmatprep.subr.bf16.mxu0 0
      %4578 = vmatpush1.bf16.msra.mxu0 0
      %4579 = vmatprep.subr.bf16.mxu0 0
      %4580 = vmatpush1.bf16.msra.mxu0 0
      %4581 = vmatprep.subr.bf16.mxu0 0
      %4582 = vmatpush1.bf16.msra.mxu0 0
      %4583 = vmatprep.subr.bf16.mxu0 0
      %4584 = vmatpush1.bf16.msra.mxu0 0
      %4585 = vmatprep.subr.bf16.mxu0 0
      %4586 = vmatpush1.bf16.msra.mxu0 0
      %4587 = vmatprep.mubr.bf16.mxu0 0
      %4588 = vmatmul.mubr.bf16.gmra.mrb[0].mxu0 %v4475
      %v4589 = vpop.f32.mrb[0].mxu0
      %v4590 = vadd.f32 0.0, %v4589
      %v4591 = vpop.f32.mrb[0].mxu0
      %v4592 = vpop.f32.mrb[0].mxu0
      %v4593 = vadd.f32 0.0, %v4592
      %v4594 = vpop.f32.mrb[0].mxu0
      %4595 = vmatprep.mubr.bf16.mxu0 0
      %4596 = vmatmul.mubr.bf16.gmra.mrb[0].mxu0 %v4476
      %v4597 = vpop.f32.mrb[0].mxu0
      %v4598 = vadd.f32 0.0, %v4597
      %v4599 = vpop.f32.mrb[0].mxu0
      %v4600 = vpop.f32.mrb[0].mxu0
      %v4601 = vadd.f32 0.0, %v4600
      %v4602 = vpop.f32.mrb[0].mxu0
      %4603 = vmatprep.mubr.bf16.mxu0 0
      %4604 = vmatmul.mubr.bf16.gmra.mrb[0].mxu0 %v4477
      %v4605 = vpop.f32.mrb[0].mxu0
      %v4606 = vadd.f32 0.0, %v4605
      %v4607 = vpop.f32.mrb[0].mxu0
      %v4608 = vpop.f32.mrb[0].mxu0
      %v4609 = vadd.f32 0.0, %v4608
      %v4610 = vpop.f32.mrb[0].mxu0
      %4611 = vmatprep.mubr.bf16.mxu0 0
      %4612 = vmatmul.mubr.bf16.gmra.mrb[0].mxu0 %v4478
      %v4613 = vpop.f32.mrb[0].mxu0
      %v4614 = vadd.f32 0.0, %v4613
      %v4615 = vpop.f32.mrb[0].mxu0
      %v4616 = vpop.f32.mrb[0].mxu0
      %v4617 = vadd.f32 0.0, %v4616
      %v4618 = vpop.f32.mrb[0].mxu0
      %4619 = vmatprep.mubr.bf16.mxu0 0
      %4620 = vmatmul.mubr.bf16.gmra.mrb[0].mxu0 %v4479
      %v4621 = vpop.f32.mrb[0].mxu0
      %v4622 = vadd.f32 0.0, %v4621
      %v4623 = vpop.f32.mrb[0].mxu0
      %v4624 = vpop.f32.mrb[0].mxu0
      %v4625 = vadd.f32 0.0, %v4624
      %v4626 = vpop.f32.mrb[0].mxu0
      %4627 = vmatprep.mubr.bf16.mxu0 0
      %4628 = vmatmul.mubr.bf16.gmra.mrb[0].mxu0 %v4480
      %v4629 = vpop.f32.mrb[0].mxu0
      %v4630 = vadd.f32 0.0, %v4629
      %v4631 = vpop.f32.mrb[0].mxu0
      %v4632 = vpop.f32.mrb[0].mxu0
      %v4633 = vadd.f32 0.0, %v4632
      %v4634 = vpop.f32.mrb[0].mxu0
      %4635 = vmatprep.mubr.bf16.mxu0 0
      %4636 = vmatmul.mubr.bf16.gmra.mrb[0].mxu0 %v4481
      %v4637 = vpop.f32.mrb[0].mxu0
      %v4638 = vadd.f32 0.0, %v4637
      %v4639 = vpop.f32.mrb[0].mxu0
      %v4640 = vpop.f32.mrb[0].mxu0
      %v4641 = vadd.f32 0.0, %v4640
      %v4642 = vpop.f32.mrb[0].mxu0
      %4643 = vmatprep.mubr.bf16.mxu0 0
      %4644 = vmatmul.mubr.bf16.gmra.mrb[0].mxu0 %v4482
      %v4645 = vpop.f32.mrb[0].mxu0
      %v4646 = vadd.f32 0.0, %v4645
      %v4647 = vpop.f32.mrb[0].mxu0
      %v4648 = vpop.f32.mrb[0].mxu0
      %v4649 = vadd.f32 0.0, %v4648
      %v4650 = vpop.f32.mrb[0].mxu0
      %4651 = vmatprep.mubr.bf16.mxu0 0
      %4652 = vmatmul.mubr.bf16.gmra.mrb[0].mxu0 %v4483
      %v4653 = vpop.f32.mrb[0].mxu0
      %v4654 = vadd.f32 0.0, %v4653
      %v4655 = vpop.f32.mrb[0].mxu0
      %v4656 = vpop.f32.mrb[0].mxu0
      %v4657 = vadd.f32 0.0, %v4656
      %v4658 = vpop.f32.mrb[0].mxu0
      %4659 = vmatprep.mubr.bf16.mxu0 0
      %4660 = vmatmul.mubr.bf16.gmra.mrb[0].mxu0 %v4484
      %v4661 = vpop.f32.mrb[0].mxu0
      %v4662 = vadd.f32 0.0, %v4661
      %v4663 = vpop.f32.mrb[0].mxu0
      %v4664 = vpop.f32.mrb[0].mxu0
      %v4665 = vadd.f32 0.0, %v4664
      %v4666 = vpop.f32.mrb[0].mxu0
      %4667 = vmatprep.mubr.bf16.mxu0 0
      %4668 = vmatmul.mubr.bf16.gmra.mrb[0].mxu0 %v4485
      %v4669 = vpop.f32.mrb[0].mxu0
      %v4670 = vadd.f32 0.0, %v4669
      %v4671 = vpop.f32.mrb[0].mxu0
      %v4672 = vpop.f32.mrb[0].mxu0
      %v4673 = vadd.f32 0.0, %v4672
      %v4674 = vpop.f32.mrb[0].mxu0
      %4675 = vmatprep.mubr.bf16.mxu0 0
      %4676 = vmatmul.mubr.bf16.gmra.mrb[0].mxu0 %v4486
      %v4677 = vpop.f32.mrb[0].mxu0
      %v4678 = vadd.f32 0.0, %v4677
      %v4679 = vpop.f32.mrb[0].mxu0
      %v4680 = vpop.f32.mrb[0].mxu0
      %v4681 = vadd.f32 0.0, %v4680
      %v4682 = vpop.f32.mrb[0].mxu0
      %4683 = vmatprep.mubr.bf16.mxu0 0
      %4684 = vmatmul.mubr.bf16.gmra.mrb[0].mxu0 %v4487
      %v4685 = vpop.f32.mrb[0].mxu0
      %v4686 = vadd.f32 0.0, %v4685
      %v4687 = vpop.f32.mrb[0].mxu0
      %v4688 = vpop.f32.mrb[0].mxu0
      %v4689 = vadd.f32 0.0, %v4688
      %v4690 = vpop.f32.mrb[0].mxu0
      %4691 = vmatprep.mubr.bf16.mxu0 0
      %4692 = vmatmul.mubr.bf16.gmra.mrb[0].mxu0 %v4488
      %v4693 = vpop.f32.mrb[0].mxu0
      %v4694 = vadd.f32 0.0, %v4693
      %v4695 = vpop.f32.mrb[0].mxu0
      %v4696 = vpop.f32.mrb[0].mxu0
      %v4697 = vadd.f32 0.0, %v4696
      %v4698 = vpop.f32.mrb[0].mxu0
      %4699 = vmatprep.mubr.bf16.mxu0 0
      %4700 = vmatmul.mubr.bf16.gmra.mrb[0].mxu0 %v4489
      %v4701 = vpop.f32.mrb[0].mxu0
      %v4702 = vadd.f32 0.0, %v4701
      %v4703 = vpop.f32.mrb[0].mxu0
      %v4704 = vpop.f32.mrb[0].mxu0
      %v4705 = vadd.f32 0.0, %v4704
      %v4706 = vpop.f32.mrb[0].mxu0
      %4707 = vmatprep.mubr.bf16.mxu0 0
      %4708 = vmatmul.mubr.bf16.gmra.mrb[0].mxu0 %v4490
      %v4709 = vpop.f32.mrb[0].mxu0
      %v4710 = vadd.f32 0.0, %v4709
      %v4711 = vpop.f32.mrb[0].mxu0
      %v4712 = vpop.f32.mrb[0].mxu0
      %v4713 = vadd.f32 0.0, %v4712
      %v4714 = vpop.f32.mrb[0].mxu0
      %4715 = vdwg.mxu0
      %v4716 = vadd.f32 %v4346, %v4590
      %v4717 = vadd.f32 %v4347, %v4593
      %v4718 = vadd.f32 %v4348, %v4598
      %v4719 = vadd.f32 %v4349, %v4601
      %v4720 = vadd.f32 %v4350, %v4606
      %v4721 = vadd.f32 %v4351, %v4609
      %v4722 = vadd.f32 %v4352, %v4614
      %v4723 = vadd.f32 %v4353, %v4617
      %v4724 = vadd.f32 %v4354, %v4622
      %v4725 = vadd.f32 %v4355, %v4625
      %v4726 = vadd.f32 %v4356, %v4630
      %v4727 = vadd.f32 %v4357, %v4633
      %v4728 = vadd.f32 %v4358, %v4638
      %v4729 = vadd.f32 %v4359, %v4641
      %v4730 = vadd.f32 %v4360, %v4646
      %v4731 = vadd.f32 %v4361, %v4649
      %v4732 = vadd.f32 %v4362, %v4654
      %v4733 = vadd.f32 %v4363, %v4657
      %v4734 = vadd.f32 %v4364, %v4662
      %v4735 = vadd.f32 %v4365, %v4665
      %v4736 = vadd.f32 %v4366, %v4670
      %v4737 = vadd.f32 %v4367, %v4673
      %v4738 = vadd.f32 %v4368, %v4678
      %v4739 = vadd.f32 %v4369, %v4681
      %v4740 = vadd.f32 %v4370, %v4686
      %v4741 = vadd.f32 %v4371, %v4689
      %v4742 = vadd.f32 %v4372, %v4694
      %v4743 = vadd.f32 %v4373, %v4697
      %v4744 = vadd.f32 %v4374, %v4702
      %v4745 = vadd.f32 %v4375, %v4705
      %v4746 = vadd.f32 %v4376, %v4710
      %v4747 = vadd.f32 %v4377, %v4713
      %v4748 = vld [vmem:[%s4378] sm:$0xf]
      %v4749 = vld [vmem:[%s4378 + $0x4] sm:$0xf]
      %v4750 = vld [vmem:[%s4378 + $0x8] sm:$0x1]
      %v4751 = vld [vmem:[%s4378 + $0xc] sm:$0xf]
      %v4752 = vld [vmem:[%s4378 + $0x10] sm:$0xf]
      %v4753 = vld [vmem:[%s4378 + $0x14] sm:$0x1]
      %v4754 = vld [vmem:[%s4378 + $0x18] sm:$0xf]
      %v4755 = vld [vmem:[%s4378 + $0x1c] sm:$0xf]
      %v4756 = vld [vmem:[%s4378 + $0x20] sm:$0x1]
      %v4757 = vld [vmem:[%s4378 + $0x24] sm:$0xf]
      %v4758 = vld [vmem:[%s4378 + $0x28] sm:$0xf]
      %v4759 = vld [vmem:[%s4378 + $0x2c] sm:$0x1]
      %v4760 = vld [vmem:[%s4378 + $0x30] sm:$0xf]
      %v4761 = vld [vmem:[%s4378 + $0x34] sm:$0xf]
      %v4762 = vld [vmem:[%s4378 + $0x38] sm:$0x1]
      %v4763 = vld [vmem:[%s4378 + $0x3c] sm:$0xf]
      %v4764 = vld [vmem:[%s4378 + $0x40] sm:$0xf]
      %v4765 = vld [vmem:[%s4378 + $0x44] sm:$0x1]
      %v4766 = vld [vmem:[%s4378 + $0x48] sm:$0xf]
      %v4767 = vld [vmem:[%s4378 + $0x4c] sm:$0xf]
      %v4768 = vld [vmem:[%s4378 + $0x50] sm:$0x1]
      %v4769 = vld [vmem:[%s4378 + $0x54] sm:$0xf]
      %v4770 = vld [vmem:[%s4378 + $0x58] sm:$0xf]
      %v4771 = vld [vmem:[%s4378 + $0x5c] sm:$0x1]
      %v4772 = vld [vmem:[%s4378 + $0x60] sm:$0xf]
      %v4773 = vld [vmem:[%s4378 + $0x64] sm:$0xf]
      %v4774 = vld [vmem:[%s4378 + $0x68] sm:$0x1]
      %v4775 = vld [vmem:[%s4378 + $0x6c] sm:$0xf]
      %v4776 = vld [vmem:[%s4378 + $0x70] sm:$0xf]
      %v4777 = vld [vmem:[%s4378 + $0x74] sm:$0x1]
      %v4778 = vld [vmem:[%s4378 + $0x78] sm:$0xf]
      %v4779 = vld [vmem:[%s4378 + $0x7c] sm:$0xf]
      %v4780 = vld [vmem:[%s4378 + $0x80] sm:$0x1]
      %v4781 = vld [vmem:[%s4378 + $0x84] sm:$0xf]
      %v4782 = vld [vmem:[%s4378 + $0x88] sm:$0xf]
      %v4783 = vld [vmem:[%s4378 + $0x8c] sm:$0x1]
      %v4784 = vld [vmem:[%s4378 + $0x90] sm:$0xf]
      %v4785 = vld [vmem:[%s4378 + $0x94] sm:$0xf]
      %v4786 = vld [vmem:[%s4378 + $0x98] sm:$0x1]
      %v4787 = vld [vmem:[%s4378 + $0x9c] sm:$0xf]
      %v4788 = vld [vmem:[%s4378 + $0xa0] sm:$0xf]
      %v4789 = vld [vmem:[%s4378 + $0xa4] sm:$0x1]
      %v4790 = vld [vmem:[%s4378 + $0xa8] sm:$0xf]
      %v4791 = vld [vmem:[%s4378 + $0xac] sm:$0xf]
      %v4792 = vld [vmem:[%s4378 + $0xb0] sm:$0x1]
      %v4793 = vld [vmem:[%s4378 + $0xb4] sm:$0xf]
      %v4794 = vld [vmem:[%s4378 + $0xb8] sm:$0xf]
      %v4795 = vld [vmem:[%s4378 + $0xbc] sm:$0x1]
      %v4797 = vshrl.u32 %v4748, 16
      %v4799 = vrot.slane %v4797, 4
      %v4800 = vshll.u32 %v4748, 16
      %v4802 = vrot.slane %v4800, 5
      %v4803 = vor.u32 %v4799, %v4802
      %v4804 = vrot.slane %v4803, 4
      %v4806 = vshll.u32 %v4749, 16
      %v4808 = vrot.slane %v4806, 5
      %v4809 = vsel %vm1360, %v4804, %v4808
      %v4810 = vshrl.u32 %v4749, 16
      %v4812 = vrot.slane %v4810, 4
      %v4813 = vor.u32 %v4812, %v4808
      %v4814 = vrot.slane %v4813, 4
      %v4816 = vshll.u32 %v4750, 16
      %v4818 = vrot.slane %v4816, 5
      %v4819 = vsel %vm1360, %v4814, %v4818
      %v4821 = vshrl.u32 %v4751, 16
      %v4823 = vrot.slane %v4821, 4
      %v4824 = vshll.u32 %v4751, 16
      %v4826 = vrot.slane %v4824, 5
      %v4827 = vor.u32 %v4823, %v4826
      %v4828 = vrot.slane %v4827, 4
      %v4830 = vshll.u32 %v4752, 16
      %v4832 = vrot.slane %v4830, 5
      %v4833 = vsel %vm1360, %v4828, %v4832
      %v4834 = vshrl.u32 %v4752, 16
      %v4836 = vrot.slane %v4834, 4
      %v4837 = vor.u32 %v4836, %v4832
      %v4838 = vrot.slane %v4837, 4
      %v4840 = vshll.u32 %v4753, 16
      %v4842 = vrot.slane %v4840, 5
      %v4843 = vsel %vm1360, %v4838, %v4842
      %v4845 = vshrl.u32 %v4754, 16
      %v4847 = vrot.slane %v4845, 4
      %v4848 = vshll.u32 %v4754, 16
      %v4850 = vrot.slane %v4848, 5
      %v4851 = vor.u32 %v4847, %v4850
      %v4852 = vrot.slane %v4851, 4
      %v4854 = vshll.u32 %v4755, 16
      %v4856 = vrot.slane %v4854, 5
      %v4857 = vsel %vm1360, %v4852, %v4856
      %v4858 = vshrl.u32 %v4755, 16
      %v4860 = vrot.slane %v4858, 4
      %v4861 = vor.u32 %v4860, %v4856
      %v4862 = vrot.slane %v4861, 4
      %v4864 = vshll.u32 %v4756, 16
      %v4866 = vrot.slane %v4864, 5
      %v4867 = vsel %vm1360, %v4862, %v4866
      %v4869 = vshrl.u32 %v4757, 16
      %v4871 = vrot.slane %v4869, 4
      %v4872 = vshll.u32 %v4757, 16
      %v4874 = vrot.slane %v4872, 5
      %v4875 = vor.u32 %v4871, %v4874
      %v4876 = vrot.slane %v4875, 4
      %v4878 = vshll.u32 %v4758, 16
      %v4880 = vrot.slane %v4878, 5
      %v4881 = vsel %vm1360, %v4876, %v4880
      %v4882 = vshrl.u32 %v4758, 16
      %v4884 = vrot.slane %v4882, 4
      %v4885 = vor.u32 %v4884, %v4880
      %v4886 = vrot.slane %v4885, 4
      %v4888 = vshll.u32 %v4759, 16
      %v4890 = vrot.slane %v4888, 5
      %v4891 = vsel %vm1360, %v4886, %v4890
      %v4893 = vshrl.u32 %v4760, 16
      %v4895 = vrot.slane %v4893, 4
      %v4896 = vshll.u32 %v4760, 16
      %v4898 = vrot.slane %v4896, 5
      %v4899 = vor.u32 %v4895, %v4898
      %v4900 = vrot.slane %v4899, 4
      %v4902 = vshll.u32 %v4761, 16
      %v4904 = vrot.slane %v4902, 5
      %v4905 = vsel %vm1360, %v4900, %v4904
      %v4906 = vshrl.u32 %v4761, 16
      %v4908 = vrot.slane %v4906, 4
      %v4909 = vor.u32 %v4908, %v4904
      %v4910 = vrot.slane %v4909, 4
      %v4912 = vshll.u32 %v4762, 16
      %v4914 = vrot.slane %v4912, 5
      %v4915 = vsel %vm1360, %v4910, %v4914
      %v4917 = vshrl.u32 %v4763, 16
      %v4919 = vrot.slane %v4917, 4
      %v4920 = vshll.u32 %v4763, 16
      %v4922 = vrot.slane %v4920, 5
      %v4923 = vor.u32 %v4919, %v4922
      %v4924 = vrot.slane %v4923, 4
      %v4926 = vshll.u32 %v4764, 16
      %v4928 = vrot.slane %v4926, 5
      %v4929 = vsel %vm1360, %v4924, %v4928
      %v4930 = vshrl.u32 %v4764, 16
      %v4932 = vrot.slane %v4930, 4
      %v4933 = vor.u32 %v4932, %v4928
      %v4934 = vrot.slane %v4933, 4
      %v4936 = vshll.u32 %v4765, 16
      %v4938 = vrot.slane %v4936, 5
      %v4939 = vsel %vm1360, %v4934, %v4938
      %v4941 = vshrl.u32 %v4766, 16
      %v4943 = vrot.slane %v4941, 4
      %v4944 = vshll.u32 %v4766, 16
      %v4946 = vrot.slane %v4944, 5
      %v4947 = vor.u32 %v4943, %v4946
      %v4948 = vrot.slane %v4947, 4
      %v4950 = vshll.u32 %v4767, 16
      %v4952 = vrot.slane %v4950, 5
      %v4953 = vsel %vm1360, %v4948, %v4952
      %v4954 = vshrl.u32 %v4767, 16
      %v4956 = vrot.slane %v4954, 4
      %v4957 = vor.u32 %v4956, %v4952
      %v4958 = vrot.slane %v4957, 4
      %v4960 = vshll.u32 %v4768, 16
      %v4962 = vrot.slane %v4960, 5
      %v4963 = vsel %vm1360, %v4958, %v4962
      %v4965 = vshrl.u32 %v4769, 16
      %v4967 = vrot.slane %v4965, 4
      %v4968 = vshll.u32 %v4769, 16
      %v4970 = vrot.slane %v4968, 5
      %v4971 = vor.u32 %v4967, %v4970
      %v4972 = vrot.slane %v4971, 4
      %v4974 = vshll.u32 %v4770, 16
      %v4976 = vrot.slane %v4974, 5
      %v4977 = vsel %vm1360, %v4972, %v4976
      %v4978 = vshrl.u32 %v4770, 16
      %v4980 = vrot.slane %v4978, 4
      %v4981 = vor.u32 %v4980, %v4976
      %v4982 = vrot.slane %v4981, 4
      %v4984 = vshll.u32 %v4771, 16
      %v4986 = vrot.slane %v4984, 5
      %v4987 = vsel %vm1360, %v4982, %v4986
      %v4989 = vshrl.u32 %v4772, 16
      %v4991 = vrot.slane %v4989, 4
      %v4992 = vshll.u32 %v4772, 16
      %v4994 = vrot.slane %v4992, 5
      %v4995 = vor.u32 %v4991, %v4994
      %v4996 = vrot.slane %v4995, 4
      %v4998 = vshll.u32 %v4773, 16
      %v5000 = vrot.slane %v4998, 5
      %v5001 = vsel %vm1360, %v4996, %v5000
      %v5002 = vshrl.u32 %v4773, 16
      %v5004 = vrot.slane %v5002, 4
      %v5005 = vor.u32 %v5004, %v5000
      %v5006 = vrot.slane %v5005, 4
      %v5008 = vshll.u32 %v4774, 16
      %v5010 = vrot.slane %v5008, 5
      %v5011 = vsel %vm1360, %v5006, %v5010
      %v5013 = vshrl.u32 %v4775, 16
      %v5015 = vrot.slane %v5013, 4
      %v5016 = vshll.u32 %v4775, 16
      %v5018 = vrot.slane %v5016, 5
      %v5019 = vor.u32 %v5015, %v5018
      %v5020 = vrot.slane %v5019, 4
      %v5022 = vshll.u32 %v4776, 16
      %v5024 = vrot.slane %v5022, 5
      %v5025 = vsel %vm1360, %v5020, %v5024
      %v5026 = vshrl.u32 %v4776, 16
      %v5028 = vrot.slane %v5026, 4
      %v5029 = vor.u32 %v5028, %v5024
      %v5030 = vrot.slane %v5029, 4
      %v5032 = vshll.u32 %v4777, 16
      %v5034 = vrot.slane %v5032, 5
      %v5035 = vsel %vm1360, %v5030, %v5034
      %v5037 = vshrl.u32 %v4778, 16
      %v5039 = vrot.slane %v5037, 4
      %v5040 = vshll.u32 %v4778, 16
      %v5042 = vrot.slane %v5040, 5
      %v5043 = vor.u32 %v5039, %v5042
      %v5044 = vrot.slane %v5043, 4
      %v5046 = vshll.u32 %v4779, 16
      %v5048 = vrot.slane %v5046, 5
      %v5049 = vsel %vm1360, %v5044, %v5048
      %v5050 = vshrl.u32 %v4779, 16
      %v5052 = vrot.slane %v5050, 4
      %v5053 = vor.u32 %v5052, %v5048
      %v5054 = vrot.slane %v5053, 4
      %v5056 = vshll.u32 %v4780, 16
      %v5058 = vrot.slane %v5056, 5
      %v5059 = vsel %vm1360, %v5054, %v5058
      %v5061 = vshrl.u32 %v4781, 16
      %v5063 = vrot.slane %v5061, 4
      %v5064 = vshll.u32 %v4781, 16
      %v5066 = vrot.slane %v5064, 5
      %v5067 = vor.u32 %v5063, %v5066
      %v5068 = vrot.slane %v5067, 4
      %v5070 = vshll.u32 %v4782, 16
      %v5072 = vrot.slane %v5070, 5
      %v5073 = vsel %vm1360, %v5068, %v5072
      %v5074 = vshrl.u32 %v4782, 16
      %v5076 = vrot.slane %v5074, 4
      %v5077 = vor.u32 %v5076, %v5072
      %v5078 = vrot.slane %v5077, 4
      %v5080 = vshll.u32 %v4783, 16
      %v5082 = vrot.slane %v5080, 5
      %v5083 = vsel %vm1360, %v5078, %v5082
      %v5085 = vshrl.u32 %v4784, 16
      %v5087 = vrot.slane %v5085, 4
      %v5088 = vshll.u32 %v4784, 16
      %v5090 = vrot.slane %v5088, 5
      %v5091 = vor.u32 %v5087, %v5090
      %v5092 = vrot.slane %v5091, 4
      %v5094 = vshll.u32 %v4785, 16
      %v5096 = vrot.slane %v5094, 5
      %v5097 = vsel %vm1360, %v5092, %v5096
      %v5098 = vshrl.u32 %v4785, 16
      %v5100 = vrot.slane %v5098, 4
      %v5101 = vor.u32 %v5100, %v5096
      %v5102 = vrot.slane %v5101, 4
      %v5104 = vshll.u32 %v4786, 16
      %v5106 = vrot.slane %v5104, 5
      %v5107 = vsel %vm1360, %v5102, %v5106
      %v5109 = vshrl.u32 %v4787, 16
      %v5111 = vrot.slane %v5109, 4
      %v5112 = vshll.u32 %v4787, 16
      %v5114 = vrot.slane %v5112, 5
      %v5115 = vor.u32 %v5111, %v5114
      %v5116 = vrot.slane %v5115, 4
      %v5118 = vshll.u32 %v4788, 16
      %v5120 = vrot.slane %v5118, 5
      %v5121 = vsel %vm1360, %v5116, %v5120
      %v5122 = vshrl.u32 %v4788, 16
      %v5124 = vrot.slane %v5122, 4
      %v5125 = vor.u32 %v5124, %v5120
      %v5126 = vrot.slane %v5125, 4
      %v5128 = vshll.u32 %v4789, 16
      %v5130 = vrot.slane %v5128, 5
      %v5131 = vsel %vm1360, %v5126, %v5130
      %v5133 = vshrl.u32 %v4790, 16
      %v5135 = vrot.slane %v5133, 4
      %v5136 = vshll.u32 %v4790, 16
      %v5138 = vrot.slane %v5136, 5
      %v5139 = vor.u32 %v5135, %v5138
      %v5140 = vrot.slane %v5139, 4
      %v5142 = vshll.u32 %v4791, 16
      %v5144 = vrot.slane %v5142, 5
      %v5145 = vsel %vm1360, %v5140, %v5144
      %v5146 = vshrl.u32 %v4791, 16
      %v5148 = vrot.slane %v5146, 4
      %v5149 = vor.u32 %v5148, %v5144
      %v5150 = vrot.slane %v5149, 4
      %v5152 = vshll.u32 %v4792, 16
      %v5154 = vrot.slane %v5152, 5
      %v5155 = vsel %vm1360, %v5150, %v5154
      %v5157 = vshrl.u32 %v4793, 16
      %v5159 = vrot.slane %v5157, 4
      %v5160 = vshll.u32 %v4793, 16
      %v5162 = vrot.slane %v5160, 5
      %v5163 = vor.u32 %v5159, %v5162
      %v5164 = vrot.slane %v5163, 4
      %v5166 = vshll.u32 %v4794, 16
      %v5168 = vrot.slane %v5166, 5
      %v5169 = vsel %vm1360, %v5164, %v5168
      %v5170 = vshrl.u32 %v4794, 16
      %v5172 = vrot.slane %v5170, 4
      %v5173 = vor.u32 %v5172, %v5168
      %v5174 = vrot.slane %v5173, 4
      %v5176 = vshll.u32 %v4795, 16
      %v5178 = vrot.slane %v5176, 5
      %v5179 = vsel %vm1360, %v5174, %v5178
      %v5180 = vunpack.c.l.b16 %v4809
      %v5181 = vunpack.c.l.b16 %v4819
      %v5182 = vunpack.c.l.b16 %v4833
      %v5183 = vunpack.c.l.b16 %v4843
      %v5184 = vunpack.c.l.b16 %v4857
      %v5185 = vunpack.c.l.b16 %v4867
      %v5186 = vunpack.c.l.b16 %v4881
      %v5187 = vunpack.c.l.b16 %v4891
      %v5188 = vunpack.c.l.b16 %v4905
      %v5189 = vunpack.c.l.b16 %v4915
      %v5190 = vunpack.c.l.b16 %v4929
      %v5191 = vunpack.c.l.b16 %v4939
      %v5192 = vunpack.c.l.b16 %v4953
      %v5193 = vunpack.c.l.b16 %v4963
      %v5194 = vunpack.c.l.b16 %v4977
      %v5195 = vunpack.c.l.b16 %v4987
      %v5196 = vunpack.c.l.b16 %v5001
      %v5197 = vunpack.c.l.b16 %v5011
      %v5198 = vunpack.c.l.b16 %v5025
      %v5199 = vunpack.c.l.b16 %v5035
      %v5200 = vunpack.c.l.b16 %v5049
      %v5201 = vunpack.c.l.b16 %v5059
      %v5202 = vunpack.c.l.b16 %v5073
      %v5203 = vunpack.c.l.b16 %v5083
      %v5204 = vunpack.c.l.b16 %v5097
      %v5205 = vunpack.c.l.b16 %v5107
      %v5206 = vunpack.c.l.b16 %v5121
      %v5207 = vunpack.c.l.b16 %v5131
      %v5208 = vunpack.c.l.b16 %v5145
      %v5209 = vunpack.c.l.b16 %v5155
      %v5210 = vunpack.c.l.b16 %v5169
      %v5211 = vunpack.c.l.b16 %v5179
      %v5212 = vpack.c.b16 %v5181, %v5180
      %v5213 = vpack.c.b16 %v5183, %v5182
      %v5214 = vpack.c.b16 %v5185, %v5184
      %v5215 = vpack.c.b16 %v5187, %v5186
      %v5216 = vpack.c.b16 %v5189, %v5188
      %v5217 = vpack.c.b16 %v5191, %v5190
      %v5218 = vpack.c.b16 %v5193, %v5192
      %v5219 = vpack.c.b16 %v5195, %v5194
      %v5220 = vpack.c.b16 %v5197, %v5196
      %v5221 = vpack.c.b16 %v5199, %v5198
      %v5222 = vpack.c.b16 %v5201, %v5200
      %v5223 = vpack.c.b16 %v5203, %v5202
      %v5224 = vpack.c.b16 %v5205, %v5204
      %v5225 = vpack.c.b16 %v5207, %v5206
      %v5226 = vpack.c.b16 %v5209, %v5208
      %v5227 = vpack.c.b16 %v5211, %v5210
      %v5260 = vunpack.c.l.b16 %v1277
      %v5261 = vunpack.c.l.b16 %v1278
      %v5262 = vunpack.c.l.b16 %v1279
      %v5263 = vunpack.c.l.b16 %v1280
      %v5264 = vunpack.c.l.b16 %v1281
      %v5265 = vunpack.c.l.b16 %v1282
      %v5266 = vunpack.c.l.b16 %v1283
      %v5267 = vunpack.c.l.b16 %v1284
      %v5268 = vunpack.c.l.b16 %v1285
      %v5269 = vunpack.c.l.b16 %v1286
      %v5270 = vunpack.c.l.b16 %v1287
      %v5271 = vunpack.c.l.b16 %v1288
      %v5272 = vunpack.c.l.b16 %v1289
      %v5273 = vunpack.c.l.b16 %v1290
      %v5274 = vunpack.c.l.b16 %v1291
      %v5275 = vunpack.c.l.b16 %v1292
      %v5276 = vpack.c.b16 %v5261, %v5260
      %v5277 = vpack.c.b16 %v5263, %v5262
      %v5278 = vpack.c.b16 %v5265, %v5264
      %v5279 = vpack.c.b16 %v5267, %v5266
      %v5280 = vpack.c.b16 %v5269, %v5268
      %v5281 = vpack.c.b16 %v5271, %v5270
      %v5282 = vpack.c.b16 %v5273, %v5272
      %v5283 = vpack.c.b16 %v5275, %v5274
      %5292 = vmatprep.subr.bf16.mxu0 0
      %5293 = vmatpush1.bf16.msra.mxu0 %v5276
      %5294 = vmatprep.subr.bf16.mxu0 0
      %5295 = vmatpush1.bf16.msra.mxu0 %v5277
      %5296 = vmatprep.subr.bf16.mxu0 0
      %5297 = vmatpush1.bf16.msra.mxu0 %v5278
      %5298 = vmatprep.subr.bf16.mxu0 0
      %5299 = vmatpush1.bf16.msra.mxu0 %v5279
      %5300 = vmatprep.subr.bf16.mxu0 0
      %5301 = vmatpush1.bf16.msra.mxu0 %v5280
      %5302 = vmatprep.subr.bf16.mxu0 0
      %5303 = vmatpush1.bf16.msra.mxu0 %v5281
      %5304 = vmatprep.subr.bf16.mxu0 0
      %5305 = vmatpush1.bf16.msra.mxu0 %v5282
      %5306 = vmatprep.subr.bf16.mxu0 0
      %5307 = vmatpush1.bf16.msra.mxu0 %v5283
      %5308 = vmatprep.subr.bf16.mxu0 0
      %5309 = vmatpush1.bf16.msra.mxu0 0
      %5310 = vmatprep.subr.bf16.mxu0 0
      %5311 = vmatpush1.bf16.msra.mxu0 0
      %5312 = vmatprep.subr.bf16.mxu0 0
      %5313 = vmatpush1.bf16.msra.mxu0 0
      %5314 = vmatprep.subr.bf16.mxu0 0
      %5315 = vmatpush1.bf16.msra.mxu0 0
      %5316 = vmatprep.subr.bf16.mxu0 0
      %5317 = vmatpush1.bf16.msra.mxu0 0
      %5318 = vmatprep.subr.bf16.mxu0 0
      %5319 = vmatpush1.bf16.msra.mxu0 0
      %5320 = vmatprep.subr.bf16.mxu0 0
      %5321 = vmatpush1.bf16.msra.mxu0 0
      %5322 = vmatprep.subr.bf16.mxu0 0
      %5323 = vmatpush1.bf16.msra.mxu0 0
      %5324 = vmatprep.mubr.bf16.mxu0 0
      %5325 = vmatmul.mubr.bf16.gmra.mrb[0].mxu0 %v5212
      %v5326 = vpop.f32.mrb[0].mxu0
      %v5327 = vadd.f32 0.0, %v5326
      %v5328 = vpop.f32.mrb[0].mxu0
      %v5329 = vpop.f32.mrb[0].mxu0
      %v5330 = vadd.f32 0.0, %v5329
      %v5331 = vpop.f32.mrb[0].mxu0
      %5332 = vmatprep.mubr.bf16.mxu0 0
      %5333 = vmatmul.mubr.bf16.gmra.mrb[0].mxu0 %v5213
      %v5334 = vpop.f32.mrb[0].mxu0
      %v5335 = vadd.f32 0.0, %v5334
      %v5336 = vpop.f32.mrb[0].mxu0
      %v5337 = vpop.f32.mrb[0].mxu0
      %v5338 = vadd.f32 0.0, %v5337
      %v5339 = vpop.f32.mrb[0].mxu0
      %5340 = vmatprep.mubr.bf16.mxu0 0
      %5341 = vmatmul.mubr.bf16.gmra.mrb[0].mxu0 %v5214
      %v5342 = vpop.f32.mrb[0].mxu0
      %v5343 = vadd.f32 0.0, %v5342
      %v5344 = vpop.f32.mrb[0].mxu0
      %v5345 = vpop.f32.mrb[0].mxu0
      %v5346 = vadd.f32 0.0, %v5345
      %v5347 = vpop.f32.mrb[0].mxu0
      %5348 = vmatprep.mubr.bf16.mxu0 0
      %5349 = vmatmul.mubr.bf16.gmra.mrb[0].mxu0 %v5215
      %v5350 = vpop.f32.mrb[0].mxu0
      %v5351 = vadd.f32 0.0, %v5350
      %v5352 = vpop.f32.mrb[0].mxu0
      %v5353 = vpop.f32.mrb[0].mxu0
      %v5354 = vadd.f32 0.0, %v5353
      %v5355 = vpop.f32.mrb[0].mxu0
      %5356 = vmatprep.mubr.bf16.mxu0 0
      %5357 = vmatmul.mubr.bf16.gmra.mrb[0].mxu0 %v5216
      %v5358 = vpop.f32.mrb[0].mxu0
      %v5359 = vadd.f32 0.0, %v5358
      %v5360 = vpop.f32.mrb[0].mxu0
      %v5361 = vpop.f32.mrb[0].mxu0
      %v5362 = vadd.f32 0.0, %v5361
      %v5363 = vpop.f32.mrb[0].mxu0
      %5364 = vmatprep.mubr.bf16.mxu0 0
      %5365 = vmatmul.mubr.bf16.gmra.mrb[0].mxu0 %v5217
      %v5366 = vpop.f32.mrb[0].mxu0
      %v5367 = vadd.f32 0.0, %v5366
      %v5368 = vpop.f32.mrb[0].mxu0
      %v5369 = vpop.f32.mrb[0].mxu0
      %v5370 = vadd.f32 0.0, %v5369
      %v5371 = vpop.f32.mrb[0].mxu0
      %5372 = vmatprep.mubr.bf16.mxu0 0
      %5373 = vmatmul.mubr.bf16.gmra.mrb[0].mxu0 %v5218
      %v5374 = vpop.f32.mrb[0].mxu0
      %v5375 = vadd.f32 0.0, %v5374
      %v5376 = vpop.f32.mrb[0].mxu0
      %v5377 = vpop.f32.mrb[0].mxu0
      %v5378 = vadd.f32 0.0, %v5377
      %v5379 = vpop.f32.mrb[0].mxu0
      %5380 = vmatprep.mubr.bf16.mxu0 0
      %5381 = vmatmul.mubr.bf16.gmra.mrb[0].mxu0 %v5219
      %v5382 = vpop.f32.mrb[0].mxu0
      %v5383 = vadd.f32 0.0, %v5382
      %v5384 = vpop.f32.mrb[0].mxu0
      %v5385 = vpop.f32.mrb[0].mxu0
      %v5386 = vadd.f32 0.0, %v5385
      %v5387 = vpop.f32.mrb[0].mxu0
      %5388 = vmatprep.mubr.bf16.mxu0 0
      %5389 = vmatmul.mubr.bf16.gmra.mrb[0].mxu0 %v5220
      %v5390 = vpop.f32.mrb[0].mxu0
      %v5391 = vadd.f32 0.0, %v5390
      %v5392 = vpop.f32.mrb[0].mxu0
      %v5393 = vpop.f32.mrb[0].mxu0
      %v5394 = vadd.f32 0.0, %v5393
      %v5395 = vpop.f32.mrb[0].mxu0
      %5396 = vmatprep.mubr.bf16.mxu0 0
      %5397 = vmatmul.mubr.bf16.gmra.mrb[0].mxu0 %v5221
      %v5398 = vpop.f32.mrb[0].mxu0
      %v5399 = vadd.f32 0.0, %v5398
      %v5400 = vpop.f32.mrb[0].mxu0
      %v5401 = vpop.f32.mrb[0].mxu0
      %v5402 = vadd.f32 0.0, %v5401
      %v5403 = vpop.f32.mrb[0].mxu0
      %5404 = vmatprep.mubr.bf16.mxu0 0
      %5405 = vmatmul.mubr.bf16.gmra.mrb[0].mxu0 %v5222
      %v5406 = vpop.f32.mrb[0].mxu0
      %v5407 = vadd.f32 0.0, %v5406
      %v5408 = vpop.f32.mrb[0].mxu0
      %v5409 = vpop.f32.mrb[0].mxu0
      %v5410 = vadd.f32 0.0, %v5409
      %v5411 = vpop.f32.mrb[0].mxu0
      %5412 = vmatprep.mubr.bf16.mxu0 0
      %5413 = vmatmul.mubr.bf16.gmra.mrb[0].mxu0 %v5223
      %v5414 = vpop.f32.mrb[0].mxu0
      %v5415 = vadd.f32 0.0, %v5414
      %v5416 = vpop.f32.mrb[0].mxu0
      %v5417 = vpop.f32.mrb[0].mxu0
      %v5418 = vadd.f32 0.0, %v5417
      %v5419 = vpop.f32.mrb[0].mxu0
      %5420 = vmatprep.mubr.bf16.mxu0 0
      %5421 = vmatmul.mubr.bf16.gmra.mrb[0].mxu0 %v5224
      %v5422 = vpop.f32.mrb[0].mxu0
      %v5423 = vadd.f32 0.0, %v5422
      %v5424 = vpop.f32.mrb[0].mxu0
      %v5425 = vpop.f32.mrb[0].mxu0
      %v5426 = vadd.f32 0.0, %v5425
      %v5427 = vpop.f32.mrb[0].mxu0
      %5428 = vmatprep.mubr.bf16.mxu0 0
      %5429 = vmatmul.mubr.bf16.gmra.mrb[0].mxu0 %v5225
      %v5430 = vpop.f32.mrb[0].mxu0
      %v5431 = vadd.f32 0.0, %v5430
      %v5432 = vpop.f32.mrb[0].mxu0
      %v5433 = vpop.f32.mrb[0].mxu0
      %v5434 = vadd.f32 0.0, %v5433
      %v5435 = vpop.f32.mrb[0].mxu0
      %5436 = vmatprep.mubr.bf16.mxu0 0
      %5437 = vmatmul.mubr.bf16.gmra.mrb[0].mxu0 %v5226
      %v5438 = vpop.f32.mrb[0].mxu0
      %v5439 = vadd.f32 0.0, %v5438
      %v5440 = vpop.f32.mrb[0].mxu0
      %v5441 = vpop.f32.mrb[0].mxu0
      %v5442 = vadd.f32 0.0, %v5441
      %v5443 = vpop.f32.mrb[0].mxu0
      %5444 = vmatprep.mubr.bf16.mxu0 0
      %5445 = vmatmul.mubr.bf16.gmra.mrb[0].mxu0 %v5227
      %v5446 = vpop.f32.mrb[0].mxu0
      %v5447 = vadd.f32 0.0, %v5446
      %v5448 = vpop.f32.mrb[0].mxu0
      %v5449 = vpop.f32.mrb[0].mxu0
      %v5450 = vadd.f32 0.0, %v5449
      %v5451 = vpop.f32.mrb[0].mxu0
      %5452 = vdwg.mxu0
      %v5453 = vadd.f32 %v4716, %v5327
      %v5454 = vadd.f32 %v4717, %v5330
      %v5455 = vadd.f32 %v4718, %v5335
      %v5456 = vadd.f32 %v4719, %v5338
      %v5457 = vadd.f32 %v4720, %v5343
      %v5458 = vadd.f32 %v4721, %v5346
      %v5459 = vadd.f32 %v4722, %v5351
      %v5460 = vadd.f32 %v4723, %v5354
      %v5461 = vadd.f32 %v4724, %v5359
      %v5462 = vadd.f32 %v4725, %v5362
      %v5463 = vadd.f32 %v4726, %v5367
      %v5464 = vadd.f32 %v4727, %v5370
      %v5465 = vadd.f32 %v4728, %v5375
      %v5466 = vadd.f32 %v4729, %v5378
      %v5467 = vadd.f32 %v4730, %v5383
      %v5468 = vadd.f32 %v4731, %v5386
      %v5469 = vadd.f32 %v4732, %v5391
      %v5470 = vadd.f32 %v4733, %v5394
      %v5471 = vadd.f32 %v4734, %v5399
      %v5472 = vadd.f32 %v4735, %v5402
      %v5473 = vadd.f32 %v4736, %v5407
      %v5474 = vadd.f32 %v4737, %v5410
      %v5475 = vadd.f32 %v4738, %v5415
      %v5476 = vadd.f32 %v4739, %v5418
      %v5477 = vadd.f32 %v4740, %v5423
      %v5478 = vadd.f32 %v4741, %v5426
      %v5479 = vadd.f32 %v4742, %v5431
      %v5480 = vadd.f32 %v4743, %v5434
      %v5481 = vadd.f32 %v4744, %v5439
      %v5482 = vadd.f32 %v4745, %v5442
      %v5483 = vadd.f32 %v4746, %v5447
      %v5484 = vadd.f32 %v4747, %v5450
      %v5485 = vld [vmem:[%s4378] sm:$0xe]
      %v5486 = vld [vmem:[%s4378 + $0xc] sm:$0xe]
      %v5487 = vld [vmem:[%s4378 + $0x18] sm:$0xe]
      %v5488 = vld [vmem:[%s4378 + $0x24] sm:$0xe]
      %v5489 = vld [vmem:[%s4378 + $0x30] sm:$0xe]
      %v5490 = vld [vmem:[%s4378 + $0x3c] sm:$0xe]
      %v5491 = vld [vmem:[%s4378 + $0x48] sm:$0xe]
      %v5492 = vld [vmem:[%s4378 + $0x54] sm:$0xe]
      %v5493 = vld [vmem:[%s4378 + $0x60] sm:$0xe]
      %v5494 = vld [vmem:[%s4378 + $0x6c] sm:$0xe]
      %v5495 = vld [vmem:[%s4378 + $0x78] sm:$0xe]
      %v5496 = vld [vmem:[%s4378 + $0x84] sm:$0xe]
      %v5497 = vld [vmem:[%s4378 + $0x90] sm:$0xe]
      %v5498 = vld [vmem:[%s4378 + $0x9c] sm:$0xe]
      %v5499 = vld [vmem:[%s4378 + $0xa8] sm:$0xe]
      %v5500 = vld [vmem:[%s4378 + $0xb4] sm:$0xe]
      %v5549 = vrot.slane %v5485, 5
      %v5550 = vrot.slane %v5549, 4
      %v5551 = vrot.slane %v4749, 5
      %v5552 = vsel %vm2373, %v5550, %v5551
      %v5553 = vrot.slane %v5551, 4
      %v5554 = vrot.slane %v4750, 5
      %v5555 = vsel %vm2373, %v5553, %v5554
      %v5556 = vrot.slane %v5486, 5
      %v5557 = vrot.slane %v5556, 4
      %v5558 = vrot.slane %v4752, 5
      %v5559 = vsel %vm2373, %v5557, %v5558
      %v5560 = vrot.slane %v5558, 4
      %v5561 = vrot.slane %v4753, 5
      %v5562 = vsel %vm2373, %v5560, %v5561
      %v5563 = vrot.slane %v5487, 5
      %v5564 = vrot.slane %v5563, 4
      %v5565 = vrot.slane %v4755, 5
      %v5566 = vsel %vm2373, %v5564, %v5565
      %v5567 = vrot.slane %v5565, 4
      %v5568 = vrot.slane %v4756, 5
      %v5569 = vsel %vm2373, %v5567, %v5568
      %v5570 = vrot.slane %v5488, 5
      %v5571 = vrot.slane %v5570, 4
      %v5572 = vrot.slane %v4758, 5
      %v5573 = vsel %vm2373, %v5571, %v5572
      %v5574 = vrot.slane %v5572, 4
      %v5575 = vrot.slane %v4759, 5
      %v5576 = vsel %vm2373, %v5574, %v5575
      %v5577 = vrot.slane %v5489, 5
      %v5578 = vrot.slane %v5577, 4
      %v5579 = vrot.slane %v4761, 5
      %v5580 = vsel %vm2373, %v5578, %v5579
      %v5581 = vrot.slane %v5579, 4
      %v5582 = vrot.slane %v4762, 5
      %v5583 = vsel %vm2373, %v5581, %v5582
      %v5584 = vrot.slane %v5490, 5
      %v5585 = vrot.slane %v5584, 4
      %v5586 = vrot.slane %v4764, 5
      %v5587 = vsel %vm2373, %v5585, %v5586
      %v5588 = vrot.slane %v5586, 4
      %v5589 = vrot.slane %v4765, 5
      %v5590 = vsel %vm2373, %v5588, %v5589
      %v5591 = vrot.slane %v5491, 5
      %v5592 = vrot.slane %v5591, 4
      %v5593 = vrot.slane %v4767, 5
      %v5594 = vsel %vm2373, %v5592, %v5593
      %v5595 = vrot.slane %v5593, 4
      %v5596 = vrot.slane %v4768, 5
      %v5597 = vsel %vm2373, %v5595, %v5596
      %v5598 = vrot.slane %v5492, 5
      %v5599 = vrot.slane %v5598, 4
      %v5600 = vrot.slane %v4770, 5
      %v5601 = vsel %vm2373, %v5599, %v5600
      %v5602 = vrot.slane %v5600, 4
      %v5603 = vrot.slane %v4771, 5
      %v5604 = vsel %vm2373, %v5602, %v5603
      %v5605 = vrot.slane %v5493, 5
      %v5606 = vrot.slane %v5605, 4
      %v5607 = vrot.slane %v4773, 5
      %v5608 = vsel %vm2373, %v5606, %v5607
      %v5609 = vrot.slane %v5607, 4
      %v5610 = vrot.slane %v4774, 5
      %v5611 = vsel %vm2373, %v5609, %v5610
      %v5612 = vrot.slane %v5494, 5
      %v5613 = vrot.slane %v5612, 4
      %v5614 = vrot.slane %v4776, 5
      %v5615 = vsel %vm2373, %v5613, %v5614
      %v5616 = vrot.slane %v5614, 4
      %v5617 = vrot.slane %v4777, 5
      %v5618 = vsel %vm2373, %v5616, %v5617
      %v5619 = vrot.slane %v5495, 5
      %v5620 = vrot.slane %v5619, 4
      %v5621 = vrot.slane %v4779, 5
      %v5622 = vsel %vm2373, %v5620, %v5621
      %v5623 = vrot.slane %v5621, 4
      %v5624 = vrot.slane %v4780, 5
      %v5625 = vsel %vm2373, %v5623, %v5624
      %v5626 = vrot.slane %v5496, 5
      %v5627 = vrot.slane %v5626, 4
      %v5628 = vrot.slane %v4782, 5
      %v5629 = vsel %vm2373, %v5627, %v5628
      %v5630 = vrot.slane %v5628, 4
      %v5631 = vrot.slane %v4783, 5
      %v5632 = vsel %vm2373, %v5630, %v5631
      %v5633 = vrot.slane %v5497, 5
      %v5634 = vrot.slane %v5633, 4
      %v5635 = vrot.slane %v4785, 5
      %v5636 = vsel %vm2373, %v5634, %v5635
      %v5637 = vrot.slane %v5635, 4
      %v5638 = vrot.slane %v4786, 5
      %v5639 = vsel %vm2373, %v5637, %v5638
      %v5640 = vrot.slane %v5498, 5
      %v5641 = vrot.slane %v5640, 4
      %v5642 = vrot.slane %v4788, 5
      %v5643 = vsel %vm2373, %v5641, %v5642
      %v5644 = vrot.slane %v5642, 4
      %v5645 = vrot.slane %v4789, 5
      %v5646 = vsel %vm2373, %v5644, %v5645
      %v5647 = vrot.slane %v5499, 5
      %v5648 = vrot.slane %v5647, 4
      %v5649 = vrot.slane %v4791, 5
      %v5650 = vsel %vm2373, %v5648, %v5649
      %v5651 = vrot.slane %v5649, 4
      %v5652 = vrot.slane %v4792, 5
      %v5653 = vsel %vm2373, %v5651, %v5652
      %v5654 = vrot.slane %v5500, 5
      %v5655 = vrot.slane %v5654, 4
      %v5656 = vrot.slane %v4794, 5
      %v5657 = vsel %vm2373, %v5655, %v5656
      %v5658 = vrot.slane %v5656, 4
      %v5659 = vrot.slane %v4795, 5
      %v5660 = vsel %vm2373, %v5658, %v5659
      %v5661 = vunpack.c.l.b16 %v5552
      %v5662 = vunpack.c.l.b16 %v5555
      %v5663 = vunpack.c.l.b16 %v5559
      %v5664 = vunpack.c.l.b16 %v5562
      %v5665 = vunpack.c.l.b16 %v5566
      %v5666 = vunpack.c.l.b16 %v5569
      %v5667 = vunpack.c.l.b16 %v5573
      %v5668 = vunpack.c.l.b16 %v5576
      %v5669 = vunpack.c.l.b16 %v5580
      %v5670 = vunpack.c.l.b16 %v5583
      %v5671 = vunpack.c.l.b16 %v5587
      %v5672 = vunpack.c.l.b16 %v5590
      %v5673 = vunpack.c.l.b16 %v5594
      %v5674 = vunpack.c.l.b16 %v5597
      %v5675 = vunpack.c.l.b16 %v5601
      %v5676 = vunpack.c.l.b16 %v5604
      %v5677 = vunpack.c.l.b16 %v5608
      %v5678 = vunpack.c.l.b16 %v5611
      %v5679 = vunpack.c.l.b16 %v5615
      %v5680 = vunpack.c.l.b16 %v5618
      %v5681 = vunpack.c.l.b16 %v5622
      %v5682 = vunpack.c.l.b16 %v5625
      %v5683 = vunpack.c.l.b16 %v5629
      %v5684 = vunpack.c.l.b16 %v5632
      %v5685 = vunpack.c.l.b16 %v5636
      %v5686 = vunpack.c.l.b16 %v5639
      %v5687 = vunpack.c.l.b16 %v5643
      %v5688 = vunpack.c.l.b16 %v5646
      %v5689 = vunpack.c.l.b16 %v5650
      %v5690 = vunpack.c.l.b16 %v5653
      %v5691 = vunpack.c.l.b16 %v5657
      %v5692 = vunpack.c.l.b16 %v5660
      %v5693 = vpack.c.b16 %v5662, %v5661
      %v5694 = vpack.c.b16 %v5664, %v5663
      %v5695 = vpack.c.b16 %v5666, %v5665
      %v5696 = vpack.c.b16 %v5668, %v5667
      %v5697 = vpack.c.b16 %v5670, %v5669
      %v5698 = vpack.c.b16 %v5672, %v5671
      %v5699 = vpack.c.b16 %v5674, %v5673
      %v5700 = vpack.c.b16 %v5676, %v5675
      %v5701 = vpack.c.b16 %v5678, %v5677
      %v5702 = vpack.c.b16 %v5680, %v5679
      %v5703 = vpack.c.b16 %v5682, %v5681
      %v5704 = vpack.c.b16 %v5684, %v5683
      %v5705 = vpack.c.b16 %v5686, %v5685
      %v5706 = vpack.c.b16 %v5688, %v5687
      %v5707 = vpack.c.b16 %v5690, %v5689
      %v5708 = vpack.c.b16 %v5692, %v5691
      %v5741 = vunpack.c.l.b16 %v1294
      %v5742 = vunpack.c.l.b16 %v1295
      %v5743 = vunpack.c.l.b16 %v1296
      %v5744 = vunpack.c.l.b16 %v1297
      %v5745 = vunpack.c.l.b16 %v1298
      %v5746 = vunpack.c.l.b16 %v1299
      %v5747 = vunpack.c.l.b16 %v1300
      %v5748 = vunpack.c.l.b16 %v1301
      %v5749 = vunpack.c.l.b16 %v1302
      %v5750 = vunpack.c.l.b16 %v1303
      %v5751 = vunpack.c.l.b16 %v1304
      %v5752 = vunpack.c.l.b16 %v1305
      %v5753 = vunpack.c.l.b16 %v1306
      %v5754 = vunpack.c.l.b16 %v1307
      %v5755 = vunpack.c.l.b16 %v1308
      %v5756 = vunpack.c.l.b16 %v1309
      %v5757 = vpack.c.b16 %v5742, %v5741
      %v5758 = vpack.c.b16 %v5744, %v5743
      %v5759 = vpack.c.b16 %v5746, %v5745
      %v5760 = vpack.c.b16 %v5748, %v5747
      %v5761 = vpack.c.b16 %v5750, %v5749
      %v5762 = vpack.c.b16 %v5752, %v5751
      %v5763 = vpack.c.b16 %v5754, %v5753
      %v5764 = vpack.c.b16 %v5756, %v5755
      %5773 = vmatprep.subr.bf16.mxu0 0
      %5774 = vmatpush1.bf16.msra.mxu0 %v5757
      %5775 = vmatprep.subr.bf16.mxu0 0
      %5776 = vmatpush1.bf16.msra.mxu0 %v5758
      %5777 = vmatprep.subr.bf16.mxu0 0
      %5778 = vmatpush1.bf16.msra.mxu0 %v5759
      %5779 = vmatprep.subr.bf16.mxu0 0
      %5780 = vmatpush1.bf16.msra.mxu0 %v5760
      %5781 = vmatprep.subr.bf16.mxu0 0
      %5782 = vmatpush1.bf16.msra.mxu0 %v5761
      %5783 = vmatprep.subr.bf16.mxu0 0
      %5784 = vmatpush1.bf16.msra.mxu0 %v5762
      %5785 = vmatprep.subr.bf16.mxu0 0
      %5786 = vmatpush1.bf16.msra.mxu0 %v5763
      %5787 = vmatprep.subr.bf16.mxu0 0
      %5788 = vmatpush1.bf16.msra.mxu0 %v5764
      %5789 = vmatprep.subr.bf16.mxu0 0
      %5790 = vmatpush1.bf16.msra.mxu0 0
      %5791 = vmatprep.subr.bf16.mxu0 0
      %5792 = vmatpush1.bf16.msra.mxu0 0
      %5793 = vmatprep.subr.bf16.mxu0 0
      %5794 = vmatpush1.bf16.msra.mxu0 0
      %5795 = vmatprep.subr.bf16.mxu0 0
      %5796 = vmatpush1.bf16.msra.mxu0 0
      %5797 = vmatprep.subr.bf16.mxu0 0
      %5798 = vmatpush1.bf16.msra.mxu0 0
      %5799 = vmatprep.subr.bf16.mxu0 0
      %5800 = vmatpush1.bf16.msra.mxu0 0
      %5801 = vmatprep.subr.bf16.mxu0 0
      %5802 = vmatpush1.bf16.msra.mxu0 0
      %5803 = vmatprep.subr.bf16.mxu0 0
      %5804 = vmatpush1.bf16.msra.mxu0 0
      %5805 = vmatprep.mubr.bf16.mxu0 0
      %5806 = vmatmul.mubr.bf16.gmra.mrb[0].mxu0 %v5693
      %v5807 = vpop.f32.mrb[0].mxu0
      %v5808 = vadd.f32 0.0, %v5807
      %v5809 = vpop.f32.mrb[0].mxu0
      %v5810 = vpop.f32.mrb[0].mxu0
      %v5811 = vadd.f32 0.0, %v5810
      %v5812 = vpop.f32.mrb[0].mxu0
      %5813 = vmatprep.mubr.bf16.mxu0 0
      %5814 = vmatmul.mubr.bf16.gmra.mrb[0].mxu0 %v5694
      %v5815 = vpop.f32.mrb[0].mxu0
      %v5816 = vadd.f32 0.0, %v5815
      %v5817 = vpop.f32.mrb[0].mxu0
      %v5818 = vpop.f32.mrb[0].mxu0
      %v5819 = vadd.f32 0.0, %v5818
      %v5820 = vpop.f32.mrb[0].mxu0
      %5821 = vmatprep.mubr.bf16.mxu0 0
      %5822 = vmatmul.mubr.bf16.gmra.mrb[0].mxu0 %v5695
      %v5823 = vpop.f32.mrb[0].mxu0
      %v5824 = vadd.f32 0.0, %v5823
      %v5825 = vpop.f32.mrb[0].mxu0
      %v5826 = vpop.f32.mrb[0].mxu0
      %v5827 = vadd.f32 0.0, %v5826
      %v5828 = vpop.f32.mrb[0].mxu0
      %5829 = vmatprep.mubr.bf16.mxu0 0
      %5830 = vmatmul.mubr.bf16.gmra.mrb[0].mxu0 %v5696
      %v5831 = vpop.f32.mrb[0].mxu0
      %v5832 = vadd.f32 0.0, %v5831
      %v5833 = vpop.f32.mrb[0].mxu0
      %v5834 = vpop.f32.mrb[0].mxu0
      %v5835 = vadd.f32 0.0, %v5834
      %v5836 = vpop.f32.mrb[0].mxu0
      %5837 = vmatprep.mubr.bf16.mxu0 0
      %5838 = vmatmul.mubr.bf16.gmra.mrb[0].mxu0 %v5697
      %v5839 = vpop.f32.mrb[0].mxu0
      %v5840 = vadd.f32 0.0, %v5839
      %v5841 = vpop.f32.mrb[0].mxu0
      %v5842 = vpop.f32.mrb[0].mxu0
      %v5843 = vadd.f32 0.0, %v5842
      %v5844 = vpop.f32.mrb[0].mxu0
      %5845 = vmatprep.mubr.bf16.mxu0 0
      %5846 = vmatmul.mubr.bf16.gmra.mrb[0].mxu0 %v5698
      %v5847 = vpop.f32.mrb[0].mxu0
      %v5848 = vadd.f32 0.0, %v5847
      %v5849 = vpop.f32.mrb[0].mxu0
      %v5850 = vpop.f32.mrb[0].mxu0
      %v5851 = vadd.f32 0.0, %v5850
      %v5852 = vpop.f32.mrb[0].mxu0
      %5853 = vmatprep.mubr.bf16.mxu0 0
      %5854 = vmatmul.mubr.bf16.gmra.mrb[0].mxu0 %v5699
      %v5855 = vpop.f32.mrb[0].mxu0
      %v5856 = vadd.f32 0.0, %v5855
      %v5857 = vpop.f32.mrb[0].mxu0
      %v5858 = vpop.f32.mrb[0].mxu0
      %v5859 = vadd.f32 0.0, %v5858
      %v5860 = vpop.f32.mrb[0].mxu0
      %5861 = vmatprep.mubr.bf16.mxu0 0
      %5862 = vmatmul.mubr.bf16.gmra.mrb[0].mxu0 %v5700
      %v5863 = vpop.f32.mrb[0].mxu0
      %v5864 = vadd.f32 0.0, %v5863
      %v5865 = vpop.f32.mrb[0].mxu0
      %v5866 = vpop.f32.mrb[0].mxu0
      %v5867 = vadd.f32 0.0, %v5866
      %v5868 = vpop.f32.mrb[0].mxu0
      %5869 = vmatprep.mubr.bf16.mxu0 0
      %5870 = vmatmul.mubr.bf16.gmra.mrb[0].mxu0 %v5701
      %v5871 = vpop.f32.mrb[0].mxu0
      %v5872 = vadd.f32 0.0, %v5871
      %v5873 = vpop.f32.mrb[0].mxu0
      %v5874 = vpop.f32.mrb[0].mxu0
      %v5875 = vadd.f32 0.0, %v5874
      %v5876 = vpop.f32.mrb[0].mxu0
      %5877 = vmatprep.mubr.bf16.mxu0 0
      %5878 = vmatmul.mubr.bf16.gmra.mrb[0].mxu0 %v5702
      %v5879 = vpop.f32.mrb[0].mxu0
      %v5880 = vadd.f32 0.0, %v5879
      %v5881 = vpop.f32.mrb[0].mxu0
      %v5882 = vpop.f32.mrb[0].mxu0
      %v5883 = vadd.f32 0.0, %v5882
      %v5884 = vpop.f32.mrb[0].mxu0
      %5885 = vmatprep.mubr.bf16.mxu0 0
      %5886 = vmatmul.mubr.bf16.gmra.mrb[0].mxu0 %v5703
      %v5887 = vpop.f32.mrb[0].mxu0
      %v5888 = vadd.f32 0.0, %v5887
      %v5889 = vpop.f32.mrb[0].mxu0
      %v5890 = vpop.f32.mrb[0].mxu0
      %v5891 = vadd.f32 0.0, %v5890
      %v5892 = vpop.f32.mrb[0].mxu0
      %5893 = vmatprep.mubr.bf16.mxu0 0
      %5894 = vmatmul.mubr.bf16.gmra.mrb[0].mxu0 %v5704
      %v5895 = vpop.f32.mrb[0].mxu0
      %v5896 = vadd.f32 0.0, %v5895
      %v5897 = vpop.f32.mrb[0].mxu0
      %v5898 = vpop.f32.mrb[0].mxu0
      %v5899 = vadd.f32 0.0, %v5898
      %v5900 = vpop.f32.mrb[0].mxu0
      %5901 = vmatprep.mubr.bf16.mxu0 0
      %5902 = vmatmul.mubr.bf16.gmra.mrb[0].mxu0 %v5705
      %v5903 = vpop.f32.mrb[0].mxu0
      %v5904 = vadd.f32 0.0, %v5903
      %v5905 = vpop.f32.mrb[0].mxu0
      %v5906 = vpop.f32.mrb[0].mxu0
      %v5907 = vadd.f32 0.0, %v5906
      %v5908 = vpop.f32.mrb[0].mxu0
      %5909 = vmatprep.mubr.bf16.mxu0 0
      %5910 = vmatmul.mubr.bf16.gmra.mrb[0].mxu0 %v5706
      %v5911 = vpop.f32.mrb[0].mxu0
      %v5912 = vadd.f32 0.0, %v5911
      %v5913 = vpop.f32.mrb[0].mxu0
      %v5914 = vpop.f32.mrb[0].mxu0
      %v5915 = vadd.f32 0.0, %v5914
      %v5916 = vpop.f32.mrb[0].mxu0
      %5917 = vmatprep.mubr.bf16.mxu0 0
      %5918 = vmatmul.mubr.bf16.gmra.mrb[0].mxu0 %v5707
      %v5919 = vpop.f32.mrb[0].mxu0
      %v5920 = vadd.f32 0.0, %v5919
      %v5921 = vpop.f32.mrb[0].mxu0
      %v5922 = vpop.f32.mrb[0].mxu0
      %v5923 = vadd.f32 0.0, %v5922
      %v5924 = vpop.f32.mrb[0].mxu0
      %5925 = vmatprep.mubr.bf16.mxu0 0
      %5926 = vmatmul.mubr.bf16.gmra.mrb[0].mxu0 %v5708
      %v5927 = vpop.f32.mrb[0].mxu0
      %v5928 = vadd.f32 0.0, %v5927
      %v5929 = vpop.f32.mrb[0].mxu0
      %v5930 = vpop.f32.mrb[0].mxu0
      %v5931 = vadd.f32 0.0, %v5930
      %v5932 = vpop.f32.mrb[0].mxu0
      %5933 = vdwg.mxu0
      %v5934 = vadd.f32 %v5453, %v5808
      %v5935 = vadd.f32 %v5454, %v5811
      %v5936 = vadd.f32 %v5455, %v5816
      %v5937 = vadd.f32 %v5456, %v5819
      %v5938 = vadd.f32 %v5457, %v5824
      %v5939 = vadd.f32 %v5458, %v5827
      %v5940 = vadd.f32 %v5459, %v5832
      %v5941 = vadd.f32 %v5460, %v5835
      %v5942 = vadd.f32 %v5461, %v5840
      %v5943 = vadd.f32 %v5462, %v5843
      %v5944 = vadd.f32 %v5463, %v5848
      %v5945 = vadd.f32 %v5464, %v5851
      %v5946 = vadd.f32 %v5465, %v5856
      %v5947 = vadd.f32 %v5466, %v5859
      %v5948 = vadd.f32 %v5467, %v5864
      %v5949 = vadd.f32 %v5468, %v5867
      %v5950 = vadd.f32 %v5469, %v5872
      %v5951 = vadd.f32 %v5470, %v5875
      %v5952 = vadd.f32 %v5471, %v5880
      %v5953 = vadd.f32 %v5472, %v5883
      %v5954 = vadd.f32 %v5473, %v5888
      %v5955 = vadd.f32 %v5474, %v5891
      %v5956 = vadd.f32 %v5475, %v5896
      %v5957 = vadd.f32 %v5476, %v5899
      %v5958 = vadd.f32 %v5477, %v5904
      %v5959 = vadd.f32 %v5478, %v5907
      %v5960 = vadd.f32 %v5479, %v5912
      %v5961 = vadd.f32 %v5480, %v5915
      %v5962 = vadd.f32 %v5481, %v5920
      %v5963 = vadd.f32 %v5482, %v5923
      %v5964 = vadd.f32 %v5483, %v5928
      %v5965 = vadd.f32 %v5484, %v5931
      %v5966 = vpack.c.bf16 %v5935, %v5934
      %v5967 = vpack.c.bf16 %v5937, %v5936
      %v5968 = vpack.c.bf16 %v5939, %v5938
      %v5969 = vpack.c.bf16 %v5941, %v5940
      %v5970 = vpack.c.bf16 %v5943, %v5942
      %v5971 = vpack.c.bf16 %v5945, %v5944
      %v5972 = vpack.c.bf16 %v5947, %v5946
      %v5973 = vpack.c.bf16 %v5949, %v5948
      %v5974 = vpack.c.bf16 %v5951, %v5950
      %v5975 = vpack.c.bf16 %v5953, %v5952
      %v5976 = vpack.c.bf16 %v5955, %v5954
      %v5977 = vpack.c.bf16 %v5957, %v5956
      %v5978 = vpack.c.bf16 %v5959, %v5958
      %v5979 = vpack.c.bf16 %v5961, %v5960
      %v5980 = vpack.c.bf16 %v5963, %v5962
      %v5981 = vpack.c.bf16 %v5965, %v5964
      %v5998 = vunpack.c.l.b16 %v5966
      %v5999 = vunpack.c.h.b16 %v5966
      %v6000 = vunpack.c.l.b16 %v5967
      %v6001 = vunpack.c.h.b16 %v5967
      %v6002 = vunpack.c.l.b16 %v5968
      %v6003 = vunpack.c.h.b16 %v5968
      %v6004 = vunpack.c.l.b16 %v5969
      %v6005 = vunpack.c.h.b16 %v5969
      %v6006 = vunpack.c.l.b16 %v5970
      %v6007 = vunpack.c.h.b16 %v5970
      %v6008 = vunpack.c.l.b16 %v5971
      %v6009 = vunpack.c.h.b16 %v5971
      %v6010 = vunpack.c.l.b16 %v5972
      %v6011 = vunpack.c.h.b16 %v5972
      %v6012 = vunpack.c.l.b16 %v5973
      %v6013 = vunpack.c.h.b16 %v5973
      %v6014 = vunpack.c.l.b16 %v5974
      %v6015 = vunpack.c.h.b16 %v5974
      %v6016 = vunpack.c.l.b16 %v5975
      %v6017 = vunpack.c.h.b16 %v5975
      %v6018 = vunpack.c.l.b16 %v5976
      %v6019 = vunpack.c.h.b16 %v5976
      %v6020 = vunpack.c.l.b16 %v5977
      %v6021 = vunpack.c.h.b16 %v5977
      %v6022 = vunpack.c.l.b16 %v5978
      %v6023 = vunpack.c.h.b16 %v5978
      %v6024 = vunpack.c.l.b16 %v5979
      %v6025 = vunpack.c.h.b16 %v5979
      %v6026 = vunpack.c.l.b16 %v5980
      %v6027 = vunpack.c.h.b16 %v5980
      %v6028 = vunpack.c.l.b16 %v5981
      %v6029 = vunpack.c.h.b16 %v5981
      %v6030 = vpack.c.b16 %v5998, %v5998
      %v6031 = vpack.c.b16 %v5999, %v5999
      %v6032 = vpack.c.b16 %v6000, %v6000
      %v6033 = vpack.c.b16 %v6001, %v6001
      %v6034 = vpack.c.b16 %v6002, %v6002
      %v6035 = vpack.c.b16 %v6003, %v6003
      %v6036 = vpack.c.b16 %v6004, %v6004
      %v6037 = vpack.c.b16 %v6005, %v6005
      %v6038 = vpack.c.b16 %v6006, %v6006
      %v6039 = vpack.c.b16 %v6007, %v6007
      %v6040 = vpack.c.b16 %v6008, %v6008
      %v6041 = vpack.c.b16 %v6009, %v6009
      %v6042 = vpack.c.b16 %v6010, %v6010
      %v6043 = vpack.c.b16 %v6011, %v6011
      %v6044 = vpack.c.b16 %v6012, %v6012
      %v6045 = vpack.c.b16 %v6013, %v6013
      %v6046 = vpack.c.b16 %v6014, %v6014
      %v6047 = vpack.c.b16 %v6015, %v6015
      %v6048 = vpack.c.b16 %v6016, %v6016
      %v6049 = vpack.c.b16 %v6017, %v6017
      %v6050 = vpack.c.b16 %v6018, %v6018
      %v6051 = vpack.c.b16 %v6019, %v6019
      %v6052 = vpack.c.b16 %v6020, %v6020
      %v6053 = vpack.c.b16 %v6021, %v6021
      %v6054 = vpack.c.b16 %v6022, %v6022
      %v6055 = vpack.c.b16 %v6023, %v6023
      %v6056 = vpack.c.b16 %v6024, %v6024
      %v6057 = vpack.c.b16 %v6025, %v6025
      %v6058 = vpack.c.b16 %v6026, %v6026
      %v6059 = vpack.c.b16 %v6027, %v6027
      %v6060 = vpack.c.b16 %v6028, %v6028
      %v6061 = vpack.c.b16 %v6029, %v6029
      %6094 = vst [vmem:[%s259] sm:$0xf] %v6030
      %6095 = vst [vmem:[%s259 + $0x4] sm:$0xf] %v6031
      %6096 = vst [vmem:[%s259 + $0x8] sm:$0xf] %v6032
      %6097 = vst [vmem:[%s259 + $0xc] sm:$0xf] %v6033
      %6098 = vst [vmem:[%s259 + $0x10] sm:$0xf] %v6034
      %6099 = vst [vmem:[%s259 + $0x14] sm:$0xf] %v6035
      %6100 = vst [vmem:[%s259 + $0x18] sm:$0xf] %v6036
      %6101 = vst [vmem:[%s259 + $0x1c] sm:$0xf] %v6037
      %6102 = vst [vmem:[%s259 + $0x20] sm:$0xf] %v6038
      %6103 = vst [vmem:[%s259 + $0x24] sm:$0xf] %v6039
      %6104 = vst [vmem:[%s259 + $0x28] sm:$0xf] %v6040
      %6105 = vst [vmem:[%s259 + $0x2c] sm:$0xf] %v6041
      %6106 = vst [vmem:[%s259 + $0x30] sm:$0xf] %v6042
      %6107 = vst [vmem:[%s259 + $0x34] sm:$0xf] %v6043
      %6108 = vst [vmem:[%s259 + $0x38] sm:$0xf] %v6044
      %6109 = vst [vmem:[%s259 + $0x3c] sm:$0xf] %v6045
      %6110 = vst [vmem:[%s259 + $0x40] sm:$0xf] %v6046
      %6111 = vst [vmem:[%s259 + $0x44] sm:$0xf] %v6047
      %6112 = vst [vmem:[%s259 + $0x48] sm:$0xf] %v6048
      %6113 = vst [vmem:[%s259 + $0x4c] sm:$0xf] %v6049
      %6114 = vst [vmem:[%s259 + $0x50] sm:$0xf] %v6050
      %6115 = vst [vmem:[%s259 + $0x54] sm:$0xf] %v6051
      %6116 = vst [vmem:[%s259 + $0x58] sm:$0xf] %v6052
      %6117 = vst [vmem:[%s259 + $0x5c] sm:$0xf] %v6053
      %6118 = vst [vmem:[%s259 + $0x60] sm:$0xf] %v6054
      %6119 = vst [vmem:[%s259 + $0x64] sm:$0xf] %v6055
      %6120 = vst [vmem:[%s259 + $0x68] sm:$0xf] %v6056
      %6121 = vst [vmem:[%s259 + $0x6c] sm:$0xf] %v6057
      %6122 = vst [vmem:[%s259 + $0x70] sm:$0xf] %v6058
      %6123 = vst [vmem:[%s259 + $0x74] sm:$0xf] %v6059
      %6124 = vst [vmem:[%s259 + $0x78] sm:$0xf] %v6060
      %6125 = vst [vmem:[%s259 + $0x7c] sm:$0xf] %v6061
      %v6126 = vadd.f32 %v5934, %v5935
      %v6127 = vadd.f32 %v6126, %v5936
      %v6128 = vadd.f32 %v6127, %v5937
      %v6129 = vadd.f32 %v6128, %v5938
      %v6130 = vadd.f32 %v6129, %v5939
      %v6131 = vadd.f32 %v6130, %v5940
      %v6132 = vadd.f32 %v6131, %v5941
      %v6133 = vadd.f32 %v6132, %v5942
      %v6134 = vadd.f32 %v6133, %v5943
      %v6135 = vadd.f32 %v6134, %v5944
      %v6136 = vadd.f32 %v6135, %v5945
      %v6137 = vadd.f32 %v6136, %v5946
      %v6138 = vadd.f32 %v6137, %v5947
      %v6139 = vadd.f32 %v6138, %v5948
      %v6140 = vadd.f32 %v6139, %v5949
      %v6141 = vadd.f32 %v6140, %v5950
      %v6142 = vadd.f32 %v6141, %v5951
      %v6143 = vadd.f32 %v6142, %v5952
      %v6144 = vadd.f32 %v6143, %v5953
      %v6145 = vadd.f32 %v6144, %v5954
      %v6146 = vadd.f32 %v6145, %v5955
      %v6147 = vadd.f32 %v6146, %v5956
      %v6148 = vadd.f32 %v6147, %v5957
      %v6149 = vadd.f32 %v6148, %v5958
      %v6150 = vadd.f32 %v6149, %v5959
      %v6151 = vadd.f32 %v6150, %v5960
      %v6152 = vadd.f32 %v6151, %v5961
      %v6153 = vadd.f32 %v6152, %v5962
      %v6154 = vadd.f32 %v6153, %v5963
      %v6155 = vadd.f32 %v6154, %v5964
      %v6156 = vadd.f32 %v6155, %v5965
      %v6157 = vrot.slane %v6156, 4
      %v6158 = vadd.f32 %v6156, %v6157
      %v6159 = vrot.slane %v6158, 2
      %v6160 = vadd.f32 %v6158, %v6159
      %v6161 = vrot.slane %v6160, 1
      %v6162 = vadd.f32 %v6160, %v6161
      %v6163 = vadd.f32 %v6162, 0.0
      %v6164 = vmul.f32 %v5934, %v5934
      %v6165 = vmul.f32 %v5935, %v5935
      %v6166 = vmul.f32 %v5936, %v5936
      %v6167 = vmul.f32 %v5937, %v5937
      %v6168 = vmul.f32 %v5938, %v5938
      %v6169 = vmul.f32 %v5939, %v5939
      %v6170 = vmul.f32 %v5940, %v5940
      %v6171 = vmul.f32 %v5941, %v5941
      %v6172 = vmul.f32 %v5942, %v5942
      %v6173 = vmul.f32 %v5943, %v5943
      %v6174 = vmul.f32 %v5944, %v5944
      %v6175 = vmul.f32 %v5945, %v5945
      %v6176 = vmul.f32 %v5946, %v5946
      %v6177 = vmul.f32 %v5947, %v5947
      %v6178 = vmul.f32 %v5948, %v5948
      %v6179 = vmul.f32 %v5949, %v5949
      %v6180 = vmul.f32 %v5950, %v5950
      %v6181 = vmul.f32 %v5951, %v5951
      %v6182 = vmul.f32 %v5952, %v5952
      %v6183 = vmul.f32 %v5953, %v5953
      %v6184 = vmul.f32 %v5954, %v5954
      %v6185 = vmul.f32 %v5955, %v5955
      %v6186 = vmul.f32 %v5956, %v5956
      %v6187 = vmul.f32 %v5957, %v5957
      %v6188 = vmul.f32 %v5958, %v5958
      %v6189 = vmul.f32 %v5959, %v5959
      %v6190 = vmul.f32 %v5960, %v5960
      %v6191 = vmul.f32 %v5961, %v5961
      %v6192 = vmul.f32 %v5962, %v5962
      %v6193 = vmul.f32 %v5963, %v5963
      %v6194 = vmul.f32 %v5964, %v5964
      %v6195 = vmul.f32 %v5965, %v5965
      %v6196 = vadd.f32 %v6164, %v6165
      %v6197 = vadd.f32 %v6196, %v6166
      %v6198 = vadd.f32 %v6197, %v6167
      %v6199 = vadd.f32 %v6198, %v6168
      %v6200 = vadd.f32 %v6199, %v6169
      %v6201 = vadd.f32 %v6200, %v6170
      %v6202 = vadd.f32 %v6201, %v6171
      %v6203 = vadd.f32 %v6202, %v6172
      %v6204 = vadd.f32 %v6203, %v6173
      %v6205 = vadd.f32 %v6204, %v6174
      %v6206 = vadd.f32 %v6205, %v6175
      %v6207 = vadd.f32 %v6206, %v6176
      %v6208 = vadd.f32 %v6207, %v6177
      %v6209 = vadd.f32 %v6208, %v6178
      %v6210 = vadd.f32 %v6209, %v6179
      %v6211 = vadd.f32 %v6210, %v6180
      %v6212 = vadd.f32 %v6211, %v6181
      %v6213 = vadd.f32 %v6212, %v6182
      %v6214 = vadd.f32 %v6213, %v6183
      %v6215 = vadd.f32 %v6214, %v6184
      %v6216 = vadd.f32 %v6215, %v6185
      %v6217 = vadd.f32 %v6216, %v6186
      %v6218 = vadd.f32 %v6217, %v6187
      %v6219 = vadd.f32 %v6218, %v6188
      %v6220 = vadd.f32 %v6219, %v6189
      %v6221 = vadd.f32 %v6220, %v6190
      %v6222 = vadd.f32 %v6221, %v6191
      %v6223 = vadd.f32 %v6222, %v6192
      %v6224 = vadd.f32 %v6223, %v6193
      %v6225 = vadd.f32 %v6224, %v6194
      %v6226 = vadd.f32 %v6225, %v6195
      %v6227 = vrot.slane %v6226, 4
      %v6228 = vadd.f32 %v6226, %v6227
      %v6229 = vrot.slane %v6228, 2
      %v6230 = vadd.f32 %v6228, %v6229
      %v6231 = vrot.slane %v6230, 1
      %v6232 = vadd.f32 %v6230, %v6231
      %v6233 = vadd.f32 %v6232, 0.0
      %6234 = vst [vmem:[%s263] sm:$0x1] %v6163
      %6235 = vst [vmem:[%s263 + $0x1] sm:$0x1] %v6233
      %p6236 = scmp.lt.s32.totalorder %s19, 1
      %s6237 = scalar_select %p6236, %s19, 1
      %s6238 = smul.addr %s6237, 32
      %s6239 = smul.addr %s6238, 4
      %s6240 = scalar_lea.vmem %s5, %s6239
      %p6241 = scmp.lt.s32.totalorder %s19, 1
      %s6242 = scalar_select %p6241, %s19, 1
      %s6243 = smul.addr %s6242, 2
      %s6244 = scalar_lea.vmem %s6, %s6243
      // Predicated region
      $region41: #{resblock_forward.4} parent=39 // pred_check
        %p6245 = pneg %p147
      $region42: #{resblock_forward.4} parent=39 // pred_check_branch
        %6247 = sbr.rel (%p6245) target = $region44
      $region43: #{resblock_forward.4} parent=39 // pred_region
        _
      $region44: #{resblock_forward.4} parent=39 // pred_fallthru
        _
      // Predicated region
      $region45: #{resblock_forward.4} parent=39 // pred_check
        %p6248 = pneg %p173
      $region46: #{resblock_forward.4} parent=39 // pred_check_branch
        %6250 = sbr.rel (%p6248) target = $region48
      $region47: #{resblock_forward.4} parent=39 // pred_region
        _
      $region48: #{resblock_forward.4} parent=39 // pred_fallthru
        _
    $region40: #{resblock_forward.4} parent=5 // pred_fallthru
      _
    %p6251 = scmp.le.s32.totalorder 2, %s14
    // Predicated region
    $region49: #{resblock_forward.4} parent=5 // pred_check
      %p6252 = pneg %p6251
    $region50: #{resblock_forward.4} parent=5 // pred_check_branch
      %6254 = sbr.rel (%p6252) target = $region52
    $region51: #{resblock_forward.4} parent=5 // pred_region
      %s6255 = ssub.s32 %s14, 2
      // Predicated region
      $region53: #{resblock_forward.4} parent=51 // pred_check
        %p6256 = pneg %p153
      $region54: #{resblock_forward.4} parent=51 // pred_check_branch
        %6258 = sbr.rel (%p6256) target = $region56
      $region55: #{resblock_forward.4} parent=51 // pred_region
        %p6259 = scmp.lt.s32.totalorder %s20, 1
        %s6260 = scalar_select %p6259, %s20, 1
        %s6261 = smul.addr %s6260, 32
        %s6262 = smul.addr %s6261, 4
        %s6263 = scalar_lea.vmem %s5, %s6262
      $region56: #{resblock_forward.4} parent=51 // pred_fallthru
        _
      // Predicated region
      $region57: #{resblock_forward.4} parent=51 // pred_check
        %p6264 = pneg %p179
      $region58: #{resblock_forward.4} parent=51 // pred_check_branch
        %6266 = sbr.rel (%p6264) target = $region60
      $region59: #{resblock_forward.4} parent=51 // pred_region
        %p6267 = scmp.lt.s32.totalorder %s20, 1
        %s6268 = scalar_select %p6267, %s20, 1
        %s6269 = smul.addr %s6268, 2
        %s6270 = scalar_lea.vmem %s6, %s6269
      $region60: #{resblock_forward.4} parent=51 // pred_fallthru
        _
    $region52: #{resblock_forward.4} parent=5 // pred_fallthru
      _
  $region6: #{resblock_forward.4} parent=0 // loop_footer
    %s18 = sadd.s32 1, %s14
  $region7: #{resblock_forward.4} parent=0 // loop_footer_branch
    %13 = sbr.rel target = $region3
  $region8: #{resblock_forward.4} parent=0 // loop_exit
    _

// kernel: resblock_forward.3
$region0: #{resblock_forward.3}
  #allocation0 [shape = 'u32[]', space=smem, size = 0x4, offset = 0x4, fixed_abs, tag = 'smem constant byte address 0x4 - core index']
  #allocation1 [shape = 'u32[144,128]{1,0:T(1,128)}', space=vmem, size = 0x12000, scoped, tag = 'internal scratch']
  #allocation2 [shape = 'bf16[18,18,128]{2,1,0:T(8,128)(2,1)}', space=vmem, size = 0x1b000, scoped, tag = 'scratch operand']
  %s0 = inlined_call_operand.vmem [shape: f32[2,256,128], index: 0, kind: input, shape index: {}]
  %s1 = inlined_call_operand.vmem [shape: bf16[9,128,128], index: 1, kind: input, shape index: {}]
  %s2 = inlined_call_operand.vmem [shape: bf16[2,256,128], index: 2, kind: output, shape index: {0}]
  %s3 = inlined_call_operand.vmem [shape: f32[2,2,128], index: 3, kind: output, shape index: {1}]
  %4 = xla_tuple %s2, %s3
  %s5 = sld [smem:[#allocation0]]
  $region49: #{resblock_forward.3} parent=0
    _
  %s7 = ssub.s32 1, %s5
  %s8 = scalar_select 0, %s7, %s5
  loop: start=0, step=1, limit=4
  $region2: #{resblock_forward.3} parent=0 // loop_pre_header
    _
  $region3: #{resblock_forward.3} parent=0 // loop_header
    %s10 = sphi 0, %s14
    %p11 = scmp.ge.s32.totalorder %s10, 4
    %s20 = sphi 0, %s22
    %s23 = sphi 0, %s20
    %s24 = sphi 0, %s23
    %s40 = sphi 0, %s24
    %s44 = sphi 0, %s44
    %s46 = sphi 0, %s44
    %s47 = sphi 0, %s46
    %s61 = sphi 0, %s47
    %s67 = sphi 0, %s69
    %s70 = sphi 0, %s67
    %s71 = sphi 0, %s70
    %s87 = sphi 0, %s71
    %s93 = sphi 0, %s95
    %s96 = sphi 0, %s93
    %s97 = sphi 0, %s96
    %s113 = sphi 0, %s97
  $region4: #{resblock_forward.3} parent=0 // loop_header_branch
    %13 = sbr.rel (%p11) target = $region8
  $region5: #{resblock_forward.3} parent=0 // loop_body
    %s15 = ssub.s32 %s10, 1
    %s16 = ssub.s32 %s10, 2
    %s17 = sadd.s32 %s10, 1
    %s18 = ssub.s32 %s10, %s17
    %p19 = scmp.eq.s32.totalorder %s18, 0
    %s21 = sadd.s32 %s20, 1
    %s22 = scalar_select %p19, %s20, %s21
    %p25 = pneg %p19
    %p26 = scmp.eq.s32.totalorder %s10, 1
    %p27 = por %p25, %p26
    %p28 = scmp.ne.s32.totalorder %s20, %s23
    %p29 = scmp.eq.s32.totalorder %s10, 0
    %p30 = por %p28, %p29
    %p31 = scmp.ne.s32.totalorder %s20, %s23
    %p32 = scmp.eq.s32.totalorder %s15, 1
    %p33 = por %p31, %p32
    %p34 = scmp.ne.s32.totalorder %s23, %s24
    %p35 = scmp.eq.s32.totalorder %s15, 0
    %p36 = por %p34, %p35
    %p37 = scmp.ne.s32.totalorder %s23, %s24
    %p38 = scmp.eq.s32.totalorder %s16, 1
    %p39 = por %p37, %p38
    %p41 = scmp.ne.s32.totalorder %s24, %s40
    %p42 = scmp.eq.s32.totalorder %s16, 0
    %p43 = por %p41, %p42
    %s45 = sadd.s32 %s44, 1
    %p48 = scmp.eq.s32.totalorder %s10, 1
    %p49 = scmp.ne.s32.totalorder %s44, %s46
    %p50 = scmp.eq.s32.totalorder %s10, 0
    %p51 = por %p49, %p50
    %p52 = scmp.ne.s32.totalorder %s44, %s46
    %p53 = scmp.eq.s32.totalorder %s15, 1
    %p54 = por %p52, %p53
    %p55 = scmp.ne.s32.totalorder %s46, %s47
    %p56 = scmp.eq.s32.totalorder %s15, 0
    %p57 = por %p55, %p56
    %p58 = scmp.ne.s32.totalorder %s46, %s47
    %p59 = scmp.eq.s32.totalorder %s16, 1
    %p60 = por %p58, %p59
    %p62 = scmp.ne.s32.totalorder %s47, %s61
    %p63 = scmp.eq.s32.totalorder %s16, 0
    %p64 = por %p62, %p63
    %s65 = ssub.s32 %s10, %s17
    %p66 = scmp.eq.s32.totalorder %s65, 0
    %s68 = sadd.s32 %s67, 1
    %s69 = scalar_select %p66, %s67, %s68
    %p72 = pneg %p66
    %p73 = scmp.eq.s32.totalorder %s10, 1
    %p74 = por %p72, %p73
    %p75 = scmp.ne.s32.totalorder %s67, %s70
    %p76 = scmp.eq.s32.totalorder %s10, 0
    %p77 = por %p75, %p76
    %p78 = scmp.ne.s32.totalorder %s67, %s70
    %p79 = scmp.eq.s32.totalorder %s15, 1
    %p80 = por %p78, %p79
    %p81 = scmp.ne.s32.totalorder %s70, %s71
    %p82 = scmp.eq.s32.totalorder %s15, 0
    %p83 = por %p81, %p82
    %p84 = scmp.ne.s32.totalorder %s70, %s71
    %p85 = scmp.eq.s32.totalorder %s16, 1
    %p86 = por %p84, %p85
    %p88 = scmp.ne.s32.totalorder %s71, %s87
    %p89 = scmp.eq.s32.totalorder %s16, 0
    %p90 = por %p88, %p89
    %s91 = ssub.s32 %s10, %s17
    %p92 = scmp.eq.s32.totalorder %s91, 0
    %s94 = sadd.s32 %s93, 1
    %s95 = scalar_select %p92, %s93, %s94
    %p98 = pneg %p92
    %p99 = scmp.eq.s32.totalorder %s10, 1
    %p100 = por %p98, %p99
    %p101 = scmp.ne.s32.totalorder %s93, %s96
    %p102 = scmp.eq.s32.totalorder %s10, 0
    %p103 = por %p101, %p102
    %p104 = scmp.ne.s32.totalorder %s93, %s96
    %p105 = scmp.eq.s32.totalorder %s15, 1
    %p106 = por %p104, %p105
    %p107 = scmp.ne.s32.totalorder %s96, %s97
    %p108 = scmp.eq.s32.totalorder %s15, 0
    %p109 = por %p107, %p108
    %p110 = scmp.ne.s32.totalorder %s96, %s97
    %p111 = scmp.eq.s32.totalorder %s16, 1
    %p112 = por %p110, %p111
    %p114 = scmp.ne.s32.totalorder %s97, %s113
    %p115 = scmp.eq.s32.totalorder %s16, 0
    %p116 = por %p114, %p115
    %p117 = scmp.le.s32.totalorder 1, %s10
    %p118 = scmp.lt.s32.totalorder %s10, 3
    %p119 = pnand %p117, %p118
    %p120 = pneg %p119
    // Predicated region
    $region9: #{resblock_forward.3} parent=5 // pred_check
      _
    $region10: #{resblock_forward.3} parent=5 // pred_check_branch
      %122 = sbr.rel (%p119) target = $region12
    $region11: #{resblock_forward.3} parent=5 // pred_region
      %s123 = ssub.s32 %s10, 1
      // Predicated region
      $region13: #{resblock_forward.3} parent=11 // pred_check
        %p124 = pneg %p57
      $region14: #{resblock_forward.3} parent=11 // pred_check_branch
        %126 = sbr.rel (%p124) target = $region16
      $region15: #{resblock_forward.3} parent=11 // pred_region
        _
      $region16: #{resblock_forward.3} parent=11 // pred_fallthru
        _
    $region12: #{resblock_forward.3} parent=5 // pred_fallthru
      _
    %p127 = scmp.lt.s32.totalorder %s10, 2
    // Predicated region
    $region17: #{resblock_forward.3} parent=5 // pred_check
      %p128 = pneg %p127
    $region18: #{resblock_forward.3} parent=5 // pred_check_branch
      %130 = sbr.rel (%p128) target = $region20
    $region19: #{resblock_forward.3} parent=5 // pred_region
      // Predicated region
      $region21: #{resblock_forward.3} parent=19 // pred_check
        %p131 = pneg %p30
      $region22: #{resblock_forward.3} parent=19 // pred_check_branch
        %133 = sbr.rel (%p131) target = $region24
      $region23: #{resblock_forward.3} parent=19 // pred_region
        %p134 = scmp.lt.s32.totalorder %s10, 1
        %s135 = scalar_select %p134, %s10, 1
        %s136 = smul.addr %s135, 32
        %s137 = smul.addr %s136, 8
        %s138 = scalar_lea.vmem %s0, %s137
      $region24: #{resblock_forward.3} parent=19 // pred_fallthru
        _
    $region20: #{resblock_forward.3} parent=5 // pred_fallthru
      _
    %p139 = scmp.le.s32.totalorder 1, %s10
    %p140 = scmp.lt.s32.totalorder %s10, 3
    %p141 = pnand %p139, %p140
    %p142 = pneg %p141
    // Predicated region
    $region25: #{resblock_forward.3} parent=5 // pred_check
      _
    $region26: #{resblock_forward.3} parent=5 // pred_check_branch
      %144 = sbr.rel (%p141) target = $region28
    $region27: #{resblock_forward.3} parent=5 // pred_region
      %s145 = ssub.s32 %s10, 1
      %p146 = scmp.lt.s32.totalorder %s15, 1
      %s147 = scalar_select %p146, %s15, 1
      %s148 = smul.addr %s147, 32
      %s149 = smul.addr %s148, 8
      %s150 = scalar_lea.vmem %s0, %s149
      %p151 = pneg %p36
      %p152 = pneg %p33
      %p153 = pneg %p57
      %p154 = pneg %p54
      %p155 = pneg %p83
      %p156 = pneg %p80
      %p157 = scmp.lt.s32.totalorder %s15, 1
      %s158 = scalar_select %p157, %s15, 1
      %s159 = smul.addr %s158, 32
      %s160 = smul.addr %s159, 4
      %s161 = scalar_lea.vmem %s2, %s160
      %p162 = pneg %p109
      %p163 = pneg %p106
      %p164 = scmp.lt.s32.totalorder %s15, 1
      %s165 = scalar_select %p164, %s15, 1
      %s166 = smul.addr %s165, 2
      %s167 = scalar_lea.vmem %s3, %s166
      %p168 = scmp.lt.s32.totalorder %s15, 1
      %s169 = scalar_select %p168, %s15, 1
      %s170 = smul.addr %s169, 32
      %s171 = smul.addr %s170, 8
      %s172 = scalar_lea.vmem %s0, %s171
      %p173 = scmp.lt.s32.totalorder %s15, 1
      %s174 = scalar_select %p173, %s15, 1
      %s175 = smul.addr %s174, 32
      %s176 = smul.addr %s175, 4
      %s177 = scalar_lea.vmem %s2, %s176
      %p178 = scmp.lt.s32.totalorder %s15, 1
      %s179 = scalar_select %p178, %s15, 1
      %s180 = smul.addr %s179, 2
      %s181 = scalar_lea.vmem %s3, %s180
      %183 = vst [vmem:[#allocation2] sm:$0xf] 0
      %184 = vst [vmem:[#allocation2 + $0x4] sm:$0xf] 0
      %185 = vst [vmem:[#allocation2 + $0x8] sm:$0x1] 0
      %s186 = scalar_lea.vmem [#allocation2], 204
      %187 = vst [vmem:[%s186] sm:$0xf] 0
      %188 = vst [vmem:[%s186 + $0x4] sm:$0xf] 0
      %189 = vst [vmem:[%s186 + $0x8] sm:$0x1] 0
      %vm190 = vcmask 1040384
      %vm191 = vsmask.f32 256
      %vm192 = vmand %vm190, %vm191
      %v193 = vld [vmem:[#allocation2] sm:$0x1]
      %v194 = vsel %vm192, 0, %v193
      %195 = vst [vmem:[#allocation2] sm:$0x1] %v194
      %v196 = vld [vmem:[#allocation2 + $0xc] sm:$0x1]
      %v197 = vsel %vm192, 0, %v196
      %198 = vst [vmem:[#allocation2 + $0xc] sm:$0x1] %v197
      %v199 = vld [vmem:[#allocation2 + $0x18] sm:$0x1]
      %v200 = vsel %vm192, 0, %v199
      %201 = vst [vmem:[#allocation2 + $0x18] sm:$0x1] %v200
      %v202 = vld [vmem:[#allocation2 + $0x24] sm:$0x1]
      %v203 = vsel %vm192, 0, %v202
      %204 = vst [vmem:[#allocation2 + $0x24] sm:$0x1] %v203
      %v205 = vld [vmem:[#allocation2 + $0x30] sm:$0x1]
      %v206 = vsel %vm192, 0, %v205
      %207 = vst [vmem:[#allocation2 + $0x30] sm:$0x1] %v206
      %v208 = vld [vmem:[#allocation2 + $0x3c] sm:$0x1]
      %v209 = vsel %vm192, 0, %v208
      %210 = vst [vmem:[#allocation2 + $0x3c] sm:$0x1] %v209
      %v211 = vld [vmem:[#allocation2 + $0x48] sm:$0x1]
      %v212 = vsel %vm192, 0, %v211
      %213 = vst [vmem:[#allocation2 + $0x48] sm:$0x1] %v212
      %v214 = vld [vmem:[#allocation2 + $0x54] sm:$0x1]
      %v215 = vsel %vm192, 0, %v214
      %216 = vst [vmem:[#allocation2 + $0x54] sm:$0x1] %v215
      %v217 = vld [vmem:[#allocation2 + $0x60] sm:$0x1]
      %v218 = vsel %vm192, 0, %v217
      %219 = vst [vmem:[#allocation2 + $0x60] sm:$0x1] %v218
      %v220 = vld [vmem:[#allocation2 + $0x6c] sm:$0x1]
      %v221 = vsel %vm192, 0, %v220
      %222 = vst [vmem:[#allocation2 + $0x6c] sm:$0x1] %v221
      %v223 = vld [vmem:[#allocation2 + $0x78] sm:$0x1]
      %v224 = vsel %vm192, 0, %v223
      %225 = vst [vmem:[#allocation2 + $0x78] sm:$0x1] %v224
      %v226 = vld [vmem:[#allocation2 + $0x84] sm:$0x1]
      %v227 = vsel %vm192, 0, %v226
      %228 = vst [vmem:[#allocation2 + $0x84] sm:$0x1] %v227
      %v229 = vld [vmem:[#allocation2 + $0x90] sm:$0x1]
      %v230 = vsel %vm192, 0, %v229
      %231 = vst [vmem:[#allocation2 + $0x90] sm:$0x1] %v230
      %v232 = vld [vmem:[#allocation2 + $0x9c] sm:$0x1]
      %v233 = vsel %vm192, 0, %v232
      %234 = vst [vmem:[#allocation2 + $0x9c] sm:$0x1] %v233
      %v235 = vld [vmem:[#allocation2 + $0xa8] sm:$0x1]
      %v236 = vsel %vm192, 0, %v235
      %237 = vst [vmem:[#allocation2 + $0xa8] sm:$0x1] %v236
      %v238 = vld [vmem:[#allocation2 + $0xb4] sm:$0x1]
      %v239 = vsel %vm192, 0, %v238
      %240 = vst [vmem:[#allocation2 + $0xb4] sm:$0x1] %v239
      %v241 = vld [vmem:[#allocation2 + $0xc0] sm:$0x1]
      %v242 = vsel %vm192, 0, %v241
      %243 = vst [vmem:[#allocation2 + $0xc0] sm:$0x1] %v242
      %v244 = vld [vmem:[#allocation2 + $0xcc] sm:$0x1]
      %v245 = vsel %vm192, 0, %v244
      %246 = vst [vmem:[#allocation2 + $0xcc] sm:$0x1] %v245
      %vm247 = vsmask.f32 7938
      %vm248 = vmand %vm190, %vm247
      %v249 = vld [vmem:[#allocation2 + $0x8] sm:$0x1]
      %v250 = vsel %vm248, 0, %v249
      %251 = vst [vmem:[#allocation2 + $0x8] sm:$0x1] %v250
      %v252 = vld [vmem:[#allocation2 + $0x14] sm:$0x1]
      %v253 = vsel %vm248, 0, %v252
      %254 = vst [vmem:[#allocation2 + $0x14] sm:$0x1] %v253
      %v255 = vld [vmem:[#allocation2 + $0x20] sm:$0x1]
      %v256 = vsel %vm248, 0, %v255
      %257 = vst [vmem:[#allocation2 + $0x20] sm:$0x1] %v256
      %v258 = vld [vmem:[#allocation2 + $0x2c] sm:$0x1]
      %v259 = vsel %vm248, 0, %v258
      %260 = vst [vmem:[#allocation2 + $0x2c] sm:$0x1] %v259
      %v261 = vld [vmem:[#allocation2 + $0x38] sm:$0x1]
      %v262 = vsel %vm248, 0, %v261
      %263 = vst [vmem:[#allocation2 + $0x38] sm:$0x1] %v262
      %v264 = vld [vmem:[#allocation2 + $0x44] sm:$0x1]
      %v265 = vsel %vm248, 0, %v264
      %266 = vst [vmem:[#allocation2 + $0x44] sm:$0x1] %v265
      %v267 = vld [vmem:[#allocation2 + $0x50] sm:$0x1]
      %v268 = vsel %vm248, 0, %v267
      %269 = vst [vmem:[#allocation2 + $0x50] sm:$0x1] %v268
      %v270 = vld [vmem:[#allocation2 + $0x5c] sm:$0x1]
      %v271 = vsel %vm248, 0, %v270
      %272 = vst [vmem:[#allocation2 + $0x5c] sm:$0x1] %v271
      %v273 = vld [vmem:[#allocation2 + $0x68] sm:$0x1]
      %v274 = vsel %vm248, 0, %v273
      %275 = vst [vmem:[#allocation2 + $0x68] sm:$0x1] %v274
      %v276 = vld [vmem:[#allocation2 + $0x74] sm:$0x1]
      %v277 = vsel %vm248, 0, %v276
      %278 = vst [vmem:[#allocation2 + $0x74] sm:$0x1] %v277
      %v279 = vld [vmem:[#allocation2 + $0x80] sm:$0x1]
      %v280 = vsel %vm248, 0, %v279
      %281 = vst [vmem:[#allocation2 + $0x80] sm:$0x1] %v280
      %v282 = vld [vmem:[#allocation2 + $0x8c] sm:$0x1]
      %v283 = vsel %vm248, 0, %v282
      %284 = vst [vmem:[#allocation2 + $0x8c] sm:$0x1] %v283
      %v285 = vld [vmem:[#allocation2 + $0x98] sm:$0x1]
      %v286 = vsel %vm248, 0, %v285
      %287 = vst [vmem:[#allocation2 + $0x98] sm:$0x1] %v286
      %v288 = vld [vmem:[#allocation2 + $0xa4] sm:$0x1]
      %v289 = vsel %vm248, 0, %v288
      %290 = vst [vmem:[#allocation2 + $0xa4] sm:$0x1] %v289
      %v291 = vld [vmem:[#allocation2 + $0xb0] sm:$0x1]
      %v292 = vsel %vm248, 0, %v291
      %293 = vst [vmem:[#allocation2 + $0xb0] sm:$0x1] %v292
      %v294 = vld [vmem:[#allocation2 + $0xbc] sm:$0x1]
      %v295 = vsel %vm248, 0, %v294
      %296 = vst [vmem:[#allocation2 + $0xbc] sm:$0x1] %v295
      %v297 = vld [vmem:[#allocation2 + $0xc8] sm:$0x1]
      %v298 = vsel %vm248, 0, %v297
      %299 = vst [vmem:[#allocation2 + $0xc8] sm:$0x1] %v298
      %v300 = vld [vmem:[#allocation2 + $0xd4] sm:$0x1]
      %v301 = vsel %vm248, 0, %v300
      %302 = vst [vmem:[#allocation2 + $0xd4] sm:$0x1] %v301
      %v303 = vld [vmem:[%s172] sm:$0xff]
      %v304 = vld [vmem:[%s172 + $0x8] sm:$0xff]
      %v305 = vld [vmem:[%s172 + $0x10] sm:$0xff]
      %v306 = vld [vmem:[%s172 + $0x18] sm:$0xff]
      %v307 = vld [vmem:[%s172 + $0x20] sm:$0xff]
      %v308 = vld [vmem:[%s172 + $0x28] sm:$0xff]
      %v309 = vld [vmem:[%s172 + $0x30] sm:$0xff]
      %v310 = vld [vmem:[%s172 + $0x38] sm:$0xff]
      %v311 = vld [vmem:[%s172 + $0x40] sm:$0xff]
      %v312 = vld [vmem:[%s172 + $0x48] sm:$0xff]
      %v313 = vld [vmem:[%s172 + $0x50] sm:$0xff]
      %v314 = vld [vmem:[%s172 + $0x58] sm:$0xff]
      %v315 = vld [vmem:[%s172 + $0x60] sm:$0xff]
      %v316 = vld [vmem:[%s172 + $0x68] sm:$0xff]
      %v317 = vld [vmem:[%s172 + $0x70] sm:$0xff]
      %v318 = vld [vmem:[%s172 + $0x78] sm:$0xff]
      %v319 = vld [vmem:[%s172 + $0x80] sm:$0xff]
      %v320 = vld [vmem:[%s172 + $0x88] sm:$0xff]
      %v321 = vld [vmem:[%s172 + $0x90] sm:$0xff]
      %v322 = vld [vmem:[%s172 + $0x98] sm:$0xff]
      %v323 = vld [vmem:[%s172 + $0xa0] sm:$0xff]
      %v324 = vld [vmem:[%s172 + $0xa8] sm:$0xff]
      %v325 = vld [vmem:[%s172 + $0xb0] sm:$0xff]
      %v326 = vld [vmem:[%s172 + $0xb8] sm:$0xff]
      %v327 = vld [vmem:[%s172 + $0xc0] sm:$0xff]
      %v328 = vld [vmem:[%s172 + $0xc8] sm:$0xff]
      %v329 = vld [vmem:[%s172 + $0xd0] sm:$0xff]
      %v330 = vld [vmem:[%s172 + $0xd8] sm:$0xff]
      %v331 = vld [vmem:[%s172 + $0xe0] sm:$0xff]
      %v332 = vld [vmem:[%s172 + $0xe8] sm:$0xff]
      %v333 = vld [vmem:[%s172 + $0xf0] sm:$0xff]
      %v334 = vld [vmem:[%s172 + $0xf8] sm:$0xff]
      %v335 = vpack.c.bf16 %v304, %v303
      %v336 = vpack.c.bf16 %v306, %v305
      %v337 = vpack.c.bf16 %v308, %v307
      %v338 = vpack.c.bf16 %v310, %v309
      %v339 = vpack.c.bf16 %v312, %v311
      %v340 = vpack.c.bf16 %v314, %v313
      %v341 = vpack.c.bf16 %v316, %v315
      %v342 = vpack.c.bf16 %v318, %v317
      %v343 = vpack.c.bf16 %v320, %v319
      %v344 = vpack.c.bf16 %v322, %v321
      %v345 = vpack.c.bf16 %v324, %v323
      %v346 = vpack.c.bf16 %v326, %v325
      %v347 = vpack.c.bf16 %v328, %v327
      %v348 = vpack.c.bf16 %v330, %v329
      %v349 = vpack.c.bf16 %v332, %v331
      %v350 = vpack.c.bf16 %v334, %v333
      %v367 = vunpack.c.l.b16 %v335
      %v368 = vunpack.c.h.b16 %v335
      %v369 = vunpack.c.l.b16 %v336
      %v370 = vunpack.c.h.b16 %v336
      %v371 = vunpack.c.l.b16 %v337
      %v372 = vunpack.c.h.b16 %v337
      %v373 = vunpack.c.l.b16 %v338
      %v374 = vunpack.c.h.b16 %v338
      %v375 = vunpack.c.l.b16 %v339
      %v376 = vunpack.c.h.b16 %v339
      %v377 = vunpack.c.l.b16 %v340
      %v378 = vunpack.c.h.b16 %v340
      %v379 = vunpack.c.l.b16 %v341
      %v380 = vunpack.c.h.b16 %v341
      %v381 = vunpack.c.l.b16 %v342
      %v382 = vunpack.c.h.b16 %v342
      %v383 = vunpack.c.l.b16 %v343
      %v384 = vunpack.c.h.b16 %v343
      %v385 = vunpack.c.l.b16 %v344
      %v386 = vunpack.c.h.b16 %v344
      %v387 = vunpack.c.l.b16 %v345
      %v388 = vunpack.c.h.b16 %v345
      %v389 = vunpack.c.l.b16 %v346
      %v390 = vunpack.c.h.b16 %v346
      %v391 = vunpack.c.l.b16 %v347
      %v392 = vunpack.c.h.b16 %v347
      %v393 = vunpack.c.l.b16 %v348
      %v394 = vunpack.c.h.b16 %v348
      %v395 = vunpack.c.l.b16 %v349
      %v396 = vunpack.c.h.b16 %v349
      %v397 = vunpack.c.l.b16 %v350
      %v398 = vunpack.c.h.b16 %v350
      %v399 = vpack.c.b16 %v367, %v367
      %v400 = vpack.c.b16 %v368, %v368
      %v401 = vpack.c.b16 %v369, %v369
      %v402 = vpack.c.b16 %v370, %v370
      %v403 = vpack.c.b16 %v371, %v371
      %v404 = vpack.c.b16 %v372, %v372
      %v405 = vpack.c.b16 %v373, %v373
      %v406 = vpack.c.b16 %v374, %v374
      %v407 = vpack.c.b16 %v375, %v375
      %v408 = vpack.c.b16 %v376, %v376
      %v409 = vpack.c.b16 %v377, %v377
      %v410 = vpack.c.b16 %v378, %v378
      %v411 = vpack.c.b16 %v379, %v379
      %v412 = vpack.c.b16 %v380, %v380
      %v413 = vpack.c.b16 %v381, %v381
      %v414 = vpack.c.b16 %v382, %v382
      %v415 = vpack.c.b16 %v383, %v383
      %v416 = vpack.c.b16 %v384, %v384
      %v417 = vpack.c.b16 %v385, %v385
      %v418 = vpack.c.b16 %v386, %v386
      %v419 = vpack.c.b16 %v387, %v387
      %v420 = vpack.c.b16 %v388, %v388
      %v421 = vpack.c.b16 %v389, %v389
      %v422 = vpack.c.b16 %v390, %v390
      %v423 = vpack.c.b16 %v391, %v391
      %v424 = vpack.c.b16 %v392, %v392
      %v425 = vpack.c.b16 %v393, %v393
      %v426 = vpack.c.b16 %v394, %v394
      %v427 = vpack.c.b16 %v395, %v395
      %v428 = vpack.c.b16 %v396, %v396
      %v429 = vpack.c.b16 %v397, %v397
      %v430 = vpack.c.b16 %v398, %v398
      %vm431 = vsmask.f32 4368
      %vm432 = vmor %vm191, %vm431
      %v434 = vshrl.u32 %v399, 16
      %v436 = vrot.slane %v434, 7
      %v437 = vshll.u32 %v399, 16
      %v439 = vor.u32 %v436, %v437
      %v440 = vrot.slane %v436, 4
      %v442 = vshrl.u32 %v400, 16
      %v444 = vrot.slane %v442, 7
      %v445 = vshll.u32 %v400, 16
      %v447 = vor.u32 %v444, %v445
      %v448 = vsel %vm432, %v440, %v447
      %v449 = vrot.slane %v444, 4
      %v451 = vshrl.u32 %v401, 16
      %v453 = vrot.slane %v451, 7
      %v454 = vshll.u32 %v401, 16
      %v456 = vor.u32 %v453, %v454
      %v457 = vrot.slane %v453, 4
      %v459 = vshrl.u32 %v402, 16
      %v461 = vrot.slane %v459, 7
      %v462 = vshll.u32 %v402, 16
      %v464 = vor.u32 %v461, %v462
      %v465 = vsel %vm432, %v457, %v464
      %v466 = vrot.slane %v461, 4
      %v468 = vshrl.u32 %v403, 16
      %v470 = vrot.slane %v468, 7
      %v471 = vshll.u32 %v403, 16
      %v473 = vor.u32 %v470, %v471
      %v474 = vrot.slane %v470, 4
      %v476 = vshrl.u32 %v404, 16
      %v478 = vrot.slane %v476, 7
      %v479 = vshll.u32 %v404, 16
      %v481 = vor.u32 %v478, %v479
      %v482 = vsel %vm432, %v474, %v481
      %v483 = vrot.slane %v478, 4
      %v485 = vshrl.u32 %v405, 16
      %v487 = vrot.slane %v485, 7
      %v488 = vshll.u32 %v405, 16
      %v490 = vor.u32 %v487, %v488
      %v491 = vrot.slane %v487, 4
      %v493 = vshrl.u32 %v406, 16
      %v495 = vrot.slane %v493, 7
      %v496 = vshll.u32 %v406, 16
      %v498 = vor.u32 %v495, %v496
      %v499 = vsel %vm432, %v491, %v498
      %v500 = vrot.slane %v495, 4
      %v502 = vshrl.u32 %v407, 16
      %v504 = vrot.slane %v502, 7
      %v505 = vshll.u32 %v407, 16
      %v507 = vor.u32 %v504, %v505
      %v508 = vrot.slane %v504, 4
      %v510 = vshrl.u32 %v408, 16
      %v512 = vrot.slane %v510, 7
      %v513 = vshll.u32 %v408, 16
      %v515 = vor.u32 %v512, %v513
      %v516 = vsel %vm432, %v508, %v515
      %v517 = vrot.slane %v512, 4
      %v519 = vshrl.u32 %v409, 16
      %v521 = vrot.slane %v519, 7
      %v522 = vshll.u32 %v409, 16
      %v524 = vor.u32 %v521, %v522
      %v525 = vrot.slane %v521, 4
      %v527 = vshrl.u32 %v410, 16
      %v529 = vrot.slane %v527, 7
      %v530 = vshll.u32 %v410, 16
      %v532 = vor.u32 %v529, %v530
      %v533 = vsel %vm432, %v525, %v532
      %v534 = vrot.slane %v529, 4
      %v536 = vshrl.u32 %v411, 16
      %v538 = vrot.slane %v536, 7
      %v539 = vshll.u32 %v411, 16
      %v541 = vor.u32 %v538, %v539
      %v542 = vrot.slane %v538, 4
      %v544 = vshrl.u32 %v412, 16
      %v546 = vrot.slane %v544, 7
      %v547 = vshll.u32 %v412, 16
      %v549 = vor.u32 %v546, %v547
      %v550 = vsel %vm432, %v542, %v549
      %v551 = vrot.slane %v546, 4
      %v553 = vshrl.u32 %v413, 16
      %v555 = vrot.slane %v553, 7
      %v556 = vshll.u32 %v413, 16
      %v558 = vor.u32 %v555, %v556
      %v559 = vrot.slane %v555, 4
      %v561 = vshrl.u32 %v414, 16
      %v563 = vrot.slane %v561, 7
      %v564 = vshll.u32 %v414, 16
      %v566 = vor.u32 %v563, %v564
      %v567 = vsel %vm432, %v559, %v566
      %v568 = vrot.slane %v563, 4
      %v570 = vshrl.u32 %v415, 16
      %v572 = vrot.slane %v570, 7
      %v573 = vshll.u32 %v415, 16
      %v575 = vor.u32 %v572, %v573
      %v576 = vrot.slane %v572, 4
      %v578 = vshrl.u32 %v416, 16
      %v580 = vrot.slane %v578, 7
      %v581 = vshll.u32 %v416, 16
      %v583 = vor.u32 %v580, %v581
      %v584 = vsel %vm432, %v576, %v583
      %v585 = vrot.slane %v580, 4
      %v587 = vshrl.u32 %v417, 16
      %v589 = vrot.slane %v587, 7
      %v590 = vshll.u32 %v417, 16
      %v592 = vor.u32 %v589, %v590
      %v593 = vrot.slane %v589, 4
      %v595 = vshrl.u32 %v418, 16
      %v597 = vrot.slane %v595, 7
      %v598 = vshll.u32 %v418, 16
      %v600 = vor.u32 %v597, %v598
      %v601 = vsel %vm432, %v593, %v600
      %v602 = vrot.slane %v597, 4
      %v604 = vshrl.u32 %v419, 16
      %v606 = vrot.slane %v604, 7
      %v607 = vshll.u32 %v419, 16
      %v609 = vor.u32 %v606, %v607
      %v610 = vrot.slane %v606, 4
      %v612 = vshrl.u32 %v420, 16
      %v614 = vrot.slane %v612, 7
      %v615 = vshll.u32 %v420, 16
      %v617 = vor.u32 %v614, %v615
      %v618 = vsel %vm432, %v610, %v617
      %v619 = vrot.slane %v614, 4
      %v621 = vshrl.u32 %v421, 16
      %v623 = vrot.slane %v621, 7
      %v624 = vshll.u32 %v421, 16
      %v626 = vor.u32 %v623, %v624
      %v627 = vrot.slane %v623, 4
      %v629 = vshrl.u32 %v422, 16
      %v631 = vrot.slane %v629, 7
      %v632 = vshll.u32 %v422, 16
      %v634 = vor.u32 %v631, %v632
      %v635 = vsel %vm432, %v627, %v634
      %v636 = vrot.slane %v631, 4
      %v638 = vshrl.u32 %v423, 16
      %v640 = vrot.slane %v638, 7
      %v641 = vshll.u32 %v423, 16
      %v643 = vor.u32 %v640, %v641
      %v644 = vrot.slane %v640, 4
      %v646 = vshrl.u32 %v424, 16
      %v648 = vrot.slane %v646, 7
      %v649 = vshll.u32 %v424, 16
      %v651 = vor.u32 %v648, %v649
      %v652 = vsel %vm432, %v644, %v651
      %v653 = vrot.slane %v648, 4
      %v655 = vshrl.u32 %v425, 16
      %v657 = vrot.slane %v655, 7
      %v658 = vshll.u32 %v425, 16
      %v660 = vor.u32 %v657, %v658
      %v661 = vrot.slane %v657, 4
      %v663 = vshrl.u32 %v426, 16
      %v665 = vrot.slane %v663, 7
      %v666 = vshll.u32 %v426, 16
      %v668 = vor.u32 %v665, %v666
      %v669 = vsel %vm432, %v661, %v668
      %v670 = vrot.slane %v665, 4
      %v672 = vshrl.u32 %v427, 16
      %v674 = vrot.slane %v672, 7
      %v675 = vshll.u32 %v427, 16
      %v677 = vor.u32 %v674, %v675
      %v678 = vrot.slane %v674, 4
      %v680 = vshrl.u32 %v428, 16
      %v682 = vrot.slane %v680, 7
      %v683 = vshll.u32 %v428, 16
      %v685 = vor.u32 %v682, %v683
      %v686 = vsel %vm432, %v678, %v685
      %v687 = vrot.slane %v682, 4
      %v689 = vshrl.u32 %v429, 16
      %v691 = vrot.slane %v689, 7
      %v692 = vshll.u32 %v429, 16
      %v694 = vor.u32 %v691, %v692
      %v695 = vrot.slane %v691, 4
      %v697 = vshrl.u32 %v430, 16
      %v699 = vrot.slane %v697, 7
      %v700 = vshll.u32 %v430, 16
      %v702 = vor.u32 %v699, %v700
      %v703 = vsel %vm432, %v695, %v702
      %v704 = vrot.slane %v699, 4
      %s753 = scalar_lea.vmem [#allocation2], 12
      %vm754 = vcmask 1043456
      %vm755 = vmand %vm754, %vm247
      %v756 = vld [vmem:[%s753] sm:$0xf]
      %v757 = vsel %vm755, %v439, %v756
      %758 = vst [vmem:[%s753] sm:$0xf] %v757
      %759 = vst [vmem:[%s753 + $0x4] sm:$0xf] %v448
      %v760 = vld [vmem:[%s753 + $0x8] sm:$0x1]
      %v761 = vsel %vm192, %v449, %v760
      %762 = vst [vmem:[%s753 + $0x8] sm:$0x1] %v761
      %v763 = vld [vmem:[%s753 + $0xc] sm:$0xf]
      %v764 = vsel %vm755, %v456, %v763
      %765 = vst [vmem:[%s753 + $0xc] sm:$0xf] %v764
      %766 = vst [vmem:[%s753 + $0x10] sm:$0xf] %v465
      %v767 = vld [vmem:[%s753 + $0x14] sm:$0x1]
      %v768 = vsel %vm192, %v466, %v767
      %769 = vst [vmem:[%s753 + $0x14] sm:$0x1] %v768
      %v770 = vld [vmem:[%s753 + $0x18] sm:$0xf]
      %v771 = vsel %vm755, %v473, %v770
      %772 = vst [vmem:[%s753 + $0x18] sm:$0xf] %v771
      %773 = vst [vmem:[%s753 + $0x1c] sm:$0xf] %v482
      %v774 = vld [vmem:[%s753 + $0x20] sm:$0x1]
      %v775 = vsel %vm192, %v483, %v774
      %776 = vst [vmem:[%s753 + $0x20] sm:$0x1] %v775
      %v777 = vld [vmem:[%s753 + $0x24] sm:$0xf]
      %v778 = vsel %vm755, %v490, %v777
      %779 = vst [vmem:[%s753 + $0x24] sm:$0xf] %v778
      %780 = vst [vmem:[%s753 + $0x28] sm:$0xf] %v499
      %v781 = vld [vmem:[%s753 + $0x2c] sm:$0x1]
      %v782 = vsel %vm192, %v500, %v781
      %783 = vst [vmem:[%s753 + $0x2c] sm:$0x1] %v782
      %v784 = vld [vmem:[%s753 + $0x30] sm:$0xf]
      %v785 = vsel %vm755, %v507, %v784
      %786 = vst [vmem:[%s753 + $0x30] sm:$0xf] %v785
      %787 = vst [vmem:[%s753 + $0x34] sm:$0xf] %v516
      %v788 = vld [vmem:[%s753 + $0x38] sm:$0x1]
      %v789 = vsel %vm192, %v517, %v788
      %790 = vst [vmem:[%s753 + $0x38] sm:$0x1] %v789
      %v791 = vld [vmem:[%s753 + $0x3c] sm:$0xf]
      %v792 = vsel %vm755, %v524, %v791
      %793 = vst [vmem:[%s753 + $0x3c] sm:$0xf] %v792
      %794 = vst [vmem:[%s753 + $0x40] sm:$0xf] %v533
      %v795 = vld [vmem:[%s753 + $0x44] sm:$0x1]
      %v796 = vsel %vm192, %v534, %v795
      %797 = vst [vmem:[%s753 + $0x44] sm:$0x1] %v796
      %v798 = vld [vmem:[%s753 + $0x48] sm:$0xf]
      %v799 = vsel %vm755, %v541, %v798
      %800 = vst [vmem:[%s753 + $0x48] sm:$0xf] %v799
      %801 = vst [vmem:[%s753 + $0x4c] sm:$0xf] %v550
      %v802 = vld [vmem:[%s753 + $0x50] sm:$0x1]
      %v803 = vsel %vm192, %v551, %v802
      %804 = vst [vmem:[%s753 + $0x50] sm:$0x1] %v803
      %v805 = vld [vmem:[%s753 + $0x54] sm:$0xf]
      %v806 = vsel %vm755, %v558, %v805
      %807 = vst [vmem:[%s753 + $0x54] sm:$0xf] %v806
      %808 = vst [vmem:[%s753 + $0x58] sm:$0xf] %v567
      %v809 = vld [vmem:[%s753 + $0x5c] sm:$0x1]
      %v810 = vsel %vm192, %v568, %v809
      %811 = vst [vmem:[%s753 + $0x5c] sm:$0x1] %v810
      %v812 = vld [vmem:[%s753 + $0x60] sm:$0xf]
      %v813 = vsel %vm755, %v575, %v812
      %814 = vst [vmem:[%s753 + $0x60] sm:$0xf] %v813
      %815 = vst [vmem:[%s753 + $0x64] sm:$0xf] %v584
      %v816 = vld [vmem:[%s753 + $0x68] sm:$0x1]
      %v817 = vsel %vm192, %v585, %v816
      %818 = vst [vmem:[%s753 + $0x68] sm:$0x1] %v817
      %v819 = vld [vmem:[%s753 + $0x6c] sm:$0xf]
      %v820 = vsel %vm755, %v592, %v819
      %821 = vst [vmem:[%s753 + $0x6c] sm:$0xf] %v820
      %822 = vst [vmem:[%s753 + $0x70] sm:$0xf] %v601
      %v823 = vld [vmem:[%s753 + $0x74] sm:$0x1]
      %v824 = vsel %vm192, %v602, %v823
      %825 = vst [vmem:[%s753 + $0x74] sm:$0x1] %v824
      %v826 = vld [vmem:[%s753 + $0x78] sm:$0xf]
      %v827 = vsel %vm755, %v609, %v826
      %828 = vst [vmem:[%s753 + $0x78] sm:$0xf] %v827
      %829 = vst [vmem:[%s753 + $0x7c] sm:$0xf] %v618
      %v830 = vld [vmem:[%s753 + $0x80] sm:$0x1]
      %v831 = vsel %vm192, %v619, %v830
      %832 = vst [vmem:[%s753 + $0x80] sm:$0x1] %v831
      %v833 = vld [vmem:[%s753 + $0x84] sm:$0xf]
      %v834 = vsel %vm755, %v626, %v833
      %835 = vst [vmem:[%s753 + $0x84] sm:$0xf] %v834
      %836 = vst [vmem:[%s753 + $0x88] sm:$0xf] %v635
      %v837 = vld [vmem:[%s753 + $0x8c] sm:$0x1]
      %v838 = vsel %vm192, %v636, %v837
      %839 = vst [vmem:[%s753 + $0x8c] sm:$0x1] %v838
      %v840 = vld [vmem:[%s753 + $0x90] sm:$0xf]
      %v841 = vsel %vm755, %v643, %v840
      %842 = vst [vmem:[%s753 + $0x90] sm:$0xf] %v841
      %843 = vst [vmem:[%s753 + $0x94] sm:$0xf] %v652
      %v844 = vld [vmem:[%s753 + $0x98] sm:$0x1]
      %v845 = vsel %vm192, %v653, %v844
      %846 = vst [vmem:[%s753 + $0x98] sm:$0x1] %v845
      %v847 = vld [vmem:[%s753 + $0x9c] sm:$0xf]
      %v848 = vsel %vm755, %v660, %v847
      %849 = vst [vmem:[%s753 + $0x9c] sm:$0xf] %v848
      %850 = vst [vmem:[%s753 + $0xa0] sm:$0xf] %v669
      %v851 = vld [vmem:[%s753 + $0xa4] sm:$0x1]
      %v852 = vsel %vm192, %v670, %v851
      %853 = vst [vmem:[%s753 + $0xa4] sm:$0x1] %v852
      %v854 = vld [vmem:[%s753 + $0xa8] sm:$0xf]
      %v855 = vsel %vm755, %v677, %v854
      %856 = vst [vmem:[%s753 + $0xa8] sm:$0xf] %v855
      %857 = vst [vmem:[%s753 + $0xac] sm:$0xf] %v686
      %v858 = vld [vmem:[%s753 + $0xb0] sm:$0x1]
      %v859 = vsel %vm192, %v687, %v858
      %860 = vst [vmem:[%s753 + $0xb0] sm:$0x1] %v859
      %v861 = vld [vmem:[%s753 + $0xb4] sm:$0xf]
      %v862 = vsel %vm755, %v694, %v861
      %863 = vst [vmem:[%s753 + $0xb4] sm:$0xf] %v862
      %864 = vst [vmem:[%s753 + $0xb8] sm:$0xf] %v703
      %v865 = vld [vmem:[%s753 + $0xbc] sm:$0x1]
      %v866 = vsel %vm192, %v704, %v865
      %867 = vst [vmem:[%s753 + $0xbc] sm:$0x1] %v866
      %v868 = vld [vmem:[%s1] sm:$0xf]
      %v869 = vld [vmem:[%s1 + $0x4] sm:$0xf]
      %v870 = vld [vmem:[%s1 + $0x8] sm:$0xf]
      %v871 = vld [vmem:[%s1 + $0xc] sm:$0xf]
      %v872 = vld [vmem:[%s1 + $0x10] sm:$0xf]
      %v873 = vld [vmem:[%s1 + $0x14] sm:$0xf]
      %v874 = vld [vmem:[%s1 + $0x18] sm:$0xf]
      %v875 = vld [vmem:[%s1 + $0x1c] sm:$0xf]
      %v876 = vld [vmem:[%s1 + $0x20] sm:$0xf]
      %v877 = vld [vmem:[%s1 + $0x24] sm:$0xf]
      %v878 = vld [vmem:[%s1 + $0x28] sm:$0xf]
      %v879 = vld [vmem:[%s1 + $0x2c] sm:$0xf]
      %v880 = vld [vmem:[%s1 + $0x30] sm:$0xf]
      %v881 = vld [vmem:[%s1 + $0x34] sm:$0xf]
      %v882 = vld [vmem:[%s1 + $0x38] sm:$0xf]
      %v883 = vld [vmem:[%s1 + $0x3c] sm:$0xf]
      %s884 = scalar_lea.vmem %s1, 64
      %v885 = vld [vmem:[%s884] sm:$0xf]
      %v886 = vld [vmem:[%s884 + $0x4] sm:$0xf]
      %v887 = vld [vmem:[%s884 + $0x8] sm:$0xf]
      %v888 = vld [vmem:[%s884 + $0xc] sm:$0xf]
      %v889 = vld [vmem:[%s884 + $0x10] sm:$0xf]
      %v890 = vld [vmem:[%s884 + $0x14] sm:$0xf]
      %v891 = vld [vmem:[%s884 + $0x18] sm:$0xf]
      %v892 = vld [vmem:[%s884 + $0x1c] sm:$0xf]
      %v893 = vld [vmem:[%s884 + $0x20] sm:$0xf]
      %v894 = vld [vmem:[%s884 + $0x24] sm:$0xf]
      %v895 = vld [vmem:[%s884 + $0x28] sm:$0xf]
      %v896 = vld [vmem:[%s884 + $0x2c] sm:$0xf]
      %v897 = vld [vmem:[%s884 + $0x30] sm:$0xf]
      %v898 = vld [vmem:[%s884 + $0x34] sm:$0xf]
      %v899 = vld [vmem:[%s884 + $0x38] sm:$0xf]
      %v900 = vld [vmem:[%s884 + $0x3c] sm:$0xf]
      %s901 = scalar_lea.vmem %s1, 128
      %v902 = vld [vmem:[%s901] sm:$0xf]
      %v903 = vld [vmem:[%s901 + $0x4] sm:$0xf]
      %v904 = vld [vmem:[%s901 + $0x8] sm:$0xf]
      %v905 = vld [vmem:[%s901 + $0xc] sm:$0xf]
      %v906 = vld [vmem:[%s901 + $0x10] sm:$0xf]
      %v907 = vld [vmem:[%s901 + $0x14] sm:$0xf]
      %v908 = vld [vmem:[%s901 + $0x18] sm:$0xf]
      %v909 = vld [vmem:[%s901 + $0x1c] sm:$0xf]
      %v910 = vld [vmem:[%s901 + $0x20] sm:$0xf]
      %v911 = vld [vmem:[%s901 + $0x24] sm:$0xf]
      %v912 = vld [vmem:[%s901 + $0x28] sm:$0xf]
      %v913 = vld [vmem:[%s901 + $0x2c] sm:$0xf]
      %v914 = vld [vmem:[%s901 + $0x30] sm:$0xf]
      %v915 = vld [vmem:[%s901 + $0x34] sm:$0xf]
      %v916 = vld [vmem:[%s901 + $0x38] sm:$0xf]
      %v917 = vld [vmem:[%s901 + $0x3c] sm:$0xf]
      %s918 = scalar_lea.vmem %s1, 192
      %v919 = vld [vmem:[%s918] sm:$0xf]
      %v920 = vld [vmem:[%s918 + $0x4] sm:$0xf]
      %v921 = vld [vmem:[%s918 + $0x8] sm:$0xf]
      %v922 = vld [vmem:[%s918 + $0xc] sm:$0xf]
      %v923 = vld [vmem:[%s918 + $0x10] sm:$0xf]
      %v924 = vld [vmem:[%s918 + $0x14] sm:$0xf]
      %v925 = vld [vmem:[%s918 + $0x18] sm:$0xf]
      %v926 = vld [vmem:[%s918 + $0x1c] sm:$0xf]
      %v927 = vld [vmem:[%s918 + $0x20] sm:$0xf]
      %v928 = vld [vmem:[%s918 + $0x24] sm:$0xf]
      %v929 = vld [vmem:[%s918 + $0x28] sm:$0xf]
      %v930 = vld [vmem:[%s918 + $0x2c] sm:$0xf]
      %v931 = vld [vmem:[%s918 + $0x30] sm:$0xf]
      %v932 = vld [vmem:[%s918 + $0x34] sm:$0xf]
      %v933 = vld [vmem:[%s918 + $0x38] sm:$0xf]
      %v934 = vld [vmem:[%s918 + $0x3c] sm:$0xf]
      %s935 = scalar_lea.vmem %s1, 256
      %v936 = vld [vmem:[%s935] sm:$0xf]
      %v937 = vld [vmem:[%s935 + $0x4] sm:$0xf]
      %v938 = vld [vmem:[%s935 + $0x8] sm:$0xf]
      %v939 = vld [vmem:[%s935 + $0xc] sm:$0xf]
      %v940 = vld [vmem:[%s935 + $0x10] sm:$0xf]
      %v941 = vld [vmem:[%s935 + $0x14] sm:$0xf]
      %v942 = vld [vmem:[%s935 + $0x18] sm:$0xf]
      %v943 = vld [vmem:[%s935 + $0x1c] sm:$0xf]
      %v944 = vld [vmem:[%s935 + $0x20] sm:$0xf]
      %v945 = vld [vmem:[%s935 + $0x24] sm:$0xf]
      %v946 = vld [vmem:[%s935 + $0x28] sm:$0xf]
      %v947 = vld [vmem:[%s935 + $0x2c] sm:$0xf]
      %v948 = vld [vmem:[%s935 + $0x30] sm:$0xf]
      %v949 = vld [vmem:[%s935 + $0x34] sm:$0xf]
      %v950 = vld [vmem:[%s935 + $0x38] sm:$0xf]
      %v951 = vld [vmem:[%s935 + $0x3c] sm:$0xf]
      %s952 = scalar_lea.vmem %s1, 320
      %v953 = vld [vmem:[%s952] sm:$0xf]
      %v954 = vld [vmem:[%s952 + $0x4] sm:$0xf]
      %v955 = vld [vmem:[%s952 + $0x8] sm:$0xf]
      %v956 = vld [vmem:[%s952 + $0xc] sm:$0xf]
      %v957 = vld [vmem:[%s952 + $0x10] sm:$0xf]
      %v958 = vld [vmem:[%s952 + $0x14] sm:$0xf]
      %v959 = vld [vmem:[%s952 + $0x18] sm:$0xf]
      %v960 = vld [vmem:[%s952 + $0x1c] sm:$0xf]
      %v961 = vld [vmem:[%s952 + $0x20] sm:$0xf]
      %v962 = vld [vmem:[%s952 + $0x24] sm:$0xf]
      %v963 = vld [vmem:[%s952 + $0x28] sm:$0xf]
      %v964 = vld [vmem:[%s952 + $0x2c] sm:$0xf]
      %v965 = vld [vmem:[%s952 + $0x30] sm:$0xf]
      %v966 = vld [vmem:[%s952 + $0x34] sm:$0xf]
      %v967 = vld [vmem:[%s952 + $0x38] sm:$0xf]
      %v968 = vld [vmem:[%s952 + $0x3c] sm:$0xf]
      %s969 = scalar_lea.vmem %s1, 384
      %v970 = vld [vmem:[%s969] sm:$0xf]
      %v971 = vld [vmem:[%s969 + $0x4] sm:$0xf]
      %v972 = vld [vmem:[%s969 + $0x8] sm:$0xf]
      %v973 = vld [vmem:[%s969 + $0xc] sm:$0xf]
      %v974 = vld [vmem:[%s969 + $0x10] sm:$0xf]
      %v975 = vld [vmem:[%s969 + $0x14] sm:$0xf]
      %v976 = vld [vmem:[%s969 + $0x18] sm:$0xf]
      %v977 = vld [vmem:[%s969 + $0x1c] sm:$0xf]
      %v978 = vld [vmem:[%s969 + $0x20] sm:$0xf]
      %v979 = vld [vmem:[%s969 + $0x24] sm:$0xf]
      %v980 = vld [vmem:[%s969 + $0x28] sm:$0xf]
      %v981 = vld [vmem:[%s969 + $0x2c] sm:$0xf]
      %v982 = vld [vmem:[%s969 + $0x30] sm:$0xf]
      %v983 = vld [vmem:[%s969 + $0x34] sm:$0xf]
      %v984 = vld [vmem:[%s969 + $0x38] sm:$0xf]
      %v985 = vld [vmem:[%s969 + $0x3c] sm:$0xf]
      %s986 = scalar_lea.vmem %s1, 448
      %v987 = vld [vmem:[%s986] sm:$0xf]
      %v988 = vld [vmem:[%s986 + $0x4] sm:$0xf]
      %v989 = vld [vmem:[%s986 + $0x8] sm:$0xf]
      %v990 = vld [vmem:[%s986 + $0xc] sm:$0xf]
      %v991 = vld [vmem:[%s986 + $0x10] sm:$0xf]
      %v992 = vld [vmem:[%s986 + $0x14] sm:$0xf]
      %v993 = vld [vmem:[%s986 + $0x18] sm:$0xf]
      %v994 = vld [vmem:[%s986 + $0x1c] sm:$0xf]
      %v995 = vld [vmem:[%s986 + $0x20] sm:$0xf]
      %v996 = vld [vmem:[%s986 + $0x24] sm:$0xf]
      %v997 = vld [vmem:[%s986 + $0x28] sm:$0xf]
      %v998 = vld [vmem:[%s986 + $0x2c] sm:$0xf]
      %v999 = vld [vmem:[%s986 + $0x30] sm:$0xf]
      %v1000 = vld [vmem:[%s986 + $0x34] sm:$0xf]
      %v1001 = vld [vmem:[%s986 + $0x38] sm:$0xf]
      %v1002 = vld [vmem:[%s986 + $0x3c] sm:$0xf]
      %s1003 = scalar_lea.vmem %s1, 512
      %v1004 = vld [vmem:[%s1003] sm:$0xf]
      %v1005 = vld [vmem:[%s1003 + $0x4] sm:$0xf]
      %v1006 = vld [vmem:[%s1003 + $0x8] sm:$0xf]
      %v1007 = vld [vmem:[%s1003 + $0xc] sm:$0xf]
      %v1008 = vld [vmem:[%s1003 + $0x10] sm:$0xf]
      %v1009 = vld [vmem:[%s1003 + $0x14] sm:$0xf]
      %v1010 = vld [vmem:[%s1003 + $0x18] sm:$0xf]
      %v1011 = vld [vmem:[%s1003 + $0x1c] sm:$0xf]
      %v1012 = vld [vmem:[%s1003 + $0x20] sm:$0xf]
      %v1013 = vld [vmem:[%s1003 + $0x24] sm:$0xf]
      %v1014 = vld [vmem:[%s1003 + $0x28] sm:$0xf]
      %v1015 = vld [vmem:[%s1003 + $0x2c] sm:$0xf]
      %v1016 = vld [vmem:[%s1003 + $0x30] sm:$0xf]
      %v1017 = vld [vmem:[%s1003 + $0x34] sm:$0xf]
      %v1018 = vld [vmem:[%s1003 + $0x38] sm:$0xf]
      %v1019 = vld [vmem:[%s1003 + $0x3c] sm:$0xf]
      %v1020 = vld [vmem:[#allocation2] sm:$0xf]
      %v1021 = vld [vmem:[#allocation2 + $0x4] sm:$0xf]
      %v1022 = vld [vmem:[#allocation2 + $0xc] sm:$0xf]
      %v1023 = vld [vmem:[#allocation2 + $0x10] sm:$0xf]
      %v1024 = vld [vmem:[#allocation2 + $0x18] sm:$0xf]
      %v1025 = vld [vmem:[#allocation2 + $0x1c] sm:$0xf]
      %v1026 = vld [vmem:[#allocation2 + $0x24] sm:$0xf]
      %v1027 = vld [vmem:[#allocation2 + $0x28] sm:$0xf]
      %v1028 = vld [vmem:[#allocation2 + $0x30] sm:$0xf]
      %v1029 = vld [vmem:[#allocation2 + $0x34] sm:$0xf]
      %v1030 = vld [vmem:[#allocation2 + $0x3c] sm:$0xf]
      %v1031 = vld [vmem:[#allocation2 + $0x40] sm:$0xf]
      %v1032 = vld [vmem:[#allocation2 + $0x48] sm:$0xf]
      %v1033 = vld [vmem:[#allocation2 + $0x4c] sm:$0xf]
      %v1034 = vld [vmem:[#allocation2 + $0x54] sm:$0xf]
      %v1035 = vld [vmem:[#allocation2 + $0x58] sm:$0xf]
      %v1036 = vld [vmem:[#allocation2 + $0x60] sm:$0xf]
      %v1037 = vld [vmem:[#allocation2 + $0x64] sm:$0xf]
      %v1038 = vld [vmem:[#allocation2 + $0x6c] sm:$0xf]
      %v1039 = vld [vmem:[#allocation2 + $0x70] sm:$0xf]
      %v1040 = vld [vmem:[#allocation2 + $0x78] sm:$0xf]
      %v1041 = vld [vmem:[#allocation2 + $0x7c] sm:$0xf]
      %v1042 = vld [vmem:[#allocation2 + $0x84] sm:$0xf]
      %v1043 = vld [vmem:[#allocation2 + $0x88] sm:$0xf]
      %v1044 = vld [vmem:[#allocation2 + $0x90] sm:$0xf]
      %v1045 = vld [vmem:[#allocation2 + $0x94] sm:$0xf]
      %v1046 = vld [vmem:[#allocation2 + $0x9c] sm:$0xf]
      %v1047 = vld [vmem:[#allocation2 + $0xa0] sm:$0xf]
      %v1048 = vld [vmem:[#allocation2 + $0xa8] sm:$0xf]
      %v1049 = vld [vmem:[#allocation2 + $0xac] sm:$0xf]
      %v1050 = vld [vmem:[#allocation2 + $0xb4] sm:$0xf]
      %v1051 = vld [vmem:[#allocation2 + $0xb8] sm:$0xf]
      %v1052 = vld [vmem:[#allocation2 + $0x8] sm:$0x1]
      %v1053 = vld [vmem:[#allocation2 + $0x14] sm:$0x1]
      %v1054 = vld [vmem:[#allocation2 + $0x20] sm:$0x1]
      %v1055 = vld [vmem:[#allocation2 + $0x2c] sm:$0x1]
      %v1056 = vld [vmem:[#allocation2 + $0x38] sm:$0x1]
      %v1057 = vld [vmem:[#allocation2 + $0x44] sm:$0x1]
      %v1058 = vld [vmem:[#allocation2 + $0x50] sm:$0x1]
      %v1059 = vld [vmem:[#allocation2 + $0x5c] sm:$0x1]
      %v1060 = vld [vmem:[#allocation2 + $0x68] sm:$0x1]
      %v1061 = vld [vmem:[#allocation2 + $0x74] sm:$0x1]
      %v1062 = vld [vmem:[#allocation2 + $0x80] sm:$0x1]
      %v1063 = vld [vmem:[#allocation2 + $0x8c] sm:$0x1]
      %v1064 = vld [vmem:[#allocation2 + $0x98] sm:$0x1]
      %v1065 = vld [vmem:[#allocation2 + $0xa4] sm:$0x1]
      %v1066 = vld [vmem:[#allocation2 + $0xb0] sm:$0x1]
      %v1067 = vld [vmem:[#allocation2 + $0xbc] sm:$0x1]
      %vm1068 = vsmask.f32 3328
      %vm1069 = vsmask.f32 7440
      %vm1070 = vmor %vm1068, %vm1069
      %v1072 = vshrl.u32 %v1020, 16
      %v1074 = vrot.slane %v1072, 4
      %v1075 = vshll.u32 %v1020, 16
      %v1077 = vrot.slane %v1075, 5
      %v1078 = vor.u32 %v1074, %v1077
      %v1079 = vrot.slane %v1078, 4
      %v1081 = vshll.u32 %v1021, 16
      %v1083 = vrot.slane %v1081, 5
      %v1084 = vsel %vm1070, %v1079, %v1083
      %v1085 = vshrl.u32 %v1021, 16
      %v1087 = vrot.slane %v1085, 4
      %v1088 = vor.u32 %v1087, %v1083
      %v1089 = vrot.slane %v1088, 4
      %v1091 = vshll.u32 %v1052, 16
      %v1093 = vrot.slane %v1091, 5
      %v1094 = vsel %vm1070, %v1089, %v1093
      %v1096 = vshrl.u32 %v1022, 16
      %v1098 = vrot.slane %v1096, 4
      %v1099 = vshll.u32 %v1022, 16
      %v1101 = vrot.slane %v1099, 5
      %v1102 = vor.u32 %v1098, %v1101
      %v1103 = vrot.slane %v1102, 4
      %v1105 = vshll.u32 %v1023, 16
      %v1107 = vrot.slane %v1105, 5
      %v1108 = vsel %vm1070, %v1103, %v1107
      %v1109 = vshrl.u32 %v1023, 16
      %v1111 = vrot.slane %v1109, 4
      %v1112 = vor.u32 %v1111, %v1107
      %v1113 = vrot.slane %v1112, 4
      %v1115 = vshll.u32 %v1053, 16
      %v1117 = vrot.slane %v1115, 5
      %v1118 = vsel %vm1070, %v1113, %v1117
      %v1120 = vshrl.u32 %v1024, 16
      %v1122 = vrot.slane %v1120, 4
      %v1123 = vshll.u32 %v1024, 16
      %v1125 = vrot.slane %v1123, 5
      %v1126 = vor.u32 %v1122, %v1125
      %v1127 = vrot.slane %v1126, 4
      %v1129 = vshll.u32 %v1025, 16
      %v1131 = vrot.slane %v1129, 5
      %v1132 = vsel %vm1070, %v1127, %v1131
      %v1133 = vshrl.u32 %v1025, 16
      %v1135 = vrot.slane %v1133, 4
      %v1136 = vor.u32 %v1135, %v1131
      %v1137 = vrot.slane %v1136, 4
      %v1139 = vshll.u32 %v1054, 16
      %v1141 = vrot.slane %v1139, 5
      %v1142 = vsel %vm1070, %v1137, %v1141
      %v1144 = vshrl.u32 %v1026, 16
      %v1146 = vrot.slane %v1144, 4
      %v1147 = vshll.u32 %v1026, 16
      %v1149 = vrot.slane %v1147, 5
      %v1150 = vor.u32 %v1146, %v1149
      %v1151 = vrot.slane %v1150, 4
      %v1153 = vshll.u32 %v1027, 16
      %v1155 = vrot.slane %v1153, 5
      %v1156 = vsel %vm1070, %v1151, %v1155
      %v1157 = vshrl.u32 %v1027, 16
      %v1159 = vrot.slane %v1157, 4
      %v1160 = vor.u32 %v1159, %v1155
      %v1161 = vrot.slane %v1160, 4
      %v1163 = vshll.u32 %v1055, 16
      %v1165 = vrot.slane %v1163, 5
      %v1166 = vsel %vm1070, %v1161, %v1165
      %v1168 = vshrl.u32 %v1028, 16
      %v1170 = vrot.slane %v1168, 4
      %v1171 = vshll.u32 %v1028, 16
      %v1173 = vrot.slane %v1171, 5
      %v1174 = vor.u32 %v1170, %v1173
      %v1175 = vrot.slane %v1174, 4
      %v1177 = vshll.u32 %v1029, 16
      %v1179 = vrot.slane %v1177, 5
      %v1180 = vsel %vm1070, %v1175, %v1179
      %v1181 = vshrl.u32 %v1029, 16
      %v1183 = vrot.slane %v1181, 4
      %v1184 = vor.u32 %v1183, %v1179
      %v1185 = vrot.slane %v1184, 4
      %v1187 = vshll.u32 %v1056, 16
      %v1189 = vrot.slane %v1187, 5
      %v1190 = vsel %vm1070, %v1185, %v1189
      %v1192 = vshrl.u32 %v1030, 16
      %v1194 = vrot.slane %v1192, 4
      %v1195 = vshll.u32 %v1030, 16
      %v1197 = vrot.slane %v1195, 5
      %v1198 = vor.u32 %v1194, %v1197
      %v1199 = vrot.slane %v1198, 4
      %v1201 = vshll.u32 %v1031, 16
      %v1203 = vrot.slane %v1201, 5
      %v1204 = vsel %vm1070, %v1199, %v1203
      %v1205 = vshrl.u32 %v1031, 16
      %v1207 = vrot.slane %v1205, 4
      %v1208 = vor.u32 %v1207, %v1203
      %v1209 = vrot.slane %v1208, 4
      %v1211 = vshll.u32 %v1057, 16
      %v1213 = vrot.slane %v1211, 5
      %v1214 = vsel %vm1070, %v1209, %v1213
      %v1216 = vshrl.u32 %v1032, 16
      %v1218 = vrot.slane %v1216, 4
      %v1219 = vshll.u32 %v1032, 16
      %v1221 = vrot.slane %v1219, 5
      %v1222 = vor.u32 %v1218, %v1221
      %v1223 = vrot.slane %v1222, 4
      %v1225 = vshll.u32 %v1033, 16
      %v1227 = vrot.slane %v1225, 5
      %v1228 = vsel %vm1070, %v1223, %v1227
      %v1229 = vshrl.u32 %v1033, 16
      %v1231 = vrot.slane %v1229, 4
      %v1232 = vor.u32 %v1231, %v1227
      %v1233 = vrot.slane %v1232, 4
      %v1235 = vshll.u32 %v1058, 16
      %v1237 = vrot.slane %v1235, 5
      %v1238 = vsel %vm1070, %v1233, %v1237
      %v1240 = vshrl.u32 %v1034, 16
      %v1242 = vrot.slane %v1240, 4
      %v1243 = vshll.u32 %v1034, 16
      %v1245 = vrot.slane %v1243, 5
      %v1246 = vor.u32 %v1242, %v1245
      %v1247 = vrot.slane %v1246, 4
      %v1249 = vshll.u32 %v1035, 16
      %v1251 = vrot.slane %v1249, 5
      %v1252 = vsel %vm1070, %v1247, %v1251
      %v1253 = vshrl.u32 %v1035, 16
      %v1255 = vrot.slane %v1253, 4
      %v1256 = vor.u32 %v1255, %v1251
      %v1257 = vrot.slane %v1256, 4
      %v1259 = vshll.u32 %v1059, 16
      %v1261 = vrot.slane %v1259, 5
      %v1262 = vsel %vm1070, %v1257, %v1261
      %v1264 = vshrl.u32 %v1036, 16
      %v1266 = vrot.slane %v1264, 4
      %v1267 = vshll.u32 %v1036, 16
      %v1269 = vrot.slane %v1267, 5
      %v1270 = vor.u32 %v1266, %v1269
      %v1271 = vrot.slane %v1270, 4
      %v1273 = vshll.u32 %v1037, 16
      %v1275 = vrot.slane %v1273, 5
      %v1276 = vsel %vm1070, %v1271, %v1275
      %v1277 = vshrl.u32 %v1037, 16
      %v1279 = vrot.slane %v1277, 4
      %v1280 = vor.u32 %v1279, %v1275
      %v1281 = vrot.slane %v1280, 4
      %v1283 = vshll.u32 %v1060, 16
      %v1285 = vrot.slane %v1283, 5
      %v1286 = vsel %vm1070, %v1281, %v1285
      %v1288 = vshrl.u32 %v1038, 16
      %v1290 = vrot.slane %v1288, 4
      %v1291 = vshll.u32 %v1038, 16
      %v1293 = vrot.slane %v1291, 5
      %v1294 = vor.u32 %v1290, %v1293
      %v1295 = vrot.slane %v1294, 4
      %v1297 = vshll.u32 %v1039, 16
      %v1299 = vrot.slane %v1297, 5
      %v1300 = vsel %vm1070, %v1295, %v1299
      %v1301 = vshrl.u32 %v1039, 16
      %v1303 = vrot.slane %v1301, 4
      %v1304 = vor.u32 %v1303, %v1299
      %v1305 = vrot.slane %v1304, 4
      %v1307 = vshll.u32 %v1061, 16
      %v1309 = vrot.slane %v1307, 5
      %v1310 = vsel %vm1070, %v1305, %v1309
      %v1312 = vshrl.u32 %v1040, 16
      %v1314 = vrot.slane %v1312, 4
      %v1315 = vshll.u32 %v1040, 16
      %v1317 = vrot.slane %v1315, 5
      %v1318 = vor.u32 %v1314, %v1317
      %v1319 = vrot.slane %v1318, 4
      %v1321 = vshll.u32 %v1041, 16
      %v1323 = vrot.slane %v1321, 5
      %v1324 = vsel %vm1070, %v1319, %v1323
      %v1325 = vshrl.u32 %v1041, 16
      %v1327 = vrot.slane %v1325, 4
      %v1328 = vor.u32 %v1327, %v1323
      %v1329 = vrot.slane %v1328, 4
      %v1331 = vshll.u32 %v1062, 16
      %v1333 = vrot.slane %v1331, 5
      %v1334 = vsel %vm1070, %v1329, %v1333
      %v1336 = vshrl.u32 %v1042, 16
      %v1338 = vrot.slane %v1336, 4
      %v1339 = vshll.u32 %v1042, 16
      %v1341 = vrot.slane %v1339, 5
      %v1342 = vor.u32 %v1338, %v1341
      %v1343 = vrot.slane %v1342, 4
      %v1345 = vshll.u32 %v1043, 16
      %v1347 = vrot.slane %v1345, 5
      %v1348 = vsel %vm1070, %v1343, %v1347
      %v1349 = vshrl.u32 %v1043, 16
      %v1351 = vrot.slane %v1349, 4
      %v1352 = vor.u32 %v1351, %v1347
      %v1353 = vrot.slane %v1352, 4
      %v1355 = vshll.u32 %v1063, 16
      %v1357 = vrot.slane %v1355, 5
      %v1358 = vsel %vm1070, %v1353, %v1357
      %v1360 = vshrl.u32 %v1044, 16
      %v1362 = vrot.slane %v1360, 4
      %v1363 = vshll.u32 %v1044, 16
      %v1365 = vrot.slane %v1363, 5
      %v1366 = vor.u32 %v1362, %v1365
      %v1367 = vrot.slane %v1366, 4
      %v1369 = vshll.u32 %v1045, 16
      %v1371 = vrot.slane %v1369, 5
      %v1372 = vsel %vm1070, %v1367, %v1371
      %v1373 = vshrl.u32 %v1045, 16
      %v1375 = vrot.slane %v1373, 4
      %v1376 = vor.u32 %v1375, %v1371
      %v1377 = vrot.slane %v1376, 4
      %v1379 = vshll.u32 %v1064, 16
      %v1381 = vrot.slane %v1379, 5
      %v1382 = vsel %vm1070, %v1377, %v1381
      %v1384 = vshrl.u32 %v1046, 16
      %v1386 = vrot.slane %v1384, 4
      %v1387 = vshll.u32 %v1046, 16
      %v1389 = vrot.slane %v1387, 5
      %v1390 = vor.u32 %v1386, %v1389
      %v1391 = vrot.slane %v1390, 4
      %v1393 = vshll.u32 %v1047, 16
      %v1395 = vrot.slane %v1393, 5
      %v1396 = vsel %vm1070, %v1391, %v1395
      %v1397 = vshrl.u32 %v1047, 16
      %v1399 = vrot.slane %v1397, 4
      %v1400 = vor.u32 %v1399, %v1395
      %v1401 = vrot.slane %v1400, 4
      %v1403 = vshll.u32 %v1065, 16
      %v1405 = vrot.slane %v1403, 5
      %v1406 = vsel %vm1070, %v1401, %v1405
      %v1408 = vshrl.u32 %v1048, 16
      %v1410 = vrot.slane %v1408, 4
      %v1411 = vshll.u32 %v1048, 16
      %v1413 = vrot.slane %v1411, 5
      %v1414 = vor.u32 %v1410, %v1413
      %v1415 = vrot.slane %v1414, 4
      %v1417 = vshll.u32 %v1049, 16
      %v1419 = vrot.slane %v1417, 5
      %v1420 = vsel %vm1070, %v1415, %v1419
      %v1421 = vshrl.u32 %v1049, 16
      %v1423 = vrot.slane %v1421, 4
      %v1424 = vor.u32 %v1423, %v1419
      %v1425 = vrot.slane %v1424, 4
      %v1427 = vshll.u32 %v1066, 16
      %v1429 = vrot.slane %v1427, 5
      %v1430 = vsel %vm1070, %v1425, %v1429
      %v1432 = vshrl.u32 %v1050, 16
      %v1434 = vrot.slane %v1432, 4
      %v1435 = vshll.u32 %v1050, 16
      %v1437 = vrot.slane %v1435, 5
      %v1438 = vor.u32 %v1434, %v1437
      %v1439 = vrot.slane %v1438, 4
      %v1441 = vshll.u32 %v1051, 16
      %v1443 = vrot.slane %v1441, 5
      %v1444 = vsel %vm1070, %v1439, %v1443
      %v1445 = vshrl.u32 %v1051, 16
      %v1447 = vrot.slane %v1445, 4
      %v1448 = vor.u32 %v1447, %v1443
      %v1449 = vrot.slane %v1448, 4
      %v1451 = vshll.u32 %v1067, 16
      %v1453 = vrot.slane %v1451, 5
      %v1454 = vsel %vm1070, %v1449, %v1453
      %v1455 = vunpack.c.l.b16 %v1084
      %v1456 = vunpack.c.l.b16 %v1094
      %v1457 = vunpack.c.l.b16 %v1108
      %v1458 = vunpack.c.l.b16 %v1118
      %v1459 = vunpack.c.l.b16 %v1132
      %v1460 = vunpack.c.l.b16 %v1142
      %v1461 = vunpack.c.l.b16 %v1156
      %v1462 = vunpack.c.l.b16 %v1166
      %v1463 = vunpack.c.l.b16 %v1180
      %v1464 = vunpack.c.l.b16 %v1190
      %v1465 = vunpack.c.l.b16 %v1204
      %v1466 = vunpack.c.l.b16 %v1214
      %v1467 = vunpack.c.l.b16 %v1228
      %v1468 = vunpack.c.l.b16 %v1238
      %v1469 = vunpack.c.l.b16 %v1252
      %v1470 = vunpack.c.l.b16 %v1262
      %v1471 = vunpack.c.l.b16 %v1276
      %v1472 = vunpack.c.l.b16 %v1286
      %v1473 = vunpack.c.l.b16 %v1300
      %v1474 = vunpack.c.l.b16 %v1310
      %v1475 = vunpack.c.l.b16 %v1324
      %v1476 = vunpack.c.l.b16 %v1334
      %v1477 = vunpack.c.l.b16 %v1348
      %v1478 = vunpack.c.l.b16 %v1358
      %v1479 = vunpack.c.l.b16 %v1372
      %v1480 = vunpack.c.l.b16 %v1382
      %v1481 = vunpack.c.l.b16 %v1396
      %v1482 = vunpack.c.l.b16 %v1406
      %v1483 = vunpack.c.l.b16 %v1420
      %v1484 = vunpack.c.l.b16 %v1430
      %v1485 = vunpack.c.l.b16 %v1444
      %v1486 = vunpack.c.l.b16 %v1454
      %v1487 = vpack.c.b16 %v1456, %v1455
      %v1488 = vpack.c.b16 %v1458, %v1457
      %v1489 = vpack.c.b16 %v1460, %v1459
      %v1490 = vpack.c.b16 %v1462, %v1461
      %v1491 = vpack.c.b16 %v1464, %v1463
      %v1492 = vpack.c.b16 %v1466, %v1465
      %v1493 = vpack.c.b16 %v1468, %v1467
      %v1494 = vpack.c.b16 %v1470, %v1469
      %v1495 = vpack.c.b16 %v1472, %v1471
      %v1496 = vpack.c.b16 %v1474, %v1473
      %v1497 = vpack.c.b16 %v1476, %v1475
      %v1498 = vpack.c.b16 %v1478, %v1477
      %v1499 = vpack.c.b16 %v1480, %v1479
      %v1500 = vpack.c.b16 %v1482, %v1481
      %v1501 = vpack.c.b16 %v1484, %v1483
      %v1502 = vpack.c.b16 %v1486, %v1485
      %v1535 = vunpack.c.l.b16 %v885
      %v1536 = vunpack.c.l.b16 %v886
      %v1537 = vunpack.c.l.b16 %v887
      %v1538 = vunpack.c.l.b16 %v888
      %v1539 = vunpack.c.l.b16 %v889
      %v1540 = vunpack.c.l.b16 %v890
      %v1541 = vunpack.c.l.b16 %v891
      %v1542 = vunpack.c.l.b16 %v892
      %v1543 = vunpack.c.l.b16 %v893
      %v1544 = vunpack.c.l.b16 %v894
      %v1545 = vunpack.c.l.b16 %v895
      %v1546 = vunpack.c.l.b16 %v896
      %v1547 = vunpack.c.l.b16 %v897
      %v1548 = vunpack.c.l.b16 %v898
      %v1549 = vunpack.c.l.b16 %v899
      %v1550 = vunpack.c.l.b16 %v900
      %v1551 = vpack.c.b16 %v1536, %v1535
      %v1552 = vpack.c.b16 %v1538, %v1537
      %v1553 = vpack.c.b16 %v1540, %v1539
      %v1554 = vpack.c.b16 %v1542, %v1541
      %v1555 = vpack.c.b16 %v1544, %v1543
      %v1556 = vpack.c.b16 %v1546, %v1545
      %v1557 = vpack.c.b16 %v1548, %v1547
      %v1558 = vpack.c.b16 %v1550, %v1549
      %1567 = vmatprep.subr.bf16.mxu0 0
      %1568 = vmatpush1.bf16.msra.mxu0 %v1551
      %1569 = vmatprep.subr.bf16.mxu0 0
      %1570 = vmatpush1.bf16.msra.mxu0 %v1552
      %1571 = vmatprep.subr.bf16.mxu0 0
      %1572 = vmatpush1.bf16.msra.mxu0 %v1553
      %1573 = vmatprep.subr.bf16.mxu0 0
      %1574 = vmatpush1.bf16.msra.mxu0 %v1554
      %1575 = vmatprep.subr.bf16.mxu0 0
      %1576 = vmatpush1.bf16.msra.mxu0 %v1555
      %1577 = vmatprep.subr.bf16.mxu0 0
      %1578 = vmatpush1.bf16.msra.mxu0 %v1556
      %1579 = vmatprep.subr.bf16.mxu0 0
      %1580 = vmatpush1.bf16.msra.mxu0 %v1557
      %1581 = vmatprep.subr.bf16.mxu0 0
      %1582 = vmatpush1.bf16.msra.mxu0 %v1558
      %1583 = vmatprep.subr.bf16.mxu0 0
      %1584 = vmatpush1.bf16.msra.mxu0 0
      %1585 = vmatprep.subr.bf16.mxu0 0
      %1586 = vmatpush1.bf16.msra.mxu0 0
      %1587 = vmatprep.subr.bf16.mxu0 0
      %1588 = vmatpush1.bf16.msra.mxu0 0
      %1589 = vmatprep.subr.bf16.mxu0 0
      %1590 = vmatpush1.bf16.msra.mxu0 0
      %1591 = vmatprep.subr.bf16.mxu0 0
      %1592 = vmatpush1.bf16.msra.mxu0 0
      %1593 = vmatprep.subr.bf16.mxu0 0
      %1594 = vmatpush1.bf16.msra.mxu0 0
      %1595 = vmatprep.subr.bf16.mxu0 0
      %1596 = vmatpush1.bf16.msra.mxu0 0
      %1597 = vmatprep.subr.bf16.mxu0 0
      %1598 = vmatpush1.bf16.msra.mxu0 0
      %1599 = vmatprep.mubr.bf16.mxu0 0
      %1600 = vmatmul.mubr.bf16.gmra.mrb[0].mxu0 %v1487
      %v1601 = vpop.f32.mrb[0].mxu0
      %v1602 = vadd.f32 0.0, %v1601
      %v1603 = vpop.f32.mrb[0].mxu0
      %v1604 = vpop.f32.mrb[0].mxu0
      %v1605 = vadd.f32 0.0, %v1604
      %v1606 = vpop.f32.mrb[0].mxu0
      %1607 = vmatprep.mubr.bf16.mxu0 0
      %1608 = vmatmul.mubr.bf16.gmra.mrb[0].mxu0 %v1488
      %v1609 = vpop.f32.mrb[0].mxu0
      %v1610 = vadd.f32 0.0, %v1609
      %v1611 = vpop.f32.mrb[0].mxu0
      %v1612 = vpop.f32.mrb[0].mxu0
      %v1613 = vadd.f32 0.0, %v1612
      %v1614 = vpop.f32.mrb[0].mxu0
      %1615 = vmatprep.mubr.bf16.mxu0 0
      %1616 = vmatmul.mubr.bf16.gmra.mrb[0].mxu0 %v1489
      %v1617 = vpop.f32.mrb[0].mxu0
      %v1618 = vadd.f32 0.0, %v1617
      %v1619 = vpop.f32.mrb[0].mxu0
      %v1620 = vpop.f32.mrb[0].mxu0
      %v1621 = vadd.f32 0.0, %v1620
      %v1622 = vpop.f32.mrb[0].mxu0
      %1623 = vmatprep.mubr.bf16.mxu0 0
      %1624 = vmatmul.mubr.bf16.gmra.mrb[0].mxu0 %v1490
      %v1625 = vpop.f32.mrb[0].mxu0
      %v1626 = vadd.f32 0.0, %v1625
      %v1627 = vpop.f32.mrb[0].mxu0
      %v1628 = vpop.f32.mrb[0].mxu0
      %v1629 = vadd.f32 0.0, %v1628
      %v1630 = vpop.f32.mrb[0].mxu0
      %1631 = vmatprep.mubr.bf16.mxu0 0
      %1632 = vmatmul.mubr.bf16.gmra.mrb[0].mxu0 %v1491
      %v1633 = vpop.f32.mrb[0].mxu0
      %v1634 = vadd.f32 0.0, %v1633
      %v1635 = vpop.f32.mrb[0].mxu0
      %v1636 = vpop.f32.mrb[0].mxu0
      %v1637 = vadd.f32 0.0, %v1636
      %v1638 = vpop.f32.mrb[0].mxu0
      %1639 = vmatprep.mubr.bf16.mxu0 0
      %1640 = vmatmul.mubr.bf16.gmra.mrb[0].mxu0 %v1492
      %v1641 = vpop.f32.mrb[0].mxu0
      %v1642 = vadd.f32 0.0, %v1641
      %v1643 = vpop.f32.mrb[0].mxu0
      %v1644 = vpop.f32.mrb[0].mxu0
      %v1645 = vadd.f32 0.0, %v1644
      %v1646 = vpop.f32.mrb[0].mxu0
      %1647 = vmatprep.mubr.bf16.mxu0 0
      %1648 = vmatmul.mubr.bf16.gmra.mrb[0].mxu0 %v1493
      %v1649 = vpop.f32.mrb[0].mxu0
      %v1650 = vadd.f32 0.0, %v1649
      %v1651 = vpop.f32.mrb[0].mxu0
      %v1652 = vpop.f32.mrb[0].mxu0
      %v1653 = vadd.f32 0.0, %v1652
      %v1654 = vpop.f32.mrb[0].mxu0
      %1655 = vmatprep.mubr.bf16.mxu0 0
      %1656 = vmatmul.mubr.bf16.gmra.mrb[0].mxu0 %v1494
      %v1657 = vpop.f32.mrb[0].mxu0
      %v1658 = vadd.f32 0.0, %v1657
      %v1659 = vpop.f32.mrb[0].mxu0
      %v1660 = vpop.f32.mrb[0].mxu0
      %v1661 = vadd.f32 0.0, %v1660
      %v1662 = vpop.f32.mrb[0].mxu0
      %1663 = vmatprep.mubr.bf16.mxu0 0
      %1664 = vmatmul.mubr.bf16.gmra.mrb[0].mxu0 %v1495
      %v1665 = vpop.f32.mrb[0].mxu0
      %v1666 = vadd.f32 0.0, %v1665
      %v1667 = vpop.f32.mrb[0].mxu0
      %v1668 = vpop.f32.mrb[0].mxu0
      %v1669 = vadd.f32 0.0, %v1668
      %v1670 = vpop.f32.mrb[0].mxu0
      %1671 = vmatprep.mubr.bf16.mxu0 0
      %1672 = vmatmul.mubr.bf16.gmra.mrb[0].mxu0 %v1496
      %v1673 = vpop.f32.mrb[0].mxu0
      %v1674 = vadd.f32 0.0, %v1673
      %v1675 = vpop.f32.mrb[0].mxu0
      %v1676 = vpop.f32.mrb[0].mxu0
      %v1677 = vadd.f32 0.0, %v1676
      %v1678 = vpop.f32.mrb[0].mxu0
      %1679 = vmatprep.mubr.bf16.mxu0 0
      %1680 = vmatmul.mubr.bf16.gmra.mrb[0].mxu0 %v1497
      %v1681 = vpop.f32.mrb[0].mxu0
      %v1682 = vadd.f32 0.0, %v1681
      %v1683 = vpop.f32.mrb[0].mxu0
      %v1684 = vpop.f32.mrb[0].mxu0
      %v1685 = vadd.f32 0.0, %v1684
      %v1686 = vpop.f32.mrb[0].mxu0
      %1687 = vmatprep.mubr.bf16.mxu0 0
      %1688 = vmatmul.mubr.bf16.gmra.mrb[0].mxu0 %v1498
      %v1689 = vpop.f32.mrb[0].mxu0
      %v1690 = vadd.f32 0.0, %v1689
      %v1691 = vpop.f32.mrb[0].mxu0
      %v1692 = vpop.f32.mrb[0].mxu0
      %v1693 = vadd.f32 0.0, %v1692
      %v1694 = vpop.f32.mrb[0].mxu0
      %1695 = vmatprep.mubr.bf16.mxu0 0
      %1696 = vmatmul.mubr.bf16.gmra.mrb[0].mxu0 %v1499
      %v1697 = vpop.f32.mrb[0].mxu0
      %v1698 = vadd.f32 0.0, %v1697
      %v1699 = vpop.f32.mrb[0].mxu0
      %v1700 = vpop.f32.mrb[0].mxu0
      %v1701 = vadd.f32 0.0, %v1700
      %v1702 = vpop.f32.mrb[0].mxu0
      %1703 = vmatprep.mubr.bf16.mxu0 0
      %1704 = vmatmul.mubr.bf16.gmra.mrb[0].mxu0 %v1500
      %v1705 = vpop.f32.mrb[0].mxu0
      %v1706 = vadd.f32 0.0, %v1705
      %v1707 = vpop.f32.mrb[0].mxu0
      %v1708 = vpop.f32.mrb[0].mxu0
      %v1709 = vadd.f32 0.0, %v1708
      %v1710 = vpop.f32.mrb[0].mxu0
      %1711 = vmatprep.mubr.bf16.mxu0 0
      %1712 = vmatmul.mubr.bf16.gmra.mrb[0].mxu0 %v1501
      %v1713 = vpop.f32.mrb[0].mxu0
      %v1714 = vadd.f32 0.0, %v1713
      %v1715 = vpop.f32.mrb[0].mxu0
      %v1716 = vpop.f32.mrb[0].mxu0
      %v1717 = vadd.f32 0.0, %v1716
      %v1718 = vpop.f32.mrb[0].mxu0
      %1719 = vmatprep.mubr.bf16.mxu0 0
      %1720 = vmatmul.mubr.bf16.gmra.mrb[0].mxu0 %v1502
      %v1721 = vpop.f32.mrb[0].mxu0
      %v1722 = vadd.f32 0.0, %v1721
      %v1723 = vpop.f32.mrb[0].mxu0
      %v1724 = vpop.f32.mrb[0].mxu0
      %v1725 = vadd.f32 0.0, %v1724
      %v1726 = vpop.f32.mrb[0].mxu0
      %1727 = vdwg.mxu0
      %v1760 = vunpack.c.l.b16 %v1020
      %v1761 = vunpack.c.l.b16 %v1021
      %v1762 = vunpack.c.l.b16 %v1022
      %v1763 = vunpack.c.l.b16 %v1023
      %v1764 = vunpack.c.l.b16 %v1024
      %v1765 = vunpack.c.l.b16 %v1025
      %v1766 = vunpack.c.l.b16 %v1026
      %v1767 = vunpack.c.l.b16 %v1027
      %v1768 = vunpack.c.l.b16 %v1028
      %v1769 = vunpack.c.l.b16 %v1029
      %v1770 = vunpack.c.l.b16 %v1030
      %v1771 = vunpack.c.l.b16 %v1031
      %v1772 = vunpack.c.l.b16 %v1032
      %v1773 = vunpack.c.l.b16 %v1033
      %v1774 = vunpack.c.l.b16 %v1034
      %v1775 = vunpack.c.l.b16 %v1035
      %v1776 = vunpack.c.l.b16 %v1036
      %v1777 = vunpack.c.l.b16 %v1037
      %v1778 = vunpack.c.l.b16 %v1038
      %v1779 = vunpack.c.l.b16 %v1039
      %v1780 = vunpack.c.l.b16 %v1040
      %v1781 = vunpack.c.l.b16 %v1041
      %v1782 = vunpack.c.l.b16 %v1042
      %v1783 = vunpack.c.l.b16 %v1043
      %v1784 = vunpack.c.l.b16 %v1044
      %v1785 = vunpack.c.l.b16 %v1045
      %v1786 = vunpack.c.l.b16 %v1046
      %v1787 = vunpack.c.l.b16 %v1047
      %v1788 = vunpack.c.l.b16 %v1048
      %v1789 = vunpack.c.l.b16 %v1049
      %v1790 = vunpack.c.l.b16 %v1050
      %v1791 = vunpack.c.l.b16 %v1051
      %v1792 = vpack.c.b16 %v1761, %v1760
      %v1793 = vpack.c.b16 %v1763, %v1762
      %v1794 = vpack.c.b16 %v1765, %v1764
      %v1795 = vpack.c.b16 %v1767, %v1766
      %v1796 = vpack.c.b16 %v1769, %v1768
      %v1797 = vpack.c.b16 %v1771, %v1770
      %v1798 = vpack.c.b16 %v1773, %v1772
      %v1799 = vpack.c.b16 %v1775, %v1774
      %v1800 = vpack.c.b16 %v1777, %v1776
      %v1801 = vpack.c.b16 %v1779, %v1778
      %v1802 = vpack.c.b16 %v1781, %v1780
      %v1803 = vpack.c.b16 %v1783, %v1782
      %v1804 = vpack.c.b16 %v1785, %v1784
      %v1805 = vpack.c.b16 %v1787, %v1786
      %v1806 = vpack.c.b16 %v1789, %v1788
      %v1807 = vpack.c.b16 %v1791, %v1790
      %v1840 = vunpack.c.l.b16 %v868
      %v1841 = vunpack.c.l.b16 %v869
      %v1842 = vunpack.c.l.b16 %v870
      %v1843 = vunpack.c.l.b16 %v871
      %v1844 = vunpack.c.l.b16 %v872
      %v1845 = vunpack.c.l.b16 %v873
      %v1846 = vunpack.c.l.b16 %v874
      %v1847 = vunpack.c.l.b16 %v875
      %v1848 = vunpack.c.l.b16 %v876
      %v1849 = vunpack.c.l.b16 %v877
      %v1850 = vunpack.c.l.b16 %v878
      %v1851 = vunpack.c.l.b16 %v879
      %v1852 = vunpack.c.l.b16 %v880
      %v1853 = vunpack.c.l.b16 %v881
      %v1854 = vunpack.c.l.b16 %v882
      %v1855 = vunpack.c.l.b16 %v883
      %v1856 = vpack.c.b16 %v1841, %v1840
      %v1857 = vpack.c.b16 %v1843, %v1842
      %v1858 = vpack.c.b16 %v1845, %v1844
      %v1859 = vpack.c.b16 %v1847, %v1846
      %v1860 = vpack.c.b16 %v1849, %v1848
      %v1861 = vpack.c.b16 %v1851, %v1850
      %v1862 = vpack.c.b16 %v1853, %v1852
      %v1863 = vpack.c.b16 %v1855, %v1854
      %1872 = vmatprep.subr.bf16.mxu0 0
      %1873 = vmatpush1.bf16.msra.mxu0 %v1856
      %1874 = vmatprep.subr.bf16.mxu0 0
      %1875 = vmatpush1.bf16.msra.mxu0 %v1857
      %1876 = vmatprep.subr.bf16.mxu0 0
      %1877 = vmatpush1.bf16.msra.mxu0 %v1858
      %1878 = vmatprep.subr.bf16.mxu0 0
      %1879 = vmatpush1.bf16.msra.mxu0 %v1859
      %1880 = vmatprep.subr.bf16.mxu0 0
      %1881 = vmatpush1.bf16.msra.mxu0 %v1860
      %1882 = vmatprep.subr.bf16.mxu0 0
      %1883 = vmatpush1.bf16.msra.mxu0 %v1861
      %1884 = vmatprep.subr.bf16.mxu0 0
      %1885 = vmatpush1.bf16.msra.mxu0 %v1862
      %1886 = vmatprep.subr.bf16.mxu0 0
      %1887 = vmatpush1.bf16.msra.mxu0 %v1863
      %1888 = vmatprep.subr.bf16.mxu0 0
      %1889 = vmatpush1.bf16.msra.mxu0 0
      %1890 = vmatprep.subr.bf16.mxu0 0
      %1891 = vmatpush1.bf16.msra.mxu0 0
      %1892 = vmatprep.subr.bf16.mxu0 0
      %1893 = vmatpush1.bf16.msra.mxu0 0
      %1894 = vmatprep.subr.bf16.mxu0 0
      %1895 = vmatpush1.bf16.msra.mxu0 0
      %1896 = vmatprep.subr.bf16.mxu0 0
      %1897 = vmatpush1.bf16.msra.mxu0 0
      %1898 = vmatprep.subr.bf16.mxu0 0
      %1899 = vmatpush1.bf16.msra.mxu0 0
      %1900 = vmatprep.subr.bf16.mxu0 0
      %1901 = vmatpush1.bf16.msra.mxu0 0
      %1902 = vmatprep.subr.bf16.mxu0 0
      %1903 = vmatpush1.bf16.msra.mxu0 0
      %1904 = vmatprep.mubr.bf16.mxu0 0
      %1905 = vmatmul.mubr.bf16.gmra.mrb[0].mxu0 %v1792
      %v1906 = vpop.f32.mrb[0].mxu0
      %v1907 = vadd.f32 %v1602, %v1906
      %v1908 = vpop.f32.mrb[0].mxu0
      %v1909 = vpop.f32.mrb[0].mxu0
      %v1910 = vadd.f32 %v1605, %v1909
      %v1911 = vpop.f32.mrb[0].mxu0
      %1912 = vmatprep.mubr.bf16.mxu0 0
      %1913 = vmatmul.mubr.bf16.gmra.mrb[0].mxu0 %v1793
      %v1914 = vpop.f32.mrb[0].mxu0
      %v1915 = vadd.f32 %v1610, %v1914
      %v1916 = vpop.f32.mrb[0].mxu0
      %v1917 = vpop.f32.mrb[0].mxu0
      %v1918 = vadd.f32 %v1613, %v1917
      %v1919 = vpop.f32.mrb[0].mxu0
      %1920 = vmatprep.mubr.bf16.mxu0 0
      %1921 = vmatmul.mubr.bf16.gmra.mrb[0].mxu0 %v1794
      %v1922 = vpop.f32.mrb[0].mxu0
      %v1923 = vadd.f32 %v1618, %v1922
      %v1924 = vpop.f32.mrb[0].mxu0
      %v1925 = vpop.f32.mrb[0].mxu0
      %v1926 = vadd.f32 %v1621, %v1925
      %v1927 = vpop.f32.mrb[0].mxu0
      %1928 = vmatprep.mubr.bf16.mxu0 0
      %1929 = vmatmul.mubr.bf16.gmra.mrb[0].mxu0 %v1795
      %v1930 = vpop.f32.mrb[0].mxu0
      %v1931 = vadd.f32 %v1626, %v1930
      %v1932 = vpop.f32.mrb[0].mxu0
      %v1933 = vpop.f32.mrb[0].mxu0
      %v1934 = vadd.f32 %v1629, %v1933
      %v1935 = vpop.f32.mrb[0].mxu0
      %1936 = vmatprep.mubr.bf16.mxu0 0
      %1937 = vmatmul.mubr.bf16.gmra.mrb[0].mxu0 %v1796
      %v1938 = vpop.f32.mrb[0].mxu0
      %v1939 = vadd.f32 %v1634, %v1938
      %v1940 = vpop.f32.mrb[0].mxu0
      %v1941 = vpop.f32.mrb[0].mxu0
      %v1942 = vadd.f32 %v1637, %v1941
      %v1943 = vpop.f32.mrb[0].mxu0
      %1944 = vmatprep.mubr.bf16.mxu0 0
      %1945 = vmatmul.mubr.bf16.gmra.mrb[0].mxu0 %v1797
      %v1946 = vpop.f32.mrb[0].mxu0
      %v1947 = vadd.f32 %v1642, %v1946
      %v1948 = vpop.f32.mrb[0].mxu0
      %v1949 = vpop.f32.mrb[0].mxu0
      %v1950 = vadd.f32 %v1645, %v1949
      %v1951 = vpop.f32.mrb[0].mxu0
      %1952 = vmatprep.mubr.bf16.mxu0 0
      %1953 = vmatmul.mubr.bf16.gmra.mrb[0].mxu0 %v1798
      %v1954 = vpop.f32.mrb[0].mxu0
      %v1955 = vadd.f32 %v1650, %v1954
      %v1956 = vpop.f32.mrb[0].mxu0
      %v1957 = vpop.f32.mrb[0].mxu0
      %v1958 = vadd.f32 %v1653, %v1957
      %v1959 = vpop.f32.mrb[0].mxu0
      %1960 = vmatprep.mubr.bf16.mxu0 0
      %1961 = vmatmul.mubr.bf16.gmra.mrb[0].mxu0 %v1799
      %v1962 = vpop.f32.mrb[0].mxu0
      %v1963 = vadd.f32 %v1658, %v1962
      %v1964 = vpop.f32.mrb[0].mxu0
      %v1965 = vpop.f32.mrb[0].mxu0
      %v1966 = vadd.f32 %v1661, %v1965
      %v1967 = vpop.f32.mrb[0].mxu0
      %1968 = vmatprep.mubr.bf16.mxu0 0
      %1969 = vmatmul.mubr.bf16.gmra.mrb[0].mxu0 %v1800
      %v1970 = vpop.f32.mrb[0].mxu0
      %v1971 = vadd.f32 %v1666, %v1970
      %v1972 = vpop.f32.mrb[0].mxu0
      %v1973 = vpop.f32.mrb[0].mxu0
      %v1974 = vadd.f32 %v1669, %v1973
      %v1975 = vpop.f32.mrb[0].mxu0
      %1976 = vmatprep.mubr.bf16.mxu0 0
      %1977 = vmatmul.mubr.bf16.gmra.mrb[0].mxu0 %v1801
      %v1978 = vpop.f32.mrb[0].mxu0
      %v1979 = vadd.f32 %v1674, %v1978
      %v1980 = vpop.f32.mrb[0].mxu0
      %v1981 = vpop.f32.mrb[0].mxu0
      %v1982 = vadd.f32 %v1677, %v1981
      %v1983 = vpop.f32.mrb[0].mxu0
      %1984 = vmatprep.mubr.bf16.mxu0 0
      %1985 = vmatmul.mubr.bf16.gmra.mrb[0].mxu0 %v1802
      %v1986 = vpop.f32.mrb[0].mxu0
      %v1987 = vadd.f32 %v1682, %v1986
      %v1988 = vpop.f32.mrb[0].mxu0
      %v1989 = vpop.f32.mrb[0].mxu0
      %v1990 = vadd.f32 %v1685, %v1989
      %v1991 = vpop.f32.mrb[0].mxu0
      %1992 = vmatprep.mubr.bf16.mxu0 0
      %1993 = vmatmul.mubr.bf16.gmra.mrb[0].mxu0 %v1803
      %v1994 = vpop.f32.mrb[0].mxu0
      %v1995 = vadd.f32 %v1690, %v1994
      %v1996 = vpop.f32.mrb[0].mxu0
      %v1997 = vpop.f32.mrb[0].mxu0
      %v1998 = vadd.f32 %v1693, %v1997
      %v1999 = vpop.f32.mrb[0].mxu0
      %2000 = vmatprep.mubr.bf16.mxu0 0
      %2001 = vmatmul.mubr.bf16.gmra.mrb[0].mxu0 %v1804
      %v2002 = vpop.f32.mrb[0].mxu0
      %v2003 = vadd.f32 %v1698, %v2002
      %v2004 = vpop.f32.mrb[0].mxu0
      %v2005 = vpop.f32.mrb[0].mxu0
      %v2006 = vadd.f32 %v1701, %v2005
      %v2007 = vpop.f32.mrb[0].mxu0
      %2008 = vmatprep.mubr.bf16.mxu0 0
      %2009 = vmatmul.mubr.bf16.gmra.mrb[0].mxu0 %v1805
      %v2010 = vpop.f32.mrb[0].mxu0
      %v2011 = vadd.f32 %v1706, %v2010
      %v2012 = vpop.f32.mrb[0].mxu0
      %v2013 = vpop.f32.mrb[0].mxu0
      %v2014 = vadd.f32 %v1709, %v2013
      %v2015 = vpop.f32.mrb[0].mxu0
      %2016 = vmatprep.mubr.bf16.mxu0 0
      %2017 = vmatmul.mubr.bf16.gmra.mrb[0].mxu0 %v1806
      %v2018 = vpop.f32.mrb[0].mxu0
      %v2019 = vadd.f32 %v1714, %v2018
      %v2020 = vpop.f32.mrb[0].mxu0
      %v2021 = vpop.f32.mrb[0].mxu0
      %v2022 = vadd.f32 %v1717, %v2021
      %v2023 = vpop.f32.mrb[0].mxu0
      %2024 = vmatprep.mubr.bf16.mxu0 0
      %2025 = vmatmul.mubr.bf16.gmra.mrb[0].mxu0 %v1807
      %v2026 = vpop.f32.mrb[0].mxu0
      %v2027 = vadd.f32 %v1722, %v2026
      %v2028 = vpop.f32.mrb[0].mxu0
      %v2029 = vpop.f32.mrb[0].mxu0
      %v2030 = vadd.f32 %v1725, %v2029
      %v2031 = vpop.f32.mrb[0].mxu0
      %2032 = vdwg.mxu0
      %v2033 = vld [vmem:[#allocation2] sm:$0xe]
      %v2034 = vld [vmem:[#allocation2 + $0xc] sm:$0xe]
      %v2035 = vld [vmem:[#allocation2 + $0x18] sm:$0xe]
      %v2036 = vld [vmem:[#allocation2 + $0x24] sm:$0xe]
      %v2037 = vld [vmem:[#allocation2 + $0x30] sm:$0xe]
      %v2038 = vld [vmem:[#allocation2 + $0x3c] sm:$0xe]
      %v2039 = vld [vmem:[#allocation2 + $0x48] sm:$0xe]
      %v2040 = vld [vmem:[#allocation2 + $0x54] sm:$0xe]
      %v2041 = vld [vmem:[#allocation2 + $0x60] sm:$0xe]
      %v2042 = vld [vmem:[#allocation2 + $0x6c] sm:$0xe]
      %v2043 = vld [vmem:[#allocation2 + $0x78] sm:$0xe]
      %v2044 = vld [vmem:[#allocation2 + $0x84] sm:$0xe]
      %v2045 = vld [vmem:[#allocation2 + $0x90] sm:$0xe]
      %v2046 = vld [vmem:[#allocation2 + $0x9c] sm:$0xe]
      %v2047 = vld [vmem:[#allocation2 + $0xa8] sm:$0xe]
      %v2048 = vld [vmem:[#allocation2 + $0xb4] sm:$0xe]
      %vm2081 = vcmask 1042432
      %vm2082 = vcmask 1046532
      %vm2083 = vmor %vm2081, %vm2082
      %v2084 = vrot.slane %v2033, 5
      %v2085 = vrot.slane %v2084, 4
      %v2086 = vrot.slane %v1021, 5
      %v2087 = vsel %vm2083, %v2085, %v2086
      %v2088 = vrot.slane %v2086, 4
      %v2089 = vrot.slane %v1052, 5
      %v2090 = vsel %vm2083, %v2088, %v2089
      %v2091 = vrot.slane %v2034, 5
      %v2092 = vrot.slane %v2091, 4
      %v2093 = vrot.slane %v1023, 5
      %v2094 = vsel %vm2083, %v2092, %v2093
      %v2095 = vrot.slane %v2093, 4
      %v2096 = vrot.slane %v1053, 5
      %v2097 = vsel %vm2083, %v2095, %v2096
      %v2098 = vrot.slane %v2035, 5
      %v2099 = vrot.slane %v2098, 4
      %v2100 = vrot.slane %v1025, 5
      %v2101 = vsel %vm2083, %v2099, %v2100
      %v2102 = vrot.slane %v2100, 4
      %v2103 = vrot.slane %v1054, 5
      %v2104 = vsel %vm2083, %v2102, %v2103
      %v2105 = vrot.slane %v2036, 5
      %v2106 = vrot.slane %v2105, 4
      %v2107 = vrot.slane %v1027, 5
      %v2108 = vsel %vm2083, %v2106, %v2107
      %v2109 = vrot.slane %v2107, 4
      %v2110 = vrot.slane %v1055, 5
      %v2111 = vsel %vm2083, %v2109, %v2110
      %v2112 = vrot.slane %v2037, 5
      %v2113 = vrot.slane %v2112, 4
      %v2114 = vrot.slane %v1029, 5
      %v2115 = vsel %vm2083, %v2113, %v2114
      %v2116 = vrot.slane %v2114, 4
      %v2117 = vrot.slane %v1056, 5
      %v2118 = vsel %vm2083, %v2116, %v2117
      %v2119 = vrot.slane %v2038, 5
      %v2120 = vrot.slane %v2119, 4
      %v2121 = vrot.slane %v1031, 5
      %v2122 = vsel %vm2083, %v2120, %v2121
      %v2123 = vrot.slane %v2121, 4
      %v2124 = vrot.slane %v1057, 5
      %v2125 = vsel %vm2083, %v2123, %v2124
      %v2126 = vrot.slane %v2039, 5
      %v2127 = vrot.slane %v2126, 4
      %v2128 = vrot.slane %v1033, 5
      %v2129 = vsel %vm2083, %v2127, %v2128
      %v2130 = vrot.slane %v2128, 4
      %v2131 = vrot.slane %v1058, 5
      %v2132 = vsel %vm2083, %v2130, %v2131
      %v2133 = vrot.slane %v2040, 5
      %v2134 = vrot.slane %v2133, 4
      %v2135 = vrot.slane %v1035, 5
      %v2136 = vsel %vm2083, %v2134, %v2135
      %v2137 = vrot.slane %v2135, 4
      %v2138 = vrot.slane %v1059, 5
      %v2139 = vsel %vm2083, %v2137, %v2138
      %v2140 = vrot.slane %v2041, 5
      %v2141 = vrot.slane %v2140, 4
      %v2142 = vrot.slane %v1037, 5
      %v2143 = vsel %vm2083, %v2141, %v2142
      %v2144 = vrot.slane %v2142, 4
      %v2145 = vrot.slane %v1060, 5
      %v2146 = vsel %vm2083, %v2144, %v2145
      %v2147 = vrot.slane %v2042, 5
      %v2148 = vrot.slane %v2147, 4
      %v2149 = vrot.slane %v1039, 5
      %v2150 = vsel %vm2083, %v2148, %v2149
      %v2151 = vrot.slane %v2149, 4
      %v2152 = vrot.slane %v1061, 5
      %v2153 = vsel %vm2083, %v2151, %v2152
      %v2154 = vrot.slane %v2043, 5
      %v2155 = vrot.slane %v2154, 4
      %v2156 = vrot.slane %v1041, 5
      %v2157 = vsel %vm2083, %v2155, %v2156
      %v2158 = vrot.slane %v2156, 4
      %v2159 = vrot.slane %v1062, 5
      %v2160 = vsel %vm2083, %v2158, %v2159
      %v2161 = vrot.slane %v2044, 5
      %v2162 = vrot.slane %v2161, 4
      %v2163 = vrot.slane %v1043, 5
      %v2164 = vsel %vm2083, %v2162, %v2163
      %v2165 = vrot.slane %v2163, 4
      %v2166 = vrot.slane %v1063, 5
      %v2167 = vsel %vm2083, %v2165, %v2166
      %v2168 = vrot.slane %v2045, 5
      %v2169 = vrot.slane %v2168, 4
      %v2170 = vrot.slane %v1045, 5
      %v2171 = vsel %vm2083, %v2169, %v2170
      %v2172 = vrot.slane %v2170, 4
      %v2173 = vrot.slane %v1064, 5
      %v2174 = vsel %vm2083, %v2172, %v2173
      %v2175 = vrot.slane %v2046, 5
      %v2176 = vrot.slane %v2175, 4
      %v2177 = vrot.slane %v1047, 5
      %v2178 = vsel %vm2083, %v2176, %v2177
      %v2179 = vrot.slane %v2177, 4
      %v2180 = vrot.slane %v1065, 5
      %v2181 = vsel %vm2083, %v2179, %v2180
      %v2182 = vrot.slane %v2047, 5
      %v2183 = vrot.slane %v2182, 4
      %v2184 = vrot.slane %v1049, 5
      %v2185 = vsel %vm2083, %v2183, %v2184
      %v2186 = vrot.slane %v2184, 4
      %v2187 = vrot.slane %v1066, 5
      %v2188 = vsel %vm2083, %v2186, %v2187
      %v2189 = vrot.slane %v2048, 5
      %v2190 = vrot.slane %v2189, 4
      %v2191 = vrot.slane %v1051, 5
      %v2192 = vsel %vm2083, %v2190, %v2191
      %v2193 = vrot.slane %v2191, 4
      %v2194 = vrot.slane %v1067, 5
      %v2195 = vsel %vm2083, %v2193, %v2194
      %v2196 = vunpack.c.l.b16 %v2087
      %v2197 = vunpack.c.l.b16 %v2090
      %v2198 = vunpack.c.l.b16 %v2094
      %v2199 = vunpack.c.l.b16 %v2097
      %v2200 = vunpack.c.l.b16 %v2101
      %v2201 = vunpack.c.l.b16 %v2104
      %v2202 = vunpack.c.l.b16 %v2108
      %v2203 = vunpack.c.l.b16 %v2111
      %v2204 = vunpack.c.l.b16 %v2115
      %v2205 = vunpack.c.l.b16 %v2118
      %v2206 = vunpack.c.l.b16 %v2122
      %v2207 = vunpack.c.l.b16 %v2125
      %v2208 = vunpack.c.l.b16 %v2129
      %v2209 = vunpack.c.l.b16 %v2132
      %v2210 = vunpack.c.l.b16 %v2136
      %v2211 = vunpack.c.l.b16 %v2139
      %v2212 = vunpack.c.l.b16 %v2143
      %v2213 = vunpack.c.l.b16 %v2146
      %v2214 = vunpack.c.l.b16 %v2150
      %v2215 = vunpack.c.l.b16 %v2153
      %v2216 = vunpack.c.l.b16 %v2157
      %v2217 = vunpack.c.l.b16 %v2160
      %v2218 = vunpack.c.l.b16 %v2164
      %v2219 = vunpack.c.l.b16 %v2167
      %v2220 = vunpack.c.l.b16 %v2171
      %v2221 = vunpack.c.l.b16 %v2174
      %v2222 = vunpack.c.l.b16 %v2178
      %v2223 = vunpack.c.l.b16 %v2181
      %v2224 = vunpack.c.l.b16 %v2185
      %v2225 = vunpack.c.l.b16 %v2188
      %v2226 = vunpack.c.l.b16 %v2192
      %v2227 = vunpack.c.l.b16 %v2195
      %v2228 = vpack.c.b16 %v2197, %v2196
      %v2229 = vpack.c.b16 %v2199, %v2198
      %v2230 = vpack.c.b16 %v2201, %v2200
      %v2231 = vpack.c.b16 %v2203, %v2202
      %v2232 = vpack.c.b16 %v2205, %v2204
      %v2233 = vpack.c.b16 %v2207, %v2206
      %v2234 = vpack.c.b16 %v2209, %v2208
      %v2235 = vpack.c.b16 %v2211, %v2210
      %v2236 = vpack.c.b16 %v2213, %v2212
      %v2237 = vpack.c.b16 %v2215, %v2214
      %v2238 = vpack.c.b16 %v2217, %v2216
      %v2239 = vpack.c.b16 %v2219, %v2218
      %v2240 = vpack.c.b16 %v2221, %v2220
      %v2241 = vpack.c.b16 %v2223, %v2222
      %v2242 = vpack.c.b16 %v2225, %v2224
      %v2243 = vpack.c.b16 %v2227, %v2226
      %v2276 = vunpack.c.l.b16 %v902
      %v2277 = vunpack.c.l.b16 %v903
      %v2278 = vunpack.c.l.b16 %v904
      %v2279 = vunpack.c.l.b16 %v905
      %v2280 = vunpack.c.l.b16 %v906
      %v2281 = vunpack.c.l.b16 %v907
      %v2282 = vunpack.c.l.b16 %v908
      %v2283 = vunpack.c.l.b16 %v909
      %v2284 = vunpack.c.l.b16 %v910
      %v2285 = vunpack.c.l.b16 %v911
      %v2286 = vunpack.c.l.b16 %v912
      %v2287 = vunpack.c.l.b16 %v913
      %v2288 = vunpack.c.l.b16 %v914
      %v2289 = vunpack.c.l.b16 %v915
      %v2290 = vunpack.c.l.b16 %v916
      %v2291 = vunpack.c.l.b16 %v917
      %v2292 = vpack.c.b16 %v2277, %v2276
      %v2293 = vpack.c.b16 %v2279, %v2278
      %v2294 = vpack.c.b16 %v2281, %v2280
      %v2295 = vpack.c.b16 %v2283, %v2282
      %v2296 = vpack.c.b16 %v2285, %v2284
      %v2297 = vpack.c.b16 %v2287, %v2286
      %v2298 = vpack.c.b16 %v2289, %v2288
      %v2299 = vpack.c.b16 %v2291, %v2290
      %2308 = vmatprep.subr.bf16.mxu0 0
      %2309 = vmatpush1.bf16.msra.mxu0 %v2292
      %2310 = vmatprep.subr.bf16.mxu0 0
      %2311 = vmatpush1.bf16.msra.mxu0 %v2293
      %2312 = vmatprep.subr.bf16.mxu0 0
      %2313 = vmatpush1.bf16.msra.mxu0 %v2294
      %2314 = vmatprep.subr.bf16.mxu0 0
      %2315 = vmatpush1.bf16.msra.mxu0 %v2295
      %2316 = vmatprep.subr.bf16.mxu0 0
      %2317 = vmatpush1.bf16.msra.mxu0 %v2296
      %2318 = vmatprep.subr.bf16.mxu0 0
      %2319 = vmatpush1.bf16.msra.mxu0 %v2297
      %2320 = vmatprep.subr.bf16.mxu0 0
      %2321 = vmatpush1.bf16.msra.mxu0 %v2298
      %2322 = vmatprep.subr.bf16.mxu0 0
      %2323 = vmatpush1.bf16.msra.mxu0 %v2299
      %2324 = vmatprep.subr.bf16.mxu0 0
      %2325 = vmatpush1.bf16.msra.mxu0 0
      %2326 = vmatprep.subr.bf16.mxu0 0
      %2327 = vmatpush1.bf16.msra.mxu0 0
      %2328 = vmatprep.subr.bf16.mxu0 0
      %2329 = vmatpush1.bf16.msra.mxu0 0
      %2330 = vmatprep.subr.bf16.mxu0 0
      %2331 = vmatpush1.bf16.msra.mxu0 0
      %2332 = vmatprep.subr.bf16.mxu0 0
      %2333 = vmatpush1.bf16.msra.mxu0 0
      %2334 = vmatprep.subr.bf16.mxu0 0
      %2335 = vmatpush1.bf16.msra.mxu0 0
      %2336 = vmatprep.subr.bf16.mxu0 0
      %2337 = vmatpush1.bf16.msra.mxu0 0
      %2338 = vmatprep.subr.bf16.mxu0 0
      %2339 = vmatpush1.bf16.msra.mxu0 0
      %2340 = vmatprep.mubr.bf16.mxu0 0
      %2341 = vmatmul.mubr.bf16.gmra.mrb[0].mxu0 %v2228
      %v2342 = vpop.f32.mrb[0].mxu0
      %v2343 = vadd.f32 0.0, %v2342
      %v2344 = vpop.f32.mrb[0].mxu0
      %v2345 = vpop.f32.mrb[0].mxu0
      %v2346 = vadd.f32 0.0, %v2345
      %v2347 = vpop.f32.mrb[0].mxu0
      %2348 = vmatprep.mubr.bf16.mxu0 0
      %2349 = vmatmul.mubr.bf16.gmra.mrb[0].mxu0 %v2229
      %v2350 = vpop.f32.mrb[0].mxu0
      %v2351 = vadd.f32 0.0, %v2350
      %v2352 = vpop.f32.mrb[0].mxu0
      %v2353 = vpop.f32.mrb[0].mxu0
      %v2354 = vadd.f32 0.0, %v2353
      %v2355 = vpop.f32.mrb[0].mxu0
      %2356 = vmatprep.mubr.bf16.mxu0 0
      %2357 = vmatmul.mubr.bf16.gmra.mrb[0].mxu0 %v2230
      %v2358 = vpop.f32.mrb[0].mxu0
      %v2359 = vadd.f32 0.0, %v2358
      %v2360 = vpop.f32.mrb[0].mxu0
      %v2361 = vpop.f32.mrb[0].mxu0
      %v2362 = vadd.f32 0.0, %v2361
      %v2363 = vpop.f32.mrb[0].mxu0
      %2364 = vmatprep.mubr.bf16.mxu0 0
      %2365 = vmatmul.mubr.bf16.gmra.mrb[0].mxu0 %v2231
      %v2366 = vpop.f32.mrb[0].mxu0
      %v2367 = vadd.f32 0.0, %v2366
      %v2368 = vpop.f32.mrb[0].mxu0
      %v2369 = vpop.f32.mrb[0].mxu0
      %v2370 = vadd.f32 0.0, %v2369
      %v2371 = vpop.f32.mrb[0].mxu0
      %2372 = vmatprep.mubr.bf16.mxu0 0
      %2373 = vmatmul.mubr.bf16.gmra.mrb[0].mxu0 %v2232
      %v2374 = vpop.f32.mrb[0].mxu0
      %v2375 = vadd.f32 0.0, %v2374
      %v2376 = vpop.f32.mrb[0].mxu0
      %v2377 = vpop.f32.mrb[0].mxu0
      %v2378 = vadd.f32 0.0, %v2377
      %v2379 = vpop.f32.mrb[0].mxu0
      %2380 = vmatprep.mubr.bf16.mxu0 0
      %2381 = vmatmul.mubr.bf16.gmra.mrb[0].mxu0 %v2233
      %v2382 = vpop.f32.mrb[0].mxu0
      %v2383 = vadd.f32 0.0, %v2382
      %v2384 = vpop.f32.mrb[0].mxu0
      %v2385 = vpop.f32.mrb[0].mxu0
      %v2386 = vadd.f32 0.0, %v2385
      %v2387 = vpop.f32.mrb[0].mxu0
      %2388 = vmatprep.mubr.bf16.mxu0 0
      %2389 = vmatmul.mubr.bf16.gmra.mrb[0].mxu0 %v2234
      %v2390 = vpop.f32.mrb[0].mxu0
      %v2391 = vadd.f32 0.0, %v2390
      %v2392 = vpop.f32.mrb[0].mxu0
      %v2393 = vpop.f32.mrb[0].mxu0
      %v2394 = vadd.f32 0.0, %v2393
      %v2395 = vpop.f32.mrb[0].mxu0
      %2396 = vmatprep.mubr.bf16.mxu0 0
      %2397 = vmatmul.mubr.bf16.gmra.mrb[0].mxu0 %v2235
      %v2398 = vpop.f32.mrb[0].mxu0
      %v2399 = vadd.f32 0.0, %v2398
      %v2400 = vpop.f32.mrb[0].mxu0
      %v2401 = vpop.f32.mrb[0].mxu0
      %v2402 = vadd.f32 0.0, %v2401
      %v2403 = vpop.f32.mrb[0].mxu0
      %2404 = vmatprep.mubr.bf16.mxu0 0
      %2405 = vmatmul.mubr.bf16.gmra.mrb[0].mxu0 %v2236
      %v2406 = vpop.f32.mrb[0].mxu0
      %v2407 = vadd.f32 0.0, %v2406
      %v2408 = vpop.f32.mrb[0].mxu0
      %v2409 = vpop.f32.mrb[0].mxu0
      %v2410 = vadd.f32 0.0, %v2409
      %v2411 = vpop.f32.mrb[0].mxu0
      %2412 = vmatprep.mubr.bf16.mxu0 0
      %2413 = vmatmul.mubr.bf16.gmra.mrb[0].mxu0 %v2237
      %v2414 = vpop.f32.mrb[0].mxu0
      %v2415 = vadd.f32 0.0, %v2414
      %v2416 = vpop.f32.mrb[0].mxu0
      %v2417 = vpop.f32.mrb[0].mxu0
      %v2418 = vadd.f32 0.0, %v2417
      %v2419 = vpop.f32.mrb[0].mxu0
      %2420 = vmatprep.mubr.bf16.mxu0 0
      %2421 = vmatmul.mubr.bf16.gmra.mrb[0].mxu0 %v2238
      %v2422 = vpop.f32.mrb[0].mxu0
      %v2423 = vadd.f32 0.0, %v2422
      %v2424 = vpop.f32.mrb[0].mxu0
      %v2425 = vpop.f32.mrb[0].mxu0
      %v2426 = vadd.f32 0.0, %v2425
      %v2427 = vpop.f32.mrb[0].mxu0
      %2428 = vmatprep.mubr.bf16.mxu0 0
      %2429 = vmatmul.mubr.bf16.gmra.mrb[0].mxu0 %v2239
      %v2430 = vpop.f32.mrb[0].mxu0
      %v2431 = vadd.f32 0.0, %v2430
      %v2432 = vpop.f32.mrb[0].mxu0
      %v2433 = vpop.f32.mrb[0].mxu0
      %v2434 = vadd.f32 0.0, %v2433
      %v2435 = vpop.f32.mrb[0].mxu0
      %2436 = vmatprep.mubr.bf16.mxu0 0
      %2437 = vmatmul.mubr.bf16.gmra.mrb[0].mxu0 %v2240
      %v2438 = vpop.f32.mrb[0].mxu0
      %v2439 = vadd.f32 0.0, %v2438
      %v2440 = vpop.f32.mrb[0].mxu0
      %v2441 = vpop.f32.mrb[0].mxu0
      %v2442 = vadd.f32 0.0, %v2441
      %v2443 = vpop.f32.mrb[0].mxu0
      %2444 = vmatprep.mubr.bf16.mxu0 0
      %2445 = vmatmul.mubr.bf16.gmra.mrb[0].mxu0 %v2241
      %v2446 = vpop.f32.mrb[0].mxu0
      %v2447 = vadd.f32 0.0, %v2446
      %v2448 = vpop.f32.mrb[0].mxu0
      %v2449 = vpop.f32.mrb[0].mxu0
      %v2450 = vadd.f32 0.0, %v2449
      %v2451 = vpop.f32.mrb[0].mxu0
      %2452 = vmatprep.mubr.bf16.mxu0 0
      %2453 = vmatmul.mubr.bf16.gmra.mrb[0].mxu0 %v2242
      %v2454 = vpop.f32.mrb[0].mxu0
      %v2455 = vadd.f32 0.0, %v2454
      %v2456 = vpop.f32.mrb[0].mxu0
      %v2457 = vpop.f32.mrb[0].mxu0
      %v2458 = vadd.f32 0.0, %v2457
      %v2459 = vpop.f32.mrb[0].mxu0
      %2460 = vmatprep.mubr.bf16.mxu0 0
      %2461 = vmatmul.mubr.bf16.gmra.mrb[0].mxu0 %v2243
      %v2462 = vpop.f32.mrb[0].mxu0
      %v2463 = vadd.f32 0.0, %v2462
      %v2464 = vpop.f32.mrb[0].mxu0
      %v2465 = vpop.f32.mrb[0].mxu0
      %v2466 = vadd.f32 0.0, %v2465
      %v2467 = vpop.f32.mrb[0].mxu0
      %2468 = vdwg.mxu0
      %v2469 = vadd.f32 %v1907, %v2343
      %v2470 = vadd.f32 %v1910, %v2346
      %v2471 = vadd.f32 %v1915, %v2351
      %v2472 = vadd.f32 %v1918, %v2354
      %v2473 = vadd.f32 %v1923, %v2359
      %v2474 = vadd.f32 %v1926, %v2362
      %v2475 = vadd.f32 %v1931, %v2367
      %v2476 = vadd.f32 %v1934, %v2370
      %v2477 = vadd.f32 %v1939, %v2375
      %v2478 = vadd.f32 %v1942, %v2378
      %v2479 = vadd.f32 %v1947, %v2383
      %v2480 = vadd.f32 %v1950, %v2386
      %v2481 = vadd.f32 %v1955, %v2391
      %v2482 = vadd.f32 %v1958, %v2394
      %v2483 = vadd.f32 %v1963, %v2399
      %v2484 = vadd.f32 %v1966, %v2402
      %v2485 = vadd.f32 %v1971, %v2407
      %v2486 = vadd.f32 %v1974, %v2410
      %v2487 = vadd.f32 %v1979, %v2415
      %v2488 = vadd.f32 %v1982, %v2418
      %v2489 = vadd.f32 %v1987, %v2423
      %v2490 = vadd.f32 %v1990, %v2426
      %v2491 = vadd.f32 %v1995, %v2431
      %v2492 = vadd.f32 %v1998, %v2434
      %v2493 = vadd.f32 %v2003, %v2439
      %v2494 = vadd.f32 %v2006, %v2442
      %v2495 = vadd.f32 %v2011, %v2447
      %v2496 = vadd.f32 %v2014, %v2450
      %v2497 = vadd.f32 %v2019, %v2455
      %v2498 = vadd.f32 %v2022, %v2458
      %v2499 = vadd.f32 %v2027, %v2463
      %v2500 = vadd.f32 %v2030, %v2466
      %v2501 = vld [vmem:[%s753] sm:$0xf]
      %v2502 = vld [vmem:[%s753 + $0x4] sm:$0xf]
      %v2503 = vld [vmem:[%s753 + $0xc] sm:$0xf]
      %v2504 = vld [vmem:[%s753 + $0x10] sm:$0xf]
      %v2505 = vld [vmem:[%s753 + $0x18] sm:$0xf]
      %v2506 = vld [vmem:[%s753 + $0x1c] sm:$0xf]
      %v2507 = vld [vmem:[%s753 + $0x24] sm:$0xf]
      %v2508 = vld [vmem:[%s753 + $0x28] sm:$0xf]
      %v2509 = vld [vmem:[%s753 + $0x30] sm:$0xf]
      %v2510 = vld [vmem:[%s753 + $0x34] sm:$0xf]
      %v2511 = vld [vmem:[%s753 + $0x3c] sm:$0xf]
      %v2512 = vld [vmem:[%s753 + $0x40] sm:$0xf]
      %v2513 = vld [vmem:[%s753 + $0x48] sm:$0xf]
      %v2514 = vld [vmem:[%s753 + $0x4c] sm:$0xf]
      %v2515 = vld [vmem:[%s753 + $0x54] sm:$0xf]
      %v2516 = vld [vmem:[%s753 + $0x58] sm:$0xf]
      %v2517 = vld [vmem:[%s753 + $0x60] sm:$0xf]
      %v2518 = vld [vmem:[%s753 + $0x64] sm:$0xf]
      %v2519 = vld [vmem:[%s753 + $0x6c] sm:$0xf]
      %v2520 = vld [vmem:[%s753 + $0x70] sm:$0xf]
      %v2521 = vld [vmem:[%s753 + $0x78] sm:$0xf]
      %v2522 = vld [vmem:[%s753 + $0x7c] sm:$0xf]
      %v2523 = vld [vmem:[%s753 + $0x84] sm:$0xf]
      %v2524 = vld [vmem:[%s753 + $0x88] sm:$0xf]
      %v2525 = vld [vmem:[%s753 + $0x90] sm:$0xf]
      %v2526 = vld [vmem:[%s753 + $0x94] sm:$0xf]
      %v2527 = vld [vmem:[%s753 + $0x9c] sm:$0xf]
      %v2528 = vld [vmem:[%s753 + $0xa0] sm:$0xf]
      %v2529 = vld [vmem:[%s753 + $0xa8] sm:$0xf]
      %v2530 = vld [vmem:[%s753 + $0xac] sm:$0xf]
      %v2531 = vld [vmem:[%s753 + $0xb4] sm:$0xf]
      %v2532 = vld [vmem:[%s753 + $0xb8] sm:$0xf]
      %v2565 = vunpack.c.l.b16 %v2501
      %v2566 = vunpack.c.l.b16 %v2502
      %v2567 = vunpack.c.l.b16 %v2503
      %v2568 = vunpack.c.l.b16 %v2504
      %v2569 = vunpack.c.l.b16 %v2505
      %v2570 = vunpack.c.l.b16 %v2506
      %v2571 = vunpack.c.l.b16 %v2507
      %v2572 = vunpack.c.l.b16 %v2508
      %v2573 = vunpack.c.l.b16 %v2509
      %v2574 = vunpack.c.l.b16 %v2510
      %v2575 = vunpack.c.l.b16 %v2511
      %v2576 = vunpack.c.l.b16 %v2512
      %v2577 = vunpack.c.l.b16 %v2513
      %v2578 = vunpack.c.l.b16 %v2514
      %v2579 = vunpack.c.l.b16 %v2515
      %v2580 = vunpack.c.l.b16 %v2516
      %v2581 = vunpack.c.l.b16 %v2517
      %v2582 = vunpack.c.l.b16 %v2518
      %v2583 = vunpack.c.l.b16 %v2519
      %v2584 = vunpack.c.l.b16 %v2520
      %v2585 = vunpack.c.l.b16 %v2521
      %v2586 = vunpack.c.l.b16 %v2522
      %v2587 = vunpack.c.l.b16 %v2523
      %v2588 = vunpack.c.l.b16 %v2524
      %v2589 = vunpack.c.l.b16 %v2525
      %v2590 = vunpack.c.l.b16 %v2526
      %v2591 = vunpack.c.l.b16 %v2527
      %v2592 = vunpack.c.l.b16 %v2528
      %v2593 = vunpack.c.l.b16 %v2529
      %v2594 = vunpack.c.l.b16 %v2530
      %v2595 = vunpack.c.l.b16 %v2531
      %v2596 = vunpack.c.l.b16 %v2532
      %v2597 = vpack.c.b16 %v2566, %v2565
      %v2598 = vpack.c.b16 %v2568, %v2567
      %v2599 = vpack.c.b16 %v2570, %v2569
      %v2600 = vpack.c.b16 %v2572, %v2571
      %v2601 = vpack.c.b16 %v2574, %v2573
      %v2602 = vpack.c.b16 %v2576, %v2575
      %v2603 = vpack.c.b16 %v2578, %v2577
      %v2604 = vpack.c.b16 %v2580, %v2579
      %v2605 = vpack.c.b16 %v2582, %v2581
      %v2606 = vpack.c.b16 %v2584, %v2583
      %v2607 = vpack.c.b16 %v2586, %v2585
      %v2608 = vpack.c.b16 %v2588, %v2587
      %v2609 = vpack.c.b16 %v2590, %v2589
      %v2610 = vpack.c.b16 %v2592, %v2591
      %v2611 = vpack.c.b16 %v2594, %v2593
      %v2612 = vpack.c.b16 %v2596, %v2595
      %v2645 = vunpack.c.l.b16 %v919
      %v2646 = vunpack.c.l.b16 %v920
      %v2647 = vunpack.c.l.b16 %v921
      %v2648 = vunpack.c.l.b16 %v922
      %v2649 = vunpack.c.l.b16 %v923
      %v2650 = vunpack.c.l.b16 %v924
      %v2651 = vunpack.c.l.b16 %v925
      %v2652 = vunpack.c.l.b16 %v926
      %v2653 = vunpack.c.l.b16 %v927
      %v2654 = vunpack.c.l.b16 %v928
      %v2655 = vunpack.c.l.b16 %v929
      %v2656 = vunpack.c.l.b16 %v930
      %v2657 = vunpack.c.l.b16 %v931
      %v2658 = vunpack.c.l.b16 %v932
      %v2659 = vunpack.c.l.b16 %v933
      %v2660 = vunpack.c.l.b16 %v934
      %v2661 = vpack.c.b16 %v2646, %v2645
      %v2662 = vpack.c.b16 %v2648, %v2647
      %v2663 = vpack.c.b16 %v2650, %v2649
      %v2664 = vpack.c.b16 %v2652, %v2651
      %v2665 = vpack.c.b16 %v2654, %v2653
      %v2666 = vpack.c.b16 %v2656, %v2655
      %v2667 = vpack.c.b16 %v2658, %v2657
      %v2668 = vpack.c.b16 %v2660, %v2659
      %2677 = vmatprep.subr.bf16.mxu0 0
      %2678 = vmatpush1.bf16.msra.mxu0 %v2661
      %2679 = vmatprep.subr.bf16.mxu0 0
      %2680 = vmatpush1.bf16.msra.mxu0 %v2662
      %2681 = vmatprep.subr.bf16.mxu0 0
      %2682 = vmatpush1.bf16.msra.mxu0 %v2663
      %2683 = vmatprep.subr.bf16.mxu0 0
      %2684 = vmatpush1.bf16.msra.mxu0 %v2664
      %2685 = vmatprep.subr.bf16.mxu0 0
      %2686 = vmatpush1.bf16.msra.mxu0 %v2665
      %2687 = vmatprep.subr.bf16.mxu0 0
      %2688 = vmatpush1.bf16.msra.mxu0 %v2666
      %2689 = vmatprep.subr.bf16.mxu0 0
      %2690 = vmatpush1.bf16.msra.mxu0 %v2667
      %2691 = vmatprep.subr.bf16.mxu0 0
      %2692 = vmatpush1.bf16.msra.mxu0 %v2668
      %2693 = vmatprep.subr.bf16.mxu0 0
      %2694 = vmatpush1.bf16.msra.mxu0 0
      %2695 = vmatprep.subr.bf16.mxu0 0
      %2696 = vmatpush1.bf16.msra.mxu0 0
      %2697 = vmatprep.subr.bf16.mxu0 0
      %2698 = vmatpush1.bf16.msra.mxu0 0
      %2699 = vmatprep.subr.bf16.mxu0 0
      %2700 = vmatpush1.bf16.msra.mxu0 0
      %2701 = vmatprep.subr.bf16.mxu0 0
      %2702 = vmatpush1.bf16.msra.mxu0 0
      %2703 = vmatprep.subr.bf16.mxu0 0
      %2704 = vmatpush1.bf16.msra.mxu0 0
      %2705 = vmatprep.subr.bf16.mxu0 0
      %2706 = vmatpush1.bf16.msra.mxu0 0
      %2707 = vmatprep.subr.bf16.mxu0 0
      %2708 = vmatpush1.bf16.msra.mxu0 0
      %2709 = vmatprep.mubr.bf16.mxu0 0
      %2710 = vmatmul.mubr.bf16.gmra.mrb[0].mxu0 %v2597
      %v2711 = vpop.f32.mrb[0].mxu0
      %v2712 = vadd.f32 0.0, %v2711
      %v2713 = vpop.f32.mrb[0].mxu0
      %v2714 = vpop.f32.mrb[0].mxu0
      %v2715 = vadd.f32 0.0, %v2714
      %v2716 = vpop.f32.mrb[0].mxu0
      %2717 = vmatprep.mubr.bf16.mxu0 0
      %2718 = vmatmul.mubr.bf16.gmra.mrb[0].mxu0 %v2598
      %v2719 = vpop.f32.mrb[0].mxu0
      %v2720 = vadd.f32 0.0, %v2719
      %v2721 = vpop.f32.mrb[0].mxu0
      %v2722 = vpop.f32.mrb[0].mxu0
      %v2723 = vadd.f32 0.0, %v2722
      %v2724 = vpop.f32.mrb[0].mxu0
      %2725 = vmatprep.mubr.bf16.mxu0 0
      %2726 = vmatmul.mubr.bf16.gmra.mrb[0].mxu0 %v2599
      %v2727 = vpop.f32.mrb[0].mxu0
      %v2728 = vadd.f32 0.0, %v2727
      %v2729 = vpop.f32.mrb[0].mxu0
      %v2730 = vpop.f32.mrb[0].mxu0
      %v2731 = vadd.f32 0.0, %v2730
      %v2732 = vpop.f32.mrb[0].mxu0
      %2733 = vmatprep.mubr.bf16.mxu0 0
      %2734 = vmatmul.mubr.bf16.gmra.mrb[0].mxu0 %v2600
      %v2735 = vpop.f32.mrb[0].mxu0
      %v2736 = vadd.f32 0.0, %v2735
      %v2737 = vpop.f32.mrb[0].mxu0
      %v2738 = vpop.f32.mrb[0].mxu0
      %v2739 = vadd.f32 0.0, %v2738
      %v2740 = vpop.f32.mrb[0].mxu0
      %2741 = vmatprep.mubr.bf16.mxu0 0
      %2742 = vmatmul.mubr.bf16.gmra.mrb[0].mxu0 %v2601
      %v2743 = vpop.f32.mrb[0].mxu0
      %v2744 = vadd.f32 0.0, %v2743
      %v2745 = vpop.f32.mrb[0].mxu0
      %v2746 = vpop.f32.mrb[0].mxu0
      %v2747 = vadd.f32 0.0, %v2746
      %v2748 = vpop.f32.mrb[0].mxu0
      %2749 = vmatprep.mubr.bf16.mxu0 0
      %2750 = vmatmul.mubr.bf16.gmra.mrb[0].mxu0 %v2602
      %v2751 = vpop.f32.mrb[0].mxu0
      %v2752 = vadd.f32 0.0, %v2751
      %v2753 = vpop.f32.mrb[0].mxu0
      %v2754 = vpop.f32.mrb[0].mxu0
      %v2755 = vadd.f32 0.0, %v2754
      %v2756 = vpop.f32.mrb[0].mxu0
      %2757 = vmatprep.mubr.bf16.mxu0 0
      %2758 = vmatmul.mubr.bf16.gmra.mrb[0].mxu0 %v2603
      %v2759 = vpop.f32.mrb[0].mxu0
      %v2760 = vadd.f32 0.0, %v2759
      %v2761 = vpop.f32.mrb[0].mxu0
      %v2762 = vpop.f32.mrb[0].mxu0
      %v2763 = vadd.f32 0.0, %v2762
      %v2764 = vpop.f32.mrb[0].mxu0
      %2765 = vmatprep.mubr.bf16.mxu0 0
      %2766 = vmatmul.mubr.bf16.gmra.mrb[0].mxu0 %v2604
      %v2767 = vpop.f32.mrb[0].mxu0
      %v2768 = vadd.f32 0.0, %v2767
      %v2769 = vpop.f32.mrb[0].mxu0
      %v2770 = vpop.f32.mrb[0].mxu0
      %v2771 = vadd.f32 0.0, %v2770
      %v2772 = vpop.f32.mrb[0].mxu0
      %2773 = vmatprep.mubr.bf16.mxu0 0
      %2774 = vmatmul.mubr.bf16.gmra.mrb[0].mxu0 %v2605
      %v2775 = vpop.f32.mrb[0].mxu0
      %v2776 = vadd.f32 0.0, %v2775
      %v2777 = vpop.f32.mrb[0].mxu0
      %v2778 = vpop.f32.mrb[0].mxu0
      %v2779 = vadd.f32 0.0, %v2778
      %v2780 = vpop.f32.mrb[0].mxu0
      %2781 = vmatprep.mubr.bf16.mxu0 0
      %2782 = vmatmul.mubr.bf16.gmra.mrb[0].mxu0 %v2606
      %v2783 = vpop.f32.mrb[0].mxu0
      %v2784 = vadd.f32 0.0, %v2783
      %v2785 = vpop.f32.mrb[0].mxu0
      %v2786 = vpop.f32.mrb[0].mxu0
      %v2787 = vadd.f32 0.0, %v2786
      %v2788 = vpop.f32.mrb[0].mxu0
      %2789 = vmatprep.mubr.bf16.mxu0 0
      %2790 = vmatmul.mubr.bf16.gmra.mrb[0].mxu0 %v2607
      %v2791 = vpop.f32.mrb[0].mxu0
      %v2792 = vadd.f32 0.0, %v2791
      %v2793 = vpop.f32.mrb[0].mxu0
      %v2794 = vpop.f32.mrb[0].mxu0
      %v2795 = vadd.f32 0.0, %v2794
      %v2796 = vpop.f32.mrb[0].mxu0
      %2797 = vmatprep.mubr.bf16.mxu0 0
      %2798 = vmatmul.mubr.bf16.gmra.mrb[0].mxu0 %v2608
      %v2799 = vpop.f32.mrb[0].mxu0
      %v2800 = vadd.f32 0.0, %v2799
      %v2801 = vpop.f32.mrb[0].mxu0
      %v2802 = vpop.f32.mrb[0].mxu0
      %v2803 = vadd.f32 0.0, %v2802
      %v2804 = vpop.f32.mrb[0].mxu0
      %2805 = vmatprep.mubr.bf16.mxu0 0
      %2806 = vmatmul.mubr.bf16.gmra.mrb[0].mxu0 %v2609
      %v2807 = vpop.f32.mrb[0].mxu0
      %v2808 = vadd.f32 0.0, %v2807
      %v2809 = vpop.f32.mrb[0].mxu0
      %v2810 = vpop.f32.mrb[0].mxu0
      %v2811 = vadd.f32 0.0, %v2810
      %v2812 = vpop.f32.mrb[0].mxu0
      %2813 = vmatprep.mubr.bf16.mxu0 0
      %2814 = vmatmul.mubr.bf16.gmra.mrb[0].mxu0 %v2610
      %v2815 = vpop.f32.mrb[0].mxu0
      %v2816 = vadd.f32 0.0, %v2815
      %v2817 = vpop.f32.mrb[0].mxu0
      %v2818 = vpop.f32.mrb[0].mxu0
      %v2819 = vadd.f32 0.0, %v2818
      %v2820 = vpop.f32.mrb[0].mxu0
      %2821 = vmatprep.mubr.bf16.mxu0 0
      %2822 = vmatmul.mubr.bf16.gmra.mrb[0].mxu0 %v2611
      %v2823 = vpop.f32.mrb[0].mxu0
      %v2824 = vadd.f32 0.0, %v2823
      %v2825 = vpop.f32.mrb[0].mxu0
      %v2826 = vpop.f32.mrb[0].mxu0
      %v2827 = vadd.f32 0.0, %v2826
      %v2828 = vpop.f32.mrb[0].mxu0
      %2829 = vmatprep.mubr.bf16.mxu0 0
      %2830 = vmatmul.mubr.bf16.gmra.mrb[0].mxu0 %v2612
      %v2831 = vpop.f32.mrb[0].mxu0
      %v2832 = vadd.f32 0.0, %v2831
      %v2833 = vpop.f32.mrb[0].mxu0
      %v2834 = vpop.f32.mrb[0].mxu0
      %v2835 = vadd.f32 0.0, %v2834
      %v2836 = vpop.f32.mrb[0].mxu0
      %2837 = vdwg.mxu0
      %v2838 = vadd.f32 %v2469, %v2712
      %v2839 = vadd.f32 %v2470, %v2715
      %v2840 = vadd.f32 %v2471, %v2720
      %v2841 = vadd.f32 %v2472, %v2723
      %v2842 = vadd.f32 %v2473, %v2728
      %v2843 = vadd.f32 %v2474, %v2731
      %v2844 = vadd.f32 %v2475, %v2736
      %v2845 = vadd.f32 %v2476, %v2739
      %v2846 = vadd.f32 %v2477, %v2744
      %v2847 = vadd.f32 %v2478, %v2747
      %v2848 = vadd.f32 %v2479, %v2752
      %v2849 = vadd.f32 %v2480, %v2755
      %v2850 = vadd.f32 %v2481, %v2760
      %v2851 = vadd.f32 %v2482, %v2763
      %v2852 = vadd.f32 %v2483, %v2768
      %v2853 = vadd.f32 %v2484, %v2771
      %v2854 = vadd.f32 %v2485, %v2776
      %v2855 = vadd.f32 %v2486, %v2779
      %v2856 = vadd.f32 %v2487, %v2784
      %v2857 = vadd.f32 %v2488, %v2787
      %v2858 = vadd.f32 %v2489, %v2792
      %v2859 = vadd.f32 %v2490, %v2795
      %v2860 = vadd.f32 %v2491, %v2800
      %v2861 = vadd.f32 %v2492, %v2803
      %v2862 = vadd.f32 %v2493, %v2808
      %v2863 = vadd.f32 %v2494, %v2811
      %v2864 = vadd.f32 %v2495, %v2816
      %v2865 = vadd.f32 %v2496, %v2819
      %v2866 = vadd.f32 %v2497, %v2824
      %v2867 = vadd.f32 %v2498, %v2827
      %v2868 = vadd.f32 %v2499, %v2832
      %v2869 = vadd.f32 %v2500, %v2835
      %v2870 = vld [vmem:[%s753] sm:$0xf]
      %v2871 = vld [vmem:[%s753 + $0x4] sm:$0xf]
      %v2872 = vld [vmem:[%s753 + $0x8] sm:$0x1]
      %v2873 = vld [vmem:[%s753 + $0xc] sm:$0xf]
      %v2874 = vld [vmem:[%s753 + $0x10] sm:$0xf]
      %v2875 = vld [vmem:[%s753 + $0x14] sm:$0x1]
      %v2876 = vld [vmem:[%s753 + $0x18] sm:$0xf]
      %v2877 = vld [vmem:[%s753 + $0x1c] sm:$0xf]
      %v2878 = vld [vmem:[%s753 + $0x20] sm:$0x1]
      %v2879 = vld [vmem:[%s753 + $0x24] sm:$0xf]
      %v2880 = vld [vmem:[%s753 + $0x28] sm:$0xf]
      %v2881 = vld [vmem:[%s753 + $0x2c] sm:$0x1]
      %v2882 = vld [vmem:[%s753 + $0x30] sm:$0xf]
      %v2883 = vld [vmem:[%s753 + $0x34] sm:$0xf]
      %v2884 = vld [vmem:[%s753 + $0x38] sm:$0x1]
      %v2885 = vld [vmem:[%s753 + $0x3c] sm:$0xf]
      %v2886 = vld [vmem:[%s753 + $0x40] sm:$0xf]
      %v2887 = vld [vmem:[%s753 + $0x44] sm:$0x1]
      %v2888 = vld [vmem:[%s753 + $0x48] sm:$0xf]
      %v2889 = vld [vmem:[%s753 + $0x4c] sm:$0xf]
      %v2890 = vld [vmem:[%s753 + $0x50] sm:$0x1]
      %v2891 = vld [vmem:[%s753 + $0x54] sm:$0xf]
      %v2892 = vld [vmem:[%s753 + $0x58] sm:$0xf]
      %v2893 = vld [vmem:[%s753 + $0x5c] sm:$0x1]
      %v2894 = vld [vmem:[%s753 + $0x60] sm:$0xf]
      %v2895 = vld [vmem:[%s753 + $0x64] sm:$0xf]
      %v2896 = vld [vmem:[%s753 + $0x68] sm:$0x1]
      %v2897 = vld [vmem:[%s753 + $0x6c] sm:$0xf]
      %v2898 = vld [vmem:[%s753 + $0x70] sm:$0xf]
      %v2899 = vld [vmem:[%s753 + $0x74] sm:$0x1]
      %v2900 = vld [vmem:[%s753 + $0x78] sm:$0xf]
      %v2901 = vld [vmem:[%s753 + $0x7c] sm:$0xf]
      %v2902 = vld [vmem:[%s753 + $0x80] sm:$0x1]
      %v2903 = vld [vmem:[%s753 + $0x84] sm:$0xf]
      %v2904 = vld [vmem:[%s753 + $0x88] sm:$0xf]
      %v2905 = vld [vmem:[%s753 + $0x8c] sm:$0x1]
      %v2906 = vld [vmem:[%s753 + $0x90] sm:$0xf]
      %v2907 = vld [vmem:[%s753 + $0x94] sm:$0xf]
      %v2908 = vld [vmem:[%s753 + $0x98] sm:$0x1]
      %v2909 = vld [vmem:[%s753 + $0x9c] sm:$0xf]
      %v2910 = vld [vmem:[%s753 + $0xa0] sm:$0xf]
      %v2911 = vld [vmem:[%s753 + $0xa4] sm:$0x1]
      %v2912 = vld [vmem:[%s753 + $0xa8] sm:$0xf]
      %v2913 = vld [vmem:[%s753 + $0xac] sm:$0xf]
      %v2914 = vld [vmem:[%s753 + $0xb0] sm:$0x1]
      %v2915 = vld [vmem:[%s753 + $0xb4] sm:$0xf]
      %v2916 = vld [vmem:[%s753 + $0xb8] sm:$0xf]
      %v2917 = vld [vmem:[%s753 + $0xbc] sm:$0x1]
      %v2919 = vshrl.u32 %v2870, 16
      %v2921 = vrot.slane %v2919, 4
      %v2922 = vshll.u32 %v2870, 16
      %v2924 = vrot.slane %v2922, 5
      %v2925 = vor.u32 %v2921, %v2924
      %v2926 = vrot.slane %v2925, 4
      %v2928 = vshll.u32 %v2871, 16
      %v2930 = vrot.slane %v2928, 5
      %v2931 = vsel %vm1070, %v2926, %v2930
      %v2932 = vshrl.u32 %v2871, 16
      %v2934 = vrot.slane %v2932, 4
      %v2935 = vor.u32 %v2934, %v2930
      %v2936 = vrot.slane %v2935, 4
      %v2938 = vshll.u32 %v2872, 16
      %v2940 = vrot.slane %v2938, 5
      %v2941 = vsel %vm1070, %v2936, %v2940
      %v2943 = vshrl.u32 %v2873, 16
      %v2945 = vrot.slane %v2943, 4
      %v2946 = vshll.u32 %v2873, 16
      %v2948 = vrot.slane %v2946, 5
      %v2949 = vor.u32 %v2945, %v2948
      %v2950 = vrot.slane %v2949, 4
      %v2952 = vshll.u32 %v2874, 16
      %v2954 = vrot.slane %v2952, 5
      %v2955 = vsel %vm1070, %v2950, %v2954
      %v2956 = vshrl.u32 %v2874, 16
      %v2958 = vrot.slane %v2956, 4
      %v2959 = vor.u32 %v2958, %v2954
      %v2960 = vrot.slane %v2959, 4
      %v2962 = vshll.u32 %v2875, 16
      %v2964 = vrot.slane %v2962, 5
      %v2965 = vsel %vm1070, %v2960, %v2964
      %v2967 = vshrl.u32 %v2876, 16
      %v2969 = vrot.slane %v2967, 4
      %v2970 = vshll.u32 %v2876, 16
      %v2972 = vrot.slane %v2970, 5
      %v2973 = vor.u32 %v2969, %v2972
      %v2974 = vrot.slane %v2973, 4
      %v2976 = vshll.u32 %v2877, 16
      %v2978 = vrot.slane %v2976, 5
      %v2979 = vsel %vm1070, %v2974, %v2978
      %v2980 = vshrl.u32 %v2877, 16
      %v2982 = vrot.slane %v2980, 4
      %v2983 = vor.u32 %v2982, %v2978
      %v2984 = vrot.slane %v2983, 4
      %v2986 = vshll.u32 %v2878, 16
      %v2988 = vrot.slane %v2986, 5
      %v2989 = vsel %vm1070, %v2984, %v2988
      %v2991 = vshrl.u32 %v2879, 16
      %v2993 = vrot.slane %v2991, 4
      %v2994 = vshll.u32 %v2879, 16
      %v2996 = vrot.slane %v2994, 5
      %v2997 = vor.u32 %v2993, %v2996
      %v2998 = vrot.slane %v2997, 4
      %v3000 = vshll.u32 %v2880, 16
      %v3002 = vrot.slane %v3000, 5
      %v3003 = vsel %vm1070, %v2998, %v3002
      %v3004 = vshrl.u32 %v2880, 16
      %v3006 = vrot.slane %v3004, 4
      %v3007 = vor.u32 %v3006, %v3002
      %v3008 = vrot.slane %v3007, 4
      %v3010 = vshll.u32 %v2881, 16
      %v3012 = vrot.slane %v3010, 5
      %v3013 = vsel %vm1070, %v3008, %v3012
      %v3015 = vshrl.u32 %v2882, 16
      %v3017 = vrot.slane %v3015, 4
      %v3018 = vshll.u32 %v2882, 16
      %v3020 = vrot.slane %v3018, 5
      %v3021 = vor.u32 %v3017, %v3020
      %v3022 = vrot.slane %v3021, 4
      %v3024 = vshll.u32 %v2883, 16
      %v3026 = vrot.slane %v3024, 5
      %v3027 = vsel %vm1070, %v3022, %v3026
      %v3028 = vshrl.u32 %v2883, 16
      %v3030 = vrot.slane %v3028, 4
      %v3031 = vor.u32 %v3030, %v3026
      %v3032 = vrot.slane %v3031, 4
      %v3034 = vshll.u32 %v2884, 16
      %v3036 = vrot.slane %v3034, 5
      %v3037 = vsel %vm1070, %v3032, %v3036
      %v3039 = vshrl.u32 %v2885, 16
      %v3041 = vrot.slane %v3039, 4
      %v3042 = vshll.u32 %v2885, 16
      %v3044 = vrot.slane %v3042, 5
      %v3045 = vor.u32 %v3041, %v3044
      %v3046 = vrot.slane %v3045, 4
      %v3048 = vshll.u32 %v2886, 16
      %v3050 = vrot.slane %v3048, 5
      %v3051 = vsel %vm1070, %v3046, %v3050
      %v3052 = vshrl.u32 %v2886, 16
      %v3054 = vrot.slane %v3052, 4
      %v3055 = vor.u32 %v3054, %v3050
      %v3056 = vrot.slane %v3055, 4
      %v3058 = vshll.u32 %v2887, 16
      %v3060 = vrot.slane %v3058, 5
      %v3061 = vsel %vm1070, %v3056, %v3060
      %v3063 = vshrl.u32 %v2888, 16
      %v3065 = vrot.slane %v3063, 4
      %v3066 = vshll.u32 %v2888, 16
      %v3068 = vrot.slane %v3066, 5
      %v3069 = vor.u32 %v3065, %v3068
      %v3070 = vrot.slane %v3069, 4
      %v3072 = vshll.u32 %v2889, 16
      %v3074 = vrot.slane %v3072, 5
      %v3075 = vsel %vm1070, %v3070, %v3074
      %v3076 = vshrl.u32 %v2889, 16
      %v3078 = vrot.slane %v3076, 4
      %v3079 = vor.u32 %v3078, %v3074
      %v3080 = vrot.slane %v3079, 4
      %v3082 = vshll.u32 %v2890, 16
      %v3084 = vrot.slane %v3082, 5
      %v3085 = vsel %vm1070, %v3080, %v3084
      %v3087 = vshrl.u32 %v2891, 16
      %v3089 = vrot.slane %v3087, 4
      %v3090 = vshll.u32 %v2891, 16
      %v3092 = vrot.slane %v3090, 5
      %v3093 = vor.u32 %v3089, %v3092
      %v3094 = vrot.slane %v3093, 4
      %v3096 = vshll.u32 %v2892, 16
      %v3098 = vrot.slane %v3096, 5
      %v3099 = vsel %vm1070, %v3094, %v3098
      %v3100 = vshrl.u32 %v2892, 16
      %v3102 = vrot.slane %v3100, 4
      %v3103 = vor.u32 %v3102, %v3098
      %v3104 = vrot.slane %v3103, 4
      %v3106 = vshll.u32 %v2893, 16
      %v3108 = vrot.slane %v3106, 5
      %v3109 = vsel %vm1070, %v3104, %v3108
      %v3111 = vshrl.u32 %v2894, 16
      %v3113 = vrot.slane %v3111, 4
      %v3114 = vshll.u32 %v2894, 16
      %v3116 = vrot.slane %v3114, 5
      %v3117 = vor.u32 %v3113, %v3116
      %v3118 = vrot.slane %v3117, 4
      %v3120 = vshll.u32 %v2895, 16
      %v3122 = vrot.slane %v3120, 5
      %v3123 = vsel %vm1070, %v3118, %v3122
      %v3124 = vshrl.u32 %v2895, 16
      %v3126 = vrot.slane %v3124, 4
      %v3127 = vor.u32 %v3126, %v3122
      %v3128 = vrot.slane %v3127, 4
      %v3130 = vshll.u32 %v2896, 16
      %v3132 = vrot.slane %v3130, 5
      %v3133 = vsel %vm1070, %v3128, %v3132
      %v3135 = vshrl.u32 %v2897, 16
      %v3137 = vrot.slane %v3135, 4
      %v3138 = vshll.u32 %v2897, 16
      %v3140 = vrot.slane %v3138, 5
      %v3141 = vor.u32 %v3137, %v3140
      %v3142 = vrot.slane %v3141, 4
      %v3144 = vshll.u32 %v2898, 16
      %v3146 = vrot.slane %v3144, 5
      %v3147 = vsel %vm1070, %v3142, %v3146
      %v3148 = vshrl.u32 %v2898, 16
      %v3150 = vrot.slane %v3148, 4
      %v3151 = vor.u32 %v3150, %v3146
      %v3152 = vrot.slane %v3151, 4
      %v3154 = vshll.u32 %v2899, 16
      %v3156 = vrot.slane %v3154, 5
      %v3157 = vsel %vm1070, %v3152, %v3156
      %v3159 = vshrl.u32 %v2900, 16
      %v3161 = vrot.slane %v3159, 4
      %v3162 = vshll.u32 %v2900, 16
      %v3164 = vrot.slane %v3162, 5
      %v3165 = vor.u32 %v3161, %v3164
      %v3166 = vrot.slane %v3165, 4
      %v3168 = vshll.u32 %v2901, 16
      %v3170 = vrot.slane %v3168, 5
      %v3171 = vsel %vm1070, %v3166, %v3170
      %v3172 = vshrl.u32 %v2901, 16
      %v3174 = vrot.slane %v3172, 4
      %v3175 = vor.u32 %v3174, %v3170
      %v3176 = vrot.slane %v3175, 4
      %v3178 = vshll.u32 %v2902, 16
      %v3180 = vrot.slane %v3178, 5
      %v3181 = vsel %vm1070, %v3176, %v3180
      %v3183 = vshrl.u32 %v2903, 16
      %v3185 = vrot.slane %v3183, 4
      %v3186 = vshll.u32 %v2903, 16
      %v3188 = vrot.slane %v3186, 5
      %v3189 = vor.u32 %v3185, %v3188
      %v3190 = vrot.slane %v3189, 4
      %v3192 = vshll.u32 %v2904, 16
      %v3194 = vrot.slane %v3192, 5
      %v3195 = vsel %vm1070, %v3190, %v3194
      %v3196 = vshrl.u32 %v2904, 16
      %v3198 = vrot.slane %v3196, 4
      %v3199 = vor.u32 %v3198, %v3194
      %v3200 = vrot.slane %v3199, 4
      %v3202 = vshll.u32 %v2905, 16
      %v3204 = vrot.slane %v3202, 5
      %v3205 = vsel %vm1070, %v3200, %v3204
      %v3207 = vshrl.u32 %v2906, 16
      %v3209 = vrot.slane %v3207, 4
      %v3210 = vshll.u32 %v2906, 16
      %v3212 = vrot.slane %v3210, 5
      %v3213 = vor.u32 %v3209, %v3212
      %v3214 = vrot.slane %v3213, 4
      %v3216 = vshll.u32 %v2907, 16
      %v3218 = vrot.slane %v3216, 5
      %v3219 = vsel %vm1070, %v3214, %v3218
      %v3220 = vshrl.u32 %v2907, 16
      %v3222 = vrot.slane %v3220, 4
      %v3223 = vor.u32 %v3222, %v3218
      %v3224 = vrot.slane %v3223, 4
      %v3226 = vshll.u32 %v2908, 16
      %v3228 = vrot.slane %v3226, 5
      %v3229 = vsel %vm1070, %v3224, %v3228
      %v3231 = vshrl.u32 %v2909, 16
      %v3233 = vrot.slane %v3231, 4
      %v3234 = vshll.u32 %v2909, 16
      %v3236 = vrot.slane %v3234, 5
      %v3237 = vor.u32 %v3233, %v3236
      %v3238 = vrot.slane %v3237, 4
      %v3240 = vshll.u32 %v2910, 16
      %v3242 = vrot.slane %v3240, 5
      %v3243 = vsel %vm1070, %v3238, %v3242
      %v3244 = vshrl.u32 %v2910, 16
      %v3246 = vrot.slane %v3244, 4
      %v3247 = vor.u32 %v3246, %v3242
      %v3248 = vrot.slane %v3247, 4
      %v3250 = vshll.u32 %v2911, 16
      %v3252 = vrot.slane %v3250, 5
      %v3253 = vsel %vm1070, %v3248, %v3252
      %v3255 = vshrl.u32 %v2912, 16
      %v3257 = vrot.slane %v3255, 4
      %v3258 = vshll.u32 %v2912, 16
      %v3260 = vrot.slane %v3258, 5
      %v3261 = vor.u32 %v3257, %v3260
      %v3262 = vrot.slane %v3261, 4
      %v3264 = vshll.u32 %v2913, 16
      %v3266 = vrot.slane %v3264, 5
      %v3267 = vsel %vm1070, %v3262, %v3266
      %v3268 = vshrl.u32 %v2913, 16
      %v3270 = vrot.slane %v3268, 4
      %v3271 = vor.u32 %v3270, %v3266
      %v3272 = vrot.slane %v3271, 4
      %v3274 = vshll.u32 %v2914, 16
      %v3276 = vrot.slane %v3274, 5
      %v3277 = vsel %vm1070, %v3272, %v3276
      %v3279 = vshrl.u32 %v2915, 16
      %v3281 = vrot.slane %v3279, 4
      %v3282 = vshll.u32 %v2915, 16
      %v3284 = vrot.slane %v3282, 5
      %v3285 = vor.u32 %v3281, %v3284
      %v3286 = vrot.slane %v3285, 4
      %v3288 = vshll.u32 %v2916, 16
      %v3290 = vrot.slane %v3288, 5
      %v3291 = vsel %vm1070, %v3286, %v3290
      %v3292 = vshrl.u32 %v2916, 16
      %v3294 = vrot.slane %v3292, 4
      %v3295 = vor.u32 %v3294, %v3290
      %v3296 = vrot.slane %v3295, 4
      %v3298 = vshll.u32 %v2917, 16
      %v3300 = vrot.slane %v3298, 5
      %v3301 = vsel %vm1070, %v3296, %v3300
      %v3302 = vunpack.c.l.b16 %v2931
      %v3303 = vunpack.c.l.b16 %v2941
      %v3304 = vunpack.c.l.b16 %v2955
      %v3305 = vunpack.c.l.b16 %v2965
      %v3306 = vunpack.c.l.b16 %v2979
      %v3307 = vunpack.c.l.b16 %v2989
      %v3308 = vunpack.c.l.b16 %v3003
      %v3309 = vunpack.c.l.b16 %v3013
      %v3310 = vunpack.c.l.b16 %v3027
      %v3311 = vunpack.c.l.b16 %v3037
      %v3312 = vunpack.c.l.b16 %v3051
      %v3313 = vunpack.c.l.b16 %v3061
      %v3314 = vunpack.c.l.b16 %v3075
      %v3315 = vunpack.c.l.b16 %v3085
      %v3316 = vunpack.c.l.b16 %v3099
      %v3317 = vunpack.c.l.b16 %v3109
      %v3318 = vunpack.c.l.b16 %v3123
      %v3319 = vunpack.c.l.b16 %v3133
      %v3320 = vunpack.c.l.b16 %v3147
      %v3321 = vunpack.c.l.b16 %v3157
      %v3322 = vunpack.c.l.b16 %v3171
      %v3323 = vunpack.c.l.b16 %v3181
      %v3324 = vunpack.c.l.b16 %v3195
      %v3325 = vunpack.c.l.b16 %v3205
      %v3326 = vunpack.c.l.b16 %v3219
      %v3327 = vunpack.c.l.b16 %v3229
      %v3328 = vunpack.c.l.b16 %v3243
      %v3329 = vunpack.c.l.b16 %v3253
      %v3330 = vunpack.c.l.b16 %v3267
      %v3331 = vunpack.c.l.b16 %v3277
      %v3332 = vunpack.c.l.b16 %v3291
      %v3333 = vunpack.c.l.b16 %v3301
      %v3334 = vpack.c.b16 %v3303, %v3302
      %v3335 = vpack.c.b16 %v3305, %v3304
      %v3336 = vpack.c.b16 %v3307, %v3306
      %v3337 = vpack.c.b16 %v3309, %v3308
      %v3338 = vpack.c.b16 %v3311, %v3310
      %v3339 = vpack.c.b16 %v3313, %v3312
      %v3340 = vpack.c.b16 %v3315, %v3314
      %v3341 = vpack.c.b16 %v3317, %v3316
      %v3342 = vpack.c.b16 %v3319, %v3318
      %v3343 = vpack.c.b16 %v3321, %v3320
      %v3344 = vpack.c.b16 %v3323, %v3322
      %v3345 = vpack.c.b16 %v3325, %v3324
      %v3346 = vpack.c.b16 %v3327, %v3326
      %v3347 = vpack.c.b16 %v3329, %v3328
      %v3348 = vpack.c.b16 %v3331, %v3330
      %v3349 = vpack.c.b16 %v3333, %v3332
      %v3382 = vunpack.c.l.b16 %v936
      %v3383 = vunpack.c.l.b16 %v937
      %v3384 = vunpack.c.l.b16 %v938
      %v3385 = vunpack.c.l.b16 %v939
      %v3386 = vunpack.c.l.b16 %v940
      %v3387 = vunpack.c.l.b16 %v941
      %v3388 = vunpack.c.l.b16 %v942
      %v3389 = vunpack.c.l.b16 %v943
      %v3390 = vunpack.c.l.b16 %v944
      %v3391 = vunpack.c.l.b16 %v945
      %v3392 = vunpack.c.l.b16 %v946
      %v3393 = vunpack.c.l.b16 %v947
      %v3394 = vunpack.c.l.b16 %v948
      %v3395 = vunpack.c.l.b16 %v949
      %v3396 = vunpack.c.l.b16 %v950
      %v3397 = vunpack.c.l.b16 %v951
      %v3398 = vpack.c.b16 %v3383, %v3382
      %v3399 = vpack.c.b16 %v3385, %v3384
      %v3400 = vpack.c.b16 %v3387, %v3386
      %v3401 = vpack.c.b16 %v3389, %v3388
      %v3402 = vpack.c.b16 %v3391, %v3390
      %v3403 = vpack.c.b16 %v3393, %v3392
      %v3404 = vpack.c.b16 %v3395, %v3394
      %v3405 = vpack.c.b16 %v3397, %v3396
      %3414 = vmatprep.subr.bf16.mxu0 0
      %3415 = vmatpush1.bf16.msra.mxu0 %v3398
      %3416 = vmatprep.subr.bf16.mxu0 0
      %3417 = vmatpush1.bf16.msra.mxu0 %v3399
      %3418 = vmatprep.subr.bf16.mxu0 0
      %3419 = vmatpush1.bf16.msra.mxu0 %v3400
      %3420 = vmatprep.subr.bf16.mxu0 0
      %3421 = vmatpush1.bf16.msra.mxu0 %v3401
      %3422 = vmatprep.subr.bf16.mxu0 0
      %3423 = vmatpush1.bf16.msra.mxu0 %v3402
      %3424 = vmatprep.subr.bf16.mxu0 0
      %3425 = vmatpush1.bf16.msra.mxu0 %v3403
      %3426 = vmatprep.subr.bf16.mxu0 0
      %3427 = vmatpush1.bf16.msra.mxu0 %v3404
      %3428 = vmatprep.subr.bf16.mxu0 0
      %3429 = vmatpush1.bf16.msra.mxu0 %v3405
      %3430 = vmatprep.subr.bf16.mxu0 0
      %3431 = vmatpush1.bf16.msra.mxu0 0
      %3432 = vmatprep.subr.bf16.mxu0 0
      %3433 = vmatpush1.bf16.msra.mxu0 0
      %3434 = vmatprep.subr.bf16.mxu0 0
      %3435 = vmatpush1.bf16.msra.mxu0 0
      %3436 = vmatprep.subr.bf16.mxu0 0
      %3437 = vmatpush1.bf16.msra.mxu0 0
      %3438 = vmatprep.subr.bf16.mxu0 0
      %3439 = vmatpush1.bf16.msra.mxu0 0
      %3440 = vmatprep.subr.bf16.mxu0 0
      %3441 = vmatpush1.bf16.msra.mxu0 0
      %3442 = vmatprep.subr.bf16.mxu0 0
      %3443 = vmatpush1.bf16.msra.mxu0 0
      %3444 = vmatprep.subr.bf16.mxu0 0
      %3445 = vmatpush1.bf16.msra.mxu0 0
      %3446 = vmatprep.mubr.bf16.mxu0 0
      %3447 = vmatmul.mubr.bf16.gmra.mrb[0].mxu0 %v3334
      %v3448 = vpop.f32.mrb[0].mxu0
      %v3449 = vadd.f32 0.0, %v3448
      %v3450 = vpop.f32.mrb[0].mxu0
      %v3451 = vpop.f32.mrb[0].mxu0
      %v3452 = vadd.f32 0.0, %v3451
      %v3453 = vpop.f32.mrb[0].mxu0
      %3454 = vmatprep.mubr.bf16.mxu0 0
      %3455 = vmatmul.mubr.bf16.gmra.mrb[0].mxu0 %v3335
      %v3456 = vpop.f32.mrb[0].mxu0
      %v3457 = vadd.f32 0.0, %v3456
      %v3458 = vpop.f32.mrb[0].mxu0
      %v3459 = vpop.f32.mrb[0].mxu0
      %v3460 = vadd.f32 0.0, %v3459
      %v3461 = vpop.f32.mrb[0].mxu0
      %3462 = vmatprep.mubr.bf16.mxu0 0
      %3463 = vmatmul.mubr.bf16.gmra.mrb[0].mxu0 %v3336
      %v3464 = vpop.f32.mrb[0].mxu0
      %v3465 = vadd.f32 0.0, %v3464
      %v3466 = vpop.f32.mrb[0].mxu0
      %v3467 = vpop.f32.mrb[0].mxu0
      %v3468 = vadd.f32 0.0, %v3467
      %v3469 = vpop.f32.mrb[0].mxu0
      %3470 = vmatprep.mubr.bf16.mxu0 0
      %3471 = vmatmul.mubr.bf16.gmra.mrb[0].mxu0 %v3337
      %v3472 = vpop.f32.mrb[0].mxu0
      %v3473 = vadd.f32 0.0, %v3472
      %v3474 = vpop.f32.mrb[0].mxu0
      %v3475 = vpop.f32.mrb[0].mxu0
      %v3476 = vadd.f32 0.0, %v3475
      %v3477 = vpop.f32.mrb[0].mxu0
      %3478 = vmatprep.mubr.bf16.mxu0 0
      %3479 = vmatmul.mubr.bf16.gmra.mrb[0].mxu0 %v3338
      %v3480 = vpop.f32.mrb[0].mxu0
      %v3481 = vadd.f32 0.0, %v3480
      %v3482 = vpop.f32.mrb[0].mxu0
      %v3483 = vpop.f32.mrb[0].mxu0
      %v3484 = vadd.f32 0.0, %v3483
      %v3485 = vpop.f32.mrb[0].mxu0
      %3486 = vmatprep.mubr.bf16.mxu0 0
      %3487 = vmatmul.mubr.bf16.gmra.mrb[0].mxu0 %v3339
      %v3488 = vpop.f32.mrb[0].mxu0
      %v3489 = vadd.f32 0.0, %v3488
      %v3490 = vpop.f32.mrb[0].mxu0
      %v3491 = vpop.f32.mrb[0].mxu0
      %v3492 = vadd.f32 0.0, %v3491
      %v3493 = vpop.f32.mrb[0].mxu0
      %3494 = vmatprep.mubr.bf16.mxu0 0
      %3495 = vmatmul.mubr.bf16.gmra.mrb[0].mxu0 %v3340
      %v3496 = vpop.f32.mrb[0].mxu0
      %v3497 = vadd.f32 0.0, %v3496
      %v3498 = vpop.f32.mrb[0].mxu0
      %v3499 = vpop.f32.mrb[0].mxu0
      %v3500 = vadd.f32 0.0, %v3499
      %v3501 = vpop.f32.mrb[0].mxu0
      %3502 = vmatprep.mubr.bf16.mxu0 0
      %3503 = vmatmul.mubr.bf16.gmra.mrb[0].mxu0 %v3341
      %v3504 = vpop.f32.mrb[0].mxu0
      %v3505 = vadd.f32 0.0, %v3504
      %v3506 = vpop.f32.mrb[0].mxu0
      %v3507 = vpop.f32.mrb[0].mxu0
      %v3508 = vadd.f32 0.0, %v3507
      %v3509 = vpop.f32.mrb[0].mxu0
      %3510 = vmatprep.mubr.bf16.mxu0 0
      %3511 = vmatmul.mubr.bf16.gmra.mrb[0].mxu0 %v3342
      %v3512 = vpop.f32.mrb[0].mxu0
      %v3513 = vadd.f32 0.0, %v3512
      %v3514 = vpop.f32.mrb[0].mxu0
      %v3515 = vpop.f32.mrb[0].mxu0
      %v3516 = vadd.f32 0.0, %v3515
      %v3517 = vpop.f32.mrb[0].mxu0
      %3518 = vmatprep.mubr.bf16.mxu0 0
      %3519 = vmatmul.mubr.bf16.gmra.mrb[0].mxu0 %v3343
      %v3520 = vpop.f32.mrb[0].mxu0
      %v3521 = vadd.f32 0.0, %v3520
      %v3522 = vpop.f32.mrb[0].mxu0
      %v3523 = vpop.f32.mrb[0].mxu0
      %v3524 = vadd.f32 0.0, %v3523
      %v3525 = vpop.f32.mrb[0].mxu0
      %3526 = vmatprep.mubr.bf16.mxu0 0
      %3527 = vmatmul.mubr.bf16.gmra.mrb[0].mxu0 %v3344
      %v3528 = vpop.f32.mrb[0].mxu0
      %v3529 = vadd.f32 0.0, %v3528
      %v3530 = vpop.f32.mrb[0].mxu0
      %v3531 = vpop.f32.mrb[0].mxu0
      %v3532 = vadd.f32 0.0, %v3531
      %v3533 = vpop.f32.mrb[0].mxu0
      %3534 = vmatprep.mubr.bf16.mxu0 0
      %3535 = vmatmul.mubr.bf16.gmra.mrb[0].mxu0 %v3345
      %v3536 = vpop.f32.mrb[0].mxu0
      %v3537 = vadd.f32 0.0, %v3536
      %v3538 = vpop.f32.mrb[0].mxu0
      %v3539 = vpop.f32.mrb[0].mxu0
      %v3540 = vadd.f32 0.0, %v3539
      %v3541 = vpop.f32.mrb[0].mxu0
      %3542 = vmatprep.mubr.bf16.mxu0 0
      %3543 = vmatmul.mubr.bf16.gmra.mrb[0].mxu0 %v3346
      %v3544 = vpop.f32.mrb[0].mxu0
      %v3545 = vadd.f32 0.0, %v3544
      %v3546 = vpop.f32.mrb[0].mxu0
      %v3547 = vpop.f32.mrb[0].mxu0
      %v3548 = vadd.f32 0.0, %v3547
      %v3549 = vpop.f32.mrb[0].mxu0
      %3550 = vmatprep.mubr.bf16.mxu0 0
      %3551 = vmatmul.mubr.bf16.gmra.mrb[0].mxu0 %v3347
      %v3552 = vpop.f32.mrb[0].mxu0
      %v3553 = vadd.f32 0.0, %v3552
      %v3554 = vpop.f32.mrb[0].mxu0
      %v3555 = vpop.f32.mrb[0].mxu0
      %v3556 = vadd.f32 0.0, %v3555
      %v3557 = vpop.f32.mrb[0].mxu0
      %3558 = vmatprep.mubr.bf16.mxu0 0
      %3559 = vmatmul.mubr.bf16.gmra.mrb[0].mxu0 %v3348
      %v3560 = vpop.f32.mrb[0].mxu0
      %v3561 = vadd.f32 0.0, %v3560
      %v3562 = vpop.f32.mrb[0].mxu0
      %v3563 = vpop.f32.mrb[0].mxu0
      %v3564 = vadd.f32 0.0, %v3563
      %v3565 = vpop.f32.mrb[0].mxu0
      %3566 = vmatprep.mubr.bf16.mxu0 0
      %3567 = vmatmul.mubr.bf16.gmra.mrb[0].mxu0 %v3349
      %v3568 = vpop.f32.mrb[0].mxu0
      %v3569 = vadd.f32 0.0, %v3568
      %v3570 = vpop.f32.mrb[0].mxu0
      %v3571 = vpop.f32.mrb[0].mxu0
      %v3572 = vadd.f32 0.0, %v3571
      %v3573 = vpop.f32.mrb[0].mxu0
      %3574 = vdwg.mxu0
      %v3575 = vadd.f32 %v2838, %v3449
      %v3576 = vadd.f32 %v2839, %v3452
      %v3577 = vadd.f32 %v2840, %v3457
      %v3578 = vadd.f32 %v2841, %v3460
      %v3579 = vadd.f32 %v2842, %v3465
      %v3580 = vadd.f32 %v2843, %v3468
      %v3581 = vadd.f32 %v2844, %v3473
      %v3582 = vadd.f32 %v2845, %v3476
      %v3583 = vadd.f32 %v2846, %v3481
      %v3584 = vadd.f32 %v2847, %v3484
      %v3585 = vadd.f32 %v2848, %v3489
      %v3586 = vadd.f32 %v2849, %v3492
      %v3587 = vadd.f32 %v2850, %v3497
      %v3588 = vadd.f32 %v2851, %v3500
      %v3589 = vadd.f32 %v2852, %v3505
      %v3590 = vadd.f32 %v2853, %v3508
      %v3591 = vadd.f32 %v2854, %v3513
      %v3592 = vadd.f32 %v2855, %v3516
      %v3593 = vadd.f32 %v2856, %v3521
      %v3594 = vadd.f32 %v2857, %v3524
      %v3595 = vadd.f32 %v2858, %v3529
      %v3596 = vadd.f32 %v2859, %v3532
      %v3597 = vadd.f32 %v2860, %v3537
      %v3598 = vadd.f32 %v2861, %v3540
      %v3599 = vadd.f32 %v2862, %v3545
      %v3600 = vadd.f32 %v2863, %v3548
      %v3601 = vadd.f32 %v2864, %v3553
      %v3602 = vadd.f32 %v2865, %v3556
      %v3603 = vadd.f32 %v2866, %v3561
      %v3604 = vadd.f32 %v2867, %v3564
      %v3605 = vadd.f32 %v2868, %v3569
      %v3606 = vadd.f32 %v2869, %v3572
      %v3607 = vld [vmem:[%s753] sm:$0xe]
      %v3608 = vld [vmem:[%s753 + $0xc] sm:$0xe]
      %v3609 = vld [vmem:[%s753 + $0x18] sm:$0xe]
      %v3610 = vld [vmem:[%s753 + $0x24] sm:$0xe]
      %v3611 = vld [vmem:[%s753 + $0x30] sm:$0xe]
      %v3612 = vld [vmem:[%s753 + $0x3c] sm:$0xe]
      %v3613 = vld [vmem:[%s753 + $0x48] sm:$0xe]
      %v3614 = vld [vmem:[%s753 + $0x54] sm:$0xe]
      %v3615 = vld [vmem:[%s753 + $0x60] sm:$0xe]
      %v3616 = vld [vmem:[%s753 + $0x6c] sm:$0xe]
      %v3617 = vld [vmem:[%s753 + $0x78] sm:$0xe]
      %v3618 = vld [vmem:[%s753 + $0x84] sm:$0xe]
      %v3619 = vld [vmem:[%s753 + $0x90] sm:$0xe]
      %v3620 = vld [vmem:[%s753 + $0x9c] sm:$0xe]
      %v3621 = vld [vmem:[%s753 + $0xa8] sm:$0xe]
      %v3622 = vld [vmem:[%s753 + $0xb4] sm:$0xe]
      %v3671 = vrot.slane %v3607, 5
      %v3672 = vrot.slane %v3671, 4
      %v3673 = vrot.slane %v2871, 5
      %v3674 = vsel %vm2083, %v3672, %v3673
      %v3675 = vrot.slane %v3673, 4
      %v3676 = vrot.slane %v2872, 5
      %v3677 = vsel %vm2083, %v3675, %v3676
      %v3678 = vrot.slane %v3608, 5
      %v3679 = vrot.slane %v3678, 4
      %v3680 = vrot.slane %v2874, 5
      %v3681 = vsel %vm2083, %v3679, %v3680
      %v3682 = vrot.slane %v3680, 4
      %v3683 = vrot.slane %v2875, 5
      %v3684 = vsel %vm2083, %v3682, %v3683
      %v3685 = vrot.slane %v3609, 5
      %v3686 = vrot.slane %v3685, 4
      %v3687 = vrot.slane %v2877, 5
      %v3688 = vsel %vm2083, %v3686, %v3687
      %v3689 = vrot.slane %v3687, 4
      %v3690 = vrot.slane %v2878, 5
      %v3691 = vsel %vm2083, %v3689, %v3690
      %v3692 = vrot.slane %v3610, 5
      %v3693 = vrot.slane %v3692, 4
      %v3694 = vrot.slane %v2880, 5
      %v3695 = vsel %vm2083, %v3693, %v3694
      %v3696 = vrot.slane %v3694, 4
      %v3697 = vrot.slane %v2881, 5
      %v3698 = vsel %vm2083, %v3696, %v3697
      %v3699 = vrot.slane %v3611, 5
      %v3700 = vrot.slane %v3699, 4
      %v3701 = vrot.slane %v2883, 5
      %v3702 = vsel %vm2083, %v3700, %v3701
      %v3703 = vrot.slane %v3701, 4
      %v3704 = vrot.slane %v2884, 5
      %v3705 = vsel %vm2083, %v3703, %v3704
      %v3706 = vrot.slane %v3612, 5
      %v3707 = vrot.slane %v3706, 4
      %v3708 = vrot.slane %v2886, 5
      %v3709 = vsel %vm2083, %v3707, %v3708
      %v3710 = vrot.slane %v3708, 4
      %v3711 = vrot.slane %v2887, 5
      %v3712 = vsel %vm2083, %v3710, %v3711
      %v3713 = vrot.slane %v3613, 5
      %v3714 = vrot.slane %v3713, 4
      %v3715 = vrot.slane %v2889, 5
      %v3716 = vsel %vm2083, %v3714, %v3715
      %v3717 = vrot.slane %v3715, 4
      %v3718 = vrot.slane %v2890, 5
      %v3719 = vsel %vm2083, %v3717, %v3718
      %v3720 = vrot.slane %v3614, 5
      %v3721 = vrot.slane %v3720, 4
      %v3722 = vrot.slane %v2892, 5
      %v3723 = vsel %vm2083, %v3721, %v3722
      %v3724 = vrot.slane %v3722, 4
      %v3725 = vrot.slane %v2893, 5
      %v3726 = vsel %vm2083, %v3724, %v3725
      %v3727 = vrot.slane %v3615, 5
      %v3728 = vrot.slane %v3727, 4
      %v3729 = vrot.slane %v2895, 5
      %v3730 = vsel %vm2083, %v3728, %v3729
      %v3731 = vrot.slane %v3729, 4
      %v3732 = vrot.slane %v2896, 5
      %v3733 = vsel %vm2083, %v3731, %v3732
      %v3734 = vrot.slane %v3616, 5
      %v3735 = vrot.slane %v3734, 4
      %v3736 = vrot.slane %v2898, 5
      %v3737 = vsel %vm2083, %v3735, %v3736
      %v3738 = vrot.slane %v3736, 4
      %v3739 = vrot.slane %v2899, 5
      %v3740 = vsel %vm2083, %v3738, %v3739
      %v3741 = vrot.slane %v3617, 5
      %v3742 = vrot.slane %v3741, 4
      %v3743 = vrot.slane %v2901, 5
      %v3744 = vsel %vm2083, %v3742, %v3743
      %v3745 = vrot.slane %v3743, 4
      %v3746 = vrot.slane %v2902, 5
      %v3747 = vsel %vm2083, %v3745, %v3746
      %v3748 = vrot.slane %v3618, 5
      %v3749 = vrot.slane %v3748, 4
      %v3750 = vrot.slane %v2904, 5
      %v3751 = vsel %vm2083, %v3749, %v3750
      %v3752 = vrot.slane %v3750, 4
      %v3753 = vrot.slane %v2905, 5
      %v3754 = vsel %vm2083, %v3752, %v3753
      %v3755 = vrot.slane %v3619, 5
      %v3756 = vrot.slane %v3755, 4
      %v3757 = vrot.slane %v2907, 5
      %v3758 = vsel %vm2083, %v3756, %v3757
      %v3759 = vrot.slane %v3757, 4
      %v3760 = vrot.slane %v2908, 5
      %v3761 = vsel %vm2083, %v3759, %v3760
      %v3762 = vrot.slane %v3620, 5
      %v3763 = vrot.slane %v3762, 4
      %v3764 = vrot.slane %v2910, 5
      %v3765 = vsel %vm2083, %v3763, %v3764
      %v3766 = vrot.slane %v3764, 4
      %v3767 = vrot.slane %v2911, 5
      %v3768 = vsel %vm2083, %v3766, %v3767
      %v3769 = vrot.slane %v3621, 5
      %v3770 = vrot.slane %v3769, 4
      %v3771 = vrot.slane %v2913, 5
      %v3772 = vsel %vm2083, %v3770, %v3771
      %v3773 = vrot.slane %v3771, 4
      %v3774 = vrot.slane %v2914, 5
      %v3775 = vsel %vm2083, %v3773, %v3774
      %v3776 = vrot.slane %v3622, 5
      %v3777 = vrot.slane %v3776, 4
      %v3778 = vrot.slane %v2916, 5
      %v3779 = vsel %vm2083, %v3777, %v3778
      %v3780 = vrot.slane %v3778, 4
      %v3781 = vrot.slane %v2917, 5
      %v3782 = vsel %vm2083, %v3780, %v3781
      %v3783 = vunpack.c.l.b16 %v3674
      %v3784 = vunpack.c.l.b16 %v3677
      %v3785 = vunpack.c.l.b16 %v3681
      %v3786 = vunpack.c.l.b16 %v3684
      %v3787 = vunpack.c.l.b16 %v3688
      %v3788 = vunpack.c.l.b16 %v3691
      %v3789 = vunpack.c.l.b16 %v3695
      %v3790 = vunpack.c.l.b16 %v3698
      %v3791 = vunpack.c.l.b16 %v3702
      %v3792 = vunpack.c.l.b16 %v3705
      %v3793 = vunpack.c.l.b16 %v3709
      %v3794 = vunpack.c.l.b16 %v3712
      %v3795 = vunpack.c.l.b16 %v3716
      %v3796 = vunpack.c.l.b16 %v3719
      %v3797 = vunpack.c.l.b16 %v3723
      %v3798 = vunpack.c.l.b16 %v3726
      %v3799 = vunpack.c.l.b16 %v3730
      %v3800 = vunpack.c.l.b16 %v3733
      %v3801 = vunpack.c.l.b16 %v3737
      %v3802 = vunpack.c.l.b16 %v3740
      %v3803 = vunpack.c.l.b16 %v3744
      %v3804 = vunpack.c.l.b16 %v3747
      %v3805 = vunpack.c.l.b16 %v3751
      %v3806 = vunpack.c.l.b16 %v3754
      %v3807 = vunpack.c.l.b16 %v3758
      %v3808 = vunpack.c.l.b16 %v3761
      %v3809 = vunpack.c.l.b16 %v3765
      %v3810 = vunpack.c.l.b16 %v3768
      %v3811 = vunpack.c.l.b16 %v3772
      %v3812 = vunpack.c.l.b16 %v3775
      %v3813 = vunpack.c.l.b16 %v3779
      %v3814 = vunpack.c.l.b16 %v3782
      %v3815 = vpack.c.b16 %v3784, %v3783
      %v3816 = vpack.c.b16 %v3786, %v3785
      %v3817 = vpack.c.b16 %v3788, %v3787
      %v3818 = vpack.c.b16 %v3790, %v3789
      %v3819 = vpack.c.b16 %v3792, %v3791
      %v3820 = vpack.c.b16 %v3794, %v3793
      %v3821 = vpack.c.b16 %v3796, %v3795
      %v3822 = vpack.c.b16 %v3798, %v3797
      %v3823 = vpack.c.b16 %v3800, %v3799
      %v3824 = vpack.c.b16 %v3802, %v3801
      %v3825 = vpack.c.b16 %v3804, %v3803
      %v3826 = vpack.c.b16 %v3806, %v3805
      %v3827 = vpack.c.b16 %v3808, %v3807
      %v3828 = vpack.c.b16 %v3810, %v3809
      %v3829 = vpack.c.b16 %v3812, %v3811
      %v3830 = vpack.c.b16 %v3814, %v3813
      %v3863 = vunpack.c.l.b16 %v953
      %v3864 = vunpack.c.l.b16 %v954
      %v3865 = vunpack.c.l.b16 %v955
      %v3866 = vunpack.c.l.b16 %v956
      %v3867 = vunpack.c.l.b16 %v957
      %v3868 = vunpack.c.l.b16 %v958
      %v3869 = vunpack.c.l.b16 %v959
      %v3870 = vunpack.c.l.b16 %v960
      %v3871 = vunpack.c.l.b16 %v961
      %v3872 = vunpack.c.l.b16 %v962
      %v3873 = vunpack.c.l.b16 %v963
      %v3874 = vunpack.c.l.b16 %v964
      %v3875 = vunpack.c.l.b16 %v965
      %v3876 = vunpack.c.l.b16 %v966
      %v3877 = vunpack.c.l.b16 %v967
      %v3878 = vunpack.c.l.b16 %v968
      %v3879 = vpack.c.b16 %v3864, %v3863
      %v3880 = vpack.c.b16 %v3866, %v3865
      %v3881 = vpack.c.b16 %v3868, %v3867
      %v3882 = vpack.c.b16 %v3870, %v3869
      %v3883 = vpack.c.b16 %v3872, %v3871
      %v3884 = vpack.c.b16 %v3874, %v3873
      %v3885 = vpack.c.b16 %v3876, %v3875
      %v3886 = vpack.c.b16 %v3878, %v3877
      %3895 = vmatprep.subr.bf16.mxu0 0
      %3896 = vmatpush1.bf16.msra.mxu0 %v3879
      %3897 = vmatprep.subr.bf16.mxu0 0
      %3898 = vmatpush1.bf16.msra.mxu0 %v3880
      %3899 = vmatprep.subr.bf16.mxu0 0
      %3900 = vmatpush1.bf16.msra.mxu0 %v3881
      %3901 = vmatprep.subr.bf16.mxu0 0
      %3902 = vmatpush1.bf16.msra.mxu0 %v3882
      %3903 = vmatprep.subr.bf16.mxu0 0
      %3904 = vmatpush1.bf16.msra.mxu0 %v3883
      %3905 = vmatprep.subr.bf16.mxu0 0
      %3906 = vmatpush1.bf16.msra.mxu0 %v3884
      %3907 = vmatprep.subr.bf16.mxu0 0
      %3908 = vmatpush1.bf16.msra.mxu0 %v3885
      %3909 = vmatprep.subr.bf16.mxu0 0
      %3910 = vmatpush1.bf16.msra.mxu0 %v3886
      %3911 = vmatprep.subr.bf16.mxu0 0
      %3912 = vmatpush1.bf16.msra.mxu0 0
      %3913 = vmatprep.subr.bf16.mxu0 0
      %3914 = vmatpush1.bf16.msra.mxu0 0
      %3915 = vmatprep.subr.bf16.mxu0 0
      %3916 = vmatpush1.bf16.msra.mxu0 0
      %3917 = vmatprep.subr.bf16.mxu0 0
      %3918 = vmatpush1.bf16.msra.mxu0 0
      %3919 = vmatprep.subr.bf16.mxu0 0
      %3920 = vmatpush1.bf16.msra.mxu0 0
      %3921 = vmatprep.subr.bf16.mxu0 0
      %3922 = vmatpush1.bf16.msra.mxu0 0
      %3923 = vmatprep.subr.bf16.mxu0 0
      %3924 = vmatpush1.bf16.msra.mxu0 0
      %3925 = vmatprep.subr.bf16.mxu0 0
      %3926 = vmatpush1.bf16.msra.mxu0 0
      %3927 = vmatprep.mubr.bf16.mxu0 0
      %3928 = vmatmul.mubr.bf16.gmra.mrb[0].mxu0 %v3815
      %v3929 = vpop.f32.mrb[0].mxu0
      %v3930 = vadd.f32 0.0, %v3929
      %v3931 = vpop.f32.mrb[0].mxu0
      %v3932 = vpop.f32.mrb[0].mxu0
      %v3933 = vadd.f32 0.0, %v3932
      %v3934 = vpop.f32.mrb[0].mxu0
      %3935 = vmatprep.mubr.bf16.mxu0 0
      %3936 = vmatmul.mubr.bf16.gmra.mrb[0].mxu0 %v3816
      %v3937 = vpop.f32.mrb[0].mxu0
      %v3938 = vadd.f32 0.0, %v3937
      %v3939 = vpop.f32.mrb[0].mxu0
      %v3940 = vpop.f32.mrb[0].mxu0
      %v3941 = vadd.f32 0.0, %v3940
      %v3942 = vpop.f32.mrb[0].mxu0
      %3943 = vmatprep.mubr.bf16.mxu0 0
      %3944 = vmatmul.mubr.bf16.gmra.mrb[0].mxu0 %v3817
      %v3945 = vpop.f32.mrb[0].mxu0
      %v3946 = vadd.f32 0.0, %v3945
      %v3947 = vpop.f32.mrb[0].mxu0
      %v3948 = vpop.f32.mrb[0].mxu0
      %v3949 = vadd.f32 0.0, %v3948
      %v3950 = vpop.f32.mrb[0].mxu0
      %3951 = vmatprep.mubr.bf16.mxu0 0
      %3952 = vmatmul.mubr.bf16.gmra.mrb[0].mxu0 %v3818
      %v3953 = vpop.f32.mrb[0].mxu0
      %v3954 = vadd.f32 0.0, %v3953
      %v3955 = vpop.f32.mrb[0].mxu0
      %v3956 = vpop.f32.mrb[0].mxu0
      %v3957 = vadd.f32 0.0, %v3956
      %v3958 = vpop.f32.mrb[0].mxu0
      %3959 = vmatprep.mubr.bf16.mxu0 0
      %3960 = vmatmul.mubr.bf16.gmra.mrb[0].mxu0 %v3819
      %v3961 = vpop.f32.mrb[0].mxu0
      %v3962 = vadd.f32 0.0, %v3961
      %v3963 = vpop.f32.mrb[0].mxu0
      %v3964 = vpop.f32.mrb[0].mxu0
      %v3965 = vadd.f32 0.0, %v3964
      %v3966 = vpop.f32.mrb[0].mxu0
      %3967 = vmatprep.mubr.bf16.mxu0 0
      %3968 = vmatmul.mubr.bf16.gmra.mrb[0].mxu0 %v3820
      %v3969 = vpop.f32.mrb[0].mxu0
      %v3970 = vadd.f32 0.0, %v3969
      %v3971 = vpop.f32.mrb[0].mxu0
      %v3972 = vpop.f32.mrb[0].mxu0
      %v3973 = vadd.f32 0.0, %v3972
      %v3974 = vpop.f32.mrb[0].mxu0
      %3975 = vmatprep.mubr.bf16.mxu0 0
      %3976 = vmatmul.mubr.bf16.gmra.mrb[0].mxu0 %v3821
      %v3977 = vpop.f32.mrb[0].mxu0
      %v3978 = vadd.f32 0.0, %v3977
      %v3979 = vpop.f32.mrb[0].mxu0
      %v3980 = vpop.f32.mrb[0].mxu0
      %v3981 = vadd.f32 0.0, %v3980
      %v3982 = vpop.f32.mrb[0].mxu0
      %3983 = vmatprep.mubr.bf16.mxu0 0
      %3984 = vmatmul.mubr.bf16.gmra.mrb[0].mxu0 %v3822
      %v3985 = vpop.f32.mrb[0].mxu0
      %v3986 = vadd.f32 0.0, %v3985
      %v3987 = vpop.f32.mrb[0].mxu0
      %v3988 = vpop.f32.mrb[0].mxu0
      %v3989 = vadd.f32 0.0, %v3988
      %v3990 = vpop.f32.mrb[0].mxu0
      %3991 = vmatprep.mubr.bf16.mxu0 0
      %3992 = vmatmul.mubr.bf16.gmra.mrb[0].mxu0 %v3823
      %v3993 = vpop.f32.mrb[0].mxu0
      %v3994 = vadd.f32 0.0, %v3993
      %v3995 = vpop.f32.mrb[0].mxu0
      %v3996 = vpop.f32.mrb[0].mxu0
      %v3997 = vadd.f32 0.0, %v3996
      %v3998 = vpop.f32.mrb[0].mxu0
      %3999 = vmatprep.mubr.bf16.mxu0 0
      %4000 = vmatmul.mubr.bf16.gmra.mrb[0].mxu0 %v3824
      %v4001 = vpop.f32.mrb[0].mxu0
      %v4002 = vadd.f32 0.0, %v4001
      %v4003 = vpop.f32.mrb[0].mxu0
      %v4004 = vpop.f32.mrb[0].mxu0
      %v4005 = vadd.f32 0.0, %v4004
      %v4006 = vpop.f32.mrb[0].mxu0
      %4007 = vmatprep.mubr.bf16.mxu0 0
      %4008 = vmatmul.mubr.bf16.gmra.mrb[0].mxu0 %v3825
      %v4009 = vpop.f32.mrb[0].mxu0
      %v4010 = vadd.f32 0.0, %v4009
      %v4011 = vpop.f32.mrb[0].mxu0
      %v4012 = vpop.f32.mrb[0].mxu0
      %v4013 = vadd.f32 0.0, %v4012
      %v4014 = vpop.f32.mrb[0].mxu0
      %4015 = vmatprep.mubr.bf16.mxu0 0
      %4016 = vmatmul.mubr.bf16.gmra.mrb[0].mxu0 %v3826
      %v4017 = vpop.f32.mrb[0].mxu0
      %v4018 = vadd.f32 0.0, %v4017
      %v4019 = vpop.f32.mrb[0].mxu0
      %v4020 = vpop.f32.mrb[0].mxu0
      %v4021 = vadd.f32 0.0, %v4020
      %v4022 = vpop.f32.mrb[0].mxu0
      %4023 = vmatprep.mubr.bf16.mxu0 0
      %4024 = vmatmul.mubr.bf16.gmra.mrb[0].mxu0 %v3827
      %v4025 = vpop.f32.mrb[0].mxu0
      %v4026 = vadd.f32 0.0, %v4025
      %v4027 = vpop.f32.mrb[0].mxu0
      %v4028 = vpop.f32.mrb[0].mxu0
      %v4029 = vadd.f32 0.0, %v4028
      %v4030 = vpop.f32.mrb[0].mxu0
      %4031 = vmatprep.mubr.bf16.mxu0 0
      %4032 = vmatmul.mubr.bf16.gmra.mrb[0].mxu0 %v3828
      %v4033 = vpop.f32.mrb[0].mxu0
      %v4034 = vadd.f32 0.0, %v4033
      %v4035 = vpop.f32.mrb[0].mxu0
      %v4036 = vpop.f32.mrb[0].mxu0
      %v4037 = vadd.f32 0.0, %v4036
      %v4038 = vpop.f32.mrb[0].mxu0
      %4039 = vmatprep.mubr.bf16.mxu0 0
      %4040 = vmatmul.mubr.bf16.gmra.mrb[0].mxu0 %v3829
      %v4041 = vpop.f32.mrb[0].mxu0
      %v4042 = vadd.f32 0.0, %v4041
      %v4043 = vpop.f32.mrb[0].mxu0
      %v4044 = vpop.f32.mrb[0].mxu0
      %v4045 = vadd.f32 0.0, %v4044
      %v4046 = vpop.f32.mrb[0].mxu0
      %4047 = vmatprep.mubr.bf16.mxu0 0
      %4048 = vmatmul.mubr.bf16.gmra.mrb[0].mxu0 %v3830
      %v4049 = vpop.f32.mrb[0].mxu0
      %v4050 = vadd.f32 0.0, %v4049
      %v4051 = vpop.f32.mrb[0].mxu0
      %v4052 = vpop.f32.mrb[0].mxu0
      %v4053 = vadd.f32 0.0, %v4052
      %v4054 = vpop.f32.mrb[0].mxu0
      %4055 = vdwg.mxu0
      %v4056 = vadd.f32 %v3575, %v3930
      %v4057 = vadd.f32 %v3576, %v3933
      %v4058 = vadd.f32 %v3577, %v3938
      %v4059 = vadd.f32 %v3578, %v3941
      %v4060 = vadd.f32 %v3579, %v3946
      %v4061 = vadd.f32 %v3580, %v3949
      %v4062 = vadd.f32 %v3581, %v3954
      %v4063 = vadd.f32 %v3582, %v3957
      %v4064 = vadd.f32 %v3583, %v3962
      %v4065 = vadd.f32 %v3584, %v3965
      %v4066 = vadd.f32 %v3585, %v3970
      %v4067 = vadd.f32 %v3586, %v3973
      %v4068 = vadd.f32 %v3587, %v3978
      %v4069 = vadd.f32 %v3588, %v3981
      %v4070 = vadd.f32 %v3589, %v3986
      %v4071 = vadd.f32 %v3590, %v3989
      %v4072 = vadd.f32 %v3591, %v3994
      %v4073 = vadd.f32 %v3592, %v3997
      %v4074 = vadd.f32 %v3593, %v4002
      %v4075 = vadd.f32 %v3594, %v4005
      %v4076 = vadd.f32 %v3595, %v4010
      %v4077 = vadd.f32 %v3596, %v4013
      %v4078 = vadd.f32 %v3597, %v4018
      %v4079 = vadd.f32 %v3598, %v4021
      %v4080 = vadd.f32 %v3599, %v4026
      %v4081 = vadd.f32 %v3600, %v4029
      %v4082 = vadd.f32 %v3601, %v4034
      %v4083 = vadd.f32 %v3602, %v4037
      %v4084 = vadd.f32 %v3603, %v4042
      %v4085 = vadd.f32 %v3604, %v4045
      %v4086 = vadd.f32 %v3605, %v4050
      %v4087 = vadd.f32 %v3606, %v4053
      %s4088 = scalar_lea.vmem [#allocation2], 24
      %v4089 = vld [vmem:[%s4088] sm:$0xf]
      %v4090 = vld [vmem:[%s4088 + $0x4] sm:$0xf]
      %v4091 = vld [vmem:[%s4088 + $0xc] sm:$0xf]
      %v4092 = vld [vmem:[%s4088 + $0x10] sm:$0xf]
      %v4093 = vld [vmem:[%s4088 + $0x18] sm:$0xf]
      %v4094 = vld [vmem:[%s4088 + $0x1c] sm:$0xf]
      %v4095 = vld [vmem:[%s4088 + $0x24] sm:$0xf]
      %v4096 = vld [vmem:[%s4088 + $0x28] sm:$0xf]
      %v4097 = vld [vmem:[%s4088 + $0x30] sm:$0xf]
      %v4098 = vld [vmem:[%s4088 + $0x34] sm:$0xf]
      %v4099 = vld [vmem:[%s4088 + $0x3c] sm:$0xf]
      %v4100 = vld [vmem:[%s4088 + $0x40] sm:$0xf]
      %v4101 = vld [vmem:[%s4088 + $0x48] sm:$0xf]
      %v4102 = vld [vmem:[%s4088 + $0x4c] sm:$0xf]
      %v4103 = vld [vmem:[%s4088 + $0x54] sm:$0xf]
      %v4104 = vld [vmem:[%s4088 + $0x58] sm:$0xf]
      %v4105 = vld [vmem:[%s4088 + $0x60] sm:$0xf]
      %v4106 = vld [vmem:[%s4088 + $0x64] sm:$0xf]
      %v4107 = vld [vmem:[%s4088 + $0x6c] sm:$0xf]
      %v4108 = vld [vmem:[%s4088 + $0x70] sm:$0xf]
      %v4109 = vld [vmem:[%s4088 + $0x78] sm:$0xf]
      %v4110 = vld [vmem:[%s4088 + $0x7c] sm:$0xf]
      %v4111 = vld [vmem:[%s4088 + $0x84] sm:$0xf]
      %v4112 = vld [vmem:[%s4088 + $0x88] sm:$0xf]
      %v4113 = vld [vmem:[%s4088 + $0x90] sm:$0xf]
      %v4114 = vld [vmem:[%s4088 + $0x94] sm:$0xf]
      %v4115 = vld [vmem:[%s4088 + $0x9c] sm:$0xf]
      %v4116 = vld [vmem:[%s4088 + $0xa0] sm:$0xf]
      %v4117 = vld [vmem:[%s4088 + $0xa8] sm:$0xf]
      %v4118 = vld [vmem:[%s4088 + $0xac] sm:$0xf]
      %v4119 = vld [vmem:[%s4088 + $0xb4] sm:$0xf]
      %v4120 = vld [vmem:[%s4088 + $0xb8] sm:$0xf]
      %v4153 = vunpack.c.l.b16 %v4089
      %v4154 = vunpack.c.l.b16 %v4090
      %v4155 = vunpack.c.l.b16 %v4091
      %v4156 = vunpack.c.l.b16 %v4092
      %v4157 = vunpack.c.l.b16 %v4093
      %v4158 = vunpack.c.l.b16 %v4094
      %v4159 = vunpack.c.l.b16 %v4095
      %v4160 = vunpack.c.l.b16 %v4096
      %v4161 = vunpack.c.l.b16 %v4097
      %v4162 = vunpack.c.l.b16 %v4098
      %v4163 = vunpack.c.l.b16 %v4099
      %v4164 = vunpack.c.l.b16 %v4100
      %v4165 = vunpack.c.l.b16 %v4101
      %v4166 = vunpack.c.l.b16 %v4102
      %v4167 = vunpack.c.l.b16 %v4103
      %v4168 = vunpack.c.l.b16 %v4104
      %v4169 = vunpack.c.l.b16 %v4105
      %v4170 = vunpack.c.l.b16 %v4106
      %v4171 = vunpack.c.l.b16 %v4107
      %v4172 = vunpack.c.l.b16 %v4108
      %v4173 = vunpack.c.l.b16 %v4109
      %v4174 = vunpack.c.l.b16 %v4110
      %v4175 = vunpack.c.l.b16 %v4111
      %v4176 = vunpack.c.l.b16 %v4112
      %v4177 = vunpack.c.l.b16 %v4113
      %v4178 = vunpack.c.l.b16 %v4114
      %v4179 = vunpack.c.l.b16 %v4115
      %v4180 = vunpack.c.l.b16 %v4116
      %v4181 = vunpack.c.l.b16 %v4117
      %v4182 = vunpack.c.l.b16 %v4118
      %v4183 = vunpack.c.l.b16 %v4119
      %v4184 = vunpack.c.l.b16 %v4120
      %v4185 = vpack.c.b16 %v4154, %v4153
      %v4186 = vpack.c.b16 %v4156, %v4155
      %v4187 = vpack.c.b16 %v4158, %v4157
      %v4188 = vpack.c.b16 %v4160, %v4159
      %v4189 = vpack.c.b16 %v4162, %v4161
      %v4190 = vpack.c.b16 %v4164, %v4163
      %v4191 = vpack.c.b16 %v4166, %v4165
      %v4192 = vpack.c.b16 %v4168, %v4167
      %v4193 = vpack.c.b16 %v4170, %v4169
      %v4194 = vpack.c.b16 %v4172, %v4171
      %v4195 = vpack.c.b16 %v4174, %v4173
      %v4196 = vpack.c.b16 %v4176, %v4175
      %v4197 = vpack.c.b16 %v4178, %v4177
      %v4198 = vpack.c.b16 %v4180, %v4179
      %v4199 = vpack.c.b16 %v4182, %v4181
      %v4200 = vpack.c.b16 %v4184, %v4183
      %v4233 = vunpack.c.l.b16 %v970
      %v4234 = vunpack.c.l.b16 %v971
      %v4235 = vunpack.c.l.b16 %v972
      %v4236 = vunpack.c.l.b16 %v973
      %v4237 = vunpack.c.l.b16 %v974
      %v4238 = vunpack.c.l.b16 %v975
      %v4239 = vunpack.c.l.b16 %v976
      %v4240 = vunpack.c.l.b16 %v977
      %v4241 = vunpack.c.l.b16 %v978
      %v4242 = vunpack.c.l.b16 %v979
      %v4243 = vunpack.c.l.b16 %v980
      %v4244 = vunpack.c.l.b16 %v981
      %v4245 = vunpack.c.l.b16 %v982
      %v4246 = vunpack.c.l.b16 %v983
      %v4247 = vunpack.c.l.b16 %v984
      %v4248 = vunpack.c.l.b16 %v985
      %v4249 = vpack.c.b16 %v4234, %v4233
      %v4250 = vpack.c.b16 %v4236, %v4235
      %v4251 = vpack.c.b16 %v4238, %v4237
      %v4252 = vpack.c.b16 %v4240, %v4239
      %v4253 = vpack.c.b16 %v4242, %v4241
      %v4254 = vpack.c.b16 %v4244, %v4243
      %v4255 = vpack.c.b16 %v4246, %v4245
      %v4256 = vpack.c.b16 %v4248, %v4247
      %4265 = vmatprep.subr.bf16.mxu0 0
      %4266 = vmatpush1.bf16.msra.mxu0 %v4249
      %4267 = vmatprep.subr.bf16.mxu0 0
      %4268 = vmatpush1.bf16.msra.mxu0 %v4250
      %4269 = vmatprep.subr.bf16.mxu0 0
      %4270 = vmatpush1.bf16.msra.mxu0 %v4251
      %4271 = vmatprep.subr.bf16.mxu0 0
      %4272 = vmatpush1.bf16.msra.mxu0 %v4252
      %4273 = vmatprep.subr.bf16.mxu0 0
      %4274 = vmatpush1.bf16.msra.mxu0 %v4253
      %4275 = vmatprep.subr.bf16.mxu0 0
      %4276 = vmatpush1.bf16.msra.mxu0 %v4254
      %4277 = vmatprep.subr.bf16.mxu0 0
      %4278 = vmatpush1.bf16.msra.mxu0 %v4255
      %4279 = vmatprep.subr.bf16.mxu0 0
      %4280 = vmatpush1.bf16.msra.mxu0 %v4256
      %4281 = vmatprep.subr.bf16.mxu0 0
      %4282 = vmatpush1.bf16.msra.mxu0 0
      %4283 = vmatprep.subr.bf16.mxu0 0
      %4284 = vmatpush1.bf16.msra.mxu0 0
      %4285 = vmatprep.subr.bf16.mxu0 0
      %4286 = vmatpush1.bf16.msra.mxu0 0
      %4287 = vmatprep.subr.bf16.mxu0 0
      %4288 = vmatpush1.bf16.msra.mxu0 0
      %4289 = vmatprep.subr.bf16.mxu0 0
      %4290 = vmatpush1.bf16.msra.mxu0 0
      %4291 = vmatprep.subr.bf16.mxu0 0
      %4292 = vmatpush1.bf16.msra.mxu0 0
      %4293 = vmatprep.subr.bf16.mxu0 0
      %4294 = vmatpush1.bf16.msra.mxu0 0
      %4295 = vmatprep.subr.bf16.mxu0 0
      %4296 = vmatpush1.bf16.msra.mxu0 0
      %4297 = vmatprep.mubr.bf16.mxu0 0
      %4298 = vmatmul.mubr.bf16.gmra.mrb[0].mxu0 %v4185
      %v4299 = vpop.f32.mrb[0].mxu0
      %v4300 = vadd.f32 0.0, %v4299
      %v4301 = vpop.f32.mrb[0].mxu0
      %v4302 = vpop.f32.mrb[0].mxu0
      %v4303 = vadd.f32 0.0, %v4302
      %v4304 = vpop.f32.mrb[0].mxu0
      %4305 = vmatprep.mubr.bf16.mxu0 0
      %4306 = vmatmul.mubr.bf16.gmra.mrb[0].mxu0 %v4186
      %v4307 = vpop.f32.mrb[0].mxu0
      %v4308 = vadd.f32 0.0, %v4307
      %v4309 = vpop.f32.mrb[0].mxu0
      %v4310 = vpop.f32.mrb[0].mxu0
      %v4311 = vadd.f32 0.0, %v4310
      %v4312 = vpop.f32.mrb[0].mxu0
      %4313 = vmatprep.mubr.bf16.mxu0 0
      %4314 = vmatmul.mubr.bf16.gmra.mrb[0].mxu0 %v4187
      %v4315 = vpop.f32.mrb[0].mxu0
      %v4316 = vadd.f32 0.0, %v4315
      %v4317 = vpop.f32.mrb[0].mxu0
      %v4318 = vpop.f32.mrb[0].mxu0
      %v4319 = vadd.f32 0.0, %v4318
      %v4320 = vpop.f32.mrb[0].mxu0
      %4321 = vmatprep.mubr.bf16.mxu0 0
      %4322 = vmatmul.mubr.bf16.gmra.mrb[0].mxu0 %v4188
      %v4323 = vpop.f32.mrb[0].mxu0
      %v4324 = vadd.f32 0.0, %v4323
      %v4325 = vpop.f32.mrb[0].mxu0
      %v4326 = vpop.f32.mrb[0].mxu0
      %v4327 = vadd.f32 0.0, %v4326
      %v4328 = vpop.f32.mrb[0].mxu0
      %4329 = vmatprep.mubr.bf16.mxu0 0
      %4330 = vmatmul.mubr.bf16.gmra.mrb[0].mxu0 %v4189
      %v4331 = vpop.f32.mrb[0].mxu0
      %v4332 = vadd.f32 0.0, %v4331
      %v4333 = vpop.f32.mrb[0].mxu0
      %v4334 = vpop.f32.mrb[0].mxu0
      %v4335 = vadd.f32 0.0, %v4334
      %v4336 = vpop.f32.mrb[0].mxu0
      %4337 = vmatprep.mubr.bf16.mxu0 0
      %4338 = vmatmul.mubr.bf16.gmra.mrb[0].mxu0 %v4190
      %v4339 = vpop.f32.mrb[0].mxu0
      %v4340 = vadd.f32 0.0, %v4339
      %v4341 = vpop.f32.mrb[0].mxu0
      %v4342 = vpop.f32.mrb[0].mxu0
      %v4343 = vadd.f32 0.0, %v4342
      %v4344 = vpop.f32.mrb[0].mxu0
      %4345 = vmatprep.mubr.bf16.mxu0 0
      %4346 = vmatmul.mubr.bf16.gmra.mrb[0].mxu0 %v4191
      %v4347 = vpop.f32.mrb[0].mxu0
      %v4348 = vadd.f32 0.0, %v4347
      %v4349 = vpop.f32.mrb[0].mxu0
      %v4350 = vpop.f32.mrb[0].mxu0
      %v4351 = vadd.f32 0.0, %v4350
      %v4352 = vpop.f32.mrb[0].mxu0
      %4353 = vmatprep.mubr.bf16.mxu0 0
      %4354 = vmatmul.mubr.bf16.gmra.mrb[0].mxu0 %v4192
      %v4355 = vpop.f32.mrb[0].mxu0
      %v4356 = vadd.f32 0.0, %v4355
      %v4357 = vpop.f32.mrb[0].mxu0
      %v4358 = vpop.f32.mrb[0].mxu0
      %v4359 = vadd.f32 0.0, %v4358
      %v4360 = vpop.f32.mrb[0].mxu0
      %4361 = vmatprep.mubr.bf16.mxu0 0
      %4362 = vmatmul.mubr.bf16.gmra.mrb[0].mxu0 %v4193
      %v4363 = vpop.f32.mrb[0].mxu0
      %v4364 = vadd.f32 0.0, %v4363
      %v4365 = vpop.f32.mrb[0].mxu0
      %v4366 = vpop.f32.mrb[0].mxu0
      %v4367 = vadd.f32 0.0, %v4366
      %v4368 = vpop.f32.mrb[0].mxu0
      %4369 = vmatprep.mubr.bf16.mxu0 0
      %4370 = vmatmul.mubr.bf16.gmra.mrb[0].mxu0 %v4194
      %v4371 = vpop.f32.mrb[0].mxu0
      %v4372 = vadd.f32 0.0, %v4371
      %v4373 = vpop.f32.mrb[0].mxu0
      %v4374 = vpop.f32.mrb[0].mxu0
      %v4375 = vadd.f32 0.0, %v4374
      %v4376 = vpop.f32.mrb[0].mxu0
      %4377 = vmatprep.mubr.bf16.mxu0 0
      %4378 = vmatmul.mubr.bf16.gmra.mrb[0].mxu0 %v4195
      %v4379 = vpop.f32.mrb[0].mxu0
      %v4380 = vadd.f32 0.0, %v4379
      %v4381 = vpop.f32.mrb[0].mxu0
      %v4382 = vpop.f32.mrb[0].mxu0
      %v4383 = vadd.f32 0.0, %v4382
      %v4384 = vpop.f32.mrb[0].mxu0
      %4385 = vmatprep.mubr.bf16.mxu0 0
      %4386 = vmatmul.mubr.bf16.gmra.mrb[0].mxu0 %v4196
      %v4387 = vpop.f32.mrb[0].mxu0
      %v4388 = vadd.f32 0.0, %v4387
      %v4389 = vpop.f32.mrb[0].mxu0
      %v4390 = vpop.f32.mrb[0].mxu0
      %v4391 = vadd.f32 0.0, %v4390
      %v4392 = vpop.f32.mrb[0].mxu0
      %4393 = vmatprep.mubr.bf16.mxu0 0
      %4394 = vmatmul.mubr.bf16.gmra.mrb[0].mxu0 %v4197
      %v4395 = vpop.f32.mrb[0].mxu0
      %v4396 = vadd.f32 0.0, %v4395
      %v4397 = vpop.f32.mrb[0].mxu0
      %v4398 = vpop.f32.mrb[0].mxu0
      %v4399 = vadd.f32 0.0, %v4398
      %v4400 = vpop.f32.mrb[0].mxu0
      %4401 = vmatprep.mubr.bf16.mxu0 0
      %4402 = vmatmul.mubr.bf16.gmra.mrb[0].mxu0 %v4198
      %v4403 = vpop.f32.mrb[0].mxu0
      %v4404 = vadd.f32 0.0, %v4403
      %v4405 = vpop.f32.mrb[0].mxu0
      %v4406 = vpop.f32.mrb[0].mxu0
      %v4407 = vadd.f32 0.0, %v4406
      %v4408 = vpop.f32.mrb[0].mxu0
      %4409 = vmatprep.mubr.bf16.mxu0 0
      %4410 = vmatmul.mubr.bf16.gmra.mrb[0].mxu0 %v4199
      %v4411 = vpop.f32.mrb[0].mxu0
      %v4412 = vadd.f32 0.0, %v4411
      %v4413 = vpop.f32.mrb[0].mxu0
      %v4414 = vpop.f32.mrb[0].mxu0
      %v4415 = vadd.f32 0.0, %v4414
      %v4416 = vpop.f32.mrb[0].mxu0
      %4417 = vmatprep.mubr.bf16.mxu0 0
      %4418 = vmatmul.mubr.bf16.gmra.mrb[0].mxu0 %v4200
      %v4419 = vpop.f32.mrb[0].mxu0
      %v4420 = vadd.f32 0.0, %v4419
      %v4421 = vpop.f32.mrb[0].mxu0
      %v4422 = vpop.f32.mrb[0].mxu0
      %v4423 = vadd.f32 0.0, %v4422
      %v4424 = vpop.f32.mrb[0].mxu0
      %4425 = vdwg.mxu0
      %v4426 = vadd.f32 %v4056, %v4300
      %v4427 = vadd.f32 %v4057, %v4303
      %v4428 = vadd.f32 %v4058, %v4308
      %v4429 = vadd.f32 %v4059, %v4311
      %v4430 = vadd.f32 %v4060, %v4316
      %v4431 = vadd.f32 %v4061, %v4319
      %v4432 = vadd.f32 %v4062, %v4324
      %v4433 = vadd.f32 %v4063, %v4327
      %v4434 = vadd.f32 %v4064, %v4332
      %v4435 = vadd.f32 %v4065, %v4335
      %v4436 = vadd.f32 %v4066, %v4340
      %v4437 = vadd.f32 %v4067, %v4343
      %v4438 = vadd.f32 %v4068, %v4348
      %v4439 = vadd.f32 %v4069, %v4351
      %v4440 = vadd.f32 %v4070, %v4356
      %v4441 = vadd.f32 %v4071, %v4359
      %v4442 = vadd.f32 %v4072, %v4364
      %v4443 = vadd.f32 %v4073, %v4367
      %v4444 = vadd.f32 %v4074, %v4372
      %v4445 = vadd.f32 %v4075, %v4375
      %v4446 = vadd.f32 %v4076, %v4380
      %v4447 = vadd.f32 %v4077, %v4383
      %v4448 = vadd.f32 %v4078, %v4388
      %v4449 = vadd.f32 %v4079, %v4391
      %v4450 = vadd.f32 %v4080, %v4396
      %v4451 = vadd.f32 %v4081, %v4399
      %v4452 = vadd.f32 %v4082, %v4404
      %v4453 = vadd.f32 %v4083, %v4407
      %v4454 = vadd.f32 %v4084, %v4412
      %v4455 = vadd.f32 %v4085, %v4415
      %v4456 = vadd.f32 %v4086, %v4420
      %v4457 = vadd.f32 %v4087, %v4423
      %v4458 = vld [vmem:[%s4088] sm:$0xf]
      %v4459 = vld [vmem:[%s4088 + $0x4] sm:$0xf]
      %v4460 = vld [vmem:[%s4088 + $0x8] sm:$0x1]
      %v4461 = vld [vmem:[%s4088 + $0xc] sm:$0xf]
      %v4462 = vld [vmem:[%s4088 + $0x10] sm:$0xf]
      %v4463 = vld [vmem:[%s4088 + $0x14] sm:$0x1]
      %v4464 = vld [vmem:[%s4088 + $0x18] sm:$0xf]
      %v4465 = vld [vmem:[%s4088 + $0x1c] sm:$0xf]
      %v4466 = vld [vmem:[%s4088 + $0x20] sm:$0x1]
      %v4467 = vld [vmem:[%s4088 + $0x24] sm:$0xf]
      %v4468 = vld [vmem:[%s4088 + $0x28] sm:$0xf]
      %v4469 = vld [vmem:[%s4088 + $0x2c] sm:$0x1]
      %v4470 = vld [vmem:[%s4088 + $0x30] sm:$0xf]
      %v4471 = vld [vmem:[%s4088 + $0x34] sm:$0xf]
      %v4472 = vld [vmem:[%s4088 + $0x38] sm:$0x1]
      %v4473 = vld [vmem:[%s4088 + $0x3c] sm:$0xf]
      %v4474 = vld [vmem:[%s4088 + $0x40] sm:$0xf]
      %v4475 = vld [vmem:[%s4088 + $0x44] sm:$0x1]
      %v4476 = vld [vmem:[%s4088 + $0x48] sm:$0xf]
      %v4477 = vld [vmem:[%s4088 + $0x4c] sm:$0xf]
      %v4478 = vld [vmem:[%s4088 + $0x50] sm:$0x1]
      %v4479 = vld [vmem:[%s4088 + $0x54] sm:$0xf]
      %v4480 = vld [vmem:[%s4088 + $0x58] sm:$0xf]
      %v4481 = vld [vmem:[%s4088 + $0x5c] sm:$0x1]
      %v4482 = vld [vmem:[%s4088 + $0x60] sm:$0xf]
      %v4483 = vld [vmem:[%s4088 + $0x64] sm:$0xf]
      %v4484 = vld [vmem:[%s4088 + $0x68] sm:$0x1]
      %v4485 = vld [vmem:[%s4088 + $0x6c] sm:$0xf]
      %v4486 = vld [vmem:[%s4088 + $0x70] sm:$0xf]
      %v4487 = vld [vmem:[%s4088 + $0x74] sm:$0x1]
      %v4488 = vld [vmem:[%s4088 + $0x78] sm:$0xf]
      %v4489 = vld [vmem:[%s4088 + $0x7c] sm:$0xf]
      %v4490 = vld [vmem:[%s4088 + $0x80] sm:$0x1]
      %v4491 = vld [vmem:[%s4088 + $0x84] sm:$0xf]
      %v4492 = vld [vmem:[%s4088 + $0x88] sm:$0xf]
      %v4493 = vld [vmem:[%s4088 + $0x8c] sm:$0x1]
      %v4494 = vld [vmem:[%s4088 + $0x90] sm:$0xf]
      %v4495 = vld [vmem:[%s4088 + $0x94] sm:$0xf]
      %v4496 = vld [vmem:[%s4088 + $0x98] sm:$0x1]
      %v4497 = vld [vmem:[%s4088 + $0x9c] sm:$0xf]
      %v4498 = vld [vmem:[%s4088 + $0xa0] sm:$0xf]
      %v4499 = vld [vmem:[%s4088 + $0xa4] sm:$0x1]
      %v4500 = vld [vmem:[%s4088 + $0xa8] sm:$0xf]
      %v4501 = vld [vmem:[%s4088 + $0xac] sm:$0xf]
      %v4502 = vld [vmem:[%s4088 + $0xb0] sm:$0x1]
      %v4503 = vld [vmem:[%s4088 + $0xb4] sm:$0xf]
      %v4504 = vld [vmem:[%s4088 + $0xb8] sm:$0xf]
      %v4505 = vld [vmem:[%s4088 + $0xbc] sm:$0x1]
      %v4507 = vshrl.u32 %v4458, 16
      %v4509 = vrot.slane %v4507, 4
      %v4510 = vshll.u32 %v4458, 16
      %v4512 = vrot.slane %v4510, 5
      %v4513 = vor.u32 %v4509, %v4512
      %v4514 = vrot.slane %v4513, 4
      %v4516 = vshll.u32 %v4459, 16
      %v4518 = vrot.slane %v4516, 5
      %v4519 = vsel %vm1070, %v4514, %v4518
      %v4520 = vshrl.u32 %v4459, 16
      %v4522 = vrot.slane %v4520, 4
      %v4523 = vor.u32 %v4522, %v4518
      %v4524 = vrot.slane %v4523, 4
      %v4526 = vshll.u32 %v4460, 16
      %v4528 = vrot.slane %v4526, 5
      %v4529 = vsel %vm1070, %v4524, %v4528
      %v4531 = vshrl.u32 %v4461, 16
      %v4533 = vrot.slane %v4531, 4
      %v4534 = vshll.u32 %v4461, 16
      %v4536 = vrot.slane %v4534, 5
      %v4537 = vor.u32 %v4533, %v4536
      %v4538 = vrot.slane %v4537, 4
      %v4540 = vshll.u32 %v4462, 16
      %v4542 = vrot.slane %v4540, 5
      %v4543 = vsel %vm1070, %v4538, %v4542
      %v4544 = vshrl.u32 %v4462, 16
      %v4546 = vrot.slane %v4544, 4
      %v4547 = vor.u32 %v4546, %v4542
      %v4548 = vrot.slane %v4547, 4
      %v4550 = vshll.u32 %v4463, 16
      %v4552 = vrot.slane %v4550, 5
      %v4553 = vsel %vm1070, %v4548, %v4552
      %v4555 = vshrl.u32 %v4464, 16
      %v4557 = vrot.slane %v4555, 4
      %v4558 = vshll.u32 %v4464, 16
      %v4560 = vrot.slane %v4558, 5
      %v4561 = vor.u32 %v4557, %v4560
      %v4562 = vrot.slane %v4561, 4
      %v4564 = vshll.u32 %v4465, 16
      %v4566 = vrot.slane %v4564, 5
      %v4567 = vsel %vm1070, %v4562, %v4566
      %v4568 = vshrl.u32 %v4465, 16
      %v4570 = vrot.slane %v4568, 4
      %v4571 = vor.u32 %v4570, %v4566
      %v4572 = vrot.slane %v4571, 4
      %v4574 = vshll.u32 %v4466, 16
      %v4576 = vrot.slane %v4574, 5
      %v4577 = vsel %vm1070, %v4572, %v4576
      %v4579 = vshrl.u32 %v4467, 16
      %v4581 = vrot.slane %v4579, 4
      %v4582 = vshll.u32 %v4467, 16
      %v4584 = vrot.slane %v4582, 5
      %v4585 = vor.u32 %v4581, %v4584
      %v4586 = vrot.slane %v4585, 4
      %v4588 = vshll.u32 %v4468, 16
      %v4590 = vrot.slane %v4588, 5
      %v4591 = vsel %vm1070, %v4586, %v4590
      %v4592 = vshrl.u32 %v4468, 16
      %v4594 = vrot.slane %v4592, 4
      %v4595 = vor.u32 %v4594, %v4590
      %v4596 = vrot.slane %v4595, 4
      %v4598 = vshll.u32 %v4469, 16
      %v4600 = vrot.slane %v4598, 5
      %v4601 = vsel %vm1070, %v4596, %v4600
      %v4603 = vshrl.u32 %v4470, 16
      %v4605 = vrot.slane %v4603, 4
      %v4606 = vshll.u32 %v4470, 16
      %v4608 = vrot.slane %v4606, 5
      %v4609 = vor.u32 %v4605, %v4608
      %v4610 = vrot.slane %v4609, 4
      %v4612 = vshll.u32 %v4471, 16
      %v4614 = vrot.slane %v4612, 5
      %v4615 = vsel %vm1070, %v4610, %v4614
      %v4616 = vshrl.u32 %v4471, 16
      %v4618 = vrot.slane %v4616, 4
      %v4619 = vor.u32 %v4618, %v4614
      %v4620 = vrot.slane %v4619, 4
      %v4622 = vshll.u32 %v4472, 16
      %v4624 = vrot.slane %v4622, 5
      %v4625 = vsel %vm1070, %v4620, %v4624
      %v4627 = vshrl.u32 %v4473, 16
      %v4629 = vrot.slane %v4627, 4
      %v4630 = vshll.u32 %v4473, 16
      %v4632 = vrot.slane %v4630, 5
      %v4633 = vor.u32 %v4629, %v4632
      %v4634 = vrot.slane %v4633, 4
      %v4636 = vshll.u32 %v4474, 16
      %v4638 = vrot.slane %v4636, 5
      %v4639 = vsel %vm1070, %v4634, %v4638
      %v4640 = vshrl.u32 %v4474, 16
      %v4642 = vrot.slane %v4640, 4
      %v4643 = vor.u32 %v4642, %v4638
      %v4644 = vrot.slane %v4643, 4
      %v4646 = vshll.u32 %v4475, 16
      %v4648 = vrot.slane %v4646, 5
      %v4649 = vsel %vm1070, %v4644, %v4648
      %v4651 = vshrl.u32 %v4476, 16
      %v4653 = vrot.slane %v4651, 4
      %v4654 = vshll.u32 %v4476, 16
      %v4656 = vrot.slane %v4654, 5
      %v4657 = vor.u32 %v4653, %v4656
      %v4658 = vrot.slane %v4657, 4
      %v4660 = vshll.u32 %v4477, 16
      %v4662 = vrot.slane %v4660, 5
      %v4663 = vsel %vm1070, %v4658, %v4662
      %v4664 = vshrl.u32 %v4477, 16
      %v4666 = vrot.slane %v4664, 4
      %v4667 = vor.u32 %v4666, %v4662
      %v4668 = vrot.slane %v4667, 4
      %v4670 = vshll.u32 %v4478, 16
      %v4672 = vrot.slane %v4670, 5
      %v4673 = vsel %vm1070, %v4668, %v4672
      %v4675 = vshrl.u32 %v4479, 16
      %v4677 = vrot.slane %v4675, 4
      %v4678 = vshll.u32 %v4479, 16
      %v4680 = vrot.slane %v4678, 5
      %v4681 = vor.u32 %v4677, %v4680
      %v4682 = vrot.slane %v4681, 4
      %v4684 = vshll.u32 %v4480, 16
      %v4686 = vrot.slane %v4684, 5
      %v4687 = vsel %vm1070, %v4682, %v4686
      %v4688 = vshrl.u32 %v4480, 16
      %v4690 = vrot.slane %v4688, 4
      %v4691 = vor.u32 %v4690, %v4686
      %v4692 = vrot.slane %v4691, 4
      %v4694 = vshll.u32 %v4481, 16
      %v4696 = vrot.slane %v4694, 5
      %v4697 = vsel %vm1070, %v4692, %v4696
      %v4699 = vshrl.u32 %v4482, 16
      %v4701 = vrot.slane %v4699, 4
      %v4702 = vshll.u32 %v4482, 16
      %v4704 = vrot.slane %v4702, 5
      %v4705 = vor.u32 %v4701, %v4704
      %v4706 = vrot.slane %v4705, 4
      %v4708 = vshll.u32 %v4483, 16
      %v4710 = vrot.slane %v4708, 5
      %v4711 = vsel %vm1070, %v4706, %v4710
      %v4712 = vshrl.u32 %v4483, 16
      %v4714 = vrot.slane %v4712, 4
      %v4715 = vor.u32 %v4714, %v4710
      %v4716 = vrot.slane %v4715, 4
      %v4718 = vshll.u32 %v4484, 16
      %v4720 = vrot.slane %v4718, 5
      %v4721 = vsel %vm1070, %v4716, %v4720
      %v4723 = vshrl.u32 %v4485, 16
      %v4725 = vrot.slane %v4723, 4
      %v4726 = vshll.u32 %v4485, 16
      %v4728 = vrot.slane %v4726, 5
      %v4729 = vor.u32 %v4725, %v4728
      %v4730 = vrot.slane %v4729, 4
      %v4732 = vshll.u32 %v4486, 16
      %v4734 = vrot.slane %v4732, 5
      %v4735 = vsel %vm1070, %v4730, %v4734
      %v4736 = vshrl.u32 %v4486, 16
      %v4738 = vrot.slane %v4736, 4
      %v4739 = vor.u32 %v4738, %v4734
      %v4740 = vrot.slane %v4739, 4
      %v4742 = vshll.u32 %v4487, 16
      %v4744 = vrot.slane %v4742, 5
      %v4745 = vsel %vm1070, %v4740, %v4744
      %v4747 = vshrl.u32 %v4488, 16
      %v4749 = vrot.slane %v4747, 4
      %v4750 = vshll.u32 %v4488, 16
      %v4752 = vrot.slane %v4750, 5
      %v4753 = vor.u32 %v4749, %v4752
      %v4754 = vrot.slane %v4753, 4
      %v4756 = vshll.u32 %v4489, 16
      %v4758 = vrot.slane %v4756, 5
      %v4759 = vsel %vm1070, %v4754, %v4758
      %v4760 = vshrl.u32 %v4489, 16
      %v4762 = vrot.slane %v4760, 4
      %v4763 = vor.u32 %v4762, %v4758
      %v4764 = vrot.slane %v4763, 4
      %v4766 = vshll.u32 %v4490, 16
      %v4768 = vrot.slane %v4766, 5
      %v4769 = vsel %vm1070, %v4764, %v4768
      %v4771 = vshrl.u32 %v4491, 16
      %v4773 = vrot.slane %v4771, 4
      %v4774 = vshll.u32 %v4491, 16
      %v4776 = vrot.slane %v4774, 5
      %v4777 = vor.u32 %v4773, %v4776
      %v4778 = vrot.slane %v4777, 4
      %v4780 = vshll.u32 %v4492, 16
      %v4782 = vrot.slane %v4780, 5
      %v4783 = vsel %vm1070, %v4778, %v4782
      %v4784 = vshrl.u32 %v4492, 16
      %v4786 = vrot.slane %v4784, 4
      %v4787 = vor.u32 %v4786, %v4782
      %v4788 = vrot.slane %v4787, 4
      %v4790 = vshll.u32 %v4493, 16
      %v4792 = vrot.slane %v4790, 5
      %v4793 = vsel %vm1070, %v4788, %v4792
      %v4795 = vshrl.u32 %v4494, 16
      %v4797 = vrot.slane %v4795, 4
      %v4798 = vshll.u32 %v4494, 16
      %v4800 = vrot.slane %v4798, 5
      %v4801 = vor.u32 %v4797, %v4800
      %v4802 = vrot.slane %v4801, 4
      %v4804 = vshll.u32 %v4495, 16
      %v4806 = vrot.slane %v4804, 5
      %v4807 = vsel %vm1070, %v4802, %v4806
      %v4808 = vshrl.u32 %v4495, 16
      %v4810 = vrot.slane %v4808, 4
      %v4811 = vor.u32 %v4810, %v4806
      %v4812 = vrot.slane %v4811, 4
      %v4814 = vshll.u32 %v4496, 16
      %v4816 = vrot.slane %v4814, 5
      %v4817 = vsel %vm1070, %v4812, %v4816
      %v4819 = vshrl.u32 %v4497, 16
      %v4821 = vrot.slane %v4819, 4
      %v4822 = vshll.u32 %v4497, 16
      %v4824 = vrot.slane %v4822, 5
      %v4825 = vor.u32 %v4821, %v4824
      %v4826 = vrot.slane %v4825, 4
      %v4828 = vshll.u32 %v4498, 16
      %v4830 = vrot.slane %v4828, 5
      %v4831 = vsel %vm1070, %v4826, %v4830
      %v4832 = vshrl.u32 %v4498, 16
      %v4834 = vrot.slane %v4832, 4
      %v4835 = vor.u32 %v4834, %v4830
      %v4836 = vrot.slane %v4835, 4
      %v4838 = vshll.u32 %v4499, 16
      %v4840 = vrot.slane %v4838, 5
      %v4841 = vsel %vm1070, %v4836, %v4840
      %v4843 = vshrl.u32 %v4500, 16
      %v4845 = vrot.slane %v4843, 4
      %v4846 = vshll.u32 %v4500, 16
      %v4848 = vrot.slane %v4846, 5
      %v4849 = vor.u32 %v4845, %v4848
      %v4850 = vrot.slane %v4849, 4
      %v4852 = vshll.u32 %v4501, 16
      %v4854 = vrot.slane %v4852, 5
      %v4855 = vsel %vm1070, %v4850, %v4854
      %v4856 = vshrl.u32 %v4501, 16
      %v4858 = vrot.slane %v4856, 4
      %v4859 = vor.u32 %v4858, %v4854
      %v4860 = vrot.slane %v4859, 4
      %v4862 = vshll.u32 %v4502, 16
      %v4864 = vrot.slane %v4862, 5
      %v4865 = vsel %vm1070, %v4860, %v4864
      %v4867 = vshrl.u32 %v4503, 16
      %v4869 = vrot.slane %v4867, 4
      %v4870 = vshll.u32 %v4503, 16
      %v4872 = vrot.slane %v4870, 5
      %v4873 = vor.u32 %v4869, %v4872
      %v4874 = vrot.slane %v4873, 4
      %v4876 = vshll.u32 %v4504, 16
      %v4878 = vrot.slane %v4876, 5
      %v4879 = vsel %vm1070, %v4874, %v4878
      %v4880 = vshrl.u32 %v4504, 16
      %v4882 = vrot.slane %v4880, 4
      %v4883 = vor.u32 %v4882, %v4878
      %v4884 = vrot.slane %v4883, 4
      %v4886 = vshll.u32 %v4505, 16
      %v4888 = vrot.slane %v4886, 5
      %v4889 = vsel %vm1070, %v4884, %v4888
      %v4890 = vunpack.c.l.b16 %v4519
      %v4891 = vunpack.c.l.b16 %v4529
      %v4892 = vunpack.c.l.b16 %v4543
      %v4893 = vunpack.c.l.b16 %v4553
      %v4894 = vunpack.c.l.b16 %v4567
      %v4895 = vunpack.c.l.b16 %v4577
      %v4896 = vunpack.c.l.b16 %v4591
      %v4897 = vunpack.c.l.b16 %v4601
      %v4898 = vunpack.c.l.b16 %v4615
      %v4899 = vunpack.c.l.b16 %v4625
      %v4900 = vunpack.c.l.b16 %v4639
      %v4901 = vunpack.c.l.b16 %v4649
      %v4902 = vunpack.c.l.b16 %v4663
      %v4903 = vunpack.c.l.b16 %v4673
      %v4904 = vunpack.c.l.b16 %v4687
      %v4905 = vunpack.c.l.b16 %v4697
      %v4906 = vunpack.c.l.b16 %v4711
      %v4907 = vunpack.c.l.b16 %v4721
      %v4908 = vunpack.c.l.b16 %v4735
      %v4909 = vunpack.c.l.b16 %v4745
      %v4910 = vunpack.c.l.b16 %v4759
      %v4911 = vunpack.c.l.b16 %v4769
      %v4912 = vunpack.c.l.b16 %v4783
      %v4913 = vunpack.c.l.b16 %v4793
      %v4914 = vunpack.c.l.b16 %v4807
      %v4915 = vunpack.c.l.b16 %v4817
      %v4916 = vunpack.c.l.b16 %v4831
      %v4917 = vunpack.c.l.b16 %v4841
      %v4918 = vunpack.c.l.b16 %v4855
      %v4919 = vunpack.c.l.b16 %v4865
      %v4920 = vunpack.c.l.b16 %v4879
      %v4921 = vunpack.c.l.b16 %v4889
      %v4922 = vpack.c.b16 %v4891, %v4890
      %v4923 = vpack.c.b16 %v4893, %v4892
      %v4924 = vpack.c.b16 %v4895, %v4894
      %v4925 = vpack.c.b16 %v4897, %v4896
      %v4926 = vpack.c.b16 %v4899, %v4898
      %v4927 = vpack.c.b16 %v4901, %v4900
      %v4928 = vpack.c.b16 %v4903, %v4902
      %v4929 = vpack.c.b16 %v4905, %v4904
      %v4930 = vpack.c.b16 %v4907, %v4906
      %v4931 = vpack.c.b16 %v4909, %v4908
      %v4932 = vpack.c.b16 %v4911, %v4910
      %v4933 = vpack.c.b16 %v4913, %v4912
      %v4934 = vpack.c.b16 %v4915, %v4914
      %v4935 = vpack.c.b16 %v4917, %v4916
      %v4936 = vpack.c.b16 %v4919, %v4918
      %v4937 = vpack.c.b16 %v4921, %v4920
      %v4970 = vunpack.c.l.b16 %v987
      %v4971 = vunpack.c.l.b16 %v988
      %v4972 = vunpack.c.l.b16 %v989
      %v4973 = vunpack.c.l.b16 %v990
      %v4974 = vunpack.c.l.b16 %v991
      %v4975 = vunpack.c.l.b16 %v992
      %v4976 = vunpack.c.l.b16 %v993
      %v4977 = vunpack.c.l.b16 %v994
      %v4978 = vunpack.c.l.b16 %v995
      %v4979 = vunpack.c.l.b16 %v996
      %v4980 = vunpack.c.l.b16 %v997
      %v4981 = vunpack.c.l.b16 %v998
      %v4982 = vunpack.c.l.b16 %v999
      %v4983 = vunpack.c.l.b16 %v1000
      %v4984 = vunpack.c.l.b16 %v1001
      %v4985 = vunpack.c.l.b16 %v1002
      %v4986 = vpack.c.b16 %v4971, %v4970
      %v4987 = vpack.c.b16 %v4973, %v4972
      %v4988 = vpack.c.b16 %v4975, %v4974
      %v4989 = vpack.c.b16 %v4977, %v4976
      %v4990 = vpack.c.b16 %v4979, %v4978
      %v4991 = vpack.c.b16 %v4981, %v4980
      %v4992 = vpack.c.b16 %v4983, %v4982
      %v4993 = vpack.c.b16 %v4985, %v4984
      %5002 = vmatprep.subr.bf16.mxu0 0
      %5003 = vmatpush1.bf16.msra.mxu0 %v4986
      %5004 = vmatprep.subr.bf16.mxu0 0
      %5005 = vmatpush1.bf16.msra.mxu0 %v4987
      %5006 = vmatprep.subr.bf16.mxu0 0
      %5007 = vmatpush1.bf16.msra.mxu0 %v4988
      %5008 = vmatprep.subr.bf16.mxu0 0
      %5009 = vmatpush1.bf16.msra.mxu0 %v4989
      %5010 = vmatprep.subr.bf16.mxu0 0
      %5011 = vmatpush1.bf16.msra.mxu0 %v4990
      %5012 = vmatprep.subr.bf16.mxu0 0
      %5013 = vmatpush1.bf16.msra.mxu0 %v4991
      %5014 = vmatprep.subr.bf16.mxu0 0
      %5015 = vmatpush1.bf16.msra.mxu0 %v4992
      %5016 = vmatprep.subr.bf16.mxu0 0
      %5017 = vmatpush1.bf16.msra.mxu0 %v4993
      %5018 = vmatprep.subr.bf16.mxu0 0
      %5019 = vmatpush1.bf16.msra.mxu0 0
      %5020 = vmatprep.subr.bf16.mxu0 0
      %5021 = vmatpush1.bf16.msra.mxu0 0
      %5022 = vmatprep.subr.bf16.mxu0 0
      %5023 = vmatpush1.bf16.msra.mxu0 0
      %5024 = vmatprep.subr.bf16.mxu0 0
      %5025 = vmatpush1.bf16.msra.mxu0 0
      %5026 = vmatprep.subr.bf16.mxu0 0
      %5027 = vmatpush1.bf16.msra.mxu0 0
      %5028 = vmatprep.subr.bf16.mxu0 0
      %5029 = vmatpush1.bf16.msra.mxu0 0
      %5030 = vmatprep.subr.bf16.mxu0 0
      %5031 = vmatpush1.bf16.msra.mxu0 0
      %5032 = vmatprep.subr.bf16.mxu0 0
      %5033 = vmatpush1.bf16.msra.mxu0 0
      %5034 = vmatprep.mubr.bf16.mxu0 0
      %5035 = vmatmul.mubr.bf16.gmra.mrb[0].mxu0 %v4922
      %v5036 = vpop.f32.mrb[0].mxu0
      %v5037 = vadd.f32 0.0, %v5036
      %v5038 = vpop.f32.mrb[0].mxu0
      %v5039 = vpop.f32.mrb[0].mxu0
      %v5040 = vadd.f32 0.0, %v5039
      %v5041 = vpop.f32.mrb[0].mxu0
      %5042 = vmatprep.mubr.bf16.mxu0 0
      %5043 = vmatmul.mubr.bf16.gmra.mrb[0].mxu0 %v4923
      %v5044 = vpop.f32.mrb[0].mxu0
      %v5045 = vadd.f32 0.0, %v5044
      %v5046 = vpop.f32.mrb[0].mxu0
      %v5047 = vpop.f32.mrb[0].mxu0
      %v5048 = vadd.f32 0.0, %v5047
      %v5049 = vpop.f32.mrb[0].mxu0
      %5050 = vmatprep.mubr.bf16.mxu0 0
      %5051 = vmatmul.mubr.bf16.gmra.mrb[0].mxu0 %v4924
      %v5052 = vpop.f32.mrb[0].mxu0
      %v5053 = vadd.f32 0.0, %v5052
      %v5054 = vpop.f32.mrb[0].mxu0
      %v5055 = vpop.f32.mrb[0].mxu0
      %v5056 = vadd.f32 0.0, %v5055
      %v5057 = vpop.f32.mrb[0].mxu0
      %5058 = vmatprep.mubr.bf16.mxu0 0
      %5059 = vmatmul.mubr.bf16.gmra.mrb[0].mxu0 %v4925
      %v5060 = vpop.f32.mrb[0].mxu0
      %v5061 = vadd.f32 0.0, %v5060
      %v5062 = vpop.f32.mrb[0].mxu0
      %v5063 = vpop.f32.mrb[0].mxu0
      %v5064 = vadd.f32 0.0, %v5063
      %v5065 = vpop.f32.mrb[0].mxu0
      %5066 = vmatprep.mubr.bf16.mxu0 0
      %5067 = vmatmul.mubr.bf16.gmra.mrb[0].mxu0 %v4926
      %v5068 = vpop.f32.mrb[0].mxu0
      %v5069 = vadd.f32 0.0, %v5068
      %v5070 = vpop.f32.mrb[0].mxu0
      %v5071 = vpop.f32.mrb[0].mxu0
      %v5072 = vadd.f32 0.0, %v5071
      %v5073 = vpop.f32.mrb[0].mxu0
      %5074 = vmatprep.mubr.bf16.mxu0 0
      %5075 = vmatmul.mubr.bf16.gmra.mrb[0].mxu0 %v4927
      %v5076 = vpop.f32.mrb[0].mxu0
      %v5077 = vadd.f32 0.0, %v5076
      %v5078 = vpop.f32.mrb[0].mxu0
      %v5079 = vpop.f32.mrb[0].mxu0
      %v5080 = vadd.f32 0.0, %v5079
      %v5081 = vpop.f32.mrb[0].mxu0
      %5082 = vmatprep.mubr.bf16.mxu0 0
      %5083 = vmatmul.mubr.bf16.gmra.mrb[0].mxu0 %v4928
      %v5084 = vpop.f32.mrb[0].mxu0
      %v5085 = vadd.f32 0.0, %v5084
      %v5086 = vpop.f32.mrb[0].mxu0
      %v5087 = vpop.f32.mrb[0].mxu0
      %v5088 = vadd.f32 0.0, %v5087
      %v5089 = vpop.f32.mrb[0].mxu0
      %5090 = vmatprep.mubr.bf16.mxu0 0
      %5091 = vmatmul.mubr.bf16.gmra.mrb[0].mxu0 %v4929
      %v5092 = vpop.f32.mrb[0].mxu0
      %v5093 = vadd.f32 0.0, %v5092
      %v5094 = vpop.f32.mrb[0].mxu0
      %v5095 = vpop.f32.mrb[0].mxu0
      %v5096 = vadd.f32 0.0, %v5095
      %v5097 = vpop.f32.mrb[0].mxu0
      %5098 = vmatprep.mubr.bf16.mxu0 0
      %5099 = vmatmul.mubr.bf16.gmra.mrb[0].mxu0 %v4930
      %v5100 = vpop.f32.mrb[0].mxu0
      %v5101 = vadd.f32 0.0, %v5100
      %v5102 = vpop.f32.mrb[0].mxu0
      %v5103 = vpop.f32.mrb[0].mxu0
      %v5104 = vadd.f32 0.0, %v5103
      %v5105 = vpop.f32.mrb[0].mxu0
      %5106 = vmatprep.mubr.bf16.mxu0 0
      %5107 = vmatmul.mubr.bf16.gmra.mrb[0].mxu0 %v4931
      %v5108 = vpop.f32.mrb[0].mxu0
      %v5109 = vadd.f32 0.0, %v5108
      %v5110 = vpop.f32.mrb[0].mxu0
      %v5111 = vpop.f32.mrb[0].mxu0
      %v5112 = vadd.f32 0.0, %v5111
      %v5113 = vpop.f32.mrb[0].mxu0
      %5114 = vmatprep.mubr.bf16.mxu0 0
      %5115 = vmatmul.mubr.bf16.gmra.mrb[0].mxu0 %v4932
      %v5116 = vpop.f32.mrb[0].mxu0
      %v5117 = vadd.f32 0.0, %v5116
      %v5118 = vpop.f32.mrb[0].mxu0
      %v5119 = vpop.f32.mrb[0].mxu0
      %v5120 = vadd.f32 0.0, %v5119
      %v5121 = vpop.f32.mrb[0].mxu0
      %5122 = vmatprep.mubr.bf16.mxu0 0
      %5123 = vmatmul.mubr.bf16.gmra.mrb[0].mxu0 %v4933
      %v5124 = vpop.f32.mrb[0].mxu0
      %v5125 = vadd.f32 0.0, %v5124
      %v5126 = vpop.f32.mrb[0].mxu0
      %v5127 = vpop.f32.mrb[0].mxu0
      %v5128 = vadd.f32 0.0, %v5127
      %v5129 = vpop.f32.mrb[0].mxu0
      %5130 = vmatprep.mubr.bf16.mxu0 0
      %5131 = vmatmul.mubr.bf16.gmra.mrb[0].mxu0 %v4934
      %v5132 = vpop.f32.mrb[0].mxu0
      %v5133 = vadd.f32 0.0, %v5132
      %v5134 = vpop.f32.mrb[0].mxu0
      %v5135 = vpop.f32.mrb[0].mxu0
      %v5136 = vadd.f32 0.0, %v5135
      %v5137 = vpop.f32.mrb[0].mxu0
      %5138 = vmatprep.mubr.bf16.mxu0 0
      %5139 = vmatmul.mubr.bf16.gmra.mrb[0].mxu0 %v4935
      %v5140 = vpop.f32.mrb[0].mxu0
      %v5141 = vadd.f32 0.0, %v5140
      %v5142 = vpop.f32.mrb[0].mxu0
      %v5143 = vpop.f32.mrb[0].mxu0
      %v5144 = vadd.f32 0.0, %v5143
      %v5145 = vpop.f32.mrb[0].mxu0
      %5146 = vmatprep.mubr.bf16.mxu0 0
      %5147 = vmatmul.mubr.bf16.gmra.mrb[0].mxu0 %v4936
      %v5148 = vpop.f32.mrb[0].mxu0
      %v5149 = vadd.f32 0.0, %v5148
      %v5150 = vpop.f32.mrb[0].mxu0
      %v5151 = vpop.f32.mrb[0].mxu0
      %v5152 = vadd.f32 0.0, %v5151
      %v5153 = vpop.f32.mrb[0].mxu0
      %5154 = vmatprep.mubr.bf16.mxu0 0
      %5155 = vmatmul.mubr.bf16.gmra.mrb[0].mxu0 %v4937
      %v5156 = vpop.f32.mrb[0].mxu0
      %v5157 = vadd.f32 0.0, %v5156
      %v5158 = vpop.f32.mrb[0].mxu0
      %v5159 = vpop.f32.mrb[0].mxu0
      %v5160 = vadd.f32 0.0, %v5159
      %v5161 = vpop.f32.mrb[0].mxu0
      %5162 = vdwg.mxu0
      %v5163 = vadd.f32 %v4426, %v5037
      %v5164 = vadd.f32 %v4427, %v5040
      %v5165 = vadd.f32 %v4428, %v5045
      %v5166 = vadd.f32 %v4429, %v5048
      %v5167 = vadd.f32 %v4430, %v5053
      %v5168 = vadd.f32 %v4431, %v5056
      %v5169 = vadd.f32 %v4432, %v5061
      %v5170 = vadd.f32 %v4433, %v5064
      %v5171 = vadd.f32 %v4434, %v5069
      %v5172 = vadd.f32 %v4435, %v5072
      %v5173 = vadd.f32 %v4436, %v5077
      %v5174 = vadd.f32 %v4437, %v5080
      %v5175 = vadd.f32 %v4438, %v5085
      %v5176 = vadd.f32 %v4439, %v5088
      %v5177 = vadd.f32 %v4440, %v5093
      %v5178 = vadd.f32 %v4441, %v5096
      %v5179 = vadd.f32 %v4442, %v5101
      %v5180 = vadd.f32 %v4443, %v5104
      %v5181 = vadd.f32 %v4444, %v5109
      %v5182 = vadd.f32 %v4445, %v5112
      %v5183 = vadd.f32 %v4446, %v5117
      %v5184 = vadd.f32 %v4447, %v5120
      %v5185 = vadd.f32 %v4448, %v5125
      %v5186 = vadd.f32 %v4449, %v5128
      %v5187 = vadd.f32 %v4450, %v5133
      %v5188 = vadd.f32 %v4451, %v5136
      %v5189 = vadd.f32 %v4452, %v5141
      %v5190 = vadd.f32 %v4453, %v5144
      %v5191 = vadd.f32 %v4454, %v5149
      %v5192 = vadd.f32 %v4455, %v5152
      %v5193 = vadd.f32 %v4456, %v5157
      %v5194 = vadd.f32 %v4457, %v5160
      %v5195 = vld [vmem:[%s4088] sm:$0xe]
      %v5196 = vld [vmem:[%s4088 + $0xc] sm:$0xe]
      %v5197 = vld [vmem:[%s4088 + $0x18] sm:$0xe]
      %v5198 = vld [vmem:[%s4088 + $0x24] sm:$0xe]
      %v5199 = vld [vmem:[%s4088 + $0x30] sm:$0xe]
      %v5200 = vld [vmem:[%s4088 + $0x3c] sm:$0xe]
      %v5201 = vld [vmem:[%s4088 + $0x48] sm:$0xe]
      %v5202 = vld [vmem:[%s4088 + $0x54] sm:$0xe]
      %v5203 = vld [vmem:[%s4088 + $0x60] sm:$0xe]
      %v5204 = vld [vmem:[%s4088 + $0x6c] sm:$0xe]
      %v5205 = vld [vmem:[%s4088 + $0x78] sm:$0xe]
      %v5206 = vld [vmem:[%s4088 + $0x84] sm:$0xe]
      %v5207 = vld [vmem:[%s4088 + $0x90] sm:$0xe]
      %v5208 = vld [vmem:[%s4088 + $0x9c] sm:$0xe]
      %v5209 = vld [vmem:[%s4088 + $0xa8] sm:$0xe]
      %v5210 = vld [vmem:[%s4088 + $0xb4] sm:$0xe]
      %v5259 = vrot.slane %v5195, 5
      %v5260 = vrot.slane %v5259, 4
      %v5261 = vrot.slane %v4459, 5
      %v5262 = vsel %vm2083, %v5260, %v5261
      %v5263 = vrot.slane %v5261, 4
      %v5264 = vrot.slane %v4460, 5
      %v5265 = vsel %vm2083, %v5263, %v5264
      %v5266 = vrot.slane %v5196, 5
      %v5267 = vrot.slane %v5266, 4
      %v5268 = vrot.slane %v4462, 5
      %v5269 = vsel %vm2083, %v5267, %v5268
      %v5270 = vrot.slane %v5268, 4
      %v5271 = vrot.slane %v4463, 5
      %v5272 = vsel %vm2083, %v5270, %v5271
      %v5273 = vrot.slane %v5197, 5
      %v5274 = vrot.slane %v5273, 4
      %v5275 = vrot.slane %v4465, 5
      %v5276 = vsel %vm2083, %v5274, %v5275
      %v5277 = vrot.slane %v5275, 4
      %v5278 = vrot.slane %v4466, 5
      %v5279 = vsel %vm2083, %v5277, %v5278
      %v5280 = vrot.slane %v5198, 5
      %v5281 = vrot.slane %v5280, 4
      %v5282 = vrot.slane %v4468, 5
      %v5283 = vsel %vm2083, %v5281, %v5282
      %v5284 = vrot.slane %v5282, 4
      %v5285 = vrot.slane %v4469, 5
      %v5286 = vsel %vm2083, %v5284, %v5285
      %v5287 = vrot.slane %v5199, 5
      %v5288 = vrot.slane %v5287, 4
      %v5289 = vrot.slane %v4471, 5
      %v5290 = vsel %vm2083, %v5288, %v5289
      %v5291 = vrot.slane %v5289, 4
      %v5292 = vrot.slane %v4472, 5
      %v5293 = vsel %vm2083, %v5291, %v5292
      %v5294 = vrot.slane %v5200, 5
      %v5295 = vrot.slane %v5294, 4
      %v5296 = vrot.slane %v4474, 5
      %v5297 = vsel %vm2083, %v5295, %v5296
      %v5298 = vrot.slane %v5296, 4
      %v5299 = vrot.slane %v4475, 5
      %v5300 = vsel %vm2083, %v5298, %v5299
      %v5301 = vrot.slane %v5201, 5
      %v5302 = vrot.slane %v5301, 4
      %v5303 = vrot.slane %v4477, 5
      %v5304 = vsel %vm2083, %v5302, %v5303
      %v5305 = vrot.slane %v5303, 4
      %v5306 = vrot.slane %v4478, 5
      %v5307 = vsel %vm2083, %v5305, %v5306
      %v5308 = vrot.slane %v5202, 5
      %v5309 = vrot.slane %v5308, 4
      %v5310 = vrot.slane %v4480, 5
      %v5311 = vsel %vm2083, %v5309, %v5310
      %v5312 = vrot.slane %v5310, 4
      %v5313 = vrot.slane %v4481, 5
      %v5314 = vsel %vm2083, %v5312, %v5313
      %v5315 = vrot.slane %v5203, 5
      %v5316 = vrot.slane %v5315, 4
      %v5317 = vrot.slane %v4483, 5
      %v5318 = vsel %vm2083, %v5316, %v5317
      %v5319 = vrot.slane %v5317, 4
      %v5320 = vrot.slane %v4484, 5
      %v5321 = vsel %vm2083, %v5319, %v5320
      %v5322 = vrot.slane %v5204, 5
      %v5323 = vrot.slane %v5322, 4
      %v5324 = vrot.slane %v4486, 5
      %v5325 = vsel %vm2083, %v5323, %v5324
      %v5326 = vrot.slane %v5324, 4
      %v5327 = vrot.slane %v4487, 5
      %v5328 = vsel %vm2083, %v5326, %v5327
      %v5329 = vrot.slane %v5205, 5
      %v5330 = vrot.slane %v5329, 4
      %v5331 = vrot.slane %v4489, 5
      %v5332 = vsel %vm2083, %v5330, %v5331
      %v5333 = vrot.slane %v5331, 4
      %v5334 = vrot.slane %v4490, 5
      %v5335 = vsel %vm2083, %v5333, %v5334
      %v5336 = vrot.slane %v5206, 5
      %v5337 = vrot.slane %v5336, 4
      %v5338 = vrot.slane %v4492, 5
      %v5339 = vsel %vm2083, %v5337, %v5338
      %v5340 = vrot.slane %v5338, 4
      %v5341 = vrot.slane %v4493, 5
      %v5342 = vsel %vm2083, %v5340, %v5341
      %v5343 = vrot.slane %v5207, 5
      %v5344 = vrot.slane %v5343, 4
      %v5345 = vrot.slane %v4495, 5
      %v5346 = vsel %vm2083, %v5344, %v5345
      %v5347 = vrot.slane %v5345, 4
      %v5348 = vrot.slane %v4496, 5
      %v5349 = vsel %vm2083, %v5347, %v5348
      %v5350 = vrot.slane %v5208, 5
      %v5351 = vrot.slane %v5350, 4
      %v5352 = vrot.slane %v4498, 5
      %v5353 = vsel %vm2083, %v5351, %v5352
      %v5354 = vrot.slane %v5352, 4
      %v5355 = vrot.slane %v4499, 5
      %v5356 = vsel %vm2083, %v5354, %v5355
      %v5357 = vrot.slane %v5209, 5
      %v5358 = vrot.slane %v5357, 4
      %v5359 = vrot.slane %v4501, 5
      %v5360 = vsel %vm2083, %v5358, %v5359
      %v5361 = vrot.slane %v5359, 4
      %v5362 = vrot.slane %v4502, 5
      %v5363 = vsel %vm2083, %v5361, %v5362
      %v5364 = vrot.slane %v5210, 5
      %v5365 = vrot.slane %v5364, 4
      %v5366 = vrot.slane %v4504, 5
      %v5367 = vsel %vm2083, %v5365, %v5366
      %v5368 = vrot.slane %v5366, 4
      %v5369 = vrot.slane %v4505, 5
      %v5370 = vsel %vm2083, %v5368, %v5369
      %v5371 = vunpack.c.l.b16 %v5262
      %v5372 = vunpack.c.l.b16 %v5265
      %v5373 = vunpack.c.l.b16 %v5269
      %v5374 = vunpack.c.l.b16 %v5272
      %v5375 = vunpack.c.l.b16 %v5276
      %v5376 = vunpack.c.l.b16 %v5279
      %v5377 = vunpack.c.l.b16 %v5283
      %v5378 = vunpack.c.l.b16 %v5286
      %v5379 = vunpack.c.l.b16 %v5290
      %v5380 = vunpack.c.l.b16 %v5293
      %v5381 = vunpack.c.l.b16 %v5297
      %v5382 = vunpack.c.l.b16 %v5300
      %v5383 = vunpack.c.l.b16 %v5304
      %v5384 = vunpack.c.l.b16 %v5307
      %v5385 = vunpack.c.l.b16 %v5311
      %v5386 = vunpack.c.l.b16 %v5314
      %v5387 = vunpack.c.l.b16 %v5318
      %v5388 = vunpack.c.l.b16 %v5321
      %v5389 = vunpack.c.l.b16 %v5325
      %v5390 = vunpack.c.l.b16 %v5328
      %v5391 = vunpack.c.l.b16 %v5332
      %v5392 = vunpack.c.l.b16 %v5335
      %v5393 = vunpack.c.l.b16 %v5339
      %v5394 = vunpack.c.l.b16 %v5342
      %v5395 = vunpack.c.l.b16 %v5346
      %v5396 = vunpack.c.l.b16 %v5349
      %v5397 = vunpack.c.l.b16 %v5353
      %v5398 = vunpack.c.l.b16 %v5356
      %v5399 = vunpack.c.l.b16 %v5360
      %v5400 = vunpack.c.l.b16 %v5363
      %v5401 = vunpack.c.l.b16 %v5367
      %v5402 = vunpack.c.l.b16 %v5370
      %v5403 = vpack.c.b16 %v5372, %v5371
      %v5404 = vpack.c.b16 %v5374, %v5373
      %v5405 = vpack.c.b16 %v5376, %v5375
      %v5406 = vpack.c.b16 %v5378, %v5377
      %v5407 = vpack.c.b16 %v5380, %v5379
      %v5408 = vpack.c.b16 %v5382, %v5381
      %v5409 = vpack.c.b16 %v5384, %v5383
      %v5410 = vpack.c.b16 %v5386, %v5385
      %v5411 = vpack.c.b16 %v5388, %v5387
      %v5412 = vpack.c.b16 %v5390, %v5389
      %v5413 = vpack.c.b16 %v5392, %v5391
      %v5414 = vpack.c.b16 %v5394, %v5393
      %v5415 = vpack.c.b16 %v5396, %v5395
      %v5416 = vpack.c.b16 %v5398, %v5397
      %v5417 = vpack.c.b16 %v5400, %v5399
      %v5418 = vpack.c.b16 %v5402, %v5401
      %v5451 = vunpack.c.l.b16 %v1004
      %v5452 = vunpack.c.l.b16 %v1005
      %v5453 = vunpack.c.l.b16 %v1006
      %v5454 = vunpack.c.l.b16 %v1007
      %v5455 = vunpack.c.l.b16 %v1008
      %v5456 = vunpack.c.l.b16 %v1009
      %v5457 = vunpack.c.l.b16 %v1010
      %v5458 = vunpack.c.l.b16 %v1011
      %v5459 = vunpack.c.l.b16 %v1012
      %v5460 = vunpack.c.l.b16 %v1013
      %v5461 = vunpack.c.l.b16 %v1014
      %v5462 = vunpack.c.l.b16 %v1015
      %v5463 = vunpack.c.l.b16 %v1016
      %v5464 = vunpack.c.l.b16 %v1017
      %v5465 = vunpack.c.l.b16 %v1018
      %v5466 = vunpack.c.l.b16 %v1019
      %v5467 = vpack.c.b16 %v5452, %v5451
      %v5468 = vpack.c.b16 %v5454, %v5453
      %v5469 = vpack.c.b16 %v5456, %v5455
      %v5470 = vpack.c.b16 %v5458, %v5457
      %v5471 = vpack.c.b16 %v5460, %v5459
      %v5472 = vpack.c.b16 %v5462, %v5461
      %v5473 = vpack.c.b16 %v5464, %v5463
      %v5474 = vpack.c.b16 %v5466, %v5465
      %5483 = vmatprep.subr.bf16.mxu0 0
      %5484 = vmatpush1.bf16.msra.mxu0 %v5467
      %5485 = vmatprep.subr.bf16.mxu0 0
      %5486 = vmatpush1.bf16.msra.mxu0 %v5468
      %5487 = vmatprep.subr.bf16.mxu0 0
      %5488 = vmatpush1.bf16.msra.mxu0 %v5469
      %5489 = vmatprep.subr.bf16.mxu0 0
      %5490 = vmatpush1.bf16.msra.mxu0 %v5470
      %5491 = vmatprep.subr.bf16.mxu0 0
      %5492 = vmatpush1.bf16.msra.mxu0 %v5471
      %5493 = vmatprep.subr.bf16.mxu0 0
      %5494 = vmatpush1.bf16.msra.mxu0 %v5472
      %5495 = vmatprep.subr.bf16.mxu0 0
      %5496 = vmatpush1.bf16.msra.mxu0 %v5473
      %5497 = vmatprep.subr.bf16.mxu0 0
      %5498 = vmatpush1.bf16.msra.mxu0 %v5474
      %5499 = vmatprep.subr.bf16.mxu0 0
      %5500 = vmatpush1.bf16.msra.mxu0 0
      %5501 = vmatprep.subr.bf16.mxu0 0
      %5502 = vmatpush1.bf16.msra.mxu0 0
      %5503 = vmatprep.subr.bf16.mxu0 0
      %5504 = vmatpush1.bf16.msra.mxu0 0
      %5505 = vmatprep.subr.bf16.mxu0 0
      %5506 = vmatpush1.bf16.msra.mxu0 0
      %5507 = vmatprep.subr.bf16.mxu0 0
      %5508 = vmatpush1.bf16.msra.mxu0 0
      %5509 = vmatprep.subr.bf16.mxu0 0
      %5510 = vmatpush1.bf16.msra.mxu0 0
      %5511 = vmatprep.subr.bf16.mxu0 0
      %5512 = vmatpush1.bf16.msra.mxu0 0
      %5513 = vmatprep.subr.bf16.mxu0 0
      %5514 = vmatpush1.bf16.msra.mxu0 0
      %5515 = vmatprep.mubr.bf16.mxu0 0
      %5516 = vmatmul.mubr.bf16.gmra.mrb[0].mxu0 %v5403
      %v5517 = vpop.f32.mrb[0].mxu0
      %v5518 = vadd.f32 0.0, %v5517
      %v5519 = vpop.f32.mrb[0].mxu0
      %v5520 = vpop.f32.mrb[0].mxu0
      %v5521 = vadd.f32 0.0, %v5520
      %v5522 = vpop.f32.mrb[0].mxu0
      %5523 = vmatprep.mubr.bf16.mxu0 0
      %5524 = vmatmul.mubr.bf16.gmra.mrb[0].mxu0 %v5404
      %v5525 = vpop.f32.mrb[0].mxu0
      %v5526 = vadd.f32 0.0, %v5525
      %v5527 = vpop.f32.mrb[0].mxu0
      %v5528 = vpop.f32.mrb[0].mxu0
      %v5529 = vadd.f32 0.0, %v5528
      %v5530 = vpop.f32.mrb[0].mxu0
      %5531 = vmatprep.mubr.bf16.mxu0 0
      %5532 = vmatmul.mubr.bf16.gmra.mrb[0].mxu0 %v5405
      %v5533 = vpop.f32.mrb[0].mxu0
      %v5534 = vadd.f32 0.0, %v5533
      %v5535 = vpop.f32.mrb[0].mxu0
      %v5536 = vpop.f32.mrb[0].mxu0
      %v5537 = vadd.f32 0.0, %v5536
      %v5538 = vpop.f32.mrb[0].mxu0
      %5539 = vmatprep.mubr.bf16.mxu0 0
      %5540 = vmatmul.mubr.bf16.gmra.mrb[0].mxu0 %v5406
      %v5541 = vpop.f32.mrb[0].mxu0
      %v5542 = vadd.f32 0.0, %v5541
      %v5543 = vpop.f32.mrb[0].mxu0
      %v5544 = vpop.f32.mrb[0].mxu0
      %v5545 = vadd.f32 0.0, %v5544
      %v5546 = vpop.f32.mrb[0].mxu0
      %5547 = vmatprep.mubr.bf16.mxu0 0
      %5548 = vmatmul.mubr.bf16.gmra.mrb[0].mxu0 %v5407
      %v5549 = vpop.f32.mrb[0].mxu0
      %v5550 = vadd.f32 0.0, %v5549
      %v5551 = vpop.f32.mrb[0].mxu0
      %v5552 = vpop.f32.mrb[0].mxu0
      %v5553 = vadd.f32 0.0, %v5552
      %v5554 = vpop.f32.mrb[0].mxu0
      %5555 = vmatprep.mubr.bf16.mxu0 0
      %5556 = vmatmul.mubr.bf16.gmra.mrb[0].mxu0 %v5408
      %v5557 = vpop.f32.mrb[0].mxu0
      %v5558 = vadd.f32 0.0, %v5557
      %v5559 = vpop.f32.mrb[0].mxu0
      %v5560 = vpop.f32.mrb[0].mxu0
      %v5561 = vadd.f32 0.0, %v5560
      %v5562 = vpop.f32.mrb[0].mxu0
      %5563 = vmatprep.mubr.bf16.mxu0 0
      %5564 = vmatmul.mubr.bf16.gmra.mrb[0].mxu0 %v5409
      %v5565 = vpop.f32.mrb[0].mxu0
      %v5566 = vadd.f32 0.0, %v5565
      %v5567 = vpop.f32.mrb[0].mxu0
      %v5568 = vpop.f32.mrb[0].mxu0
      %v5569 = vadd.f32 0.0, %v5568
      %v5570 = vpop.f32.mrb[0].mxu0
      %5571 = vmatprep.mubr.bf16.mxu0 0
      %5572 = vmatmul.mubr.bf16.gmra.mrb[0].mxu0 %v5410
      %v5573 = vpop.f32.mrb[0].mxu0
      %v5574 = vadd.f32 0.0, %v5573
      %v5575 = vpop.f32.mrb[0].mxu0
      %v5576 = vpop.f32.mrb[0].mxu0
      %v5577 = vadd.f32 0.0, %v5576
      %v5578 = vpop.f32.mrb[0].mxu0
      %5579 = vmatprep.mubr.bf16.mxu0 0
      %5580 = vmatmul.mubr.bf16.gmra.mrb[0].mxu0 %v5411
      %v5581 = vpop.f32.mrb[0].mxu0
      %v5582 = vadd.f32 0.0, %v5581
      %v5583 = vpop.f32.mrb[0].mxu0
      %v5584 = vpop.f32.mrb[0].mxu0
      %v5585 = vadd.f32 0.0, %v5584
      %v5586 = vpop.f32.mrb[0].mxu0
      %5587 = vmatprep.mubr.bf16.mxu0 0
      %5588 = vmatmul.mubr.bf16.gmra.mrb[0].mxu0 %v5412
      %v5589 = vpop.f32.mrb[0].mxu0
      %v5590 = vadd.f32 0.0, %v5589
      %v5591 = vpop.f32.mrb[0].mxu0
      %v5592 = vpop.f32.mrb[0].mxu0
      %v5593 = vadd.f32 0.0, %v5592
      %v5594 = vpop.f32.mrb[0].mxu0
      %5595 = vmatprep.mubr.bf16.mxu0 0
      %5596 = vmatmul.mubr.bf16.gmra.mrb[0].mxu0 %v5413
      %v5597 = vpop.f32.mrb[0].mxu0
      %v5598 = vadd.f32 0.0, %v5597
      %v5599 = vpop.f32.mrb[0].mxu0
      %v5600 = vpop.f32.mrb[0].mxu0
      %v5601 = vadd.f32 0.0, %v5600
      %v5602 = vpop.f32.mrb[0].mxu0
      %5603 = vmatprep.mubr.bf16.mxu0 0
      %5604 = vmatmul.mubr.bf16.gmra.mrb[0].mxu0 %v5414
      %v5605 = vpop.f32.mrb[0].mxu0
      %v5606 = vadd.f32 0.0, %v5605
      %v5607 = vpop.f32.mrb[0].mxu0
      %v5608 = vpop.f32.mrb[0].mxu0
      %v5609 = vadd.f32 0.0, %v5608
      %v5610 = vpop.f32.mrb[0].mxu0
      %5611 = vmatprep.mubr.bf16.mxu0 0
      %5612 = vmatmul.mubr.bf16.gmra.mrb[0].mxu0 %v5415
      %v5613 = vpop.f32.mrb[0].mxu0
      %v5614 = vadd.f32 0.0, %v5613
      %v5615 = vpop.f32.mrb[0].mxu0
      %v5616 = vpop.f32.mrb[0].mxu0
      %v5617 = vadd.f32 0.0, %v5616
      %v5618 = vpop.f32.mrb[0].mxu0
      %5619 = vmatprep.mubr.bf16.mxu0 0
      %5620 = vmatmul.mubr.bf16.gmra.mrb[0].mxu0 %v5416
      %v5621 = vpop.f32.mrb[0].mxu0
      %v5622 = vadd.f32 0.0, %v5621
      %v5623 = vpop.f32.mrb[0].mxu0
      %v5624 = vpop.f32.mrb[0].mxu0
      %v5625 = vadd.f32 0.0, %v5624
      %v5626 = vpop.f32.mrb[0].mxu0
      %5627 = vmatprep.mubr.bf16.mxu0 0
      %5628 = vmatmul.mubr.bf16.gmra.mrb[0].mxu0 %v5417
      %v5629 = vpop.f32.mrb[0].mxu0
      %v5630 = vadd.f32 0.0, %v5629
      %v5631 = vpop.f32.mrb[0].mxu0
      %v5632 = vpop.f32.mrb[0].mxu0
      %v5633 = vadd.f32 0.0, %v5632
      %v5634 = vpop.f32.mrb[0].mxu0
      %5635 = vmatprep.mubr.bf16.mxu0 0
      %5636 = vmatmul.mubr.bf16.gmra.mrb[0].mxu0 %v5418
      %v5637 = vpop.f32.mrb[0].mxu0
      %v5638 = vadd.f32 0.0, %v5637
      %v5639 = vpop.f32.mrb[0].mxu0
      %v5640 = vpop.f32.mrb[0].mxu0
      %v5641 = vadd.f32 0.0, %v5640
      %v5642 = vpop.f32.mrb[0].mxu0
      %5643 = vdwg.mxu0
      %v5644 = vadd.f32 %v5163, %v5518
      %v5645 = vadd.f32 %v5164, %v5521
      %v5646 = vadd.f32 %v5165, %v5526
      %v5647 = vadd.f32 %v5166, %v5529
      %v5648 = vadd.f32 %v5167, %v5534
      %v5649 = vadd.f32 %v5168, %v5537
      %v5650 = vadd.f32 %v5169, %v5542
      %v5651 = vadd.f32 %v5170, %v5545
      %v5652 = vadd.f32 %v5171, %v5550
      %v5653 = vadd.f32 %v5172, %v5553
      %v5654 = vadd.f32 %v5173, %v5558
      %v5655 = vadd.f32 %v5174, %v5561
      %v5656 = vadd.f32 %v5175, %v5566
      %v5657 = vadd.f32 %v5176, %v5569
      %v5658 = vadd.f32 %v5177, %v5574
      %v5659 = vadd.f32 %v5178, %v5577
      %v5660 = vadd.f32 %v5179, %v5582
      %v5661 = vadd.f32 %v5180, %v5585
      %v5662 = vadd.f32 %v5181, %v5590
      %v5663 = vadd.f32 %v5182, %v5593
      %v5664 = vadd.f32 %v5183, %v5598
      %v5665 = vadd.f32 %v5184, %v5601
      %v5666 = vadd.f32 %v5185, %v5606
      %v5667 = vadd.f32 %v5186, %v5609
      %v5668 = vadd.f32 %v5187, %v5614
      %v5669 = vadd.f32 %v5188, %v5617
      %v5670 = vadd.f32 %v5189, %v5622
      %v5671 = vadd.f32 %v5190, %v5625
      %v5672 = vadd.f32 %v5191, %v5630
      %v5673 = vadd.f32 %v5192, %v5633
      %v5674 = vadd.f32 %v5193, %v5638
      %v5675 = vadd.f32 %v5194, %v5641
      %v5676 = vpack.c.bf16 %v5645, %v5644
      %v5677 = vpack.c.bf16 %v5647, %v5646
      %v5678 = vpack.c.bf16 %v5649, %v5648
      %v5679 = vpack.c.bf16 %v5651, %v5650
      %v5680 = vpack.c.bf16 %v5653, %v5652
      %v5681 = vpack.c.bf16 %v5655, %v5654
      %v5682 = vpack.c.bf16 %v5657, %v5656
      %v5683 = vpack.c.bf16 %v5659, %v5658
      %v5684 = vpack.c.bf16 %v5661, %v5660
      %v5685 = vpack.c.bf16 %v5663, %v5662
      %v5686 = vpack.c.bf16 %v5665, %v5664
      %v5687 = vpack.c.bf16 %v5667, %v5666
      %v5688 = vpack.c.bf16 %v5669, %v5668
      %v5689 = vpack.c.bf16 %v5671, %v5670
      %v5690 = vpack.c.bf16 %v5673, %v5672
      %v5691 = vpack.c.bf16 %v5675, %v5674
      %v5708 = vunpack.c.l.b16 %v5676
      %v5709 = vunpack.c.h.b16 %v5676
      %v5710 = vunpack.c.l.b16 %v5677
      %v5711 = vunpack.c.h.b16 %v5677
      %v5712 = vunpack.c.l.b16 %v5678
      %v5713 = vunpack.c.h.b16 %v5678
      %v5714 = vunpack.c.l.b16 %v5679
      %v5715 = vunpack.c.h.b16 %v5679
      %v5716 = vunpack.c.l.b16 %v5680
      %v5717 = vunpack.c.h.b16 %v5680
      %v5718 = vunpack.c.l.b16 %v5681
      %v5719 = vunpack.c.h.b16 %v5681
      %v5720 = vunpack.c.l.b16 %v5682
      %v5721 = vunpack.c.h.b16 %v5682
      %v5722 = vunpack.c.l.b16 %v5683
      %v5723 = vunpack.c.h.b16 %v5683
      %v5724 = vunpack.c.l.b16 %v5684
      %v5725 = vunpack.c.h.b16 %v5684
      %v5726 = vunpack.c.l.b16 %v5685
      %v5727 = vunpack.c.h.b16 %v5685
      %v5728 = vunpack.c.l.b16 %v5686
      %v5729 = vunpack.c.h.b16 %v5686
      %v5730 = vunpack.c.l.b16 %v5687
      %v5731 = vunpack.c.h.b16 %v5687
      %v5732 = vunpack.c.l.b16 %v5688
      %v5733 = vunpack.c.h.b16 %v5688
      %v5734 = vunpack.c.l.b16 %v5689
      %v5735 = vunpack.c.h.b16 %v5689
      %v5736 = vunpack.c.l.b16 %v5690
      %v5737 = vunpack.c.h.b16 %v5690
      %v5738 = vunpack.c.l.b16 %v5691
      %v5739 = vunpack.c.h.b16 %v5691
      %v5740 = vpack.c.b16 %v5708, %v5708
      %v5741 = vpack.c.b16 %v5709, %v5709
      %v5742 = vpack.c.b16 %v5710, %v5710
      %v5743 = vpack.c.b16 %v5711, %v5711
      %v5744 = vpack.c.b16 %v5712, %v5712
      %v5745 = vpack.c.b16 %v5713, %v5713
      %v5746 = vpack.c.b16 %v5714, %v5714
      %v5747 = vpack.c.b16 %v5715, %v5715
      %v5748 = vpack.c.b16 %v5716, %v5716
      %v5749 = vpack.c.b16 %v5717, %v5717
      %v5750 = vpack.c.b16 %v5718, %v5718
      %v5751 = vpack.c.b16 %v5719, %v5719
      %v5752 = vpack.c.b16 %v5720, %v5720
      %v5753 = vpack.c.b16 %v5721, %v5721
      %v5754 = vpack.c.b16 %v5722, %v5722
      %v5755 = vpack.c.b16 %v5723, %v5723
      %v5756 = vpack.c.b16 %v5724, %v5724
      %v5757 = vpack.c.b16 %v5725, %v5725
      %v5758 = vpack.c.b16 %v5726, %v5726
      %v5759 = vpack.c.b16 %v5727, %v5727
      %v5760 = vpack.c.b16 %v5728, %v5728
      %v5761 = vpack.c.b16 %v5729, %v5729
      %v5762 = vpack.c.b16 %v5730, %v5730
      %v5763 = vpack.c.b16 %v5731, %v5731
      %v5764 = vpack.c.b16 %v5732, %v5732
      %v5765 = vpack.c.b16 %v5733, %v5733
      %v5766 = vpack.c.b16 %v5734, %v5734
      %v5767 = vpack.c.b16 %v5735, %v5735
      %v5768 = vpack.c.b16 %v5736, %v5736
      %v5769 = vpack.c.b16 %v5737, %v5737
      %v5770 = vpack.c.b16 %v5738, %v5738
      %v5771 = vpack.c.b16 %v5739, %v5739
      %5804 = vst [vmem:[%s177] sm:$0xf] %v5740
      %5805 = vst [vmem:[%s177 + $0x4] sm:$0xf] %v5741
      %5806 = vst [vmem:[%s177 + $0x8] sm:$0xf] %v5742
      %5807 = vst [vmem:[%s177 + $0xc] sm:$0xf] %v5743
      %5808 = vst [vmem:[%s177 + $0x10] sm:$0xf] %v5744
      %5809 = vst [vmem:[%s177 + $0x14] sm:$0xf] %v5745
      %5810 = vst [vmem:[%s177 + $0x18] sm:$0xf] %v5746
      %5811 = vst [vmem:[%s177 + $0x1c] sm:$0xf] %v5747
      %5812 = vst [vmem:[%s177 + $0x20] sm:$0xf] %v5748
      %5813 = vst [vmem:[%s177 + $0x24] sm:$0xf] %v5749
      %5814 = vst [vmem:[%s177 + $0x28] sm:$0xf] %v5750
      %5815 = vst [vmem:[%s177 + $0x2c] sm:$0xf] %v5751
      %5816 = vst [vmem:[%s177 + $0x30] sm:$0xf] %v5752
      %5817 = vst [vmem:[%s177 + $0x34] sm:$0xf] %v5753
      %5818 = vst [vmem:[%s177 + $0x38] sm:$0xf] %v5754
      %5819 = vst [vmem:[%s177 + $0x3c] sm:$0xf] %v5755
      %5820 = vst [vmem:[%s177 + $0x40] sm:$0xf] %v5756
      %5821 = vst [vmem:[%s177 + $0x44] sm:$0xf] %v5757
      %5822 = vst [vmem:[%s177 + $0x48] sm:$0xf] %v5758
      %5823 = vst [vmem:[%s177 + $0x4c] sm:$0xf] %v5759
      %5824 = vst [vmem:[%s177 + $0x50] sm:$0xf] %v5760
      %5825 = vst [vmem:[%s177 + $0x54] sm:$0xf] %v5761
      %5826 = vst [vmem:[%s177 + $0x58] sm:$0xf] %v5762
      %5827 = vst [vmem:[%s177 + $0x5c] sm:$0xf] %v5763
      %5828 = vst [vmem:[%s177 + $0x60] sm:$0xf] %v5764
      %5829 = vst [vmem:[%s177 + $0x64] sm:$0xf] %v5765
      %5830 = vst [vmem:[%s177 + $0x68] sm:$0xf] %v5766
      %5831 = vst [vmem:[%s177 + $0x6c] sm:$0xf] %v5767
      %5832 = vst [vmem:[%s177 + $0x70] sm:$0xf] %v5768
      %5833 = vst [vmem:[%s177 + $0x74] sm:$0xf] %v5769
      %5834 = vst [vmem:[%s177 + $0x78] sm:$0xf] %v5770
      %5835 = vst [vmem:[%s177 + $0x7c] sm:$0xf] %v5771
      %v5836 = vadd.f32 %v5644, %v5645
      %v5837 = vadd.f32 %v5836, %v5646
      %v5838 = vadd.f32 %v5837, %v5647
      %v5839 = vadd.f32 %v5838, %v5648
      %v5840 = vadd.f32 %v5839, %v5649
      %v5841 = vadd.f32 %v5840, %v5650
      %v5842 = vadd.f32 %v5841, %v5651
      %v5843 = vadd.f32 %v5842, %v5652
      %v5844 = vadd.f32 %v5843, %v5653
      %v5845 = vadd.f32 %v5844, %v5654
      %v5846 = vadd.f32 %v5845, %v5655
      %v5847 = vadd.f32 %v5846, %v5656
      %v5848 = vadd.f32 %v5847, %v5657
      %v5849 = vadd.f32 %v5848, %v5658
      %v5850 = vadd.f32 %v5849, %v5659
      %v5851 = vadd.f32 %v5850, %v5660
      %v5852 = vadd.f32 %v5851, %v5661
      %v5853 = vadd.f32 %v5852, %v5662
      %v5854 = vadd.f32 %v5853, %v5663
      %v5855 = vadd.f32 %v5854, %v5664
      %v5856 = vadd.f32 %v5855, %v5665
      %v5857 = vadd.f32 %v5856, %v5666
      %v5858 = vadd.f32 %v5857, %v5667
      %v5859 = vadd.f32 %v5858, %v5668
      %v5860 = vadd.f32 %v5859, %v5669
      %v5861 = vadd.f32 %v5860, %v5670
      %v5862 = vadd.f32 %v5861, %v5671
      %v5863 = vadd.f32 %v5862, %v5672
      %v5864 = vadd.f32 %v5863, %v5673
      %v5865 = vadd.f32 %v5864, %v5674
      %v5866 = vadd.f32 %v5865, %v5675
      %v5867 = vrot.slane %v5866, 4
      %v5868 = vadd.f32 %v5866, %v5867
      %v5869 = vrot.slane %v5868, 2
      %v5870 = vadd.f32 %v5868, %v5869
      %v5871 = vrot.slane %v5870, 1
      %v5872 = vadd.f32 %v5870, %v5871
      %v5873 = vadd.f32 %v5872, 0.0
      %v5874 = vmul.f32 %v5644, %v5644
      %v5875 = vmul.f32 %v5645, %v5645
      %v5876 = vmul.f32 %v5646, %v5646
      %v5877 = vmul.f32 %v5647, %v5647
      %v5878 = vmul.f32 %v5648, %v5648
      %v5879 = vmul.f32 %v5649, %v5649
      %v5880 = vmul.f32 %v5650, %v5650
      %v5881 = vmul.f32 %v5651, %v5651
      %v5882 = vmul.f32 %v5652, %v5652
      %v5883 = vmul.f32 %v5653, %v5653
      %v5884 = vmul.f32 %v5654, %v5654
      %v5885 = vmul.f32 %v5655, %v5655
      %v5886 = vmul.f32 %v5656, %v5656
      %v5887 = vmul.f32 %v5657, %v5657
      %v5888 = vmul.f32 %v5658, %v5658
      %v5889 = vmul.f32 %v5659, %v5659
      %v5890 = vmul.f32 %v5660, %v5660
      %v5891 = vmul.f32 %v5661, %v5661
      %v5892 = vmul.f32 %v5662, %v5662
      %v5893 = vmul.f32 %v5663, %v5663
      %v5894 = vmul.f32 %v5664, %v5664
      %v5895 = vmul.f32 %v5665, %v5665
      %v5896 = vmul.f32 %v5666, %v5666
      %v5897 = vmul.f32 %v5667, %v5667
      %v5898 = vmul.f32 %v5668, %v5668
      %v5899 = vmul.f32 %v5669, %v5669
      %v5900 = vmul.f32 %v5670, %v5670
      %v5901 = vmul.f32 %v5671, %v5671
      %v5902 = vmul.f32 %v5672, %v5672
      %v5903 = vmul.f32 %v5673, %v5673
      %v5904 = vmul.f32 %v5674, %v5674
      %v5905 = vmul.f32 %v5675, %v5675
      %v5906 = vadd.f32 %v5874, %v5875
      %v5907 = vadd.f32 %v5906, %v5876
      %v5908 = vadd.f32 %v5907, %v5877
      %v5909 = vadd.f32 %v5908, %v5878
      %v5910 = vadd.f32 %v5909, %v5879
      %v5911 = vadd.f32 %v5910, %v5880
      %v5912 = vadd.f32 %v5911, %v5881
      %v5913 = vadd.f32 %v5912, %v5882
      %v5914 = vadd.f32 %v5913, %v5883
      %v5915 = vadd.f32 %v5914, %v5884
      %v5916 = vadd.f32 %v5915, %v5885
      %v5917 = vadd.f32 %v5916, %v5886
      %v5918 = vadd.f32 %v5917, %v5887
      %v5919 = vadd.f32 %v5918, %v5888
      %v5920 = vadd.f32 %v5919, %v5889
      %v5921 = vadd.f32 %v5920, %v5890
      %v5922 = vadd.f32 %v5921, %v5891
      %v5923 = vadd.f32 %v5922, %v5892
      %v5924 = vadd.f32 %v5923, %v5893
      %v5925 = vadd.f32 %v5924, %v5894
      %v5926 = vadd.f32 %v5925, %v5895
      %v5927 = vadd.f32 %v5926, %v5896
      %v5928 = vadd.f32 %v5927, %v5897
      %v5929 = vadd.f32 %v5928, %v5898
      %v5930 = vadd.f32 %v5929, %v5899
      %v5931 = vadd.f32 %v5930, %v5900
      %v5932 = vadd.f32 %v5931, %v5901
      %v5933 = vadd.f32 %v5932, %v5902
      %v5934 = vadd.f32 %v5933, %v5903
      %v5935 = vadd.f32 %v5934, %v5904
      %v5936 = vadd.f32 %v5935, %v5905
      %v5937 = vrot.slane %v5936, 4
      %v5938 = vadd.f32 %v5936, %v5937
      %v5939 = vrot.slane %v5938, 2
      %v5940 = vadd.f32 %v5938, %v5939
      %v5941 = vrot.slane %v5940, 1
      %v5942 = vadd.f32 %v5940, %v5941
      %v5943 = vadd.f32 %v5942, 0.0
      %5944 = vst [vmem:[%s181] sm:$0x1] %v5873
      %5945 = vst [vmem:[%s181 + $0x1] sm:$0x1] %v5943
      %p5946 = scmp.lt.s32.totalorder %s15, 1
      %s5947 = scalar_select %p5946, %s15, 1
      %s5948 = smul.addr %s5947, 32
      %s5949 = smul.addr %s5948, 4
      %s5950 = scalar_lea.vmem %s2, %s5949
      %p5951 = scmp.lt.s32.totalorder %s15, 1
      %s5952 = scalar_select %p5951, %s15, 1
      %s5953 = smul.addr %s5952, 2
      %s5954 = scalar_lea.vmem %s3, %s5953
      // Predicated region
      $region29: #{resblock_forward.3} parent=27 // pred_check
        %p5955 = pneg %p80
      $region30: #{resblock_forward.3} parent=27 // pred_check_branch
        %5957 = sbr.rel (%p5955) target = $region32
      $region31: #{resblock_forward.3} parent=27 // pred_region
        _
      $region32: #{resblock_forward.3} parent=27 // pred_fallthru
        _
      // Predicated region
      $region33: #{resblock_forward.3} parent=27 // pred_check
        %p5958 = pneg %p106
      $region34: #{resblock_forward.3} parent=27 // pred_check_branch
        %5960 = sbr.rel (%p5958) target = $region36
      $region35: #{resblock_forward.3} parent=27 // pred_region
        _
      $region36: #{resblock_forward.3} parent=27 // pred_fallthru
        _
    $region28: #{resblock_forward.3} parent=5 // pred_fallthru
      _
    %p5961 = scmp.le.s32.totalorder 2, %s10
    // Predicated region
    $region37: #{resblock_forward.3} parent=5 // pred_check
      %p5962 = pneg %p5961
    $region38: #{resblock_forward.3} parent=5 // pred_check_branch
      %5964 = sbr.rel (%p5962) target = $region40
    $region39: #{resblock_forward.3} parent=5 // pred_region
      %s5965 = ssub.s32 %s10, 2
      // Predicated region
      $region41: #{resblock_forward.3} parent=39 // pred_check
        %p5966 = pneg %p86
      $region42: #{resblock_forward.3} parent=39 // pred_check_branch
        %5968 = sbr.rel (%p5966) target = $region44
      $region43: #{resblock_forward.3} parent=39 // pred_region
        %p5969 = scmp.lt.s32.totalorder %s16, 1
        %s5970 = scalar_select %p5969, %s16, 1
        %s5971 = smul.addr %s5970, 32
        %s5972 = smul.addr %s5971, 4
        %s5973 = scalar_lea.vmem %s2, %s5972
      $region44: #{resblock_forward.3} parent=39 // pred_fallthru
        _
      // Predicated region
      $region45: #{resblock_forward.3} parent=39 // pred_check
        %p5974 = pneg %p112
      $region46: #{resblock_forward.3} parent=39 // pred_check_branch
        %5976 = sbr.rel (%p5974) target = $region48
      $region47: #{resblock_forward.3} parent=39 // pred_region
        %p5977 = scmp.lt.s32.totalorder %s16, 1
        %s5978 = scalar_select %p5977, %s16, 1
        %s5979 = smul.addr %s5978, 2
        %s5980 = scalar_lea.vmem %s3, %s5979
      $region48: #{resblock_forward.3} parent=39 // pred_fallthru
        _
    $region40: #{resblock_forward.3} parent=5 // pred_fallthru
      _
  $region6: #{resblock_forward.3} parent=0 // loop_footer
    %s14 = sadd.s32 1, %s10
  $region7: #{resblock_forward.3} parent=0 // loop_footer_branch
    %9 = sbr.rel target = $region3
  $region8: #{resblock_forward.3} parent=0 // loop_exit
    _

</llo_original>
